<compile_context>
chip_gen: v6e
topology: v6e:2x2x1
jax: 0.10.0
libtpu: 0.0.40
codegen_flags: <defaults>
</compile_context>

<pallas_src>
import functools
import numpy as np
import jax
import jax.numpy as jnp
from jax.experimental import pallas as pl
from jax.experimental.pallas import tpu as pltpu

BN_EPS = 1e-5


# ---------------------------------------------------------------------------
# Shared in-kernel epilogue
# ---------------------------------------------------------------------------
def _bn_relu(z, gamma, beta):
    """Training-mode BatchNorm (biased stats over the rows/lane axis) + ReLU.

    One-pass sum / sum-of-squares, then normalization folded into a single
    per-channel scale/shift so the big [C, rows] tensor is touched only twice.
    """
    inv_n = 1.0 / z.shape[1]
    s1 = jnp.sum(z, axis=1, keepdims=True)
    s2 = jnp.sum(z * z, axis=1, keepdims=True)
    mean = s1 * inv_n
    var = jnp.maximum(s2 * inv_n - mean * mean, 0.0)
    scale = gamma * jax.lax.rsqrt(var + BN_EPS)
    shift = beta - mean * scale
    return jnp.maximum(z * scale + shift, 0.0)


# ---------------------------------------------------------------------------
# Pallas kernels
# ---------------------------------------------------------------------------
def conv_bn_relu_kernel(w_ref, p_ref, g_ref, bt_ref, o_ref):
    # Lane-dense im2col matmul on the MXU: [Cout, K] @ [K, rows] -> [Cout, rows]
    # (bf16 operands, f32 accumulation).  The conv bias is intentionally
    # omitted: it cancels exactly in the training-mode BatchNorm that follows.
    z = jnp.dot(w_ref[...], p_ref[...], preferred_element_type=jnp.float32)
    o_ref[...] = _bn_relu(z, g_ref[...], bt_ref[...]).astype(o_ref.dtype)


def conv_bn_relu(w_mat, patches, gamma, beta):
    """w_mat: [Cout, Cin*k*k] bf16, patches: [Cin*k*k, rows] bf16 -> [Cout, rows] bf16."""
    cout, kdim = w_mat.shape
    rows = patches.shape[1]
    # Single block: Cout is only 8/16 here and bf16 sublane tiling (16) makes
    # sub-16-channel blocks fragile.  TODO(synk): on v7x (2 TensorCores) a
    # rows-axis split with cross-block sum/sumsq BN partials would let both
    # cores work on conv1/conv2.
    return pl.pallas_call(
        conv_bn_relu_kernel,
        out_shape=jax.ShapeDtypeStruct((cout, rows), jnp.bfloat16),
        grid=(1,),
        in_specs=[
            pl.BlockSpec((cout, kdim), lambda i: (0, 0)),
            pl.BlockSpec((kdim, rows), lambda i: (0, 0)),
            pl.BlockSpec((cout, 1), lambda i: (0, 0)),
            pl.BlockSpec((cout, 1), lambda i: (0, 0)),
        ],
        out_specs=pl.BlockSpec((cout, rows), lambda i: (0, 0)),
    )(w_mat, patches, gamma, beta)


def make_conv34_head_kernel(batch_size, seg_len, n_taps):
    B, T = batch_size, seg_len
    N = 2 * B * T

    def kernel(p3_ref, w3_ref, g3_ref, b3_ref,
               w4_ref, g4_ref, b4_ref,
               w1_ref, b1_ref, w2_ref, b2_ref,
               r_ref, pred_ref):
        # conv3 + BN3 + ReLU.  Columns of p3 (and hence of f3) are ordered
        # (oh3, ow3, n), so conv4's tap p = oh3*5 + ow3 occupies the contiguous
        # column block [p*N, (p+1)*N): in-kernel im2col for conv4 is just
        # static slicing, no relayout.
        z3 = jnp.dot(w3_ref[...], p3_ref[...], preferred_element_type=jnp.float32)
        f3 = _bn_relu(z3, g3_ref[...], b3_ref[...]).astype(jnp.bfloat16)   # [32, 25*N]

        # conv4 (5x5 window exactly covering conv3's 5x5 map -> 1x1 output):
        # accumulate one small tap matmul per (kh, kw) into an f32 accumulator.
        z4 = jnp.zeros((w4_ref.shape[1], N), jnp.float32)
        for p in range(n_taps):
            z4 = z4 + jnp.dot(w4_ref[p], f3[:, p * N:(p + 1) * N],
                              preferred_element_type=jnp.float32)
        f4 = _bn_relu(z4, g4_ref[...], b4_ref[...]).astype(jnp.bfloat16)   # [32, N]

        # head1 (Linear + ReLU) and head2 (Linear) -> per-frame reward [1, N]
        h = jnp.maximum(
            jnp.dot(w1_ref[...], f4, preferred_element_type=jnp.float32)
            + b1_ref[...], 0.0).astype(jnp.bfloat16)
        r = jnp.dot(w2_ref[...], h, preferred_element_type=jnp.float32) + b2_ref[...]
        r_ref[...] = r

        # Per-trajectory reward sums: trajectory j owns frame columns
        # [j*T, (j+1)*T).  Mask built in-kernel from 2-D iotas (no dense
        # [2B, N] segment-sum matrix input).
        col = jax.lax.broadcasted_iota(jnp.int32, (2 * B, N), 1)
        row = jax.lax.broadcasted_iota(jnp.int32, (2 * B, N), 0)
        sel = jnp.logical_and(col >= row * T, col < (row + 1) * T).astype(jnp.float32)
        rs = jnp.sum(sel * r, axis=1, keepdims=True)          # [2B, 1]
        r1 = rs[:B, :]
        r2 = rs[B:, :]
        # softmax over the (r1, r2) pair for each trajectory pair
        m = jnp.maximum(r1, r2)
        e1 = jnp.exp(r1 - m)
        e2 = jnp.exp(r2 - m)
        inv = 1.0 / (e1 + e2)
        pred_ref[...] = jnp.concatenate([e1 * inv, e2 * inv], axis=1)      # [B, 2]

    return kernel


def conv34_and_head(patches3, prep, batch_size, seg_len, n_taps):
    n_frames = patches3.shape[1] // n_taps
    vmem = pl.BlockSpec(memory_space=pltpu.MemorySpace.VMEM)
    return pl.pallas_call(
        make_conv34_head_kernel(batch_size, seg_len, n_taps),
        out_shape=(jax.ShapeDtypeStruct((1, n_frames), jnp.float32),
                   jax.ShapeDtypeStruct((batch_size, 2), jnp.float32)),
        in_specs=[vmem] * 11,
        out_specs=(vmem, vmem),
    )(patches3, prep["conv3_w"], prep["bn3_g"], prep["bn3_b"],
      prep["conv4_w"], prep["bn4_g"], prep["bn4_b"],
      prep["head1_w"], prep["head1_b"], prep["head2_w"], prep["head2_b"])


# ---------------------------------------------------------------------------
# JAX glue: transposed im2col, one-time parameter prep, forward pass
# ---------------------------------------------------------------------------
def im2col_T(x_cnhw, k, stride, patch_major=False):
    """x: [C, N, H, W] -> patches [C*k*k, rows].

    Rows ordered (C, kh, kw) to match w.reshape(Cout, Cin*k*k).  Columns are
    ordered (N, OH, OW) by default; with patch_major=True they are ordered
    (OH, OW, N), which is what the fused conv3+conv4 kernel wants (conv4's tap
    (kh, kw) then lives in one contiguous block of N columns).
    """
    c, n, h, w = x_cnhw.shape
    oh = (h - k) // stride + 1
    ow = (w - k) // stride + 1
    taps = []
    for i in range(k):
        for j in range(k):
            taps.append(x_cnhw[:, :,
                               i:i + stride * (oh - 1) + 1:stride,
                               j:j + stride * (ow - 1) + 1:stride])
    patches = jnp.stack(taps, axis=1)                     # [C, k*k, N, OH, OW]
    if patch_major:
        patches = patches.transpose(0, 1, 3, 4, 2)        # [C, k*k, OH, OW, N]
        return patches.reshape(c * k * k, oh * ow * n), oh, ow
    return patches.reshape(c * k * k, n * oh * ow), oh, ow


def prepare_params(params):
    """One-time layout prep: bf16 MXU weights, [C, 1] f32 BN columns.

    Conv biases are intentionally NOT used by the kernels: they cancel exactly
    in the training-mode BatchNorm that follows each conv.
    """
    prep = {}
    for i in (1, 2, 3):
        w = params[f"conv{i}_w"]
        prep[f"conv{i}_w"] = w.reshape(w.shape[0], -1).astype(jnp.bfloat16)
    w4 = params["conv4_w"]                                  # [co, ci, kh, kw]
    co, ci, kh, kw = w4.shape
    prep["conv4_w"] = (w4.transpose(2, 3, 0, 1)             # [kh, kw, co, ci]
                       .reshape(kh * kw, co, ci).astype(jnp.bfloat16))
    for i in range(1, 5):
        prep[f"bn{i}_g"] = params[f"bn{i}_g"].reshape(-1, 1).astype(jnp.float32)
        prep[f"bn{i}_b"] = params[f"bn{i}_b"].reshape(-1, 1).astype(jnp.float32)
    prep["head1_w"] = params["head1_w"].astype(jnp.bfloat16)      # [16, lin_in]
    prep["head1_b"] = params["head1_b"].reshape(-1, 1).astype(jnp.float32)
    prep["head2_w"] = params["head2_w"].astype(jnp.bfloat16)      # [1, 16]
    prep["head2_b"] = params["head2_b"].reshape(-1, 1).astype(jnp.float32)
    return prep


def forward(prep, s1s, s2s):
    assert s1s.shape == s2s.shape, "segments should be the same shape"
    bsz, seg = s1s.shape[0], s1s.shape[1]
    x = jnp.concatenate([s1s.reshape((-1,) + s1s.shape[2:]),
                         s2s.reshape((-1,) + s2s.shape[2:])], axis=0)  # [N, C, H, W]
    n = x.shape[0]
    # Channel-major bf16 activation chain: [C, N, H, W] (single small transpose).
    x = x.transpose(1, 0, 2, 3).astype(jnp.bfloat16)
    for i in (1, 2):
        patches, oh, ow = im2col_T(x, 5, 2)                # [Cin*25, N*OH*OW] bf16
        y = conv_bn_relu(prep[f"conv{i}_w"], patches,
                         prep[f"bn{i}_g"], prep[f"bn{i}_b"])  # [Cout, rows] bf16
        x = y.reshape(y.shape[0], n, oh, ow)
    # conv3 patches with (oh, ow, n)-ordered columns feed the fused
    # conv3 + conv4 + head kernel.
    patches3, oh3, ow3 = im2col_T(x, 5, 2, patch_major=True)
    # TODO(synk): the fused tail assumes conv4 reduces conv3's 5x5 output to a
    # 1x1 map (true for 64x64 observations); other sizes need a generic path.
    assert oh3 == 5 and ow3 == 5, "fused conv3/conv4 head assumes a 5x5 -> 1x1 tail"
    r, pred = conv34_and_head(patches3, prep, bsz, seg, oh3 * ow3)   # r: [1, N]
    r1s = r[0, :bsz * seg].reshape(bsz, seg, 1)
    r2s = r[0, bsz * seg:].reshape(bsz, seg, 1)
    return r1s, r2s, pred


def init_params(key, nc, lin_in):
    keys = jax.random.split(key, 12)

    def rnd(k, shape, scale=0.1):
        return (scale * jax.random.normal(k, shape)).astype(jnp.float32)

    p = {
        "conv1_w": rnd(keys[0], (8, nc, 5, 5)),  "conv1_b": rnd(keys[1], (8,)),
        "conv2_w": rnd(keys[2], (16, 8, 5, 5)),  "conv2_b": rnd(keys[3], (16,)),
        "conv3_w": rnd(keys[4], (32, 16, 5, 5)), "conv3_b": rnd(keys[5], (32,)),
        "conv4_w": rnd(keys[6], (32, 32, 5, 5)), "conv4_b": rnd(keys[7], (32,)),
        "head1_w": rnd(keys[8], (16, lin_in)),   "head1_b": rnd(keys[9], (16,)),
        "head2_w": rnd(keys[10], (1, 16)),       "head2_b": rnd(keys[11], (1,)),
    }
    for i, c in zip(range(1, 5), (8, 16, 32, 32)):
        p[f"bn{i}_g"] = jnp.ones((c,), jnp.float32)   # PyTorch BatchNorm default init
        p[f"bn{i}_b"] = jnp.zeros((c,), jnp.float32)
    return p


# ---------------------------------------------------------------------------
# Pure-JAX reference (verification only; includes the conv biases, which the
# kernels drop because they cancel in training-mode BatchNorm)
# ---------------------------------------------------------------------------
def ref_forward(params, s1s, s2s):
    bsz, seg = s1s.shape[0], s1s.shape[1]
    x = jnp.concatenate([s1s.reshape((-1,) + s1s.shape[2:]),
                         s2s.reshape((-1,) + s2s.shape[2:])], axis=0)
    for i in range(1, 5):
        w, b = params[f"conv{i}_w"], params[f"conv{i}_b"]
        x = jax.lax.conv_general_dilated(
            x, w, window_strides=(2, 2), padding="VALID",
            dimension_numbers=("NCHW", "OIHW", "NCHW"),
            precision=jax.lax.Precision.HIGHEST)
        x = x + b[None, :, None, None]
        mean = jnp.mean(x, axis=(0, 2, 3), keepdims=True)
        var = jnp.mean(jnp.square(x - mean), axis=(0, 2, 3), keepdims=True)
        x = (x - mean) * jax.lax.rsqrt(var + BN_EPS)
        x = x * params[f"bn{i}_g"][None, :, None, None] + params[f"bn{i}_b"][None, :, None, None]
        x = jnp.maximum(x, 0.0)
    feat = x.reshape(x.shape[0], -1)
    h = jnp.maximum(feat @ params["head1_w"].T + params["head1_b"], 0.0)
    r = h @ params["head2_w"].T + params["head2_b"]
    r1s = r[:bsz * seg].reshape(bsz, seg, 1)
    r2s = r[bsz * seg:].reshape(bsz, seg, 1)
    r1 = jnp.sum(r1s, axis=1)
    r2 = jnp.sum(r2s, axis=1)
    pred = jax.nn.softmax(jnp.concatenate([r1, r2], axis=1), axis=1)
    return r1s, r2s, pred


# ---------------------------------------------------------------------------
if __name__ == "__main__":
    # Four stride-2 5x5 VALID convs -> use 64x64 observations (spatial chain
    # 64 -> 30 -> 13 -> 5 -> 1), so head1's input size is 1*1*32.
    B, T, C, H, W = 2, 4, 3, 64, 64          # obs space (nh, nw, nc) = (64, 64, 3)
    LIN_IN = 32

    key = jax.random.PRNGKey(0)
    k_data1, k_data2, k_param = jax.random.split(key, 3)
    s1s = jax.random.normal(k_data1, (B, T, C, H, W), jnp.float32)
    s2s = jax.random.normal(k_data2, (B, T, C, H, W), jnp.float32)

    params = init_params(k_param, C, LIN_IN)
    prep = prepare_params(params)

    fwd = jax.jit(functools.partial(forward, prep))
    r1s, r2s, pred = fwd(s1s, s2s)
    jax.block_until_ready((r1s, r2s, pred))

    # sanity check against a pure-JAX reference of the same forward pass
    r1s_ref, r2s_ref, pred_ref = jax.jit(functools.partial(ref_forward, params))(s1s, s2s)
    np.testing.assert_allclose(np.asarray(r1s), np.asarray(r1s_ref), rtol=5e-2, atol=5e-2)
    np.testing.assert_allclose(np.asarray(r2s), np.asarray(r2s_ref), rtol=5e-2, atol=5e-2)
    np.testing.assert_allclose(np.asarray(pred), np.asarray(pred_ref), rtol=5e-2, atol=5e-2)
    assert r1s.shape == (B, T, 1) and r2s.shape == (B, T, 1) and pred.shape == (B, 2)

    print("KERNEL_OK")
</pallas_src>

<mosaic_0001>
module attributes {stable_mosaic.version = 11 : i64} {
  func.func @conv_bn_relu_kernel(%arg0: i32, %arg1: memref<8x75xbf16, #tpu.memory_space<vmem>>, %arg2: memref<75x14400xbf16, #tpu.memory_space<vmem>>, %arg3: memref<8x1xf32, #tpu.memory_space<vmem>>, %arg4: memref<8x1xf32, #tpu.memory_space<vmem>>, %arg5: memref<8x14400xbf16, #tpu.memory_space<vmem>>) attributes {dimension_semantics = [#tpu.dimension_semantics<arbitrary>], iteration_bounds = array<i64: 1>, scalar_prefetch = 0 : i64, scratch_operands = 0 : i64, tpu.core_type = #tpu.core_type<tc>, window_params = [{pipeline_mode = #tpu.pipeline_mode<synchronous>, transform_indices = @transform_0, window_bounds = array<i64: 8, 75>}, {pipeline_mode = #tpu.pipeline_mode<synchronous>, transform_indices = @transform_1, window_bounds = array<i64: 75, 14400>}, {pipeline_mode = #tpu.pipeline_mode<synchronous>, transform_indices = @transform_2, window_bounds = array<i64: 8, 1>}, {pipeline_mode = #tpu.pipeline_mode<synchronous>, transform_indices = @transform_3, window_bounds = array<i64: 8, 1>}, {pipeline_mode = #tpu.pipeline_mode<synchronous>, transform_indices = @transform_4, window_bounds = array<i64: 8, 14400>}]} {
    %c0 = arith.constant 0 : index
    %c0_0 = arith.constant 0 : index
    %0 = vector.load %arg1[%c0, %c0_0] : memref<8x75xbf16, #tpu.memory_space<vmem>>, vector<8x75xbf16>
    %c0_1 = arith.constant 0 : index
    %c0_2 = arith.constant 0 : index
    %1 = vector.load %arg2[%c0_1, %c0_2] : memref<75x14400xbf16, #tpu.memory_space<vmem>>, vector<75x14400xbf16>
    %cst = arith.constant dense<0.000000e+00> : vector<8x14400xf32>
    %2 = tpu.matmul %0, %1, %cst {dimension_numbers = #tpu.dot_dimension_numbers<[1], [0], [0], [1], [0, 0, 1, 1], [], []>} : vector<8x75xbf16>, vector<75x14400xbf16>, vector<8x14400xf32> -> vector<8x14400xf32>
    %c0_3 = arith.constant 0 : index
    %c0_4 = arith.constant 0 : index
    %3 = vector.load %arg3[%c0_3, %c0_4] : memref<8x1xf32, #tpu.memory_space<vmem>>, vector<8x1xf32>
    %c0_5 = arith.constant 0 : index
    %c0_6 = arith.constant 0 : index
    %4 = vector.load %arg4[%c0_5, %c0_6] : memref<8x1xf32, #tpu.memory_space<vmem>>, vector<8x1xf32>
    %cst_7 = arith.constant dense<0.000000e+00> : vector<8xf32>
    %5 = vector.multi_reduction <add>, %2, %cst_7 [1] : vector<8x14400xf32> to vector<8xf32>
    %6 = vector.shape_cast %5 : vector<8xf32> to vector<8x1xf32>
    %7 = arith.mulf %2, %2 : vector<8x14400xf32>
    %cst_8 = arith.constant dense<0.000000e+00> : vector<8xf32>
    %8 = vector.multi_reduction <add>, %7, %cst_8 [1] : vector<8x14400xf32> to vector<8xf32>
    %9 = vector.shape_cast %8 : vector<8xf32> to vector<8x1xf32>
    %cst_9 = arith.constant 6.94444461E-5 : f32
    %10 = vector.broadcast %cst_9 : f32 to vector<8x1xf32>
    %11 = arith.mulf %6, %10 : vector<8x1xf32>
    %cst_10 = arith.constant 6.94444461E-5 : f32
    %12 = vector.broadcast %cst_10 : f32 to vector<8x1xf32>
    %13 = arith.mulf %9, %12 : vector<8x1xf32>
    %14 = arith.mulf %11, %11 : vector<8x1xf32>
    %15 = arith.subf %13, %14 : vector<8x1xf32>
    %cst_11 = arith.constant 0.000000e+00 : f32
    %16 = vector.broadcast %cst_11 : f32 to vector<8x1xf32>
    %17 = arith.maximumf %15, %16 : vector<8x1xf32>
    %cst_12 = arith.constant 9.99999974E-6 : f32
    %18 = vector.broadcast %cst_12 : f32 to vector<8x1xf32>
    %19 = arith.addf %17, %18 : vector<8x1xf32>
    %20 = math.rsqrt %19 : vector<8x1xf32>
    %21 = arith.mulf %3, %20 : vector<8x1xf32>
    %22 = arith.mulf %11, %21 : vector<8x1xf32>
    %23 = arith.subf %4, %22 : vector<8x1xf32>
    %24 = vector.broadcast %21 : vector<8x1xf32> to vector<8x14400xf32>
    %25 = arith.mulf %2, %24 : vector<8x14400xf32>
    %26 = vector.broadcast %23 : vector<8x1xf32> to vector<8x14400xf32>
    %27 = arith.addf %25, %26 : vector<8x14400xf32>
    %cst_13 = arith.constant 0.000000e+00 : f32
    %28 = vector.broadcast %cst_13 : f32 to vector<8x14400xf32>
    %29 = arith.maximumf %27, %28 : vector<8x14400xf32>
    %30 = arith.truncf %29 : vector<8x14400xf32> to vector<8x14400xbf16>
    %c0_14 = arith.constant 0 : index
    %c0_15 = arith.constant 0 : index
    %31 = vector.load %arg5[%c0_14, %c0_15] : memref<8x14400xbf16, #tpu.memory_space<vmem>>, vector<8x14400xbf16>
    tpu.vector_store %arg5[%c0_14, %c0_15], %30 {strides = array<i32>} : memref<8x14400xbf16, #tpu.memory_space<vmem>>, vector<8x14400xbf16>,
    return
  }
  func.func @transform_0(%arg0: i32) -> (i32, i32) {
    %c0_i32 = arith.constant 0 : i32
    %c0_i32_0 = arith.constant 0 : i32
    %c0_i32_1 = arith.constant 0 : i32
    return %c0_i32, %c0_i32_0 : i32, i32
  }
  func.func @transform_1(%arg0: i32) -> (i32, i32) {
    %c0_i32 = arith.constant 0 : i32
    %c0_i32_0 = arith.constant 0 : i32
    %c0_i32_1 = arith.constant 0 : i32
    return %c0_i32, %c0_i32_0 : i32, i32
  }
  func.func @transform_2(%arg0: i32) -> (i32, i32) {
    %c0_i32 = arith.constant 0 : i32
    %c0_i32_0 = arith.constant 0 : i32
    %c0_i32_1 = arith.constant 0 : i32
    return %c0_i32, %c0_i32_0 : i32, i32
  }
  func.func @transform_3(%arg0: i32) -> (i32, i32) {
    %c0_i32 = arith.constant 0 : i32
    %c0_i32_0 = arith.constant 0 : i32
    %c0_i32_1 = arith.constant 0 : i32
    return %c0_i32, %c0_i32_0 : i32, i32
  }
  func.func @transform_4(%arg0: i32) -> (i32, i32) {
    %c0_i32 = arith.constant 0 : i32
    %c0_i32_0 = arith.constant 0 : i32
    %c0_i32_1 = arith.constant 0 : i32
    return %c0_i32, %c0_i32_0 : i32, i32
  }
}

module attributes {stable_mosaic.version = 11 : i64} {
  func.func @conv_bn_relu_kernel(%arg0: i32, %arg1: memref<16x200xbf16, #tpu.memory_space<vmem>>, %arg2: memref<200x2704xbf16, #tpu.memory_space<vmem>>, %arg3: memref<16x1xf32, #tpu.memory_space<vmem>>, %arg4: memref<16x1xf32, #tpu.memory_space<vmem>>, %arg5: memref<16x2704xbf16, #tpu.memory_space<vmem>>) attributes {dimension_semantics = [#tpu.dimension_semantics<arbitrary>], iteration_bounds = array<i64: 1>, scalar_prefetch = 0 : i64, scratch_operands = 0 : i64, tpu.core_type = #tpu.core_type<tc>, window_params = [{pipeline_mode = #tpu.pipeline_mode<synchronous>, transform_indices = @transform_0, window_bounds = array<i64: 16, 200>}, {pipeline_mode = #tpu.pipeline_mode<synchronous>, transform_indices = @transform_1, window_bounds = array<i64: 200, 2704>}, {pipeline_mode = #tpu.pipeline_mode<synchronous>, transform_indices = @transform_2, window_bounds = array<i64: 16, 1>}, {pipeline_mode = #tpu.pipeline_mode<synchronous>, transform_indices = @transform_3, window_bounds = array<i64: 16, 1>}, {pipeline_mode = #tpu.pipeline_mode<synchronous>, transform_indices = @transform_4, window_bounds = array<i64: 16, 2704>}]} {
    %c0 = arith.constant 0 : index
    %c0_0 = arith.constant 0 : index
    %0 = vector.load %arg1[%c0, %c0_0] : memref<16x200xbf16, #tpu.memory_space<vmem>>, vector<16x200xbf16>
    %c0_1 = arith.constant 0 : index
    %c0_2 = arith.constant 0 : index
    %1 = vector.load %arg2[%c0_1, %c0_2] : memref<200x2704xbf16, #tpu.memory_space<vmem>>, vector<200x2704xbf16>
    %cst = arith.constant dense<0.000000e+00> : vector<16x2704xf32>
    %2 = tpu.matmul %0, %1, %cst {dimension_numbers = #tpu.dot_dimension_numbers<[1], [0], [0], [1], [0, 0, 1, 1], [], []>} : vector<16x200xbf16>, vector<200x2704xbf16>, vector<16x2704xf32> -> vector<16x2704xf32>
    %c0_3 = arith.constant 0 : index
    %c0_4 = arith.constant 0 : index
    %3 = vector.load %arg3[%c0_3, %c0_4] : memref<16x1xf32, #tpu.memory_space<vmem>>, vector<16x1xf32>
    %c0_5 = arith.constant 0 : index
    %c0_6 = arith.constant 0 : index
    %4 = vector.load %arg4[%c0_5, %c0_6] : memref<16x1xf32, #tpu.memory_space<vmem>>, vector<16x1xf32>
    %cst_7 = arith.constant dense<0.000000e+00> : vector<16xf32>
    %5 = vector.multi_reduction <add>, %2, %cst_7 [1] : vector<16x2704xf32> to vector<16xf32>
    %6 = vector.shape_cast %5 : vector<16xf32> to vector<16x1xf32>
    %7 = arith.mulf %2, %2 : vector<16x2704xf32>
    %cst_8 = arith.constant dense<0.000000e+00> : vector<16xf32>
    %8 = vector.multi_reduction <add>, %7, %cst_8 [1] : vector<16x2704xf32> to vector<16xf32>
    %9 = vector.shape_cast %8 : vector<16xf32> to vector<16x1xf32>
    %cst_9 = arith.constant 3.6982249E-4 : f32
    %10 = vector.broadcast %cst_9 : f32 to vector<16x1xf32>
    %11 = arith.mulf %6, %10 : vector<16x1xf32>
    %cst_10 = arith.constant 3.6982249E-4 : f32
    %12 = vector.broadcast %cst_10 : f32 to vector<16x1xf32>
    %13 = arith.mulf %9, %12 : vector<16x1xf32>
    %14 = arith.mulf %11, %11 : vector<16x1xf32>
    %15 = arith.subf %13, %14 : vector<16x1xf32>
    %cst_11 = arith.constant 0.000000e+00 : f32
    %16 = vector.broadcast %cst_11 : f32 to vector<16x1xf32>
    %17 = arith.maximumf %15, %16 : vector<16x1xf32>
    %cst_12 = arith.constant 9.99999974E-6 : f32
    %18 = vector.broadcast %cst_12 : f32 to vector<16x1xf32>
    %19 = arith.addf %17, %18 : vector<16x1xf32>
    %20 = math.rsqrt %19 : vector<16x1xf32>
    %21 = arith.mulf %3, %20 : vector<16x1xf32>
    %22 = arith.mulf %11, %21 : vector<16x1xf32>
    %23 = arith.subf %4, %22 : vector<16x1xf32>
    %24 = vector.broadcast %21 : vector<16x1xf32> to vector<16x2704xf32>
    %25 = arith.mulf %2, %24 : vector<16x2704xf32>
    %26 = vector.broadcast %23 : vector<16x1xf32> to vector<16x2704xf32>
    %27 = arith.addf %25, %26 : vector<16x2704xf32>
    %cst_13 = arith.constant 0.000000e+00 : f32
    %28 = vector.broadcast %cst_13 : f32 to vector<16x2704xf32>
    %29 = arith.maximumf %27, %28 : vector<16x2704xf32>
    %30 = arith.truncf %29 : vector<16x2704xf32> to vector<16x2704xbf16>
    %c0_14 = arith.constant 0 : index
    %c0_15 = arith.constant 0 : index
    %31 = vector.load %arg5[%c0_14, %c0_15] : memref<16x2704xbf16, #tpu.memory_space<vmem>>, vector<16x2704xbf16>
    tpu.vector_store %arg5[%c0_14, %c0_15], %30 {strides = array<i32>} : memref<16x2704xbf16, #tpu.memory_space<vmem>>, vector<16x2704xbf16>,
    return
  }
  func.func @transform_0(%arg0: i32) -> (i32, i32) {
    %c0_i32 = arith.constant 0 : i32
    %c0_i32_0 = arith.constant 0 : i32
    %c0_i32_1 = arith.constant 0 : i32
    return %c0_i32, %c0_i32_0 : i32, i32
  }
  func.func @transform_1(%arg0: i32) -> (i32, i32) {
    %c0_i32 = arith.constant 0 : i32
    %c0_i32_0 = arith.constant 0 : i32
    %c0_i32_1 = arith.constant 0 : i32
    return %c0_i32, %c0_i32_0 : i32, i32
  }
  func.func @transform_2(%arg0: i32) -> (i32, i32) {
    %c0_i32 = arith.constant 0 : i32
    %c0_i32_0 = arith.constant 0 : i32
    %c0_i32_1 = arith.constant 0 : i32
    return %c0_i32, %c0_i32_0 : i32, i32
  }
  func.func @transform_3(%arg0: i32) -> (i32, i32) {
    %c0_i32 = arith.constant 0 : i32
    %c0_i32_0 = arith.constant 0 : i32
    %c0_i32_1 = arith.constant 0 : i32
    return %c0_i32, %c0_i32_0 : i32, i32
  }
  func.func @transform_4(%arg0: i32) -> (i32, i32) {
    %c0_i32 = arith.constant 0 : i32
    %c0_i32_0 = arith.constant 0 : i32
    %c0_i32_1 = arith.constant 0 : i32
    return %c0_i32, %c0_i32_0 : i32, i32
  }
}

module attributes {stable_mosaic.version = 11 : i64} {
  func.func @kernel(%arg0: memref<400x400xbf16, #tpu.memory_space<vmem>>, %arg1: memref<32x400xbf16, #tpu.memory_space<vmem>>, %arg2: memref<32x1xf32, #tpu.memory_space<vmem>>, %arg3: memref<32x1xf32, #tpu.memory_space<vmem>>, %arg4: memref<25x32x32xbf16, #tpu.memory_space<vmem>>, %arg5: memref<32x1xf32, #tpu.memory_space<vmem>>, %arg6: memref<32x1xf32, #tpu.memory_space<vmem>>, %arg7: memref<16x32xbf16, #tpu.memory_space<vmem>>, %arg8: memref<16x1xf32, #tpu.memory_space<vmem>>, %arg9: memref<1x16xbf16, #tpu.memory_space<vmem>>, %arg10: memref<1x1xf32, #tpu.memory_space<vmem>>, %arg11: memref<1x16xf32, #tpu.memory_space<vmem>>, %arg12: memref<2x2xf32, #tpu.memory_space<vmem>>) attributes {dimension_semantics = [], scalar_prefetch = 0 : i64, scratch_operands = 0 : i64, tpu.core_type = #tpu.core_type<tc>} {
    %c0 = arith.constant 0 : index
    %c0_0 = arith.constant 0 : index
    %0 = vector.load %arg1[%c0, %c0_0] : memref<32x400xbf16, #tpu.memory_space<vmem>>, vector<32x400xbf16>
    %c0_1 = arith.constant 0 : index
    %c0_2 = arith.constant 0 : index
    %1 = vector.load %arg0[%c0_1, %c0_2] : memref<400x400xbf16, #tpu.memory_space<vmem>>, vector<400x400xbf16>
    %cst = arith.constant dense<0.000000e+00> : vector<32x400xf32>
    %2 = tpu.matmul %0, %1, %cst {dimension_numbers = #tpu.dot_dimension_numbers<[1], [0], [0], [1], [0, 0, 1, 1], [], []>} : vector<32x400xbf16>, vector<400x400xbf16>, vector<32x400xf32> -> vector<32x400xf32>
    %c0_3 = arith.constant 0 : index
    %c0_4 = arith.constant 0 : index
    %3 = vector.load %arg2[%c0_3, %c0_4] : memref<32x1xf32, #tpu.memory_space<vmem>>, vector<32x1xf32>
    %c0_5 = arith.constant 0 : index
    %c0_6 = arith.constant 0 : index
    %4 = vector.load %arg3[%c0_5, %c0_6] : memref<32x1xf32, #tpu.memory_space<vmem>>, vector<32x1xf32>
    %cst_7 = arith.constant dense<0.000000e+00> : vector<32xf32>
    %5 = vector.multi_reduction <add>, %2, %cst_7 [1] : vector<32x400xf32> to vector<32xf32>
    %6 = vector.shape_cast %5 : vector<32xf32> to vector<32x1xf32>
    %7 = arith.mulf %2, %2 : vector<32x400xf32>
    %cst_8 = arith.constant dense<0.000000e+00> : vector<32xf32>
    %8 = vector.multi_reduction <add>, %7, %cst_8 [1] : vector<32x400xf32> to vector<32xf32>
    %9 = vector.shape_cast %8 : vector<32xf32> to vector<32x1xf32>
    %cst_9 = arith.constant 2.500000e-03 : f32
    %10 = vector.broadcast %cst_9 : f32 to vector<32x1xf32>
    %11 = arith.mulf %6, %10 : vector<32x1xf32>
    %cst_10 = arith.constant 2.500000e-03 : f32
    %12 = vector.broadcast %cst_10 : f32 to vector<32x1xf32>
    %13 = arith.mulf %9, %12 : vector<32x1xf32>
    %14 = arith.mulf %11, %11 : vector<32x1xf32>
    %15 = arith.subf %13, %14 : vector<32x1xf32>
    %cst_11 = arith.constant 0.000000e+00 : f32
    %16 = vector.broadcast %cst_11 : f32 to vector<32x1xf32>
    %17 = arith.maximumf %15, %16 : vector<32x1xf32>
    %cst_12 = arith.constant 9.99999974E-6 : f32
    %18 = vector.broadcast %cst_12 : f32 to vector<32x1xf32>
    %19 = arith.addf %17, %18 : vector<32x1xf32>
    %20 = math.rsqrt %19 : vector<32x1xf32>
    %21 = arith.mulf %3, %20 : vector<32x1xf32>
    %22 = arith.mulf %11, %21 : vector<32x1xf32>
    %23 = arith.subf %4, %22 : vector<32x1xf32>
    %24 = vector.broadcast %21 : vector<32x1xf32> to vector<32x400xf32>
    %25 = arith.mulf %2, %24 : vector<32x400xf32>
    %26 = vector.broadcast %23 : vector<32x1xf32> to vector<32x400xf32>
    %27 = arith.addf %25, %26 : vector<32x400xf32>
    %cst_13 = arith.constant 0.000000e+00 : f32
    %28 = vector.broadcast %cst_13 : f32 to vector<32x400xf32>
    %29 = arith.maximumf %27, %28 : vector<32x400xf32>
    %30 = arith.truncf %29 : vector<32x400xf32> to vector<32x400xbf16>
    %cst_14 = arith.constant 0.000000e+00 : f32
    %31 = vector.broadcast %cst_14 : f32 to vector<32x16xf32>
    %c0_15 = arith.constant 0 : index
    %c0_16 = arith.constant 0 : index
    %c0_17 = arith.constant 0 : index
    %32 = vector.load %arg4[%c0_15, %c0_16, %c0_17] : memref<25x32x32xbf16, #tpu.memory_space<vmem>>, vector<1x32x32xbf16>
    %33 = vector.shape_cast %32 : vector<1x32x32xbf16> to vector<32x32xbf16>
    %34 = vector.extract_strided_slice %30 {offsets = [0, 0], sizes = [32, 16], strides = [1, 1]} : vector<32x400xbf16> to vector<32x16xbf16>
    %cst_18 = arith.constant dense<0.000000e+00> : vector<32x16xf32>
    %35 = tpu.matmul %33, %34, %cst_18 {dimension_numbers = #tpu.dot_dimension_numbers<[1], [0], [0], [1], [0, 0, 1, 1], [], []>} : vector<32x32xbf16>, vector<32x16xbf16>, vector<32x16xf32> -> vector<32x16xf32>
    %36 = arith.addf %31, %35 : vector<32x16xf32>
    %c1 = arith.constant 1 : index
    %c0_19 = arith.constant 0 : index
    %c0_20 = arith.constant 0 : index
    %37 = vector.load %arg4[%c1, %c0_19, %c0_20] : memref<25x32x32xbf16, #tpu.memory_space<vmem>>, vector<1x32x32xbf16>
    %38 = vector.shape_cast %37 : vector<1x32x32xbf16> to vector<32x32xbf16>
    %39 = vector.extract_strided_slice %30 {offsets = [0, 16], sizes = [32, 16], strides = [1, 1]} : vector<32x400xbf16> to vector<32x16xbf16>
    %cst_21 = arith.constant dense<0.000000e+00> : vector<32x16xf32>
    %40 = tpu.matmul %38, %39, %cst_21 {dimension_numbers = #tpu.dot_dimension_numbers<[1], [0], [0], [1], [0, 0, 1, 1], [], []>} : vector<32x32xbf16>, vector<32x16xbf16>, vector<32x16xf32> -> vector<32x16xf32>
    %41 = arith.addf %36, %40 : vector<32x16xf32>
    %c2 = arith.constant 2 : index
    %c0_22 = arith.constant 0 : index
    %c0_23 = arith.constant 0 : index
    %42 = vector.load %arg4[%c2, %c0_22, %c0_23] : memref<25x32x32xbf16, #tpu.memory_space<vmem>>, vector<1x32x32xbf16>
    %43 = vector.shape_cast %42 : vector<1x32x32xbf16> to vector<32x32xbf16>
    %44 = vector.extract_strided_slice %30 {offsets = [0, 32], sizes = [32, 16], strides = [1, 1]} : vector<32x400xbf16> to vector<32x16xbf16>
    %cst_24 = arith.constant dense<0.000000e+00> : vector<32x16xf32>
    %45 = tpu.matmul %43, %44, %cst_24 {dimension_numbers = #tpu.dot_dimension_numbers<[1], [0], [0], [1], [0, 0, 1, 1], [], []>} : vector<32x32xbf16>, vector<32x16xbf16>, vector<32x16xf32> -> vector<32x16xf32>
    %46 = arith.addf %41, %45 : vector<32x16xf32>
    %c3 = arith.constant 3 : index
    %c0_25 = arith.constant 0 : index
    %c0_26 = arith.constant 0 : index
    %47 = vector.load %arg4[%c3, %c0_25, %c0_26] : memref<25x32x32xbf16, #tpu.memory_space<vmem>>, vector<1x32x32xbf16>
    %48 = vector.shape_cast %47 : vector<1x32x32xbf16> to vector<32x32xbf16>
    %49 = vector.extract_strided_slice %30 {offsets = [0, 48], sizes = [32, 16], strides = [1, 1]} : vector<32x400xbf16> to vector<32x16xbf16>
    %cst_27 = arith.constant dense<0.000000e+00> : vector<32x16xf32>
    %50 = tpu.matmul %48, %49, %cst_27 {dimension_numbers = #tpu.dot_dimension_numbers<[1], [0], [0], [1], [0, 0, 1, 1], [], []>} : vector<32x32xbf16>, vector<32x16xbf16>, vector<32x16xf32> -> vector<32x16xf32>
    %51 = arith.addf %46, %50 : vector<32x16xf32>
    %c4 = arith.constant 4 : index
    %c0_28 = arith.constant 0 : index
    %c0_29 = arith.constant 0 : index
    %52 = vector.load %arg4[%c4, %c0_28, %c0_29] : memref<25x32x32xbf16, #tpu.memory_space<vmem>>, vector<1x32x32xbf16>
    %53 = vector.shape_cast %52 : vector<1x32x32xbf16> to vector<32x32xbf16>
    %54 = vector.extract_strided_slice %30 {offsets = [0, 64], sizes = [32, 16], strides = [1, 1]} : vector<32x400xbf16> to vector<32x16xbf16>
    %cst_30 = arith.constant dense<0.000000e+00> : vector<32x16xf32>
    %55 = tpu.matmul %53, %54, %cst_30 {dimension_numbers = #tpu.dot_dimension_numbers<[1], [0], [0], [1], [0, 0, 1, 1], [], []>} : vector<32x32xbf16>, vector<32x16xbf16>, vector<32x16xf32> -> vector<32x16xf32>
    %56 = arith.addf %51, %55 : vector<32x16xf32>
    %c5 = arith.constant 5 : index
    %c0_31 = arith.constant 0 : index
    %c0_32 = arith.constant 0 : index
    %57 = vector.load %arg4[%c5, %c0_31, %c0_32] : memref<25x32x32xbf16, #tpu.memory_space<vmem>>, vector<1x32x32xbf16>
    %58 = vector.shape_cast %57 : vector<1x32x32xbf16> to vector<32x32xbf16>
    %59 = vector.extract_strided_slice %30 {offsets = [0, 80], sizes = [32, 16], strides = [1, 1]} : vector<32x400xbf16> to vector<32x16xbf16>
    %cst_33 = arith.constant dense<0.000000e+00> : vector<32x16xf32>
    %60 = tpu.matmul %58, %59, %cst_33 {dimension_numbers = #tpu.dot_dimension_numbers<[1], [0], [0], [1], [0, 0, 1, 1], [], []>} : vector<32x32xbf16>, vector<32x16xbf16>, vector<32x16xf32> -> vector<32x16xf32>
    %61 = arith.addf %56, %60 : vector<32x16xf32>
    %c6 = arith.constant 6 : index
    %c0_34 = arith.constant 0 : index
    %c0_35 = arith.constant 0 : index
    %62 = vector.load %arg4[%c6, %c0_34, %c0_35] : memref<25x32x32xbf16, #tpu.memory_space<vmem>>, vector<1x32x32xbf16>
    %63 = vector.shape_cast %62 : vector<1x32x32xbf16> to vector<32x32xbf16>
    %64 = vector.extract_strided_slice %30 {offsets = [0, 96], sizes = [32, 16], strides = [1, 1]} : vector<32x400xbf16> to vector<32x16xbf16>
    %cst_36 = arith.constant dense<0.000000e+00> : vector<32x16xf32>
    %65 = tpu.matmul %63, %64, %cst_36 {dimension_numbers = #tpu.dot_dimension_numbers<[1], [0], [0], [1], [0, 0, 1, 1], [], []>} : vector<32x32xbf16>, vector<32x16xbf16>, vector<32x16xf32> -> vector<32x16xf32>
    %66 = arith.addf %61, %65 : vector<32x16xf32>
    %c7 = arith.constant 7 : index
    %c0_37 = arith.constant 0 : index
    %c0_38 = arith.constant 0 : index
    %67 = vector.load %arg4[%c7, %c0_37, %c0_38] : memref<25x32x32xbf16, #tpu.memory_space<vmem>>, vector<1x32x32xbf16>
    %68 = vector.shape_cast %67 : vector<1x32x32xbf16> to vector<32x32xbf16>
    %69 = vector.extract_strided_slice %30 {offsets = [0, 112], sizes = [32, 16], strides = [1, 1]} : vector<32x400xbf16> to vector<32x16xbf16>
    %cst_39 = arith.constant dense<0.000000e+00> : vector<32x16xf32>
    %70 = tpu.matmul %68, %69, %cst_39 {dimension_numbers = #tpu.dot_dimension_numbers<[1], [0], [0], [1], [0, 0, 1, 1], [], []>} : vector<32x32xbf16>, vector<32x16xbf16>, vector<32x16xf32> -> vector<32x16xf32>
    %71 = arith.addf %66, %70 : vector<32x16xf32>
    %c8 = arith.constant 8 : index
    %c0_40 = arith.constant 0 : index
    %c0_41 = arith.constant 0 : index
    %72 = vector.load %arg4[%c8, %c0_40, %c0_41] : memref<25x32x32xbf16, #tpu.memory_space<vmem>>, vector<1x32x32xbf16>
    %73 = vector.shape_cast %72 : vector<1x32x32xbf16> to vector<32x32xbf16>
    %74 = vector.extract_strided_slice %30 {offsets = [0, 128], sizes = [32, 16], strides = [1, 1]} : vector<32x400xbf16> to vector<32x16xbf16>
    %cst_42 = arith.constant dense<0.000000e+00> : vector<32x16xf32>
    %75 = tpu.matmul %73, %74, %cst_42 {dimension_numbers = #tpu.dot_dimension_numbers<[1], [0], [0], [1], [0, 0, 1, 1], [], []>} : vector<32x32xbf16>, vector<32x16xbf16>, vector<32x16xf32> -> vector<32x16xf32>
    %76 = arith.addf %71, %75 : vector<32x16xf32>
    %c9 = arith.constant 9 : index
    %c0_43 = arith.constant 0 : index
    %c0_44 = arith.constant 0 : index
    %77 = vector.load %arg4[%c9, %c0_43, %c0_44] : memref<25x32x32xbf16, #tpu.memory_space<vmem>>, vector<1x32x32xbf16>
    %78 = vector.shape_cast %77 : vector<1x32x32xbf16> to vector<32x32xbf16>
    %79 = vector.extract_strided_slice %30 {offsets = [0, 144], sizes = [32, 16], strides = [1, 1]} : vector<32x400xbf16> to vector<32x16xbf16>
    %cst_45 = arith.constant dense<0.000000e+00> : vector<32x16xf32>
    %80 = tpu.matmul %78, %79, %cst_45 {dimension_numbers = #tpu.dot_dimension_numbers<[1], [0], [0], [1], [0, 0, 1, 1], [], []>} : vector<32x32xbf16>, vector<32x16xbf16>, vector<32x16xf32> -> vector<32x16xf32>
    %81 = arith.addf %76, %80 : vector<32x16xf32>
    %c10 = arith.constant 10 : index
    %c0_46 = arith.constant 0 : index
    %c0_47 = arith.constant 0 : index
    %82 = vector.load %arg4[%c10, %c0_46, %c0_47] : memref<25x32x32xbf16, #tpu.memory_space<vmem>>, vector<1x32x32xbf16>
    %83 = vector.shape_cast %82 : vector<1x32x32xbf16> to vector<32x32xbf16>
    %84 = vector.extract_strided_slice %30 {offsets = [0, 160], sizes = [32, 16], strides = [1, 1]} : vector<32x400xbf16> to vector<32x16xbf16>
    %cst_48 = arith.constant dense<0.000000e+00> : vector<32x16xf32>
    %85 = tpu.matmul %83, %84, %cst_48 {dimension_numbers = #tpu.dot_dimension_numbers<[1], [0], [0], [1], [0, 0, 1, 1], [], []>} : vector<32x32xbf16>, vector<32x16xbf16>, vector<32x16xf32> -> vector<32x16xf32>
    %86 = arith.addf %81, %85 : vector<32x16xf32>
    %c11 = arith.constant 11 : index
    %c0_49 = arith.constant 0 : index
    %c0_50 = arith.constant 0 : index
    %87 = vector.load %arg4[%c11, %c0_49, %c0_50] : memref<25x32x32xbf16, #tpu.memory_space<vmem>>, vector<1x32x32xbf16>
    %88 = vector.shape_cast %87 : vector<1x32x32xbf16> to vector<32x32xbf16>
    %89 = vector.extract_strided_slice %30 {offsets = [0, 176], sizes = [32, 16], strides = [1, 1]} : vector<32x400xbf16> to vector<32x16xbf16>
    %cst_51 = arith.constant dense<0.000000e+00> : vector<32x16xf32>
    %90 = tpu.matmul %88, %89, %cst_51 {dimension_numbers = #tpu.dot_dimension_numbers<[1], [0], [0], [1], [0, 0, 1, 1], [], []>} : vector<32x32xbf16>, vector<32x16xbf16>, vector<32x16xf32> -> vector<32x16xf32>
    %91 = arith.addf %86, %90 : vector<32x16xf32>
    %c12 = arith.constant 12 : index
    %c0_52 = arith.constant 0 : index
    %c0_53 = arith.constant 0 : index
    %92 = vector.load %arg4[%c12, %c0_52, %c0_53] : memref<25x32x32xbf16, #tpu.memory_space<vmem>>, vector<1x32x32xbf16>
    %93 = vector.shape_cast %92 : vector<1x32x32xbf16> to vector<32x32xbf16>
    %94 = vector.extract_strided_slice %30 {offsets = [0, 192], sizes = [32, 16], strides = [1, 1]} : vector<32x400xbf16> to vector<32x16xbf16>
    %cst_54 = arith.constant dense<0.000000e+00> : vector<32x16xf32>
    %95 = tpu.matmul %93, %94, %cst_54 {dimension_numbers = #tpu.dot_dimension_numbers<[1], [0], [0], [1], [0, 0, 1, 1], [], []>} : vector<32x32xbf16>, vector<32x16xbf16>, vector<32x16xf32> -> vector<32x16xf32>
    %96 = arith.addf %91, %95 : vector<32x16xf32>
    %c13 = arith.constant 13 : index
    %c0_55 = arith.constant 0 : index
    %c0_56 = arith.constant 0 : index
    %97 = vector.load %arg4[%c13, %c0_55, %c0_56] : memref<25x32x32xbf16, #tpu.memory_space<vmem>>, vector<1x32x32xbf16>
    %98 = vector.shape_cast %97 : vector<1x32x32xbf16> to vector<32x32xbf16>
    %99 = vector.extract_strided_slice %30 {offsets = [0, 208], sizes = [32, 16], strides = [1, 1]} : vector<32x400xbf16> to vector<32x16xbf16>
    %cst_57 = arith.constant dense<0.000000e+00> : vector<32x16xf32>
    %100 = tpu.matmul %98, %99, %cst_57 {dimension_numbers = #tpu.dot_dimension_numbers<[1], [0], [0], [1], [0, 0, 1, 1], [], []>} : vector<32x32xbf16>, vector<32x16xbf16>, vector<32x16xf32> -> vector<32x16xf32>
    %101 = arith.addf %96, %100 : vector<32x16xf32>
    %c14 = arith.constant 14 : index
    %c0_58 = arith.constant 0 : index
    %c0_59 = arith.constant 0 : index
    %102 = vector.load %arg4[%c14, %c0_58, %c0_59] : memref<25x32x32xbf16, #tpu.memory_space<vmem>>, vector<1x32x32xbf16>
    %103 = vector.shape_cast %102 : vector<1x32x32xbf16> to vector<32x32xbf16>
    %104 = vector.extract_strided_slice %30 {offsets = [0, 224], sizes = [32, 16], strides = [1, 1]} : vector<32x400xbf16> to vector<32x16xbf16>
    %cst_60 = arith.constant dense<0.000000e+00> : vector<32x16xf32>
    %105 = tpu.matmul %103, %104, %cst_60 {dimension_numbers = #tpu.dot_dimension_numbers<[1], [0], [0], [1], [0, 0, 1, 1], [], []>} : vector<32x32xbf16>, vector<32x16xbf16>, vector<32x16xf32> -> vector<32x16xf32>
    %106 = arith.addf %101, %105 : vector<32x16xf32>
    %c15 = arith.constant 15 : index
    %c0_61 = arith.constant 0 : index
    %c0_62 = arith.constant 0 : index
    %107 = vector.load %arg4[%c15, %c0_61, %c0_62] : memref<25x32x32xbf16, #tpu.memory_space<vmem>>, vector<1x32x32xbf16>
    %108 = vector.shape_cast %107 : vector<1x32x32xbf16> to vector<32x32xbf16>
    %109 = vector.extract_strided_slice %30 {offsets = [0, 240], sizes = [32, 16], strides = [1, 1]} : vector<32x400xbf16> to vector<32x16xbf16>
    %cst_63 = arith.constant dense<0.000000e+00> : vector<32x16xf32>
    %110 = tpu.matmul %108, %109, %cst_63 {dimension_numbers = #tpu.dot_dimension_numbers<[1], [0], [0], [1], [0, 0, 1, 1], [], []>} : vector<32x32xbf16>, vector<32x16xbf16>, vector<32x16xf32> -> vector<32x16xf32>
    %111 = arith.addf %106, %110 : vector<32x16xf32>
    %c16 = arith.constant 16 : index
    %c0_64 = arith.constant 0 : index
    %c0_65 = arith.constant 0 : index
    %112 = vector.load %arg4[%c16, %c0_64, %c0_65] : memref<25x32x32xbf16, #tpu.memory_space<vmem>>, vector<1x32x32xbf16>
    %113 = vector.shape_cast %112 : vector<1x32x32xbf16> to vector<32x32xbf16>
    %114 = vector.extract_strided_slice %30 {offsets = [0, 256], sizes = [32, 16], strides = [1, 1]} : vector<32x400xbf16> to vector<32x16xbf16>
    %cst_66 = arith.constant dense<0.000000e+00> : vector<32x16xf32>
    %115 = tpu.matmul %113, %114, %cst_66 {dimension_numbers = #tpu.dot_dimension_numbers<[1], [0], [0], [1], [0, 0, 1, 1], [], []>} : vector<32x32xbf16>, vector<32x16xbf16>, vector<32x16xf32> -> vector<32x16xf32>
    %116 = arith.addf %111, %115 : vector<32x16xf32>
    %c17 = arith.constant 17 : index
    %c0_67 = arith.constant 0 : index
    %c0_68 = arith.constant 0 : index
    %117 = vector.load %arg4[%c17, %c0_67, %c0_68] : memref<25x32x32xbf16, #tpu.memory_space<vmem>>, vector<1x32x32xbf16>
    %118 = vector.shape_cast %117 : vector<1x32x32xbf16> to vector<32x32xbf16>
    %119 = vector.extract_strided_slice %30 {offsets = [0, 272], sizes = [32, 16], strides = [1, 1]} : vector<32x400xbf16> to vector<32x16xbf16>
    %cst_69 = arith.constant dense<0.000000e+00> : vector<32x16xf32>
    %120 = tpu.matmul %118, %119, %cst_69 {dimension_numbers = #tpu.dot_dimension_numbers<[1], [0], [0], [1], [0, 0, 1, 1], [], []>} : vector<32x32xbf16>, vector<32x16xbf16>, vector<32x16xf32> -> vector<32x16xf32>
    %121 = arith.addf %116, %120 : vector<32x16xf32>
    %c18 = arith.constant 18 : index
    %c0_70 = arith.constant 0 : index
    %c0_71 = arith.constant 0 : index
    %122 = vector.load %arg4[%c18, %c0_70, %c0_71] : memref<25x32x32xbf16, #tpu.memory_space<vmem>>, vector<1x32x32xbf16>
    %123 = vector.shape_cast %122 : vector<1x32x32xbf16> to vector<32x32xbf16>
    %124 = vector.extract_strided_slice %30 {offsets = [0, 288], sizes = [32, 16], strides = [1, 1]} : vector<32x400xbf16> to vector<32x16xbf16>
    %cst_72 = arith.constant dense<0.000000e+00> : vector<32x16xf32>
    %125 = tpu.matmul %123, %124, %cst_72 {dimension_numbers = #tpu.dot_dimension_numbers<[1], [0], [0], [1], [0, 0, 1, 1], [], []>} : vector<32x32xbf16>, vector<32x16xbf16>, vector<32x16xf32> -> vector<32x16xf32>
    %126 = arith.addf %121, %125 : vector<32x16xf32>
    %c19 = arith.constant 19 : index
    %c0_73 = arith.constant 0 : index
    %c0_74 = arith.constant 0 : index
    %127 = vector.load %arg4[%c19, %c0_73, %c0_74] : memref<25x32x32xbf16, #tpu.memory_space<vmem>>, vector<1x32x32xbf16>
    %128 = vector.shape_cast %127 : vector<1x32x32xbf16> to vector<32x32xbf16>
    %129 = vector.extract_strided_slice %30 {offsets = [0, 304], sizes = [32, 16], strides = [1, 1]} : vector<32x400xbf16> to vector<32x16xbf16>
    %cst_75 = arith.constant dense<0.000000e+00> : vector<32x16xf32>
    %130 = tpu.matmul %128, %129, %cst_75 {dimension_numbers = #tpu.dot_dimension_numbers<[1], [0], [0], [1], [0, 0, 1, 1], [], []>} : vector<32x32xbf16>, vector<32x16xbf16>, vector<32x16xf32> -> vector<32x16xf32>
    %131 = arith.addf %126, %130 : vector<32x16xf32>
    %c20 = arith.constant 20 : index
    %c0_76 = arith.constant 0 : index
    %c0_77 = arith.constant 0 : index
    %132 = vector.load %arg4[%c20, %c0_76, %c0_77] : memref<25x32x32xbf16, #tpu.memory_space<vmem>>, vector<1x32x32xbf16>
    %133 = vector.shape_cast %132 : vector<1x32x32xbf16> to vector<32x32xbf16>
    %134 = vector.extract_strided_slice %30 {offsets = [0, 320], sizes = [32, 16], strides = [1, 1]} : vector<32x400xbf16> to vector<32x16xbf16>
    %cst_78 = arith.constant dense<0.000000e+00> : vector<32x16xf32>
    %135 = tpu.matmul %133, %134, %cst_78 {dimension_numbers = #tpu.dot_dimension_numbers<[1], [0], [0], [1], [0, 0, 1, 1], [], []>} : vector<32x32xbf16>, vector<32x16xbf16>, vector<32x16xf32> -> vector<32x16xf32>
    %136 = arith.addf %131, %135 : vector<32x16xf32>
    %c21 = arith.constant 21 : index
    %c0_79 = arith.constant 0 : index
    %c0_80 = arith.constant 0 : index
    %137 = vector.load %arg4[%c21, %c0_79, %c0_80] : memref<25x32x32xbf16, #tpu.memory_space<vmem>>, vector<1x32x32xbf16>
    %138 = vector.shape_cast %137 : vector<1x32x32xbf16> to vector<32x32xbf16>
    %139 = vector.extract_strided_slice %30 {offsets = [0, 336], sizes = [32, 16], strides = [1, 1]} : vector<32x400xbf16> to vector<32x16xbf16>
    %cst_81 = arith.constant dense<0.000000e+00> : vector<32x16xf32>
    %140 = tpu.matmul %138, %139, %cst_81 {dimension_numbers = #tpu.dot_dimension_numbers<[1], [0], [0], [1], [0, 0, 1, 1], [], []>} : vector<32x32xbf16>, vector<32x16xbf16>, vector<32x16xf32> -> vector<32x16xf32>
    %141 = arith.addf %136, %140 : vector<32x16xf32>
    %c22 = arith.constant 22 : index
    %c0_82 = arith.constant 0 : index
    %c0_83 = arith.constant 0 : index
    %142 = vector.load %arg4[%c22, %c0_82, %c0_83] : memref<25x32x32xbf16, #tpu.memory_space<vmem>>, vector<1x32x32xbf16>
    %143 = vector.shape_cast %142 : vector<1x32x32xbf16> to vector<32x32xbf16>
    %144 = vector.extract_strided_slice %30 {offsets = [0, 352], sizes = [32, 16], strides = [1, 1]} : vector<32x400xbf16> to vector<32x16xbf16>
    %cst_84 = arith.constant dense<0.000000e+00> : vector<32x16xf32>
    %145 = tpu.matmul %143, %144, %cst_84 {dimension_numbers = #tpu.dot_dimension_numbers<[1], [0], [0], [1], [0, 0, 1, 1], [], []>} : vector<32x32xbf16>, vector<32x16xbf16>, vector<32x16xf32> -> vector<32x16xf32>
    %146 = arith.addf %141, %145 : vector<32x16xf32>
    %c23 = arith.constant 23 : index
    %c0_85 = arith.constant 0 : index
    %c0_86 = arith.constant 0 : index
    %147 = vector.load %arg4[%c23, %c0_85, %c0_86] : memref<25x32x32xbf16, #tpu.memory_space<vmem>>, vector<1x32x32xbf16>
    %148 = vector.shape_cast %147 : vector<1x32x32xbf16> to vector<32x32xbf16>
    %149 = vector.extract_strided_slice %30 {offsets = [0, 368], sizes = [32, 16], strides = [1, 1]} : vector<32x400xbf16> to vector<32x16xbf16>
    %cst_87 = arith.constant dense<0.000000e+00> : vector<32x16xf32>
    %150 = tpu.matmul %148, %149, %cst_87 {dimension_numbers = #tpu.dot_dimension_numbers<[1], [0], [0], [1], [0, 0, 1, 1], [], []>} : vector<32x32xbf16>, vector<32x16xbf16>, vector<32x16xf32> -> vector<32x16xf32>
    %151 = arith.addf %146, %150 : vector<32x16xf32>
    %c24 = arith.constant 24 : index
    %c0_88 = arith.constant 0 : index
    %c0_89 = arith.constant 0 : index
    %152 = vector.load %arg4[%c24, %c0_88, %c0_89] : memref<25x32x32xbf16, #tpu.memory_space<vmem>>, vector<1x32x32xbf16>
    %153 = vector.shape_cast %152 : vector<1x32x32xbf16> to vector<32x32xbf16>
    %154 = vector.extract_strided_slice %30 {offsets = [0, 384], sizes = [32, 16], strides = [1, 1]} : vector<32x400xbf16> to vector<32x16xbf16>
    %cst_90 = arith.constant dense<0.000000e+00> : vector<32x16xf32>
    %155 = tpu.matmul %153, %154, %cst_90 {dimension_numbers = #tpu.dot_dimension_numbers<[1], [0], [0], [1], [0, 0, 1, 1], [], []>} : vector<32x32xbf16>, vector<32x16xbf16>, vector<32x16xf32> -> vector<32x16xf32>
    %156 = arith.addf %151, %155 : vector<32x16xf32>
    %c0_91 = arith.constant 0 : index
    %c0_92 = arith.constant 0 : index
    %157 = vector.load %arg5[%c0_91, %c0_92] : memref<32x1xf32, #tpu.memory_space<vmem>>, vector<32x1xf32>
    %c0_93 = arith.constant 0 : index
    %c0_94 = arith.constant 0 : index
    %158 = vector.load %arg6[%c0_93, %c0_94] : memref<32x1xf32, #tpu.memory_space<vmem>>, vector<32x1xf32>
    %cst_95 = arith.constant dense<0.000000e+00> : vector<32xf32>
    %159 = vector.multi_reduction <add>, %156, %cst_95 [1] : vector<32x16xf32> to vector<32xf32>
    %160 = vector.shape_cast %159 : vector<32xf32> to vector<32x1xf32>
    %161 = arith.mulf %156, %156 : vector<32x16xf32>
    %cst_96 = arith.constant dense<0.000000e+00> : vector<32xf32>
    %162 = vector.multi_reduction <add>, %161, %cst_96 [1] : vector<32x16xf32> to vector<32xf32>
    %163 = vector.shape_cast %162 : vector<32xf32> to vector<32x1xf32>
    %cst_97 = arith.constant 6.250000e-02 : f32
    %164 = vector.broadcast %cst_97 : f32 to vector<32x1xf32>
    %165 = arith.mulf %160, %164 : vector<32x1xf32>
    %cst_98 = arith.constant 6.250000e-02 : f32
    %166 = vector.broadcast %cst_98 : f32 to vector<32x1xf32>
    %167 = arith.mulf %163, %166 : vector<32x1xf32>
    %168 = arith.mulf %165, %165 : vector<32x1xf32>
    %169 = arith.subf %167, %168 : vector<32x1xf32>
    %cst_99 = arith.constant 0.000000e+00 : f32
    %170 = vector.broadcast %cst_99 : f32 to vector<32x1xf32>
    %171 = arith.maximumf %169, %170 : vector<32x1xf32>
    %cst_100 = arith.constant 9.99999974E-6 : f32
    %172 = vector.broadcast %cst_100 : f32 to vector<32x1xf32>
    %173 = arith.addf %171, %172 : vector<32x1xf32>
    %174 = math.rsqrt %173 : vector<32x1xf32>
    %175 = arith.mulf %157, %174 : vector<32x1xf32>
    %176 = arith.mulf %165, %175 : vector<32x1xf32>
    %177 = arith.subf %158, %176 : vector<32x1xf32>
    %178 = vector.broadcast %175 : vector<32x1xf32> to vector<32x16xf32>
    %179 = arith.mulf %156, %178 : vector<32x16xf32>
    %180 = vector.broadcast %177 : vector<32x1xf32> to vector<32x16xf32>
    %181 = arith.addf %179, %180 : vector<32x16xf32>
    %cst_101 = arith.constant 0.000000e+00 : f32
    %182 = vector.broadcast %cst_101 : f32 to vector<32x16xf32>
    %183 = arith.maximumf %181, %182 : vector<32x16xf32>
    %184 = arith.truncf %183 : vector<32x16xf32> to vector<32x16xbf16>
    %c0_102 = arith.constant 0 : index
    %c0_103 = arith.constant 0 : index
    %185 = vector.load %arg7[%c0_102, %c0_103] : memref<16x32xbf16, #tpu.memory_space<vmem>>, vector<16x32xbf16>
    %cst_104 = arith.constant dense<0.000000e+00> : vector<16x16xf32>
    %186 = tpu.matmul %185, %184, %cst_104 {dimension_numbers = #tpu.dot_dimension_numbers<[1], [0], [0], [1], [0, 0, 1, 1], [], []>} : vector<16x32xbf16>, vector<32x16xbf16>, vector<16x16xf32> -> vector<16x16xf32>
    %c0_105 = arith.constant 0 : index
    %c0_106 = arith.constant 0 : index
    %187 = vector.load %arg8[%c0_105, %c0_106] : memref<16x1xf32, #tpu.memory_space<vmem>>, vector<16x1xf32>
    %188 = vector.broadcast %187 : vector<16x1xf32> to vector<16x16xf32>
    %189 = arith.addf %186, %188 : vector<16x16xf32>
    %cst_107 = arith.constant 0.000000e+00 : f32
    %190 = vector.broadcast %cst_107 : f32 to vector<16x16xf32>
    %191 = arith.maximumf %189, %190 : vector<16x16xf32>
    %192 = arith.truncf %191 : vector<16x16xf32> to vector<16x16xbf16>
    %c0_108 = arith.constant 0 : index
    %c0_109 = arith.constant 0 : index
    %193 = vector.load %arg9[%c0_108, %c0_109] : memref<1x16xbf16, #tpu.memory_space<vmem>>, vector<1x16xbf16>
    %cst_110 = arith.constant dense<0.000000e+00> : vector<1x16xf32>
    %194 = tpu.matmul %193, %192, %cst_110 {dimension_numbers = #tpu.dot_dimension_numbers<[1], [0], [0], [1], [0, 0, 1, 1], [], []>} : vector<1x16xbf16>, vector<16x16xbf16>, vector<1x16xf32> -> vector<1x16xf32>
    %c0_111 = arith.constant 0 : index
    %c0_112 = arith.constant 0 : index
    %195 = vector.load %arg10[%c0_111, %c0_112] : memref<1x1xf32, #tpu.memory_space<vmem>>, vector<1x1xf32>
    %196 = vector.broadcast %195 : vector<1x1xf32> to vector<1x16xf32>
    %197 = arith.addf %194, %196 : vector<1x16xf32>
    %c0_113 = arith.constant 0 : index
    %c0_114 = arith.constant 0 : index
    %198 = vector.load %arg11[%c0_113, %c0_114] : memref<1x16xf32, #tpu.memory_space<vmem>>, vector<1x16xf32>
    tpu.vector_store %arg11[%c0_113, %c0_114], %197 {strides = array<i32>} : memref<1x16xf32, #tpu.memory_space<vmem>>, vector<1x16xf32>,
    %199 = tpu.iota {dimensions = array<i32: 1>} : vector<4x16xi32>
    %200 = tpu.iota {dimensions = array<i32: 0>} : vector<4x16xi32>
    %c4_i32 = arith.constant 4 : i32
    %201 = vector.broadcast %c4_i32 : i32 to vector<4x16xi32>
    %202 = arith.muli %200, %201 : vector<4x16xi32>
    %203 = arith.cmpi sge, %199, %202 : vector<4x16xi32>
    %c1_i32 = arith.constant 1 : i32
    %204 = vector.broadcast %c1_i32 : i32 to vector<4x16xi32>
    %205 = arith.addi %200, %204 : vector<4x16xi32>
    %c4_i32_115 = arith.constant 4 : i32
    %206 = vector.broadcast %c4_i32_115 : i32 to vector<4x16xi32>
    %207 = arith.muli %205, %206 : vector<4x16xi32>
    %208 = arith.cmpi slt, %199, %207 : vector<4x16xi32>
    %209 = arith.andi %203, %208 : vector<4x16xi1>
    %210 = arith.extui %209 : vector<4x16xi1> to vector<4x16xi32>
    %211 = arith.sitofp %210 : vector<4x16xi32> to vector<4x16xf32>
    %212 = vector.broadcast %197 : vector<1x16xf32> to vector<4x16xf32>
    %213 = arith.mulf %211, %212 : vector<4x16xf32>
    %cst_116 = arith.constant dense<0.000000e+00> : vector<4xf32>
    %214 = vector.multi_reduction <add>, %213, %cst_116 [1] : vector<4x16xf32> to vector<4xf32>
    %215 = vector.shape_cast %214 : vector<4xf32> to vector<4x1xf32>
    %216 = vector.extract_strided_slice %215 {offsets = [0, 0], sizes = [2, 1], strides = [1, 1]} : vector<4x1xf32> to vector<2x1xf32>
    %217 = vector.extract_strided_slice %215 {offsets = [2, 0], sizes = [2, 1], strides = [1, 1]} : vector<4x1xf32> to vector<2x1xf32>
    %218 = arith.maximumf %216, %217 : vector<2x1xf32>
    %219 = arith.subf %216, %218 : vector<2x1xf32>
    %220 = math.exp %219 : vector<2x1xf32>
    %221 = arith.subf %217, %218 : vector<2x1xf32>
    %222 = math.exp %221 : vector<2x1xf32>
    %223 = arith.addf %220, %222 : vector<2x1xf32>
    %cst_117 = arith.constant 1.000000e+00 : f32
    %224 = vector.broadcast %cst_117 : f32 to vector<2x1xf32>
    %225 = arith.divf %224, %223 : vector<2x1xf32>
    %226 = arith.mulf %220, %225 : vector<2x1xf32>
    %227 = arith.mulf %222, %225 : vector<2x1xf32>
    %228 = tpu.concatenate %226, %227 in 1 : vector<2x1xf32>, vector<2x1xf32> -> vector<2x2xf32>
    %c0_118 = arith.constant 0 : index
    %c0_119 = arith.constant 0 : index
    %229 = vector.load %arg12[%c0_118, %c0_119] : memref<2x2xf32, #tpu.memory_space<vmem>>, vector<2x2xf32>
    tpu.vector_store %arg12[%c0_118, %c0_119], %228 {strides = array<i32>} : memref<2x2xf32, #tpu.memory_space<vmem>>, vector<2x2xf32>,
    return
  }
}

</mosaic_0001>

<llo_original>
// kernel: forward.3
$region0: #{forward.3}
  #allocation0 [shape = 'u32[]', space=smem, size = 0x4, offset = 0x4, fixed_abs, tag = 'smem constant byte address 0x4 - core index']
  #allocation1 [shape = 'u32[144,128]{1,0:T(1,128)}', space=vmem, size = 0x12000, scoped, tag = 'internal scratch']
  %s0 = inlined_call_operand.vmem [shape: bf16[8,75], index: 0, kind: input, shape index: {}]
  %s1 = inlined_call_operand.vmem [shape: bf16[75,14400], index: 1, kind: input, shape index: {}]
  %s2 = inlined_call_operand.vmem [shape: f32[8,1], index: 2, kind: input, shape index: {}]
  %s3 = inlined_call_operand.vmem [shape: f32[8,1], index: 3, kind: input, shape index: {}]
  %s4 = inlined_call_operand.vmem [shape: bf16[8,14400], index: 4, kind: output, shape index: {}]
  %s5 = sld [smem:[#allocation0]]
  $region26: #{forward.3} parent=0
    _
  %s7 = ssub.s32 1, %s5
  %s8 = scalar_select 0, %s7, %s5
  // Predicated region
  $region2: #{forward.3} parent=0 // pred_check
    _
  $region3: #{forward.3} parent=0 // pred_check_branch
    %10 = sbr.rel (0) target = $region5
  $region4: #{forward.3} parent=0 // pred_region
    _
  $region5: #{forward.3} parent=0 // pred_fallthru
    _
  // Predicated region
  $region6: #{forward.3} parent=0 // pred_check
    _
  $region7: #{forward.3} parent=0 // pred_check_branch
    %12 = sbr.rel (0) target = $region9
  $region8: #{forward.3} parent=0 // pred_region
    _
  $region9: #{forward.3} parent=0 // pred_fallthru
    _
  // Predicated region
  $region10: #{forward.3} parent=0 // pred_check
    _
  $region11: #{forward.3} parent=0 // pred_check_branch
    %14 = sbr.rel (0) target = $region13
  $region12: #{forward.3} parent=0 // pred_region
    _
  $region13: #{forward.3} parent=0 // pred_fallthru
    _
  // Predicated region
  $region14: #{forward.3} parent=0 // pred_check
    _
  $region15: #{forward.3} parent=0 // pred_check_branch
    %16 = sbr.rel (0) target = $region17
  $region16: #{forward.3} parent=0 // pred_region
    _
  $region17: #{forward.3} parent=0 // pred_fallthru
    _
  %v18 = vld [vmem:[%s0] sm:$0xf]
  %v19 = vld [vmem:[%s1] sm:$0xff]
  %v20 = vld [vmem:[%s1 + $0x8] sm:$0xff]
  %v21 = vld [vmem:[%s1 + $0x10] sm:$0xff]
  %v22 = vld [vmem:[%s1 + $0x18] sm:$0xff]
  %v23 = vld [vmem:[%s1 + $0x20] sm:$0xff]
  %v24 = vld [vmem:[%s1 + $0x28] sm:$0xff]
  %v25 = vld [vmem:[%s1 + $0x30] sm:$0xff]
  %v26 = vld [vmem:[%s1 + $0x38] sm:$0xff]
  %v27 = vld [vmem:[%s1 + $0x40] sm:$0xff]
  %v28 = vld [vmem:[%s1 + $0x48] sm:$0xff]
  %v29 = vld [vmem:[%s1 + $0x50] sm:$0xff]
  %v30 = vld [vmem:[%s1 + $0x58] sm:$0xff]
  %v31 = vld [vmem:[%s1 + $0x60] sm:$0xff]
  %v32 = vld [vmem:[%s1 + $0x68] sm:$0xff]
  %v33 = vld [vmem:[%s1 + $0x70] sm:$0xff]
  %v34 = vld [vmem:[%s1 + $0x78] sm:$0xff]
  %v35 = vld [vmem:[%s1 + $0x80] sm:$0xff]
  %v36 = vld [vmem:[%s1 + $0x88] sm:$0xff]
  %v37 = vld [vmem:[%s1 + $0x90] sm:$0xff]
  %v38 = vld [vmem:[%s1 + $0x98] sm:$0xff]
  %v39 = vld [vmem:[%s1 + $0xa0] sm:$0xff]
  %v40 = vld [vmem:[%s1 + $0xa8] sm:$0xff]
  %v41 = vld [vmem:[%s1 + $0xb0] sm:$0xff]
  %v42 = vld [vmem:[%s1 + $0xb8] sm:$0xff]
  %v43 = vld [vmem:[%s1 + $0xc0] sm:$0xff]
  %v44 = vld [vmem:[%s1 + $0xc8] sm:$0xff]
  %v45 = vld [vmem:[%s1 + $0xd0] sm:$0xff]
  %v46 = vld [vmem:[%s1 + $0xd8] sm:$0xff]
  %v47 = vld [vmem:[%s1 + $0xe0] sm:$0xff]
  %v48 = vld [vmem:[%s1 + $0xe8] sm:$0xff]
  %v49 = vld [vmem:[%s1 + $0xf0] sm:$0xff]
  %v50 = vld [vmem:[%s1 + $0xf8] sm:$0xff]
  %v51 = vld [vmem:[%s1 + $0x100] sm:$0xff]
  %v52 = vld [vmem:[%s1 + $0x108] sm:$0xff]
  %v53 = vld [vmem:[%s1 + $0x110] sm:$0xff]
  %v54 = vld [vmem:[%s1 + $0x118] sm:$0xff]
  %v55 = vld [vmem:[%s1 + $0x120] sm:$0xff]
  %v56 = vld [vmem:[%s1 + $0x128] sm:$0xff]
  %v57 = vld [vmem:[%s1 + $0x130] sm:$0xff]
  %v58 = vld [vmem:[%s1 + $0x138] sm:$0xff]
  %v59 = vld [vmem:[%s1 + $0x140] sm:$0xff]
  %v60 = vld [vmem:[%s1 + $0x148] sm:$0xff]
  %v61 = vld [vmem:[%s1 + $0x150] sm:$0xff]
  %v62 = vld [vmem:[%s1 + $0x158] sm:$0xff]
  %v63 = vld [vmem:[%s1 + $0x160] sm:$0xff]
  %v64 = vld [vmem:[%s1 + $0x168] sm:$0xff]
  %v65 = vld [vmem:[%s1 + $0x170] sm:$0xff]
  %v66 = vld [vmem:[%s1 + $0x178] sm:$0xff]
  %v67 = vld [vmem:[%s1 + $0x180] sm:$0xff]
  %v68 = vld [vmem:[%s1 + $0x188] sm:$0xff]
  %v69 = vld [vmem:[%s1 + $0x190] sm:$0xff]
  %v70 = vld [vmem:[%s1 + $0x198] sm:$0xff]
  %v71 = vld [vmem:[%s1 + $0x1a0] sm:$0xff]
  %v72 = vld [vmem:[%s1 + $0x1a8] sm:$0xff]
  %v73 = vld [vmem:[%s1 + $0x1b0] sm:$0xff]
  %v74 = vld [vmem:[%s1 + $0x1b8] sm:$0xff]
  %v75 = vld [vmem:[%s1 + $0x1c0] sm:$0xf]
  %v76 = vld [vmem:[%s1 + $0x1c4] sm:$0xff]
  %v77 = vld [vmem:[%s1 + $0x1cc] sm:$0xff]
  %v78 = vld [vmem:[%s1 + $0x1d4] sm:$0xff]
  %v79 = vld [vmem:[%s1 + $0x1dc] sm:$0xff]
  %v80 = vld [vmem:[%s1 + $0x1e4] sm:$0xff]
  %v81 = vld [vmem:[%s1 + $0x1ec] sm:$0xff]
  %v82 = vld [vmem:[%s1 + $0x1f4] sm:$0xff]
  %v83 = vld [vmem:[%s1 + $0x1fc] sm:$0xff]
  %v84 = vld [vmem:[%s1 + $0x204] sm:$0xff]
  %v85 = vld [vmem:[%s1 + $0x20c] sm:$0xff]
  %v86 = vld [vmem:[%s1 + $0x214] sm:$0xff]
  %v87 = vld [vmem:[%s1 + $0x21c] sm:$0xff]
  %v88 = vld [vmem:[%s1 + $0x224] sm:$0xff]
  %v89 = vld [vmem:[%s1 + $0x22c] sm:$0xff]
  %v90 = vld [vmem:[%s1 + $0x234] sm:$0xff]
  %v91 = vld [vmem:[%s1 + $0x23c] sm:$0xff]
  %v92 = vld [vmem:[%s1 + $0x244] sm:$0xff]
  %v93 = vld [vmem:[%s1 + $0x24c] sm:$0xff]
  %v94 = vld [vmem:[%s1 + $0x254] sm:$0xff]
  %v95 = vld [vmem:[%s1 + $0x25c] sm:$0xff]
  %v96 = vld [vmem:[%s1 + $0x264] sm:$0xff]
  %v97 = vld [vmem:[%s1 + $0x26c] sm:$0xff]
  %v98 = vld [vmem:[%s1 + $0x274] sm:$0xff]
  %v99 = vld [vmem:[%s1 + $0x27c] sm:$0xff]
  %v100 = vld [vmem:[%s1 + $0x284] sm:$0xff]
  %v101 = vld [vmem:[%s1 + $0x28c] sm:$0xff]
  %v102 = vld [vmem:[%s1 + $0x294] sm:$0xff]
  %v103 = vld [vmem:[%s1 + $0x29c] sm:$0xff]
  %v104 = vld [vmem:[%s1 + $0x2a4] sm:$0xff]
  %v105 = vld [vmem:[%s1 + $0x2ac] sm:$0xff]
  %v106 = vld [vmem:[%s1 + $0x2b4] sm:$0xff]
  %v107 = vld [vmem:[%s1 + $0x2bc] sm:$0xff]
  %v108 = vld [vmem:[%s1 + $0x2c4] sm:$0xff]
  %v109 = vld [vmem:[%s1 + $0x2cc] sm:$0xff]
  %v110 = vld [vmem:[%s1 + $0x2d4] sm:$0xff]
  %v111 = vld [vmem:[%s1 + $0x2dc] sm:$0xff]
  %v112 = vld [vmem:[%s1 + $0x2e4] sm:$0xff]
  %v113 = vld [vmem:[%s1 + $0x2ec] sm:$0xff]
  %v114 = vld [vmem:[%s1 + $0x2f4] sm:$0xff]
  %v115 = vld [vmem:[%s1 + $0x2fc] sm:$0xff]
  %v116 = vld [vmem:[%s1 + $0x304] sm:$0xff]
  %v117 = vld [vmem:[%s1 + $0x30c] sm:$0xff]
  %v118 = vld [vmem:[%s1 + $0x314] sm:$0xff]
  %v119 = vld [vmem:[%s1 + $0x31c] sm:$0xff]
  %v120 = vld [vmem:[%s1 + $0x324] sm:$0xff]
  %v121 = vld [vmem:[%s1 + $0x32c] sm:$0xff]
  %v122 = vld [vmem:[%s1 + $0x334] sm:$0xff]
  %v123 = vld [vmem:[%s1 + $0x33c] sm:$0xff]
  %v124 = vld [vmem:[%s1 + $0x344] sm:$0xff]
  %v125 = vld [vmem:[%s1 + $0x34c] sm:$0xff]
  %v126 = vld [vmem:[%s1 + $0x354] sm:$0xff]
  %v127 = vld [vmem:[%s1 + $0x35c] sm:$0xff]
  %v128 = vld [vmem:[%s1 + $0x364] sm:$0xff]
  %v129 = vld [vmem:[%s1 + $0x36c] sm:$0xff]
  %v130 = vld [vmem:[%s1 + $0x374] sm:$0xff]
  %v131 = vld [vmem:[%s1 + $0x37c] sm:$0xff]
  %v132 = vld [vmem:[%s1 + $0x384] sm:$0xf]
  %v133 = vld [vmem:[%s1 + $0x388] sm:$0xff]
  %v134 = vld [vmem:[%s1 + $0x390] sm:$0xff]
  %v135 = vld [vmem:[%s1 + $0x398] sm:$0xff]
  %v136 = vld [vmem:[%s1 + $0x3a0] sm:$0xff]
  %v137 = vld [vmem:[%s1 + $0x3a8] sm:$0xff]
  %v138 = vld [vmem:[%s1 + $0x3b0] sm:$0xff]
  %v139 = vld [vmem:[%s1 + $0x3b8] sm:$0xff]
  %v140 = vld [vmem:[%s1 + $0x3c0] sm:$0xff]
  %v141 = vld [vmem:[%s1 + $0x3c8] sm:$0xff]
  %v142 = vld [vmem:[%s1 + $0x3d0] sm:$0xff]
  %v143 = vld [vmem:[%s1 + $0x3d8] sm:$0xff]
  %v144 = vld [vmem:[%s1 + $0x3e0] sm:$0xff]
  %v145 = vld [vmem:[%s1 + $0x3e8] sm:$0xff]
  %v146 = vld [vmem:[%s1 + $0x3f0] sm:$0xff]
  %v147 = vld [vmem:[%s1 + $0x3f8] sm:$0xff]
  %v148 = vld [vmem:[%s1 + $0x400] sm:$0xff]
  %v149 = vld [vmem:[%s1 + $0x408] sm:$0xff]
  %v150 = vld [vmem:[%s1 + $0x410] sm:$0xff]
  %v151 = vld [vmem:[%s1 + $0x418] sm:$0xff]
  %v152 = vld [vmem:[%s1 + $0x420] sm:$0xff]
  %v153 = vld [vmem:[%s1 + $0x428] sm:$0xff]
  %v154 = vld [vmem:[%s1 + $0x430] sm:$0xff]
  %v155 = vld [vmem:[%s1 + $0x438] sm:$0xff]
  %v156 = vld [vmem:[%s1 + $0x440] sm:$0xff]
  %v157 = vld [vmem:[%s1 + $0x448] sm:$0xff]
  %v158 = vld [vmem:[%s1 + $0x450] sm:$0xff]
  %v159 = vld [vmem:[%s1 + $0x458] sm:$0xff]
  %v160 = vld [vmem:[%s1 + $0x460] sm:$0xff]
  %v161 = vld [vmem:[%s1 + $0x468] sm:$0xff]
  %v162 = vld [vmem:[%s1 + $0x470] sm:$0xff]
  %v163 = vld [vmem:[%s1 + $0x478] sm:$0xff]
  %v164 = vld [vmem:[%s1 + $0x480] sm:$0xff]
  %v165 = vld [vmem:[%s1 + $0x488] sm:$0xff]
  %v166 = vld [vmem:[%s1 + $0x490] sm:$0xff]
  %v167 = vld [vmem:[%s1 + $0x498] sm:$0xff]
  %v168 = vld [vmem:[%s1 + $0x4a0] sm:$0xff]
  %v169 = vld [vmem:[%s1 + $0x4a8] sm:$0xff]
  %v170 = vld [vmem:[%s1 + $0x4b0] sm:$0xff]
  %v171 = vld [vmem:[%s1 + $0x4b8] sm:$0xff]
  %v172 = vld [vmem:[%s1 + $0x4c0] sm:$0xff]
  %v173 = vld [vmem:[%s1 + $0x4c8] sm:$0xff]
  %v174 = vld [vmem:[%s1 + $0x4d0] sm:$0xff]
  %v175 = vld [vmem:[%s1 + $0x4d8] sm:$0xff]
  %v176 = vld [vmem:[%s1 + $0x4e0] sm:$0xff]
  %v177 = vld [vmem:[%s1 + $0x4e8] sm:$0xff]
  %v178 = vld [vmem:[%s1 + $0x4f0] sm:$0xff]
  %v179 = vld [vmem:[%s1 + $0x4f8] sm:$0xff]
  %v180 = vld [vmem:[%s1 + $0x500] sm:$0xff]
  %v181 = vld [vmem:[%s1 + $0x508] sm:$0xff]
  %v182 = vld [vmem:[%s1 + $0x510] sm:$0xff]
  %v183 = vld [vmem:[%s1 + $0x518] sm:$0xff]
  %v184 = vld [vmem:[%s1 + $0x520] sm:$0xff]
  %v185 = vld [vmem:[%s1 + $0x528] sm:$0xff]
  %v186 = vld [vmem:[%s1 + $0x530] sm:$0xff]
  %v187 = vld [vmem:[%s1 + $0x538] sm:$0xff]
  %v188 = vld [vmem:[%s1 + $0x540] sm:$0xff]
  %v189 = vld [vmem:[%s1 + $0x548] sm:$0xf]
  %v190 = vld [vmem:[%s1 + $0x54c] sm:$0xff]
  %v191 = vld [vmem:[%s1 + $0x554] sm:$0xff]
  %v192 = vld [vmem:[%s1 + $0x55c] sm:$0xff]
  %v193 = vld [vmem:[%s1 + $0x564] sm:$0xff]
  %v194 = vld [vmem:[%s1 + $0x56c] sm:$0xff]
  %v195 = vld [vmem:[%s1 + $0x574] sm:$0xff]
  %v196 = vld [vmem:[%s1 + $0x57c] sm:$0xff]
  %v197 = vld [vmem:[%s1 + $0x584] sm:$0xff]
  %v198 = vld [vmem:[%s1 + $0x58c] sm:$0xff]
  %v199 = vld [vmem:[%s1 + $0x594] sm:$0xff]
  %v200 = vld [vmem:[%s1 + $0x59c] sm:$0xff]
  %v201 = vld [vmem:[%s1 + $0x5a4] sm:$0xff]
  %v202 = vld [vmem:[%s1 + $0x5ac] sm:$0xff]
  %v203 = vld [vmem:[%s1 + $0x5b4] sm:$0xff]
  %v204 = vld [vmem:[%s1 + $0x5bc] sm:$0xff]
  %v205 = vld [vmem:[%s1 + $0x5c4] sm:$0xff]
  %v206 = vld [vmem:[%s1 + $0x5cc] sm:$0xff]
  %v207 = vld [vmem:[%s1 + $0x5d4] sm:$0xff]
  %v208 = vld [vmem:[%s1 + $0x5dc] sm:$0xff]
  %v209 = vld [vmem:[%s1 + $0x5e4] sm:$0xff]
  %v210 = vld [vmem:[%s1 + $0x5ec] sm:$0xff]
  %v211 = vld [vmem:[%s1 + $0x5f4] sm:$0xff]
  %v212 = vld [vmem:[%s1 + $0x5fc] sm:$0xff]
  %v213 = vld [vmem:[%s1 + $0x604] sm:$0xff]
  %v214 = vld [vmem:[%s1 + $0x60c] sm:$0xff]
  %v215 = vld [vmem:[%s1 + $0x614] sm:$0xff]
  %v216 = vld [vmem:[%s1 + $0x61c] sm:$0xff]
  %v217 = vld [vmem:[%s1 + $0x624] sm:$0xff]
  %v218 = vld [vmem:[%s1 + $0x62c] sm:$0xff]
  %v219 = vld [vmem:[%s1 + $0x634] sm:$0xff]
  %v220 = vld [vmem:[%s1 + $0x63c] sm:$0xff]
  %v221 = vld [vmem:[%s1 + $0x644] sm:$0xff]
  %v222 = vld [vmem:[%s1 + $0x64c] sm:$0xff]
  %v223 = vld [vmem:[%s1 + $0x654] sm:$0xff]
  %v224 = vld [vmem:[%s1 + $0x65c] sm:$0xff]
  %v225 = vld [vmem:[%s1 + $0x664] sm:$0xff]
  %v226 = vld [vmem:[%s1 + $0x66c] sm:$0xff]
  %v227 = vld [vmem:[%s1 + $0x674] sm:$0xff]
  %v228 = vld [vmem:[%s1 + $0x67c] sm:$0xff]
  %v229 = vld [vmem:[%s1 + $0x684] sm:$0xff]
  %v230 = vld [vmem:[%s1 + $0x68c] sm:$0xff]
  %v231 = vld [vmem:[%s1 + $0x694] sm:$0xff]
  %v232 = vld [vmem:[%s1 + $0x69c] sm:$0xff]
  %v233 = vld [vmem:[%s1 + $0x6a4] sm:$0xff]
  %v234 = vld [vmem:[%s1 + $0x6ac] sm:$0xff]
  %v235 = vld [vmem:[%s1 + $0x6b4] sm:$0xff]
  %v236 = vld [vmem:[%s1 + $0x6bc] sm:$0xff]
  %v237 = vld [vmem:[%s1 + $0x6c4] sm:$0xff]
  %v238 = vld [vmem:[%s1 + $0x6cc] sm:$0xff]
  %v239 = vld [vmem:[%s1 + $0x6d4] sm:$0xff]
  %v240 = vld [vmem:[%s1 + $0x6dc] sm:$0xff]
  %v241 = vld [vmem:[%s1 + $0x6e4] sm:$0xff]
  %v242 = vld [vmem:[%s1 + $0x6ec] sm:$0xff]
  %v243 = vld [vmem:[%s1 + $0x6f4] sm:$0xff]
  %v244 = vld [vmem:[%s1 + $0x6fc] sm:$0xff]
  %v245 = vld [vmem:[%s1 + $0x704] sm:$0xff]
  %v246 = vld [vmem:[%s1 + $0x70c] sm:$0xf]
  %v247 = vld [vmem:[%s1 + $0x710] sm:$0xff]
  %v248 = vld [vmem:[%s1 + $0x718] sm:$0xff]
  %v249 = vld [vmem:[%s1 + $0x720] sm:$0xff]
  %v250 = vld [vmem:[%s1 + $0x728] sm:$0xff]
  %v251 = vld [vmem:[%s1 + $0x730] sm:$0xff]
  %v252 = vld [vmem:[%s1 + $0x738] sm:$0xff]
  %v253 = vld [vmem:[%s1 + $0x740] sm:$0xff]
  %v254 = vld [vmem:[%s1 + $0x748] sm:$0xff]
  %v255 = vld [vmem:[%s1 + $0x750] sm:$0xff]
  %v256 = vld [vmem:[%s1 + $0x758] sm:$0xff]
  %v257 = vld [vmem:[%s1 + $0x760] sm:$0xff]
  %v258 = vld [vmem:[%s1 + $0x768] sm:$0xff]
  %v259 = vld [vmem:[%s1 + $0x770] sm:$0xff]
  %v260 = vld [vmem:[%s1 + $0x778] sm:$0xff]
  %v261 = vld [vmem:[%s1 + $0x780] sm:$0xff]
  %v262 = vld [vmem:[%s1 + $0x788] sm:$0xff]
  %v263 = vld [vmem:[%s1 + $0x790] sm:$0xff]
  %v264 = vld [vmem:[%s1 + $0x798] sm:$0xff]
  %v265 = vld [vmem:[%s1 + $0x7a0] sm:$0xff]
  %v266 = vld [vmem:[%s1 + $0x7a8] sm:$0xff]
  %v267 = vld [vmem:[%s1 + $0x7b0] sm:$0xff]
  %v268 = vld [vmem:[%s1 + $0x7b8] sm:$0xff]
  %v269 = vld [vmem:[%s1 + $0x7c0] sm:$0xff]
  %v270 = vld [vmem:[%s1 + $0x7c8] sm:$0xff]
  %v271 = vld [vmem:[%s1 + $0x7d0] sm:$0xff]
  %v272 = vld [vmem:[%s1 + $0x7d8] sm:$0xff]
  %v273 = vld [vmem:[%s1 + $0x7e0] sm:$0xff]
  %v274 = vld [vmem:[%s1 + $0x7e8] sm:$0xff]
  %v275 = vld [vmem:[%s1 + $0x7f0] sm:$0xff]
  %v276 = vld [vmem:[%s1 + $0x7f8] sm:$0xff]
  %v277 = vld [vmem:[%s1 + $0x800] sm:$0xff]
  %v278 = vld [vmem:[%s1 + $0x808] sm:$0xff]
  %v279 = vld [vmem:[%s1 + $0x810] sm:$0xff]
  %v280 = vld [vmem:[%s1 + $0x818] sm:$0xff]
  %v281 = vld [vmem:[%s1 + $0x820] sm:$0xff]
  %v282 = vld [vmem:[%s1 + $0x828] sm:$0xff]
  %v283 = vld [vmem:[%s1 + $0x830] sm:$0xff]
  %v284 = vld [vmem:[%s1 + $0x838] sm:$0xff]
  %v285 = vld [vmem:[%s1 + $0x840] sm:$0xff]
  %v286 = vld [vmem:[%s1 + $0x848] sm:$0xff]
  %v287 = vld [vmem:[%s1 + $0x850] sm:$0xff]
  %v288 = vld [vmem:[%s1 + $0x858] sm:$0xff]
  %v289 = vld [vmem:[%s1 + $0x860] sm:$0xff]
  %v290 = vld [vmem:[%s1 + $0x868] sm:$0xff]
  %v291 = vld [vmem:[%s1 + $0x870] sm:$0xff]
  %v292 = vld [vmem:[%s1 + $0x878] sm:$0xff]
  %v293 = vld [vmem:[%s1 + $0x880] sm:$0xff]
  %v294 = vld [vmem:[%s1 + $0x888] sm:$0xff]
  %v295 = vld [vmem:[%s1 + $0x890] sm:$0xff]
  %v296 = vld [vmem:[%s1 + $0x898] sm:$0xff]
  %v297 = vld [vmem:[%s1 + $0x8a0] sm:$0xff]
  %v298 = vld [vmem:[%s1 + $0x8a8] sm:$0xff]
  %v299 = vld [vmem:[%s1 + $0x8b0] sm:$0xff]
  %v300 = vld [vmem:[%s1 + $0x8b8] sm:$0xff]
  %v301 = vld [vmem:[%s1 + $0x8c0] sm:$0xff]
  %v302 = vld [vmem:[%s1 + $0x8c8] sm:$0xff]
  %v303 = vld [vmem:[%s1 + $0x8d0] sm:$0xf]
  %v304 = vld [vmem:[%s1 + $0x8d4] sm:$0xff]
  %v305 = vld [vmem:[%s1 + $0x8dc] sm:$0xff]
  %v306 = vld [vmem:[%s1 + $0x8e4] sm:$0xff]
  %v307 = vld [vmem:[%s1 + $0x8ec] sm:$0xff]
  %v308 = vld [vmem:[%s1 + $0x8f4] sm:$0xff]
  %v309 = vld [vmem:[%s1 + $0x8fc] sm:$0xff]
  %v310 = vld [vmem:[%s1 + $0x904] sm:$0xff]
  %v311 = vld [vmem:[%s1 + $0x90c] sm:$0xff]
  %v312 = vld [vmem:[%s1 + $0x914] sm:$0xff]
  %v313 = vld [vmem:[%s1 + $0x91c] sm:$0xff]
  %v314 = vld [vmem:[%s1 + $0x924] sm:$0xff]
  %v315 = vld [vmem:[%s1 + $0x92c] sm:$0xff]
  %v316 = vld [vmem:[%s1 + $0x934] sm:$0xff]
  %v317 = vld [vmem:[%s1 + $0x93c] sm:$0xff]
  %v318 = vld [vmem:[%s1 + $0x944] sm:$0xff]
  %v319 = vld [vmem:[%s1 + $0x94c] sm:$0xff]
  %v320 = vld [vmem:[%s1 + $0x954] sm:$0xff]
  %v321 = vld [vmem:[%s1 + $0x95c] sm:$0xff]
  %v322 = vld [vmem:[%s1 + $0x964] sm:$0xff]
  %v323 = vld [vmem:[%s1 + $0x96c] sm:$0xff]
  %v324 = vld [vmem:[%s1 + $0x974] sm:$0xff]
  %v325 = vld [vmem:[%s1 + $0x97c] sm:$0xff]
  %v326 = vld [vmem:[%s1 + $0x984] sm:$0xff]
  %v327 = vld [vmem:[%s1 + $0x98c] sm:$0xff]
  %v328 = vld [vmem:[%s1 + $0x994] sm:$0xff]
  %v329 = vld [vmem:[%s1 + $0x99c] sm:$0xff]
  %v330 = vld [vmem:[%s1 + $0x9a4] sm:$0xff]
  %v331 = vld [vmem:[%s1 + $0x9ac] sm:$0xff]
  %v332 = vld [vmem:[%s1 + $0x9b4] sm:$0xff]
  %v333 = vld [vmem:[%s1 + $0x9bc] sm:$0xff]
  %v334 = vld [vmem:[%s1 + $0x9c4] sm:$0xff]
  %v335 = vld [vmem:[%s1 + $0x9cc] sm:$0xff]
  %v336 = vld [vmem:[%s1 + $0x9d4] sm:$0xff]
  %v337 = vld [vmem:[%s1 + $0x9dc] sm:$0xff]
  %v338 = vld [vmem:[%s1 + $0x9e4] sm:$0xff]
  %v339 = vld [vmem:[%s1 + $0x9ec] sm:$0xff]
  %v340 = vld [vmem:[%s1 + $0x9f4] sm:$0xff]
  %v341 = vld [vmem:[%s1 + $0x9fc] sm:$0xff]
  %v342 = vld [vmem:[%s1 + $0xa04] sm:$0xff]
  %v343 = vld [vmem:[%s1 + $0xa0c] sm:$0xff]
  %v344 = vld [vmem:[%s1 + $0xa14] sm:$0xff]
  %v345 = vld [vmem:[%s1 + $0xa1c] sm:$0xff]
  %v346 = vld [vmem:[%s1 + $0xa24] sm:$0xff]
  %v347 = vld [vmem:[%s1 + $0xa2c] sm:$0xff]
  %v348 = vld [vmem:[%s1 + $0xa34] sm:$0xff]
  %v349 = vld [vmem:[%s1 + $0xa3c] sm:$0xff]
  %v350 = vld [vmem:[%s1 + $0xa44] sm:$0xff]
  %v351 = vld [vmem:[%s1 + $0xa4c] sm:$0xff]
  %v352 = vld [vmem:[%s1 + $0xa54] sm:$0xff]
  %v353 = vld [vmem:[%s1 + $0xa5c] sm:$0xff]
  %v354 = vld [vmem:[%s1 + $0xa64] sm:$0xff]
  %v355 = vld [vmem:[%s1 + $0xa6c] sm:$0xff]
  %v356 = vld [vmem:[%s1 + $0xa74] sm:$0xff]
  %v357 = vld [vmem:[%s1 + $0xa7c] sm:$0xff]
  %v358 = vld [vmem:[%s1 + $0xa84] sm:$0xff]
  %v359 = vld [vmem:[%s1 + $0xa8c] sm:$0xff]
  %v360 = vld [vmem:[%s1 + $0xa94] sm:$0xf]
  %v361 = vld [vmem:[%s1 + $0xa98] sm:$0xff]
  %v362 = vld [vmem:[%s1 + $0xaa0] sm:$0xff]
  %v363 = vld [vmem:[%s1 + $0xaa8] sm:$0xff]
  %v364 = vld [vmem:[%s1 + $0xab0] sm:$0xff]
  %v365 = vld [vmem:[%s1 + $0xab8] sm:$0xff]
  %v366 = vld [vmem:[%s1 + $0xac0] sm:$0xff]
  %v367 = vld [vmem:[%s1 + $0xac8] sm:$0xff]
  %v368 = vld [vmem:[%s1 + $0xad0] sm:$0xff]
  %v369 = vld [vmem:[%s1 + $0xad8] sm:$0xff]
  %v370 = vld [vmem:[%s1 + $0xae0] sm:$0xff]
  %v371 = vld [vmem:[%s1 + $0xae8] sm:$0xff]
  %v372 = vld [vmem:[%s1 + $0xaf0] sm:$0xff]
  %v373 = vld [vmem:[%s1 + $0xaf8] sm:$0xff]
  %v374 = vld [vmem:[%s1 + $0xb00] sm:$0xff]
  %v375 = vld [vmem:[%s1 + $0xb08] sm:$0xff]
  %v376 = vld [vmem:[%s1 + $0xb10] sm:$0xff]
  %v377 = vld [vmem:[%s1 + $0xb18] sm:$0xff]
  %v378 = vld [vmem:[%s1 + $0xb20] sm:$0xff]
  %v379 = vld [vmem:[%s1 + $0xb28] sm:$0xff]
  %v380 = vld [vmem:[%s1 + $0xb30] sm:$0xff]
  %v381 = vld [vmem:[%s1 + $0xb38] sm:$0xff]
  %v382 = vld [vmem:[%s1 + $0xb40] sm:$0xff]
  %v383 = vld [vmem:[%s1 + $0xb48] sm:$0xff]
  %v384 = vld [vmem:[%s1 + $0xb50] sm:$0xff]
  %v385 = vld [vmem:[%s1 + $0xb58] sm:$0xff]
  %v386 = vld [vmem:[%s1 + $0xb60] sm:$0xff]
  %v387 = vld [vmem:[%s1 + $0xb68] sm:$0xff]
  %v388 = vld [vmem:[%s1 + $0xb70] sm:$0xff]
  %v389 = vld [vmem:[%s1 + $0xb78] sm:$0xff]
  %v390 = vld [vmem:[%s1 + $0xb80] sm:$0xff]
  %v391 = vld [vmem:[%s1 + $0xb88] sm:$0xff]
  %v392 = vld [vmem:[%s1 + $0xb90] sm:$0xff]
  %v393 = vld [vmem:[%s1 + $0xb98] sm:$0xff]
  %v394 = vld [vmem:[%s1 + $0xba0] sm:$0xff]
  %v395 = vld [vmem:[%s1 + $0xba8] sm:$0xff]
  %v396 = vld [vmem:[%s1 + $0xbb0] sm:$0xff]
  %v397 = vld [vmem:[%s1 + $0xbb8] sm:$0xff]
  %v398 = vld [vmem:[%s1 + $0xbc0] sm:$0xff]
  %v399 = vld [vmem:[%s1 + $0xbc8] sm:$0xff]
  %v400 = vld [vmem:[%s1 + $0xbd0] sm:$0xff]
  %v401 = vld [vmem:[%s1 + $0xbd8] sm:$0xff]
  %v402 = vld [vmem:[%s1 + $0xbe0] sm:$0xff]
  %v403 = vld [vmem:[%s1 + $0xbe8] sm:$0xff]
  %v404 = vld [vmem:[%s1 + $0xbf0] sm:$0xff]
  %v405 = vld [vmem:[%s1 + $0xbf8] sm:$0xff]
  %v406 = vld [vmem:[%s1 + $0xc00] sm:$0xff]
  %v407 = vld [vmem:[%s1 + $0xc08] sm:$0xff]
  %v408 = vld [vmem:[%s1 + $0xc10] sm:$0xff]
  %v409 = vld [vmem:[%s1 + $0xc18] sm:$0xff]
  %v410 = vld [vmem:[%s1 + $0xc20] sm:$0xff]
  %v411 = vld [vmem:[%s1 + $0xc28] sm:$0xff]
  %v412 = vld [vmem:[%s1 + $0xc30] sm:$0xff]
  %v413 = vld [vmem:[%s1 + $0xc38] sm:$0xff]
  %v414 = vld [vmem:[%s1 + $0xc40] sm:$0xff]
  %v415 = vld [vmem:[%s1 + $0xc48] sm:$0xff]
  %v416 = vld [vmem:[%s1 + $0xc50] sm:$0xff]
  %v417 = vld [vmem:[%s1 + $0xc58] sm:$0xf]
  %v418 = vld [vmem:[%s1 + $0xc5c] sm:$0xff]
  %v419 = vld [vmem:[%s1 + $0xc64] sm:$0xff]
  %v420 = vld [vmem:[%s1 + $0xc6c] sm:$0xff]
  %v421 = vld [vmem:[%s1 + $0xc74] sm:$0xff]
  %v422 = vld [vmem:[%s1 + $0xc7c] sm:$0xff]
  %v423 = vld [vmem:[%s1 + $0xc84] sm:$0xff]
  %v424 = vld [vmem:[%s1 + $0xc8c] sm:$0xff]
  %v425 = vld [vmem:[%s1 + $0xc94] sm:$0xff]
  %v426 = vld [vmem:[%s1 + $0xc9c] sm:$0xff]
  %v427 = vld [vmem:[%s1 + $0xca4] sm:$0xff]
  %v428 = vld [vmem:[%s1 + $0xcac] sm:$0xff]
  %v429 = vld [vmem:[%s1 + $0xcb4] sm:$0xff]
  %v430 = vld [vmem:[%s1 + $0xcbc] sm:$0xff]
  %v431 = vld [vmem:[%s1 + $0xcc4] sm:$0xff]
  %v432 = vld [vmem:[%s1 + $0xccc] sm:$0xff]
  %v433 = vld [vmem:[%s1 + $0xcd4] sm:$0xff]
  %v434 = vld [vmem:[%s1 + $0xcdc] sm:$0xff]
  %v435 = vld [vmem:[%s1 + $0xce4] sm:$0xff]
  %v436 = vld [vmem:[%s1 + $0xcec] sm:$0xff]
  %v437 = vld [vmem:[%s1 + $0xcf4] sm:$0xff]
  %v438 = vld [vmem:[%s1 + $0xcfc] sm:$0xff]
  %v439 = vld [vmem:[%s1 + $0xd04] sm:$0xff]
  %v440 = vld [vmem:[%s1 + $0xd0c] sm:$0xff]
  %v441 = vld [vmem:[%s1 + $0xd14] sm:$0xff]
  %v442 = vld [vmem:[%s1 + $0xd1c] sm:$0xff]
  %v443 = vld [vmem:[%s1 + $0xd24] sm:$0xff]
  %v444 = vld [vmem:[%s1 + $0xd2c] sm:$0xff]
  %v445 = vld [vmem:[%s1 + $0xd34] sm:$0xff]
  %v446 = vld [vmem:[%s1 + $0xd3c] sm:$0xff]
  %v447 = vld [vmem:[%s1 + $0xd44] sm:$0xff]
  %v448 = vld [vmem:[%s1 + $0xd4c] sm:$0xff]
  %v449 = vld [vmem:[%s1 + $0xd54] sm:$0xff]
  %v450 = vld [vmem:[%s1 + $0xd5c] sm:$0xff]
  %v451 = vld [vmem:[%s1 + $0xd64] sm:$0xff]
  %v452 = vld [vmem:[%s1 + $0xd6c] sm:$0xff]
  %v453 = vld [vmem:[%s1 + $0xd74] sm:$0xff]
  %v454 = vld [vmem:[%s1 + $0xd7c] sm:$0xff]
  %v455 = vld [vmem:[%s1 + $0xd84] sm:$0xff]
  %v456 = vld [vmem:[%s1 + $0xd8c] sm:$0xff]
  %v457 = vld [vmem:[%s1 + $0xd94] sm:$0xff]
  %v458 = vld [vmem:[%s1 + $0xd9c] sm:$0xff]
  %v459 = vld [vmem:[%s1 + $0xda4] sm:$0xff]
  %v460 = vld [vmem:[%s1 + $0xdac] sm:$0xff]
  %v461 = vld [vmem:[%s1 + $0xdb4] sm:$0xff]
  %v462 = vld [vmem:[%s1 + $0xdbc] sm:$0xff]
  %v463 = vld [vmem:[%s1 + $0xdc4] sm:$0xff]
  %v464 = vld [vmem:[%s1 + $0xdcc] sm:$0xff]
  %v465 = vld [vmem:[%s1 + $0xdd4] sm:$0xff]
  %v466 = vld [vmem:[%s1 + $0xddc] sm:$0xff]
  %v467 = vld [vmem:[%s1 + $0xde4] sm:$0xff]
  %v468 = vld [vmem:[%s1 + $0xdec] sm:$0xff]
  %v469 = vld [vmem:[%s1 + $0xdf4] sm:$0xff]
  %v470 = vld [vmem:[%s1 + $0xdfc] sm:$0xff]
  %v471 = vld [vmem:[%s1 + $0xe04] sm:$0xff]
  %v472 = vld [vmem:[%s1 + $0xe0c] sm:$0xff]
  %v473 = vld [vmem:[%s1 + $0xe14] sm:$0xff]
  %v474 = vld [vmem:[%s1 + $0xe1c] sm:$0xf]
  %v475 = vld [vmem:[%s1 + $0xe20] sm:$0xff]
  %v476 = vld [vmem:[%s1 + $0xe28] sm:$0xff]
  %v477 = vld [vmem:[%s1 + $0xe30] sm:$0xff]
  %v478 = vld [vmem:[%s1 + $0xe38] sm:$0xff]
  %v479 = vld [vmem:[%s1 + $0xe40] sm:$0xff]
  %v480 = vld [vmem:[%s1 + $0xe48] sm:$0xff]
  %v481 = vld [vmem:[%s1 + $0xe50] sm:$0xff]
  %v482 = vld [vmem:[%s1 + $0xe58] sm:$0xff]
  %v483 = vld [vmem:[%s1 + $0xe60] sm:$0xff]
  %v484 = vld [vmem:[%s1 + $0xe68] sm:$0xff]
  %v485 = vld [vmem:[%s1 + $0xe70] sm:$0xff]
  %v486 = vld [vmem:[%s1 + $0xe78] sm:$0xff]
  %v487 = vld [vmem:[%s1 + $0xe80] sm:$0xff]
  %v488 = vld [vmem:[%s1 + $0xe88] sm:$0xff]
  %v489 = vld [vmem:[%s1 + $0xe90] sm:$0xff]
  %v490 = vld [vmem:[%s1 + $0xe98] sm:$0xff]
  %v491 = vld [vmem:[%s1 + $0xea0] sm:$0xff]
  %v492 = vld [vmem:[%s1 + $0xea8] sm:$0xff]
  %v493 = vld [vmem:[%s1 + $0xeb0] sm:$0xff]
  %v494 = vld [vmem:[%s1 + $0xeb8] sm:$0xff]
  %v495 = vld [vmem:[%s1 + $0xec0] sm:$0xff]
  %v496 = vld [vmem:[%s1 + $0xec8] sm:$0xff]
  %v497 = vld [vmem:[%s1 + $0xed0] sm:$0xff]
  %v498 = vld [vmem:[%s1 + $0xed8] sm:$0xff]
  %v499 = vld [vmem:[%s1 + $0xee0] sm:$0xff]
  %v500 = vld [vmem:[%s1 + $0xee8] sm:$0xff]
  %v501 = vld [vmem:[%s1 + $0xef0] sm:$0xff]
  %v502 = vld [vmem:[%s1 + $0xef8] sm:$0xff]
  %v503 = vld [vmem:[%s1 + $0xf00] sm:$0xff]
  %v504 = vld [vmem:[%s1 + $0xf08] sm:$0xff]
  %v505 = vld [vmem:[%s1 + $0xf10] sm:$0xff]
  %v506 = vld [vmem:[%s1 + $0xf18] sm:$0xff]
  %v507 = vld [vmem:[%s1 + $0xf20] sm:$0xff]
  %v508 = vld [vmem:[%s1 + $0xf28] sm:$0xff]
  %v509 = vld [vmem:[%s1 + $0xf30] sm:$0xff]
  %v510 = vld [vmem:[%s1 + $0xf38] sm:$0xff]
  %v511 = vld [vmem:[%s1 + $0xf40] sm:$0xff]
  %v512 = vld [vmem:[%s1 + $0xf48] sm:$0xff]
  %v513 = vld [vmem:[%s1 + $0xf50] sm:$0xff]
  %v514 = vld [vmem:[%s1 + $0xf58] sm:$0xff]
  %v515 = vld [vmem:[%s1 + $0xf60] sm:$0xff]
  %v516 = vld [vmem:[%s1 + $0xf68] sm:$0xff]
  %v517 = vld [vmem:[%s1 + $0xf70] sm:$0xff]
  %v518 = vld [vmem:[%s1 + $0xf78] sm:$0xff]
  %v519 = vld [vmem:[%s1 + $0xf80] sm:$0xff]
  %v520 = vld [vmem:[%s1 + $0xf88] sm:$0xff]
  %v521 = vld [vmem:[%s1 + $0xf90] sm:$0xff]
  %v522 = vld [vmem:[%s1 + $0xf98] sm:$0xff]
  %v523 = vld [vmem:[%s1 + $0xfa0] sm:$0xff]
  %v524 = vld [vmem:[%s1 + $0xfa8] sm:$0xff]
  %v525 = vld [vmem:[%s1 + $0xfb0] sm:$0xff]
  %v526 = vld [vmem:[%s1 + $0xfb8] sm:$0xff]
  %v527 = vld [vmem:[%s1 + $0xfc0] sm:$0xff]
  %v528 = vld [vmem:[%s1 + $0xfc8] sm:$0xff]
  %v529 = vld [vmem:[%s1 + $0xfd0] sm:$0xff]
  %v530 = vld [vmem:[%s1 + $0xfd8] sm:$0xff]
  %v531 = vld [vmem:[%s1 + $0xfe0] sm:$0xf]
  %v532 = vld [vmem:[%s1 + $0xfe4] sm:$0x33]
  %v533 = vld [vmem:[%s1 + $0xfec] sm:$0x33]
  %v534 = vld [vmem:[%s1 + $0xff4] sm:$0x33]
  %v535 = vld [vmem:[%s1 + $0xffc] sm:$0x33]
  %v536 = vld [vmem:[%s1 + $0x1004] sm:$0x33]
  %v537 = vld [vmem:[%s1 + $0x100c] sm:$0x33]
  %v538 = vld [vmem:[%s1 + $0x1014] sm:$0x33]
  %v539 = vld [vmem:[%s1 + $0x101c] sm:$0x33]
  %v540 = vld [vmem:[%s1 + $0x1024] sm:$0x33]
  %v541 = vld [vmem:[%s1 + $0x102c] sm:$0x33]
  %v542 = vld [vmem:[%s1 + $0x1034] sm:$0x33]
  %v543 = vld [vmem:[%s1 + $0x103c] sm:$0x33]
  %v544 = vld [vmem:[%s1 + $0x1044] sm:$0x33]
  %v545 = vld [vmem:[%s1 + $0x104c] sm:$0x33]
  %v546 = vld [vmem:[%s1 + $0x1054] sm:$0x33]
  %v547 = vld [vmem:[%s1 + $0x105c] sm:$0x33]
  %v548 = vld [vmem:[%s1 + $0x1064] sm:$0x33]
  %v549 = vld [vmem:[%s1 + $0x106c] sm:$0x33]
  %v550 = vld [vmem:[%s1 + $0x1074] sm:$0x33]
  %v551 = vld [vmem:[%s1 + $0x107c] sm:$0x33]
  %v552 = vld [vmem:[%s1 + $0x1084] sm:$0x33]
  %v553 = vld [vmem:[%s1 + $0x108c] sm:$0x33]
  %v554 = vld [vmem:[%s1 + $0x1094] sm:$0x33]
  %v555 = vld [vmem:[%s1 + $0x109c] sm:$0x33]
  %v556 = vld [vmem:[%s1 + $0x10a4] sm:$0x33]
  %v557 = vld [vmem:[%s1 + $0x10ac] sm:$0x33]
  %v558 = vld [vmem:[%s1 + $0x10b4] sm:$0x33]
  %v559 = vld [vmem:[%s1 + $0x10bc] sm:$0x33]
  %v560 = vld [vmem:[%s1 + $0x10c4] sm:$0x33]
  %v561 = vld [vmem:[%s1 + $0x10cc] sm:$0x33]
  %v562 = vld [vmem:[%s1 + $0x10d4] sm:$0x33]
  %v563 = vld [vmem:[%s1 + $0x10dc] sm:$0x33]
  %v564 = vld [vmem:[%s1 + $0x10e4] sm:$0x33]
  %v565 = vld [vmem:[%s1 + $0x10ec] sm:$0x33]
  %v566 = vld [vmem:[%s1 + $0x10f4] sm:$0x33]
  %v567 = vld [vmem:[%s1 + $0x10fc] sm:$0x33]
  %v568 = vld [vmem:[%s1 + $0x1104] sm:$0x33]
  %v569 = vld [vmem:[%s1 + $0x110c] sm:$0x33]
  %v570 = vld [vmem:[%s1 + $0x1114] sm:$0x33]
  %v571 = vld [vmem:[%s1 + $0x111c] sm:$0x33]
  %v572 = vld [vmem:[%s1 + $0x1124] sm:$0x33]
  %v573 = vld [vmem:[%s1 + $0x112c] sm:$0x33]
  %v574 = vld [vmem:[%s1 + $0x1134] sm:$0x33]
  %v575 = vld [vmem:[%s1 + $0x113c] sm:$0x33]
  %v576 = vld [vmem:[%s1 + $0x1144] sm:$0x33]
  %v577 = vld [vmem:[%s1 + $0x114c] sm:$0x33]
  %v578 = vld [vmem:[%s1 + $0x1154] sm:$0x33]
  %v579 = vld [vmem:[%s1 + $0x115c] sm:$0x33]
  %v580 = vld [vmem:[%s1 + $0x1164] sm:$0x33]
  %v581 = vld [vmem:[%s1 + $0x116c] sm:$0x33]
  %v582 = vld [vmem:[%s1 + $0x1174] sm:$0x33]
  %v583 = vld [vmem:[%s1 + $0x117c] sm:$0x33]
  %v584 = vld [vmem:[%s1 + $0x1184] sm:$0x33]
  %v585 = vld [vmem:[%s1 + $0x118c] sm:$0x33]
  %v586 = vld [vmem:[%s1 + $0x1194] sm:$0x33]
  %v587 = vld [vmem:[%s1 + $0x119c] sm:$0x33]
  %v588 = vld [vmem:[%s1 + $0x11a4] sm:$0x3]
  %v1159 = vunpack.c.l.b16 %v19
  %v1160 = vunpack.c.h.b16 %v19
  %v1161 = vunpack.c.l.b16 %v20
  %v1162 = vunpack.c.h.b16 %v20
  %v1163 = vunpack.c.l.b16 %v21
  %v1164 = vunpack.c.h.b16 %v21
  %v1165 = vunpack.c.l.b16 %v22
  %v1166 = vunpack.c.h.b16 %v22
  %v1167 = vunpack.c.l.b16 %v23
  %v1168 = vunpack.c.h.b16 %v23
  %v1169 = vunpack.c.l.b16 %v24
  %v1170 = vunpack.c.h.b16 %v24
  %v1171 = vunpack.c.l.b16 %v25
  %v1172 = vunpack.c.h.b16 %v25
  %v1173 = vunpack.c.l.b16 %v26
  %v1174 = vunpack.c.h.b16 %v26
  %v1175 = vunpack.c.l.b16 %v27
  %v1176 = vunpack.c.h.b16 %v27
  %v1177 = vunpack.c.l.b16 %v28
  %v1178 = vunpack.c.h.b16 %v28
  %v1179 = vunpack.c.l.b16 %v29
  %v1180 = vunpack.c.h.b16 %v29
  %v1181 = vunpack.c.l.b16 %v30
  %v1182 = vunpack.c.h.b16 %v30
  %v1183 = vunpack.c.l.b16 %v31
  %v1184 = vunpack.c.h.b16 %v31
  %v1185 = vunpack.c.l.b16 %v32
  %v1186 = vunpack.c.h.b16 %v32
  %v1187 = vunpack.c.l.b16 %v33
  %v1188 = vunpack.c.h.b16 %v33
  %v1189 = vunpack.c.l.b16 %v34
  %v1190 = vunpack.c.h.b16 %v34
  %v1191 = vunpack.c.l.b16 %v35
  %v1192 = vunpack.c.h.b16 %v35
  %v1193 = vunpack.c.l.b16 %v36
  %v1194 = vunpack.c.h.b16 %v36
  %v1195 = vunpack.c.l.b16 %v37
  %v1196 = vunpack.c.h.b16 %v37
  %v1197 = vunpack.c.l.b16 %v38
  %v1198 = vunpack.c.h.b16 %v38
  %v1199 = vunpack.c.l.b16 %v39
  %v1200 = vunpack.c.h.b16 %v39
  %v1201 = vunpack.c.l.b16 %v40
  %v1202 = vunpack.c.h.b16 %v40
  %v1203 = vunpack.c.l.b16 %v41
  %v1204 = vunpack.c.h.b16 %v41
  %v1205 = vunpack.c.l.b16 %v42
  %v1206 = vunpack.c.h.b16 %v42
  %v1207 = vunpack.c.l.b16 %v43
  %v1208 = vunpack.c.h.b16 %v43
  %v1209 = vunpack.c.l.b16 %v44
  %v1210 = vunpack.c.h.b16 %v44
  %v1211 = vunpack.c.l.b16 %v45
  %v1212 = vunpack.c.h.b16 %v45
  %v1213 = vunpack.c.l.b16 %v46
  %v1214 = vunpack.c.h.b16 %v46
  %v1215 = vunpack.c.l.b16 %v47
  %v1216 = vunpack.c.h.b16 %v47
  %v1217 = vunpack.c.l.b16 %v48
  %v1218 = vunpack.c.h.b16 %v48
  %v1219 = vunpack.c.l.b16 %v49
  %v1220 = vunpack.c.h.b16 %v49
  %v1221 = vunpack.c.l.b16 %v50
  %v1222 = vunpack.c.h.b16 %v50
  %v1223 = vunpack.c.l.b16 %v51
  %v1224 = vunpack.c.h.b16 %v51
  %v1225 = vunpack.c.l.b16 %v52
  %v1226 = vunpack.c.h.b16 %v52
  %v1227 = vunpack.c.l.b16 %v53
  %v1228 = vunpack.c.h.b16 %v53
  %v1229 = vunpack.c.l.b16 %v54
  %v1230 = vunpack.c.h.b16 %v54
  %v1231 = vunpack.c.l.b16 %v55
  %v1232 = vunpack.c.h.b16 %v55
  %v1233 = vunpack.c.l.b16 %v56
  %v1234 = vunpack.c.h.b16 %v56
  %v1235 = vunpack.c.l.b16 %v57
  %v1236 = vunpack.c.h.b16 %v57
  %v1237 = vunpack.c.l.b16 %v58
  %v1238 = vunpack.c.h.b16 %v58
  %v1239 = vunpack.c.l.b16 %v59
  %v1240 = vunpack.c.h.b16 %v59
  %v1241 = vunpack.c.l.b16 %v60
  %v1242 = vunpack.c.h.b16 %v60
  %v1243 = vunpack.c.l.b16 %v61
  %v1244 = vunpack.c.h.b16 %v61
  %v1245 = vunpack.c.l.b16 %v62
  %v1246 = vunpack.c.h.b16 %v62
  %v1247 = vunpack.c.l.b16 %v63
  %v1248 = vunpack.c.h.b16 %v63
  %v1249 = vunpack.c.l.b16 %v64
  %v1250 = vunpack.c.h.b16 %v64
  %v1251 = vunpack.c.l.b16 %v65
  %v1252 = vunpack.c.h.b16 %v65
  %v1253 = vunpack.c.l.b16 %v66
  %v1254 = vunpack.c.h.b16 %v66
  %v1255 = vunpack.c.l.b16 %v67
  %v1256 = vunpack.c.h.b16 %v67
  %v1257 = vunpack.c.l.b16 %v68
  %v1258 = vunpack.c.h.b16 %v68
  %v1259 = vunpack.c.l.b16 %v69
  %v1260 = vunpack.c.h.b16 %v69
  %v1261 = vunpack.c.l.b16 %v70
  %v1262 = vunpack.c.h.b16 %v70
  %v1263 = vunpack.c.l.b16 %v71
  %v1264 = vunpack.c.h.b16 %v71
  %v1265 = vunpack.c.l.b16 %v72
  %v1266 = vunpack.c.h.b16 %v72
  %v1267 = vunpack.c.l.b16 %v73
  %v1268 = vunpack.c.h.b16 %v73
  %v1269 = vunpack.c.l.b16 %v74
  %v1270 = vunpack.c.h.b16 %v74
  %v1271 = vunpack.c.l.b16 %v75
  %v1272 = vunpack.c.l.b16 %v76
  %v1273 = vunpack.c.h.b16 %v76
  %v1274 = vunpack.c.l.b16 %v77
  %v1275 = vunpack.c.h.b16 %v77
  %v1276 = vunpack.c.l.b16 %v78
  %v1277 = vunpack.c.h.b16 %v78
  %v1278 = vunpack.c.l.b16 %v79
  %v1279 = vunpack.c.h.b16 %v79
  %v1280 = vunpack.c.l.b16 %v80
  %v1281 = vunpack.c.h.b16 %v80
  %v1282 = vunpack.c.l.b16 %v81
  %v1283 = vunpack.c.h.b16 %v81
  %v1284 = vunpack.c.l.b16 %v82
  %v1285 = vunpack.c.h.b16 %v82
  %v1286 = vunpack.c.l.b16 %v83
  %v1287 = vunpack.c.h.b16 %v83
  %v1288 = vunpack.c.l.b16 %v84
  %v1289 = vunpack.c.h.b16 %v84
  %v1290 = vunpack.c.l.b16 %v85
  %v1291 = vunpack.c.h.b16 %v85
  %v1292 = vunpack.c.l.b16 %v86
  %v1293 = vunpack.c.h.b16 %v86
  %v1294 = vunpack.c.l.b16 %v87
  %v1295 = vunpack.c.h.b16 %v87
  %v1296 = vunpack.c.l.b16 %v88
  %v1297 = vunpack.c.h.b16 %v88
  %v1298 = vunpack.c.l.b16 %v89
  %v1299 = vunpack.c.h.b16 %v89
  %v1300 = vunpack.c.l.b16 %v90
  %v1301 = vunpack.c.h.b16 %v90
  %v1302 = vunpack.c.l.b16 %v91
  %v1303 = vunpack.c.h.b16 %v91
  %v1304 = vunpack.c.l.b16 %v92
  %v1305 = vunpack.c.h.b16 %v92
  %v1306 = vunpack.c.l.b16 %v93
  %v1307 = vunpack.c.h.b16 %v93
  %v1308 = vunpack.c.l.b16 %v94
  %v1309 = vunpack.c.h.b16 %v94
  %v1310 = vunpack.c.l.b16 %v95
  %v1311 = vunpack.c.h.b16 %v95
  %v1312 = vunpack.c.l.b16 %v96
  %v1313 = vunpack.c.h.b16 %v96
  %v1314 = vunpack.c.l.b16 %v97
  %v1315 = vunpack.c.h.b16 %v97
  %v1316 = vunpack.c.l.b16 %v98
  %v1317 = vunpack.c.h.b16 %v98
  %v1318 = vunpack.c.l.b16 %v99
  %v1319 = vunpack.c.h.b16 %v99
  %v1320 = vunpack.c.l.b16 %v100
  %v1321 = vunpack.c.h.b16 %v100
  %v1322 = vunpack.c.l.b16 %v101
  %v1323 = vunpack.c.h.b16 %v101
  %v1324 = vunpack.c.l.b16 %v102
  %v1325 = vunpack.c.h.b16 %v102
  %v1326 = vunpack.c.l.b16 %v103
  %v1327 = vunpack.c.h.b16 %v103
  %v1328 = vunpack.c.l.b16 %v104
  %v1329 = vunpack.c.h.b16 %v104
  %v1330 = vunpack.c.l.b16 %v105
  %v1331 = vunpack.c.h.b16 %v105
  %v1332 = vunpack.c.l.b16 %v106
  %v1333 = vunpack.c.h.b16 %v106
  %v1334 = vunpack.c.l.b16 %v107
  %v1335 = vunpack.c.h.b16 %v107
  %v1336 = vunpack.c.l.b16 %v108
  %v1337 = vunpack.c.h.b16 %v108
  %v1338 = vunpack.c.l.b16 %v109
  %v1339 = vunpack.c.h.b16 %v109
  %v1340 = vunpack.c.l.b16 %v110
  %v1341 = vunpack.c.h.b16 %v110
  %v1342 = vunpack.c.l.b16 %v111
  %v1343 = vunpack.c.h.b16 %v111
  %v1344 = vunpack.c.l.b16 %v112
  %v1345 = vunpack.c.h.b16 %v112
  %v1346 = vunpack.c.l.b16 %v113
  %v1347 = vunpack.c.h.b16 %v113
  %v1348 = vunpack.c.l.b16 %v114
  %v1349 = vunpack.c.h.b16 %v114
  %v1350 = vunpack.c.l.b16 %v115
  %v1351 = vunpack.c.h.b16 %v115
  %v1352 = vunpack.c.l.b16 %v116
  %v1353 = vunpack.c.h.b16 %v116
  %v1354 = vunpack.c.l.b16 %v117
  %v1355 = vunpack.c.h.b16 %v117
  %v1356 = vunpack.c.l.b16 %v118
  %v1357 = vunpack.c.h.b16 %v118
  %v1358 = vunpack.c.l.b16 %v119
  %v1359 = vunpack.c.h.b16 %v119
  %v1360 = vunpack.c.l.b16 %v120
  %v1361 = vunpack.c.h.b16 %v120
  %v1362 = vunpack.c.l.b16 %v121
  %v1363 = vunpack.c.h.b16 %v121
  %v1364 = vunpack.c.l.b16 %v122
  %v1365 = vunpack.c.h.b16 %v122
  %v1366 = vunpack.c.l.b16 %v123
  %v1367 = vunpack.c.h.b16 %v123
  %v1368 = vunpack.c.l.b16 %v124
  %v1369 = vunpack.c.h.b16 %v124
  %v1370 = vunpack.c.l.b16 %v125
  %v1371 = vunpack.c.h.b16 %v125
  %v1372 = vunpack.c.l.b16 %v126
  %v1373 = vunpack.c.h.b16 %v126
  %v1374 = vunpack.c.l.b16 %v127
  %v1375 = vunpack.c.h.b16 %v127
  %v1376 = vunpack.c.l.b16 %v128
  %v1377 = vunpack.c.h.b16 %v128
  %v1378 = vunpack.c.l.b16 %v129
  %v1379 = vunpack.c.h.b16 %v129
  %v1380 = vunpack.c.l.b16 %v130
  %v1381 = vunpack.c.h.b16 %v130
  %v1382 = vunpack.c.l.b16 %v131
  %v1383 = vunpack.c.h.b16 %v131
  %v1384 = vunpack.c.l.b16 %v132
  %v1385 = vunpack.c.l.b16 %v133
  %v1386 = vunpack.c.h.b16 %v133
  %v1387 = vunpack.c.l.b16 %v134
  %v1388 = vunpack.c.h.b16 %v134
  %v1389 = vunpack.c.l.b16 %v135
  %v1390 = vunpack.c.h.b16 %v135
  %v1391 = vunpack.c.l.b16 %v136
  %v1392 = vunpack.c.h.b16 %v136
  %v1393 = vunpack.c.l.b16 %v137
  %v1394 = vunpack.c.h.b16 %v137
  %v1395 = vunpack.c.l.b16 %v138
  %v1396 = vunpack.c.h.b16 %v138
  %v1397 = vunpack.c.l.b16 %v139
  %v1398 = vunpack.c.h.b16 %v139
  %v1399 = vunpack.c.l.b16 %v140
  %v1400 = vunpack.c.h.b16 %v140
  %v1401 = vunpack.c.l.b16 %v141
  %v1402 = vunpack.c.h.b16 %v141
  %v1403 = vunpack.c.l.b16 %v142
  %v1404 = vunpack.c.h.b16 %v142
  %v1405 = vunpack.c.l.b16 %v143
  %v1406 = vunpack.c.h.b16 %v143
  %v1407 = vunpack.c.l.b16 %v144
  %v1408 = vunpack.c.h.b16 %v144
  %v1409 = vunpack.c.l.b16 %v145
  %v1410 = vunpack.c.h.b16 %v145
  %v1411 = vunpack.c.l.b16 %v146
  %v1412 = vunpack.c.h.b16 %v146
  %v1413 = vunpack.c.l.b16 %v147
  %v1414 = vunpack.c.h.b16 %v147
  %v1415 = vunpack.c.l.b16 %v148
  %v1416 = vunpack.c.h.b16 %v148
  %v1417 = vunpack.c.l.b16 %v149
  %v1418 = vunpack.c.h.b16 %v149
  %v1419 = vunpack.c.l.b16 %v150
  %v1420 = vunpack.c.h.b16 %v150
  %v1421 = vunpack.c.l.b16 %v151
  %v1422 = vunpack.c.h.b16 %v151
  %v1423 = vunpack.c.l.b16 %v152
  %v1424 = vunpack.c.h.b16 %v152
  %v1425 = vunpack.c.l.b16 %v153
  %v1426 = vunpack.c.h.b16 %v153
  %v1427 = vunpack.c.l.b16 %v154
  %v1428 = vunpack.c.h.b16 %v154
  %v1429 = vunpack.c.l.b16 %v155
  %v1430 = vunpack.c.h.b16 %v155
  %v1431 = vunpack.c.l.b16 %v156
  %v1432 = vunpack.c.h.b16 %v156
  %v1433 = vunpack.c.l.b16 %v157
  %v1434 = vunpack.c.h.b16 %v157
  %v1435 = vunpack.c.l.b16 %v158
  %v1436 = vunpack.c.h.b16 %v158
  %v1437 = vunpack.c.l.b16 %v159
  %v1438 = vunpack.c.h.b16 %v159
  %v1439 = vunpack.c.l.b16 %v160
  %v1440 = vunpack.c.h.b16 %v160
  %v1441 = vunpack.c.l.b16 %v161
  %v1442 = vunpack.c.h.b16 %v161
  %v1443 = vunpack.c.l.b16 %v162
  %v1444 = vunpack.c.h.b16 %v162
  %v1445 = vunpack.c.l.b16 %v163
  %v1446 = vunpack.c.h.b16 %v163
  %v1447 = vunpack.c.l.b16 %v164
  %v1448 = vunpack.c.h.b16 %v164
  %v1449 = vunpack.c.l.b16 %v165
  %v1450 = vunpack.c.h.b16 %v165
  %v1451 = vunpack.c.l.b16 %v166
  %v1452 = vunpack.c.h.b16 %v166
  %v1453 = vunpack.c.l.b16 %v167
  %v1454 = vunpack.c.h.b16 %v167
  %v1455 = vunpack.c.l.b16 %v168
  %v1456 = vunpack.c.h.b16 %v168
  %v1457 = vunpack.c.l.b16 %v169
  %v1458 = vunpack.c.h.b16 %v169
  %v1459 = vunpack.c.l.b16 %v170
  %v1460 = vunpack.c.h.b16 %v170
  %v1461 = vunpack.c.l.b16 %v171
  %v1462 = vunpack.c.h.b16 %v171
  %v1463 = vunpack.c.l.b16 %v172
  %v1464 = vunpack.c.h.b16 %v172
  %v1465 = vunpack.c.l.b16 %v173
  %v1466 = vunpack.c.h.b16 %v173
  %v1467 = vunpack.c.l.b16 %v174
  %v1468 = vunpack.c.h.b16 %v174
  %v1469 = vunpack.c.l.b16 %v175
  %v1470 = vunpack.c.h.b16 %v175
  %v1471 = vunpack.c.l.b16 %v176
  %v1472 = vunpack.c.h.b16 %v176
  %v1473 = vunpack.c.l.b16 %v177
  %v1474 = vunpack.c.h.b16 %v177
  %v1475 = vunpack.c.l.b16 %v178
  %v1476 = vunpack.c.h.b16 %v178
  %v1477 = vunpack.c.l.b16 %v179
  %v1478 = vunpack.c.h.b16 %v179
  %v1479 = vunpack.c.l.b16 %v180
  %v1480 = vunpack.c.h.b16 %v180
  %v1481 = vunpack.c.l.b16 %v181
  %v1482 = vunpack.c.h.b16 %v181
  %v1483 = vunpack.c.l.b16 %v182
  %v1484 = vunpack.c.h.b16 %v182
  %v1485 = vunpack.c.l.b16 %v183
  %v1486 = vunpack.c.h.b16 %v183
  %v1487 = vunpack.c.l.b16 %v184
  %v1488 = vunpack.c.h.b16 %v184
  %v1489 = vunpack.c.l.b16 %v185
  %v1490 = vunpack.c.h.b16 %v185
  %v1491 = vunpack.c.l.b16 %v186
  %v1492 = vunpack.c.h.b16 %v186
  %v1493 = vunpack.c.l.b16 %v187
  %v1494 = vunpack.c.h.b16 %v187
  %v1495 = vunpack.c.l.b16 %v188
  %v1496 = vunpack.c.h.b16 %v188
  %v1497 = vunpack.c.l.b16 %v189
  %v1498 = vunpack.c.l.b16 %v190
  %v1499 = vunpack.c.h.b16 %v190
  %v1500 = vunpack.c.l.b16 %v191
  %v1501 = vunpack.c.h.b16 %v191
  %v1502 = vunpack.c.l.b16 %v192
  %v1503 = vunpack.c.h.b16 %v192
  %v1504 = vunpack.c.l.b16 %v193
  %v1505 = vunpack.c.h.b16 %v193
  %v1506 = vunpack.c.l.b16 %v194
  %v1507 = vunpack.c.h.b16 %v194
  %v1508 = vunpack.c.l.b16 %v195
  %v1509 = vunpack.c.h.b16 %v195
  %v1510 = vunpack.c.l.b16 %v196
  %v1511 = vunpack.c.h.b16 %v196
  %v1512 = vunpack.c.l.b16 %v197
  %v1513 = vunpack.c.h.b16 %v197
  %v1514 = vunpack.c.l.b16 %v198
  %v1515 = vunpack.c.h.b16 %v198
  %v1516 = vunpack.c.l.b16 %v199
  %v1517 = vunpack.c.h.b16 %v199
  %v1518 = vunpack.c.l.b16 %v200
  %v1519 = vunpack.c.h.b16 %v200
  %v1520 = vunpack.c.l.b16 %v201
  %v1521 = vunpack.c.h.b16 %v201
  %v1522 = vunpack.c.l.b16 %v202
  %v1523 = vunpack.c.h.b16 %v202
  %v1524 = vunpack.c.l.b16 %v203
  %v1525 = vunpack.c.h.b16 %v203
  %v1526 = vunpack.c.l.b16 %v204
  %v1527 = vunpack.c.h.b16 %v204
  %v1528 = vunpack.c.l.b16 %v205
  %v1529 = vunpack.c.h.b16 %v205
  %v1530 = vunpack.c.l.b16 %v206
  %v1531 = vunpack.c.h.b16 %v206
  %v1532 = vunpack.c.l.b16 %v207
  %v1533 = vunpack.c.h.b16 %v207
  %v1534 = vunpack.c.l.b16 %v208
  %v1535 = vunpack.c.h.b16 %v208
  %v1536 = vunpack.c.l.b16 %v209
  %v1537 = vunpack.c.h.b16 %v209
  %v1538 = vunpack.c.l.b16 %v210
  %v1539 = vunpack.c.h.b16 %v210
  %v1540 = vunpack.c.l.b16 %v211
  %v1541 = vunpack.c.h.b16 %v211
  %v1542 = vunpack.c.l.b16 %v212
  %v1543 = vunpack.c.h.b16 %v212
  %v1544 = vunpack.c.l.b16 %v213
  %v1545 = vunpack.c.h.b16 %v213
  %v1546 = vunpack.c.l.b16 %v214
  %v1547 = vunpack.c.h.b16 %v214
  %v1548 = vunpack.c.l.b16 %v215
  %v1549 = vunpack.c.h.b16 %v215
  %v1550 = vunpack.c.l.b16 %v216
  %v1551 = vunpack.c.h.b16 %v216
  %v1552 = vunpack.c.l.b16 %v217
  %v1553 = vunpack.c.h.b16 %v217
  %v1554 = vunpack.c.l.b16 %v218
  %v1555 = vunpack.c.h.b16 %v218
  %v1556 = vunpack.c.l.b16 %v219
  %v1557 = vunpack.c.h.b16 %v219
  %v1558 = vunpack.c.l.b16 %v220
  %v1559 = vunpack.c.h.b16 %v220
  %v1560 = vunpack.c.l.b16 %v221
  %v1561 = vunpack.c.h.b16 %v221
  %v1562 = vunpack.c.l.b16 %v222
  %v1563 = vunpack.c.h.b16 %v222
  %v1564 = vunpack.c.l.b16 %v223
  %v1565 = vunpack.c.h.b16 %v223
  %v1566 = vunpack.c.l.b16 %v224
  %v1567 = vunpack.c.h.b16 %v224
  %v1568 = vunpack.c.l.b16 %v225
  %v1569 = vunpack.c.h.b16 %v225
  %v1570 = vunpack.c.l.b16 %v226
  %v1571 = vunpack.c.h.b16 %v226
  %v1572 = vunpack.c.l.b16 %v227
  %v1573 = vunpack.c.h.b16 %v227
  %v1574 = vunpack.c.l.b16 %v228
  %v1575 = vunpack.c.h.b16 %v228
  %v1576 = vunpack.c.l.b16 %v229
  %v1577 = vunpack.c.h.b16 %v229
  %v1578 = vunpack.c.l.b16 %v230
  %v1579 = vunpack.c.h.b16 %v230
  %v1580 = vunpack.c.l.b16 %v231
  %v1581 = vunpack.c.h.b16 %v231
  %v1582 = vunpack.c.l.b16 %v232
  %v1583 = vunpack.c.h.b16 %v232
  %v1584 = vunpack.c.l.b16 %v233
  %v1585 = vunpack.c.h.b16 %v233
  %v1586 = vunpack.c.l.b16 %v234
  %v1587 = vunpack.c.h.b16 %v234
  %v1588 = vunpack.c.l.b16 %v235
  %v1589 = vunpack.c.h.b16 %v235
  %v1590 = vunpack.c.l.b16 %v236
  %v1591 = vunpack.c.h.b16 %v236
  %v1592 = vunpack.c.l.b16 %v237
  %v1593 = vunpack.c.h.b16 %v237
  %v1594 = vunpack.c.l.b16 %v238
  %v1595 = vunpack.c.h.b16 %v238
  %v1596 = vunpack.c.l.b16 %v239
  %v1597 = vunpack.c.h.b16 %v239
  %v1598 = vunpack.c.l.b16 %v240
  %v1599 = vunpack.c.h.b16 %v240
  %v1600 = vunpack.c.l.b16 %v241
  %v1601 = vunpack.c.h.b16 %v241
  %v1602 = vunpack.c.l.b16 %v242
  %v1603 = vunpack.c.h.b16 %v242
  %v1604 = vunpack.c.l.b16 %v243
  %v1605 = vunpack.c.h.b16 %v243
  %v1606 = vunpack.c.l.b16 %v244
  %v1607 = vunpack.c.h.b16 %v244
  %v1608 = vunpack.c.l.b16 %v245
  %v1609 = vunpack.c.h.b16 %v245
  %v1610 = vunpack.c.l.b16 %v246
  %v1611 = vunpack.c.l.b16 %v247
  %v1612 = vunpack.c.h.b16 %v247
  %v1613 = vunpack.c.l.b16 %v248
  %v1614 = vunpack.c.h.b16 %v248
  %v1615 = vunpack.c.l.b16 %v249
  %v1616 = vunpack.c.h.b16 %v249
  %v1617 = vunpack.c.l.b16 %v250
  %v1618 = vunpack.c.h.b16 %v250
  %v1619 = vunpack.c.l.b16 %v251
  %v1620 = vunpack.c.h.b16 %v251
  %v1621 = vunpack.c.l.b16 %v252
  %v1622 = vunpack.c.h.b16 %v252
  %v1623 = vunpack.c.l.b16 %v253
  %v1624 = vunpack.c.h.b16 %v253
  %v1625 = vunpack.c.l.b16 %v254
  %v1626 = vunpack.c.h.b16 %v254
  %v1627 = vunpack.c.l.b16 %v255
  %v1628 = vunpack.c.h.b16 %v255
  %v1629 = vunpack.c.l.b16 %v256
  %v1630 = vunpack.c.h.b16 %v256
  %v1631 = vunpack.c.l.b16 %v257
  %v1632 = vunpack.c.h.b16 %v257
  %v1633 = vunpack.c.l.b16 %v258
  %v1634 = vunpack.c.h.b16 %v258
  %v1635 = vunpack.c.l.b16 %v259
  %v1636 = vunpack.c.h.b16 %v259
  %v1637 = vunpack.c.l.b16 %v260
  %v1638 = vunpack.c.h.b16 %v260
  %v1639 = vunpack.c.l.b16 %v261
  %v1640 = vunpack.c.h.b16 %v261
  %v1641 = vunpack.c.l.b16 %v262
  %v1642 = vunpack.c.h.b16 %v262
  %v1643 = vunpack.c.l.b16 %v263
  %v1644 = vunpack.c.h.b16 %v263
  %v1645 = vunpack.c.l.b16 %v264
  %v1646 = vunpack.c.h.b16 %v264
  %v1647 = vunpack.c.l.b16 %v265
  %v1648 = vunpack.c.h.b16 %v265
  %v1649 = vunpack.c.l.b16 %v266
  %v1650 = vunpack.c.h.b16 %v266
  %v1651 = vunpack.c.l.b16 %v267
  %v1652 = vunpack.c.h.b16 %v267
  %v1653 = vunpack.c.l.b16 %v268
  %v1654 = vunpack.c.h.b16 %v268
  %v1655 = vunpack.c.l.b16 %v269
  %v1656 = vunpack.c.h.b16 %v269
  %v1657 = vunpack.c.l.b16 %v270
  %v1658 = vunpack.c.h.b16 %v270
  %v1659 = vunpack.c.l.b16 %v271
  %v1660 = vunpack.c.h.b16 %v271
  %v1661 = vunpack.c.l.b16 %v272
  %v1662 = vunpack.c.h.b16 %v272
  %v1663 = vunpack.c.l.b16 %v273
  %v1664 = vunpack.c.h.b16 %v273
  %v1665 = vunpack.c.l.b16 %v274
  %v1666 = vunpack.c.h.b16 %v274
  %v1667 = vunpack.c.l.b16 %v275
  %v1668 = vunpack.c.h.b16 %v275
  %v1669 = vunpack.c.l.b16 %v276
  %v1670 = vunpack.c.h.b16 %v276
  %v1671 = vunpack.c.l.b16 %v277
  %v1672 = vunpack.c.h.b16 %v277
  %v1673 = vunpack.c.l.b16 %v278
  %v1674 = vunpack.c.h.b16 %v278
  %v1675 = vunpack.c.l.b16 %v279
  %v1676 = vunpack.c.h.b16 %v279
  %v1677 = vunpack.c.l.b16 %v280
  %v1678 = vunpack.c.h.b16 %v280
  %v1679 = vunpack.c.l.b16 %v281
  %v1680 = vunpack.c.h.b16 %v281
  %v1681 = vunpack.c.l.b16 %v282
  %v1682 = vunpack.c.h.b16 %v282
  %v1683 = vunpack.c.l.b16 %v283
  %v1684 = vunpack.c.h.b16 %v283
  %v1685 = vunpack.c.l.b16 %v284
  %v1686 = vunpack.c.h.b16 %v284
  %v1687 = vunpack.c.l.b16 %v285
  %v1688 = vunpack.c.h.b16 %v285
  %v1689 = vunpack.c.l.b16 %v286
  %v1690 = vunpack.c.h.b16 %v286
  %v1691 = vunpack.c.l.b16 %v287
  %v1692 = vunpack.c.h.b16 %v287
  %v1693 = vunpack.c.l.b16 %v288
  %v1694 = vunpack.c.h.b16 %v288
  %v1695 = vunpack.c.l.b16 %v289
  %v1696 = vunpack.c.h.b16 %v289
  %v1697 = vunpack.c.l.b16 %v290
  %v1698 = vunpack.c.h.b16 %v290
  %v1699 = vunpack.c.l.b16 %v291
  %v1700 = vunpack.c.h.b16 %v291
  %v1701 = vunpack.c.l.b16 %v292
  %v1702 = vunpack.c.h.b16 %v292
  %v1703 = vunpack.c.l.b16 %v293
  %v1704 = vunpack.c.h.b16 %v293
  %v1705 = vunpack.c.l.b16 %v294
  %v1706 = vunpack.c.h.b16 %v294
  %v1707 = vunpack.c.l.b16 %v295
  %v1708 = vunpack.c.h.b16 %v295
  %v1709 = vunpack.c.l.b16 %v296
  %v1710 = vunpack.c.h.b16 %v296
  %v1711 = vunpack.c.l.b16 %v297
  %v1712 = vunpack.c.h.b16 %v297
  %v1713 = vunpack.c.l.b16 %v298
  %v1714 = vunpack.c.h.b16 %v298
  %v1715 = vunpack.c.l.b16 %v299
  %v1716 = vunpack.c.h.b16 %v299
  %v1717 = vunpack.c.l.b16 %v300
  %v1718 = vunpack.c.h.b16 %v300
  %v1719 = vunpack.c.l.b16 %v301
  %v1720 = vunpack.c.h.b16 %v301
  %v1721 = vunpack.c.l.b16 %v302
  %v1722 = vunpack.c.h.b16 %v302
  %v1723 = vunpack.c.l.b16 %v303
  %v1724 = vunpack.c.l.b16 %v304
  %v1725 = vunpack.c.h.b16 %v304
  %v1726 = vunpack.c.l.b16 %v305
  %v1727 = vunpack.c.h.b16 %v305
  %v1728 = vunpack.c.l.b16 %v306
  %v1729 = vunpack.c.h.b16 %v306
  %v1730 = vunpack.c.l.b16 %v307
  %v1731 = vunpack.c.h.b16 %v307
  %v1732 = vunpack.c.l.b16 %v308
  %v1733 = vunpack.c.h.b16 %v308
  %v1734 = vunpack.c.l.b16 %v309
  %v1735 = vunpack.c.h.b16 %v309
  %v1736 = vunpack.c.l.b16 %v310
  %v1737 = vunpack.c.h.b16 %v310
  %v1738 = vunpack.c.l.b16 %v311
  %v1739 = vunpack.c.h.b16 %v311
  %v1740 = vunpack.c.l.b16 %v312
  %v1741 = vunpack.c.h.b16 %v312
  %v1742 = vunpack.c.l.b16 %v313
  %v1743 = vunpack.c.h.b16 %v313
  %v1744 = vunpack.c.l.b16 %v314
  %v1745 = vunpack.c.h.b16 %v314
  %v1746 = vunpack.c.l.b16 %v315
  %v1747 = vunpack.c.h.b16 %v315
  %v1748 = vunpack.c.l.b16 %v316
  %v1749 = vunpack.c.h.b16 %v316
  %v1750 = vunpack.c.l.b16 %v317
  %v1751 = vunpack.c.h.b16 %v317
  %v1752 = vunpack.c.l.b16 %v318
  %v1753 = vunpack.c.h.b16 %v318
  %v1754 = vunpack.c.l.b16 %v319
  %v1755 = vunpack.c.h.b16 %v319
  %v1756 = vunpack.c.l.b16 %v320
  %v1757 = vunpack.c.h.b16 %v320
  %v1758 = vunpack.c.l.b16 %v321
  %v1759 = vunpack.c.h.b16 %v321
  %v1760 = vunpack.c.l.b16 %v322
  %v1761 = vunpack.c.h.b16 %v322
  %v1762 = vunpack.c.l.b16 %v323
  %v1763 = vunpack.c.h.b16 %v323
  %v1764 = vunpack.c.l.b16 %v324
  %v1765 = vunpack.c.h.b16 %v324
  %v1766 = vunpack.c.l.b16 %v325
  %v1767 = vunpack.c.h.b16 %v325
  %v1768 = vunpack.c.l.b16 %v326
  %v1769 = vunpack.c.h.b16 %v326
  %v1770 = vunpack.c.l.b16 %v327
  %v1771 = vunpack.c.h.b16 %v327
  %v1772 = vunpack.c.l.b16 %v328
  %v1773 = vunpack.c.h.b16 %v328
  %v1774 = vunpack.c.l.b16 %v329
  %v1775 = vunpack.c.h.b16 %v329
  %v1776 = vunpack.c.l.b16 %v330
  %v1777 = vunpack.c.h.b16 %v330
  %v1778 = vunpack.c.l.b16 %v331
  %v1779 = vunpack.c.h.b16 %v331
  %v1780 = vunpack.c.l.b16 %v332
  %v1781 = vunpack.c.h.b16 %v332
  %v1782 = vunpack.c.l.b16 %v333
  %v1783 = vunpack.c.h.b16 %v333
  %v1784 = vunpack.c.l.b16 %v334
  %v1785 = vunpack.c.h.b16 %v334
  %v1786 = vunpack.c.l.b16 %v335
  %v1787 = vunpack.c.h.b16 %v335
  %v1788 = vunpack.c.l.b16 %v336
  %v1789 = vunpack.c.h.b16 %v336
  %v1790 = vunpack.c.l.b16 %v337
  %v1791 = vunpack.c.h.b16 %v337
  %v1792 = vunpack.c.l.b16 %v338
  %v1793 = vunpack.c.h.b16 %v338
  %v1794 = vunpack.c.l.b16 %v339
  %v1795 = vunpack.c.h.b16 %v339
  %v1796 = vunpack.c.l.b16 %v340
  %v1797 = vunpack.c.h.b16 %v340
  %v1798 = vunpack.c.l.b16 %v341
  %v1799 = vunpack.c.h.b16 %v341
  %v1800 = vunpack.c.l.b16 %v342
  %v1801 = vunpack.c.h.b16 %v342
  %v1802 = vunpack.c.l.b16 %v343
  %v1803 = vunpack.c.h.b16 %v343
  %v1804 = vunpack.c.l.b16 %v344
  %v1805 = vunpack.c.h.b16 %v344
  %v1806 = vunpack.c.l.b16 %v345
  %v1807 = vunpack.c.h.b16 %v345
  %v1808 = vunpack.c.l.b16 %v346
  %v1809 = vunpack.c.h.b16 %v346
  %v1810 = vunpack.c.l.b16 %v347
  %v1811 = vunpack.c.h.b16 %v347
  %v1812 = vunpack.c.l.b16 %v348
  %v1813 = vunpack.c.h.b16 %v348
  %v1814 = vunpack.c.l.b16 %v349
  %v1815 = vunpack.c.h.b16 %v349
  %v1816 = vunpack.c.l.b16 %v350
  %v1817 = vunpack.c.h.b16 %v350
  %v1818 = vunpack.c.l.b16 %v351
  %v1819 = vunpack.c.h.b16 %v351
  %v1820 = vunpack.c.l.b16 %v352
  %v1821 = vunpack.c.h.b16 %v352
  %v1822 = vunpack.c.l.b16 %v353
  %v1823 = vunpack.c.h.b16 %v353
  %v1824 = vunpack.c.l.b16 %v354
  %v1825 = vunpack.c.h.b16 %v354
  %v1826 = vunpack.c.l.b16 %v355
  %v1827 = vunpack.c.h.b16 %v355
  %v1828 = vunpack.c.l.b16 %v356
  %v1829 = vunpack.c.h.b16 %v356
  %v1830 = vunpack.c.l.b16 %v357
  %v1831 = vunpack.c.h.b16 %v357
  %v1832 = vunpack.c.l.b16 %v358
  %v1833 = vunpack.c.h.b16 %v358
  %v1834 = vunpack.c.l.b16 %v359
  %v1835 = vunpack.c.h.b16 %v359
  %v1836 = vunpack.c.l.b16 %v360
  %v1837 = vunpack.c.l.b16 %v361
  %v1838 = vunpack.c.h.b16 %v361
  %v1839 = vunpack.c.l.b16 %v362
  %v1840 = vunpack.c.h.b16 %v362
  %v1841 = vunpack.c.l.b16 %v363
  %v1842 = vunpack.c.h.b16 %v363
  %v1843 = vunpack.c.l.b16 %v364
  %v1844 = vunpack.c.h.b16 %v364
  %v1845 = vunpack.c.l.b16 %v365
  %v1846 = vunpack.c.h.b16 %v365
  %v1847 = vunpack.c.l.b16 %v366
  %v1848 = vunpack.c.h.b16 %v366
  %v1849 = vunpack.c.l.b16 %v367
  %v1850 = vunpack.c.h.b16 %v367
  %v1851 = vunpack.c.l.b16 %v368
  %v1852 = vunpack.c.h.b16 %v368
  %v1853 = vunpack.c.l.b16 %v369
  %v1854 = vunpack.c.h.b16 %v369
  %v1855 = vunpack.c.l.b16 %v370
  %v1856 = vunpack.c.h.b16 %v370
  %v1857 = vunpack.c.l.b16 %v371
  %v1858 = vunpack.c.h.b16 %v371
  %v1859 = vunpack.c.l.b16 %v372
  %v1860 = vunpack.c.h.b16 %v372
  %v1861 = vunpack.c.l.b16 %v373
  %v1862 = vunpack.c.h.b16 %v373
  %v1863 = vunpack.c.l.b16 %v374
  %v1864 = vunpack.c.h.b16 %v374
  %v1865 = vunpack.c.l.b16 %v375
  %v1866 = vunpack.c.h.b16 %v375
  %v1867 = vunpack.c.l.b16 %v376
  %v1868 = vunpack.c.h.b16 %v376
  %v1869 = vunpack.c.l.b16 %v377
  %v1870 = vunpack.c.h.b16 %v377
  %v1871 = vunpack.c.l.b16 %v378
  %v1872 = vunpack.c.h.b16 %v378
  %v1873 = vunpack.c.l.b16 %v379
  %v1874 = vunpack.c.h.b16 %v379
  %v1875 = vunpack.c.l.b16 %v380
  %v1876 = vunpack.c.h.b16 %v380
  %v1877 = vunpack.c.l.b16 %v381
  %v1878 = vunpack.c.h.b16 %v381
  %v1879 = vunpack.c.l.b16 %v382
  %v1880 = vunpack.c.h.b16 %v382
  %v1881 = vunpack.c.l.b16 %v383
  %v1882 = vunpack.c.h.b16 %v383
  %v1883 = vunpack.c.l.b16 %v384
  %v1884 = vunpack.c.h.b16 %v384
  %v1885 = vunpack.c.l.b16 %v385
  %v1886 = vunpack.c.h.b16 %v385
  %v1887 = vunpack.c.l.b16 %v386
  %v1888 = vunpack.c.h.b16 %v386
  %v1889 = vunpack.c.l.b16 %v387
  %v1890 = vunpack.c.h.b16 %v387
  %v1891 = vunpack.c.l.b16 %v388
  %v1892 = vunpack.c.h.b16 %v388
  %v1893 = vunpack.c.l.b16 %v389
  %v1894 = vunpack.c.h.b16 %v389
  %v1895 = vunpack.c.l.b16 %v390
  %v1896 = vunpack.c.h.b16 %v390
  %v1897 = vunpack.c.l.b16 %v391
  %v1898 = vunpack.c.h.b16 %v391
  %v1899 = vunpack.c.l.b16 %v392
  %v1900 = vunpack.c.h.b16 %v392
  %v1901 = vunpack.c.l.b16 %v393
  %v1902 = vunpack.c.h.b16 %v393
  %v1903 = vunpack.c.l.b16 %v394
  %v1904 = vunpack.c.h.b16 %v394
  %v1905 = vunpack.c.l.b16 %v395
  %v1906 = vunpack.c.h.b16 %v395
  %v1907 = vunpack.c.l.b16 %v396
  %v1908 = vunpack.c.h.b16 %v396
  %v1909 = vunpack.c.l.b16 %v397
  %v1910 = vunpack.c.h.b16 %v397
  %v1911 = vunpack.c.l.b16 %v398
  %v1912 = vunpack.c.h.b16 %v398
  %v1913 = vunpack.c.l.b16 %v399
  %v1914 = vunpack.c.h.b16 %v399
  %v1915 = vunpack.c.l.b16 %v400
  %v1916 = vunpack.c.h.b16 %v400
  %v1917 = vunpack.c.l.b16 %v401
  %v1918 = vunpack.c.h.b16 %v401
  %v1919 = vunpack.c.l.b16 %v402
  %v1920 = vunpack.c.h.b16 %v402
  %v1921 = vunpack.c.l.b16 %v403
  %v1922 = vunpack.c.h.b16 %v403
  %v1923 = vunpack.c.l.b16 %v404
  %v1924 = vunpack.c.h.b16 %v404
  %v1925 = vunpack.c.l.b16 %v405
  %v1926 = vunpack.c.h.b16 %v405
  %v1927 = vunpack.c.l.b16 %v406
  %v1928 = vunpack.c.h.b16 %v406
  %v1929 = vunpack.c.l.b16 %v407
  %v1930 = vunpack.c.h.b16 %v407
  %v1931 = vunpack.c.l.b16 %v408
  %v1932 = vunpack.c.h.b16 %v408
  %v1933 = vunpack.c.l.b16 %v409
  %v1934 = vunpack.c.h.b16 %v409
  %v1935 = vunpack.c.l.b16 %v410
  %v1936 = vunpack.c.h.b16 %v410
  %v1937 = vunpack.c.l.b16 %v411
  %v1938 = vunpack.c.h.b16 %v411
  %v1939 = vunpack.c.l.b16 %v412
  %v1940 = vunpack.c.h.b16 %v412
  %v1941 = vunpack.c.l.b16 %v413
  %v1942 = vunpack.c.h.b16 %v413
  %v1943 = vunpack.c.l.b16 %v414
  %v1944 = vunpack.c.h.b16 %v414
  %v1945 = vunpack.c.l.b16 %v415
  %v1946 = vunpack.c.h.b16 %v415
  %v1947 = vunpack.c.l.b16 %v416
  %v1948 = vunpack.c.h.b16 %v416
  %v1949 = vunpack.c.l.b16 %v417
  %v1950 = vunpack.c.l.b16 %v418
  %v1951 = vunpack.c.h.b16 %v418
  %v1952 = vunpack.c.l.b16 %v419
  %v1953 = vunpack.c.h.b16 %v419
  %v1954 = vunpack.c.l.b16 %v420
  %v1955 = vunpack.c.h.b16 %v420
  %v1956 = vunpack.c.l.b16 %v421
  %v1957 = vunpack.c.h.b16 %v421
  %v1958 = vunpack.c.l.b16 %v422
  %v1959 = vunpack.c.h.b16 %v422
  %v1960 = vunpack.c.l.b16 %v423
  %v1961 = vunpack.c.h.b16 %v423
  %v1962 = vunpack.c.l.b16 %v424
  %v1963 = vunpack.c.h.b16 %v424
  %v1964 = vunpack.c.l.b16 %v425
  %v1965 = vunpack.c.h.b16 %v425
  %v1966 = vunpack.c.l.b16 %v426
  %v1967 = vunpack.c.h.b16 %v426
  %v1968 = vunpack.c.l.b16 %v427
  %v1969 = vunpack.c.h.b16 %v427
  %v1970 = vunpack.c.l.b16 %v428
  %v1971 = vunpack.c.h.b16 %v428
  %v1972 = vunpack.c.l.b16 %v429
  %v1973 = vunpack.c.h.b16 %v429
  %v1974 = vunpack.c.l.b16 %v430
  %v1975 = vunpack.c.h.b16 %v430
  %v1976 = vunpack.c.l.b16 %v431
  %v1977 = vunpack.c.h.b16 %v431
  %v1978 = vunpack.c.l.b16 %v432
  %v1979 = vunpack.c.h.b16 %v432
  %v1980 = vunpack.c.l.b16 %v433
  %v1981 = vunpack.c.h.b16 %v433
  %v1982 = vunpack.c.l.b16 %v434
  %v1983 = vunpack.c.h.b16 %v434
  %v1984 = vunpack.c.l.b16 %v435
  %v1985 = vunpack.c.h.b16 %v435
  %v1986 = vunpack.c.l.b16 %v436
  %v1987 = vunpack.c.h.b16 %v436
  %v1988 = vunpack.c.l.b16 %v437
  %v1989 = vunpack.c.h.b16 %v437
  %v1990 = vunpack.c.l.b16 %v438
  %v1991 = vunpack.c.h.b16 %v438
  %v1992 = vunpack.c.l.b16 %v439
  %v1993 = vunpack.c.h.b16 %v439
  %v1994 = vunpack.c.l.b16 %v440
  %v1995 = vunpack.c.h.b16 %v440
  %v1996 = vunpack.c.l.b16 %v441
  %v1997 = vunpack.c.h.b16 %v441
  %v1998 = vunpack.c.l.b16 %v442
  %v1999 = vunpack.c.h.b16 %v442
  %v2000 = vunpack.c.l.b16 %v443
  %v2001 = vunpack.c.h.b16 %v443
  %v2002 = vunpack.c.l.b16 %v444
  %v2003 = vunpack.c.h.b16 %v444
  %v2004 = vunpack.c.l.b16 %v445
  %v2005 = vunpack.c.h.b16 %v445
  %v2006 = vunpack.c.l.b16 %v446
  %v2007 = vunpack.c.h.b16 %v446
  %v2008 = vunpack.c.l.b16 %v447
  %v2009 = vunpack.c.h.b16 %v447
  %v2010 = vunpack.c.l.b16 %v448
  %v2011 = vunpack.c.h.b16 %v448
  %v2012 = vunpack.c.l.b16 %v449
  %v2013 = vunpack.c.h.b16 %v449
  %v2014 = vunpack.c.l.b16 %v450
  %v2015 = vunpack.c.h.b16 %v450
  %v2016 = vunpack.c.l.b16 %v451
  %v2017 = vunpack.c.h.b16 %v451
  %v2018 = vunpack.c.l.b16 %v452
  %v2019 = vunpack.c.h.b16 %v452
  %v2020 = vunpack.c.l.b16 %v453
  %v2021 = vunpack.c.h.b16 %v453
  %v2022 = vunpack.c.l.b16 %v454
  %v2023 = vunpack.c.h.b16 %v454
  %v2024 = vunpack.c.l.b16 %v455
  %v2025 = vunpack.c.h.b16 %v455
  %v2026 = vunpack.c.l.b16 %v456
  %v2027 = vunpack.c.h.b16 %v456
  %v2028 = vunpack.c.l.b16 %v457
  %v2029 = vunpack.c.h.b16 %v457
  %v2030 = vunpack.c.l.b16 %v458
  %v2031 = vunpack.c.h.b16 %v458
  %v2032 = vunpack.c.l.b16 %v459
  %v2033 = vunpack.c.h.b16 %v459
  %v2034 = vunpack.c.l.b16 %v460
  %v2035 = vunpack.c.h.b16 %v460
  %v2036 = vunpack.c.l.b16 %v461
  %v2037 = vunpack.c.h.b16 %v461
  %v2038 = vunpack.c.l.b16 %v462
  %v2039 = vunpack.c.h.b16 %v462
  %v2040 = vunpack.c.l.b16 %v463
  %v2041 = vunpack.c.h.b16 %v463
  %v2042 = vunpack.c.l.b16 %v464
  %v2043 = vunpack.c.h.b16 %v464
  %v2044 = vunpack.c.l.b16 %v465
  %v2045 = vunpack.c.h.b16 %v465
  %v2046 = vunpack.c.l.b16 %v466
  %v2047 = vunpack.c.h.b16 %v466
  %v2048 = vunpack.c.l.b16 %v467
  %v2049 = vunpack.c.h.b16 %v467
  %v2050 = vunpack.c.l.b16 %v468
  %v2051 = vunpack.c.h.b16 %v468
  %v2052 = vunpack.c.l.b16 %v469
  %v2053 = vunpack.c.h.b16 %v469
  %v2054 = vunpack.c.l.b16 %v470
  %v2055 = vunpack.c.h.b16 %v470
  %v2056 = vunpack.c.l.b16 %v471
  %v2057 = vunpack.c.h.b16 %v471
  %v2058 = vunpack.c.l.b16 %v472
  %v2059 = vunpack.c.h.b16 %v472
  %v2060 = vunpack.c.l.b16 %v473
  %v2061 = vunpack.c.h.b16 %v473
  %v2062 = vunpack.c.l.b16 %v474
  %v2063 = vunpack.c.l.b16 %v475
  %v2064 = vunpack.c.h.b16 %v475
  %v2065 = vunpack.c.l.b16 %v476
  %v2066 = vunpack.c.h.b16 %v476
  %v2067 = vunpack.c.l.b16 %v477
  %v2068 = vunpack.c.h.b16 %v477
  %v2069 = vunpack.c.l.b16 %v478
  %v2070 = vunpack.c.h.b16 %v478
  %v2071 = vunpack.c.l.b16 %v479
  %v2072 = vunpack.c.h.b16 %v479
  %v2073 = vunpack.c.l.b16 %v480
  %v2074 = vunpack.c.h.b16 %v480
  %v2075 = vunpack.c.l.b16 %v481
  %v2076 = vunpack.c.h.b16 %v481
  %v2077 = vunpack.c.l.b16 %v482
  %v2078 = vunpack.c.h.b16 %v482
  %v2079 = vunpack.c.l.b16 %v483
  %v2080 = vunpack.c.h.b16 %v483
  %v2081 = vunpack.c.l.b16 %v484
  %v2082 = vunpack.c.h.b16 %v484
  %v2083 = vunpack.c.l.b16 %v485
  %v2084 = vunpack.c.h.b16 %v485
  %v2085 = vunpack.c.l.b16 %v486
  %v2086 = vunpack.c.h.b16 %v486
  %v2087 = vunpack.c.l.b16 %v487
  %v2088 = vunpack.c.h.b16 %v487
  %v2089 = vunpack.c.l.b16 %v488
  %v2090 = vunpack.c.h.b16 %v488
  %v2091 = vunpack.c.l.b16 %v489
  %v2092 = vunpack.c.h.b16 %v489
  %v2093 = vunpack.c.l.b16 %v490
  %v2094 = vunpack.c.h.b16 %v490
  %v2095 = vunpack.c.l.b16 %v491
  %v2096 = vunpack.c.h.b16 %v491
  %v2097 = vunpack.c.l.b16 %v492
  %v2098 = vunpack.c.h.b16 %v492
  %v2099 = vunpack.c.l.b16 %v493
  %v2100 = vunpack.c.h.b16 %v493
  %v2101 = vunpack.c.l.b16 %v494
  %v2102 = vunpack.c.h.b16 %v494
  %v2103 = vunpack.c.l.b16 %v495
  %v2104 = vunpack.c.h.b16 %v495
  %v2105 = vunpack.c.l.b16 %v496
  %v2106 = vunpack.c.h.b16 %v496
  %v2107 = vunpack.c.l.b16 %v497
  %v2108 = vunpack.c.h.b16 %v497
  %v2109 = vunpack.c.l.b16 %v498
  %v2110 = vunpack.c.h.b16 %v498
  %v2111 = vunpack.c.l.b16 %v499
  %v2112 = vunpack.c.h.b16 %v499
  %v2113 = vunpack.c.l.b16 %v500
  %v2114 = vunpack.c.h.b16 %v500
  %v2115 = vunpack.c.l.b16 %v501
  %v2116 = vunpack.c.h.b16 %v501
  %v2117 = vunpack.c.l.b16 %v502
  %v2118 = vunpack.c.h.b16 %v502
  %v2119 = vunpack.c.l.b16 %v503
  %v2120 = vunpack.c.h.b16 %v503
  %v2121 = vunpack.c.l.b16 %v504
  %v2122 = vunpack.c.h.b16 %v504
  %v2123 = vunpack.c.l.b16 %v505
  %v2124 = vunpack.c.h.b16 %v505
  %v2125 = vunpack.c.l.b16 %v506
  %v2126 = vunpack.c.h.b16 %v506
  %v2127 = vunpack.c.l.b16 %v507
  %v2128 = vunpack.c.h.b16 %v507
  %v2129 = vunpack.c.l.b16 %v508
  %v2130 = vunpack.c.h.b16 %v508
  %v2131 = vunpack.c.l.b16 %v509
  %v2132 = vunpack.c.h.b16 %v509
  %v2133 = vunpack.c.l.b16 %v510
  %v2134 = vunpack.c.h.b16 %v510
  %v2135 = vunpack.c.l.b16 %v511
  %v2136 = vunpack.c.h.b16 %v511
  %v2137 = vunpack.c.l.b16 %v512
  %v2138 = vunpack.c.h.b16 %v512
  %v2139 = vunpack.c.l.b16 %v513
  %v2140 = vunpack.c.h.b16 %v513
  %v2141 = vunpack.c.l.b16 %v514
  %v2142 = vunpack.c.h.b16 %v514
  %v2143 = vunpack.c.l.b16 %v515
  %v2144 = vunpack.c.h.b16 %v515
  %v2145 = vunpack.c.l.b16 %v516
  %v2146 = vunpack.c.h.b16 %v516
  %v2147 = vunpack.c.l.b16 %v517
  %v2148 = vunpack.c.h.b16 %v517
  %v2149 = vunpack.c.l.b16 %v518
  %v2150 = vunpack.c.h.b16 %v518
  %v2151 = vunpack.c.l.b16 %v519
  %v2152 = vunpack.c.h.b16 %v519
  %v2153 = vunpack.c.l.b16 %v520
  %v2154 = vunpack.c.h.b16 %v520
  %v2155 = vunpack.c.l.b16 %v521
  %v2156 = vunpack.c.h.b16 %v521
  %v2157 = vunpack.c.l.b16 %v522
  %v2158 = vunpack.c.h.b16 %v522
  %v2159 = vunpack.c.l.b16 %v523
  %v2160 = vunpack.c.h.b16 %v523
  %v2161 = vunpack.c.l.b16 %v524
  %v2162 = vunpack.c.h.b16 %v524
  %v2163 = vunpack.c.l.b16 %v525
  %v2164 = vunpack.c.h.b16 %v525
  %v2165 = vunpack.c.l.b16 %v526
  %v2166 = vunpack.c.h.b16 %v526
  %v2167 = vunpack.c.l.b16 %v527
  %v2168 = vunpack.c.h.b16 %v527
  %v2169 = vunpack.c.l.b16 %v528
  %v2170 = vunpack.c.h.b16 %v528
  %v2171 = vunpack.c.l.b16 %v529
  %v2172 = vunpack.c.h.b16 %v529
  %v2173 = vunpack.c.l.b16 %v530
  %v2174 = vunpack.c.h.b16 %v530
  %v2175 = vunpack.c.l.b16 %v531
  %v2176 = vunpack.c.l.b16 %v532
  %v2177 = vunpack.c.h.b16 %v532
  %v2178 = vunpack.c.l.b16 %v533
  %v2179 = vunpack.c.h.b16 %v533
  %v2180 = vunpack.c.l.b16 %v534
  %v2181 = vunpack.c.h.b16 %v534
  %v2182 = vunpack.c.l.b16 %v535
  %v2183 = vunpack.c.h.b16 %v535
  %v2184 = vunpack.c.l.b16 %v536
  %v2185 = vunpack.c.h.b16 %v536
  %v2186 = vunpack.c.l.b16 %v537
  %v2187 = vunpack.c.h.b16 %v537
  %v2188 = vunpack.c.l.b16 %v538
  %v2189 = vunpack.c.h.b16 %v538
  %v2190 = vunpack.c.l.b16 %v539
  %v2191 = vunpack.c.h.b16 %v539
  %v2192 = vunpack.c.l.b16 %v540
  %v2193 = vunpack.c.h.b16 %v540
  %v2194 = vunpack.c.l.b16 %v541
  %v2195 = vunpack.c.h.b16 %v541
  %v2196 = vunpack.c.l.b16 %v542
  %v2197 = vunpack.c.h.b16 %v542
  %v2198 = vunpack.c.l.b16 %v543
  %v2199 = vunpack.c.h.b16 %v543
  %v2200 = vunpack.c.l.b16 %v544
  %v2201 = vunpack.c.h.b16 %v544
  %v2202 = vunpack.c.l.b16 %v545
  %v2203 = vunpack.c.h.b16 %v545
  %v2204 = vunpack.c.l.b16 %v546
  %v2205 = vunpack.c.h.b16 %v546
  %v2206 = vunpack.c.l.b16 %v547
  %v2207 = vunpack.c.h.b16 %v547
  %v2208 = vunpack.c.l.b16 %v548
  %v2209 = vunpack.c.h.b16 %v548
  %v2210 = vunpack.c.l.b16 %v549
  %v2211 = vunpack.c.h.b16 %v549
  %v2212 = vunpack.c.l.b16 %v550
  %v2213 = vunpack.c.h.b16 %v550
  %v2214 = vunpack.c.l.b16 %v551
  %v2215 = vunpack.c.h.b16 %v551
  %v2216 = vunpack.c.l.b16 %v552
  %v2217 = vunpack.c.h.b16 %v552
  %v2218 = vunpack.c.l.b16 %v553
  %v2219 = vunpack.c.h.b16 %v553
  %v2220 = vunpack.c.l.b16 %v554
  %v2221 = vunpack.c.h.b16 %v554
  %v2222 = vunpack.c.l.b16 %v555
  %v2223 = vunpack.c.h.b16 %v555
  %v2224 = vunpack.c.l.b16 %v556
  %v2225 = vunpack.c.h.b16 %v556
  %v2226 = vunpack.c.l.b16 %v557
  %v2227 = vunpack.c.h.b16 %v557
  %v2228 = vunpack.c.l.b16 %v558
  %v2229 = vunpack.c.h.b16 %v558
  %v2230 = vunpack.c.l.b16 %v559
  %v2231 = vunpack.c.h.b16 %v559
  %v2232 = vunpack.c.l.b16 %v560
  %v2233 = vunpack.c.h.b16 %v560
  %v2234 = vunpack.c.l.b16 %v561
  %v2235 = vunpack.c.h.b16 %v561
  %v2236 = vunpack.c.l.b16 %v562
  %v2237 = vunpack.c.h.b16 %v562
  %v2238 = vunpack.c.l.b16 %v563
  %v2239 = vunpack.c.h.b16 %v563
  %v2240 = vunpack.c.l.b16 %v564
  %v2241 = vunpack.c.h.b16 %v564
  %v2242 = vunpack.c.l.b16 %v565
  %v2243 = vunpack.c.h.b16 %v565
  %v2244 = vunpack.c.l.b16 %v566
  %v2245 = vunpack.c.h.b16 %v566
  %v2246 = vunpack.c.l.b16 %v567
  %v2247 = vunpack.c.h.b16 %v567
  %v2248 = vunpack.c.l.b16 %v568
  %v2249 = vunpack.c.h.b16 %v568
  %v2250 = vunpack.c.l.b16 %v569
  %v2251 = vunpack.c.h.b16 %v569
  %v2252 = vunpack.c.l.b16 %v570
  %v2253 = vunpack.c.h.b16 %v570
  %v2254 = vunpack.c.l.b16 %v571
  %v2255 = vunpack.c.h.b16 %v571
  %v2256 = vunpack.c.l.b16 %v572
  %v2257 = vunpack.c.h.b16 %v572
  %v2258 = vunpack.c.l.b16 %v573
  %v2259 = vunpack.c.h.b16 %v573
  %v2260 = vunpack.c.l.b16 %v574
  %v2261 = vunpack.c.h.b16 %v574
  %v2262 = vunpack.c.l.b16 %v575
  %v2263 = vunpack.c.h.b16 %v575
  %v2264 = vunpack.c.l.b16 %v576
  %v2265 = vunpack.c.h.b16 %v576
  %v2266 = vunpack.c.l.b16 %v577
  %v2267 = vunpack.c.h.b16 %v577
  %v2268 = vunpack.c.l.b16 %v578
  %v2269 = vunpack.c.h.b16 %v578
  %v2270 = vunpack.c.l.b16 %v579
  %v2271 = vunpack.c.h.b16 %v579
  %v2272 = vunpack.c.l.b16 %v580
  %v2273 = vunpack.c.h.b16 %v580
  %v2274 = vunpack.c.l.b16 %v581
  %v2275 = vunpack.c.h.b16 %v581
  %v2276 = vunpack.c.l.b16 %v582
  %v2277 = vunpack.c.h.b16 %v582
  %v2278 = vunpack.c.l.b16 %v583
  %v2279 = vunpack.c.h.b16 %v583
  %v2280 = vunpack.c.l.b16 %v584
  %v2281 = vunpack.c.h.b16 %v584
  %v2282 = vunpack.c.l.b16 %v585
  %v2283 = vunpack.c.h.b16 %v585
  %v2284 = vunpack.c.l.b16 %v586
  %v2285 = vunpack.c.h.b16 %v586
  %v2286 = vunpack.c.l.b16 %v587
  %v2287 = vunpack.c.h.b16 %v587
  %v2288 = vunpack.c.l.b16 %v588
  %v2289 = vpack.c.b16 %v1272, %v1159
  %v2290 = vpack.c.b16 %v1273, %v1160
  %v2291 = vpack.c.b16 %v1274, %v1161
  %v2292 = vpack.c.b16 %v1275, %v1162
  %v2293 = vpack.c.b16 %v1276, %v1163
  %v2294 = vpack.c.b16 %v1277, %v1164
  %v2295 = vpack.c.b16 %v1278, %v1165
  %v2296 = vpack.c.b16 %v1279, %v1166
  %v2297 = vpack.c.b16 %v1280, %v1167
  %v2298 = vpack.c.b16 %v1281, %v1168
  %v2299 = vpack.c.b16 %v1282, %v1169
  %v2300 = vpack.c.b16 %v1283, %v1170
  %v2301 = vpack.c.b16 %v1284, %v1171
  %v2302 = vpack.c.b16 %v1285, %v1172
  %v2303 = vpack.c.b16 %v1286, %v1173
  %v2304 = vpack.c.b16 %v1287, %v1174
  %v2305 = vpack.c.b16 %v1288, %v1175
  %v2306 = vpack.c.b16 %v1289, %v1176
  %v2307 = vpack.c.b16 %v1290, %v1177
  %v2308 = vpack.c.b16 %v1291, %v1178
  %v2309 = vpack.c.b16 %v1292, %v1179
  %v2310 = vpack.c.b16 %v1293, %v1180
  %v2311 = vpack.c.b16 %v1294, %v1181
  %v2312 = vpack.c.b16 %v1295, %v1182
  %v2313 = vpack.c.b16 %v1296, %v1183
  %v2314 = vpack.c.b16 %v1297, %v1184
  %v2315 = vpack.c.b16 %v1298, %v1185
  %v2316 = vpack.c.b16 %v1299, %v1186
  %v2317 = vpack.c.b16 %v1300, %v1187
  %v2318 = vpack.c.b16 %v1301, %v1188
  %v2319 = vpack.c.b16 %v1302, %v1189
  %v2320 = vpack.c.b16 %v1303, %v1190
  %v2321 = vpack.c.b16 %v1304, %v1191
  %v2322 = vpack.c.b16 %v1305, %v1192
  %v2323 = vpack.c.b16 %v1306, %v1193
  %v2324 = vpack.c.b16 %v1307, %v1194
  %v2325 = vpack.c.b16 %v1308, %v1195
  %v2326 = vpack.c.b16 %v1309, %v1196
  %v2327 = vpack.c.b16 %v1310, %v1197
  %v2328 = vpack.c.b16 %v1311, %v1198
  %v2329 = vpack.c.b16 %v1312, %v1199
  %v2330 = vpack.c.b16 %v1313, %v1200
  %v2331 = vpack.c.b16 %v1314, %v1201
  %v2332 = vpack.c.b16 %v1315, %v1202
  %v2333 = vpack.c.b16 %v1316, %v1203
  %v2334 = vpack.c.b16 %v1317, %v1204
  %v2335 = vpack.c.b16 %v1318, %v1205
  %v2336 = vpack.c.b16 %v1319, %v1206
  %v2337 = vpack.c.b16 %v1320, %v1207
  %v2338 = vpack.c.b16 %v1321, %v1208
  %v2339 = vpack.c.b16 %v1322, %v1209
  %v2340 = vpack.c.b16 %v1323, %v1210
  %v2341 = vpack.c.b16 %v1324, %v1211
  %v2342 = vpack.c.b16 %v1325, %v1212
  %v2343 = vpack.c.b16 %v1326, %v1213
  %v2344 = vpack.c.b16 %v1327, %v1214
  %v2345 = vpack.c.b16 %v1328, %v1215
  %v2346 = vpack.c.b16 %v1329, %v1216
  %v2347 = vpack.c.b16 %v1330, %v1217
  %v2348 = vpack.c.b16 %v1331, %v1218
  %v2349 = vpack.c.b16 %v1332, %v1219
  %v2350 = vpack.c.b16 %v1333, %v1220
  %v2351 = vpack.c.b16 %v1334, %v1221
  %v2352 = vpack.c.b16 %v1335, %v1222
  %v2353 = vpack.c.b16 %v1336, %v1223
  %v2354 = vpack.c.b16 %v1337, %v1224
  %v2355 = vpack.c.b16 %v1338, %v1225
  %v2356 = vpack.c.b16 %v1339, %v1226
  %v2357 = vpack.c.b16 %v1340, %v1227
  %v2358 = vpack.c.b16 %v1341, %v1228
  %v2359 = vpack.c.b16 %v1342, %v1229
  %v2360 = vpack.c.b16 %v1343, %v1230
  %v2361 = vpack.c.b16 %v1344, %v1231
  %v2362 = vpack.c.b16 %v1345, %v1232
  %v2363 = vpack.c.b16 %v1346, %v1233
  %v2364 = vpack.c.b16 %v1347, %v1234
  %v2365 = vpack.c.b16 %v1348, %v1235
  %v2366 = vpack.c.b16 %v1349, %v1236
  %v2367 = vpack.c.b16 %v1350, %v1237
  %v2368 = vpack.c.b16 %v1351, %v1238
  %v2369 = vpack.c.b16 %v1352, %v1239
  %v2370 = vpack.c.b16 %v1353, %v1240
  %v2371 = vpack.c.b16 %v1354, %v1241
  %v2372 = vpack.c.b16 %v1355, %v1242
  %v2373 = vpack.c.b16 %v1356, %v1243
  %v2374 = vpack.c.b16 %v1357, %v1244
  %v2375 = vpack.c.b16 %v1358, %v1245
  %v2376 = vpack.c.b16 %v1359, %v1246
  %v2377 = vpack.c.b16 %v1360, %v1247
  %v2378 = vpack.c.b16 %v1361, %v1248
  %v2379 = vpack.c.b16 %v1362, %v1249
  %v2380 = vpack.c.b16 %v1363, %v1250
  %v2381 = vpack.c.b16 %v1364, %v1251
  %v2382 = vpack.c.b16 %v1365, %v1252
  %v2383 = vpack.c.b16 %v1366, %v1253
  %v2384 = vpack.c.b16 %v1367, %v1254
  %v2385 = vpack.c.b16 %v1368, %v1255
  %v2386 = vpack.c.b16 %v1369, %v1256
  %v2387 = vpack.c.b16 %v1370, %v1257
  %v2388 = vpack.c.b16 %v1371, %v1258
  %v2389 = vpack.c.b16 %v1372, %v1259
  %v2390 = vpack.c.b16 %v1373, %v1260
  %v2391 = vpack.c.b16 %v1374, %v1261
  %v2392 = vpack.c.b16 %v1375, %v1262
  %v2393 = vpack.c.b16 %v1376, %v1263
  %v2394 = vpack.c.b16 %v1377, %v1264
  %v2395 = vpack.c.b16 %v1378, %v1265
  %v2396 = vpack.c.b16 %v1379, %v1266
  %v2397 = vpack.c.b16 %v1380, %v1267
  %v2398 = vpack.c.b16 %v1381, %v1268
  %v2399 = vpack.c.b16 %v1382, %v1269
  %v2400 = vpack.c.b16 %v1383, %v1270
  %v2401 = vpack.c.b16 %v1384, %v1271
  %v2402 = vpack.c.b16 %v1498, %v1385
  %v2403 = vpack.c.b16 %v1499, %v1386
  %v2404 = vpack.c.b16 %v1500, %v1387
  %v2405 = vpack.c.b16 %v1501, %v1388
  %v2406 = vpack.c.b16 %v1502, %v1389
  %v2407 = vpack.c.b16 %v1503, %v1390
  %v2408 = vpack.c.b16 %v1504, %v1391
  %v2409 = vpack.c.b16 %v1505, %v1392
  %v2410 = vpack.c.b16 %v1506, %v1393
  %v2411 = vpack.c.b16 %v1507, %v1394
  %v2412 = vpack.c.b16 %v1508, %v1395
  %v2413 = vpack.c.b16 %v1509, %v1396
  %v2414 = vpack.c.b16 %v1510, %v1397
  %v2415 = vpack.c.b16 %v1511, %v1398
  %v2416 = vpack.c.b16 %v1512, %v1399
  %v2417 = vpack.c.b16 %v1513, %v1400
  %v2418 = vpack.c.b16 %v1514, %v1401
  %v2419 = vpack.c.b16 %v1515, %v1402
  %v2420 = vpack.c.b16 %v1516, %v1403
  %v2421 = vpack.c.b16 %v1517, %v1404
  %v2422 = vpack.c.b16 %v1518, %v1405
  %v2423 = vpack.c.b16 %v1519, %v1406
  %v2424 = vpack.c.b16 %v1520, %v1407
  %v2425 = vpack.c.b16 %v1521, %v1408
  %v2426 = vpack.c.b16 %v1522, %v1409
  %v2427 = vpack.c.b16 %v1523, %v1410
  %v2428 = vpack.c.b16 %v1524, %v1411
  %v2429 = vpack.c.b16 %v1525, %v1412
  %v2430 = vpack.c.b16 %v1526, %v1413
  %v2431 = vpack.c.b16 %v1527, %v1414
  %v2432 = vpack.c.b16 %v1528, %v1415
  %v2433 = vpack.c.b16 %v1529, %v1416
  %v2434 = vpack.c.b16 %v1530, %v1417
  %v2435 = vpack.c.b16 %v1531, %v1418
  %v2436 = vpack.c.b16 %v1532, %v1419
  %v2437 = vpack.c.b16 %v1533, %v1420
  %v2438 = vpack.c.b16 %v1534, %v1421
  %v2439 = vpack.c.b16 %v1535, %v1422
  %v2440 = vpack.c.b16 %v1536, %v1423
  %v2441 = vpack.c.b16 %v1537, %v1424
  %v2442 = vpack.c.b16 %v1538, %v1425
  %v2443 = vpack.c.b16 %v1539, %v1426
  %v2444 = vpack.c.b16 %v1540, %v1427
  %v2445 = vpack.c.b16 %v1541, %v1428
  %v2446 = vpack.c.b16 %v1542, %v1429
  %v2447 = vpack.c.b16 %v1543, %v1430
  %v2448 = vpack.c.b16 %v1544, %v1431
  %v2449 = vpack.c.b16 %v1545, %v1432
  %v2450 = vpack.c.b16 %v1546, %v1433
  %v2451 = vpack.c.b16 %v1547, %v1434
  %v2452 = vpack.c.b16 %v1548, %v1435
  %v2453 = vpack.c.b16 %v1549, %v1436
  %v2454 = vpack.c.b16 %v1550, %v1437
  %v2455 = vpack.c.b16 %v1551, %v1438
  %v2456 = vpack.c.b16 %v1552, %v1439
  %v2457 = vpack.c.b16 %v1553, %v1440
  %v2458 = vpack.c.b16 %v1554, %v1441
  %v2459 = vpack.c.b16 %v1555, %v1442
  %v2460 = vpack.c.b16 %v1556, %v1443
  %v2461 = vpack.c.b16 %v1557, %v1444
  %v2462 = vpack.c.b16 %v1558, %v1445
  %v2463 = vpack.c.b16 %v1559, %v1446
  %v2464 = vpack.c.b16 %v1560, %v1447
  %v2465 = vpack.c.b16 %v1561, %v1448
  %v2466 = vpack.c.b16 %v1562, %v1449
  %v2467 = vpack.c.b16 %v1563, %v1450
  %v2468 = vpack.c.b16 %v1564, %v1451
  %v2469 = vpack.c.b16 %v1565, %v1452
  %v2470 = vpack.c.b16 %v1566, %v1453
  %v2471 = vpack.c.b16 %v1567, %v1454
  %v2472 = vpack.c.b16 %v1568, %v1455
  %v2473 = vpack.c.b16 %v1569, %v1456
  %v2474 = vpack.c.b16 %v1570, %v1457
  %v2475 = vpack.c.b16 %v1571, %v1458
  %v2476 = vpack.c.b16 %v1572, %v1459
  %v2477 = vpack.c.b16 %v1573, %v1460
  %v2478 = vpack.c.b16 %v1574, %v1461
  %v2479 = vpack.c.b16 %v1575, %v1462
  %v2480 = vpack.c.b16 %v1576, %v1463
  %v2481 = vpack.c.b16 %v1577, %v1464
  %v2482 = vpack.c.b16 %v1578, %v1465
  %v2483 = vpack.c.b16 %v1579, %v1466
  %v2484 = vpack.c.b16 %v1580, %v1467
  %v2485 = vpack.c.b16 %v1581, %v1468
  %v2486 = vpack.c.b16 %v1582, %v1469
  %v2487 = vpack.c.b16 %v1583, %v1470
  %v2488 = vpack.c.b16 %v1584, %v1471
  %v2489 = vpack.c.b16 %v1585, %v1472
  %v2490 = vpack.c.b16 %v1586, %v1473
  %v2491 = vpack.c.b16 %v1587, %v1474
  %v2492 = vpack.c.b16 %v1588, %v1475
  %v2493 = vpack.c.b16 %v1589, %v1476
  %v2494 = vpack.c.b16 %v1590, %v1477
  %v2495 = vpack.c.b16 %v1591, %v1478
  %v2496 = vpack.c.b16 %v1592, %v1479
  %v2497 = vpack.c.b16 %v1593, %v1480
  %v2498 = vpack.c.b16 %v1594, %v1481
  %v2499 = vpack.c.b16 %v1595, %v1482
  %v2500 = vpack.c.b16 %v1596, %v1483
  %v2501 = vpack.c.b16 %v1597, %v1484
  %v2502 = vpack.c.b16 %v1598, %v1485
  %v2503 = vpack.c.b16 %v1599, %v1486
  %v2504 = vpack.c.b16 %v1600, %v1487
  %v2505 = vpack.c.b16 %v1601, %v1488
  %v2506 = vpack.c.b16 %v1602, %v1489
  %v2507 = vpack.c.b16 %v1603, %v1490
  %v2508 = vpack.c.b16 %v1604, %v1491
  %v2509 = vpack.c.b16 %v1605, %v1492
  %v2510 = vpack.c.b16 %v1606, %v1493
  %v2511 = vpack.c.b16 %v1607, %v1494
  %v2512 = vpack.c.b16 %v1608, %v1495
  %v2513 = vpack.c.b16 %v1609, %v1496
  %v2514 = vpack.c.b16 %v1610, %v1497
  %v2515 = vpack.c.b16 %v1724, %v1611
  %v2516 = vpack.c.b16 %v1725, %v1612
  %v2517 = vpack.c.b16 %v1726, %v1613
  %v2518 = vpack.c.b16 %v1727, %v1614
  %v2519 = vpack.c.b16 %v1728, %v1615
  %v2520 = vpack.c.b16 %v1729, %v1616
  %v2521 = vpack.c.b16 %v1730, %v1617
  %v2522 = vpack.c.b16 %v1731, %v1618
  %v2523 = vpack.c.b16 %v1732, %v1619
  %v2524 = vpack.c.b16 %v1733, %v1620
  %v2525 = vpack.c.b16 %v1734, %v1621
  %v2526 = vpack.c.b16 %v1735, %v1622
  %v2527 = vpack.c.b16 %v1736, %v1623
  %v2528 = vpack.c.b16 %v1737, %v1624
  %v2529 = vpack.c.b16 %v1738, %v1625
  %v2530 = vpack.c.b16 %v1739, %v1626
  %v2531 = vpack.c.b16 %v1740, %v1627
  %v2532 = vpack.c.b16 %v1741, %v1628
  %v2533 = vpack.c.b16 %v1742, %v1629
  %v2534 = vpack.c.b16 %v1743, %v1630
  %v2535 = vpack.c.b16 %v1744, %v1631
  %v2536 = vpack.c.b16 %v1745, %v1632
  %v2537 = vpack.c.b16 %v1746, %v1633
  %v2538 = vpack.c.b16 %v1747, %v1634
  %v2539 = vpack.c.b16 %v1748, %v1635
  %v2540 = vpack.c.b16 %v1749, %v1636
  %v2541 = vpack.c.b16 %v1750, %v1637
  %v2542 = vpack.c.b16 %v1751, %v1638
  %v2543 = vpack.c.b16 %v1752, %v1639
  %v2544 = vpack.c.b16 %v1753, %v1640
  %v2545 = vpack.c.b16 %v1754, %v1641
  %v2546 = vpack.c.b16 %v1755, %v1642
  %v2547 = vpack.c.b16 %v1756, %v1643
  %v2548 = vpack.c.b16 %v1757, %v1644
  %v2549 = vpack.c.b16 %v1758, %v1645
  %v2550 = vpack.c.b16 %v1759, %v1646
  %v2551 = vpack.c.b16 %v1760, %v1647
  %v2552 = vpack.c.b16 %v1761, %v1648
  %v2553 = vpack.c.b16 %v1762, %v1649
  %v2554 = vpack.c.b16 %v1763, %v1650
  %v2555 = vpack.c.b16 %v1764, %v1651
  %v2556 = vpack.c.b16 %v1765, %v1652
  %v2557 = vpack.c.b16 %v1766, %v1653
  %v2558 = vpack.c.b16 %v1767, %v1654
  %v2559 = vpack.c.b16 %v1768, %v1655
  %v2560 = vpack.c.b16 %v1769, %v1656
  %v2561 = vpack.c.b16 %v1770, %v1657
  %v2562 = vpack.c.b16 %v1771, %v1658
  %v2563 = vpack.c.b16 %v1772, %v1659
  %v2564 = vpack.c.b16 %v1773, %v1660
  %v2565 = vpack.c.b16 %v1774, %v1661
  %v2566 = vpack.c.b16 %v1775, %v1662
  %v2567 = vpack.c.b16 %v1776, %v1663
  %v2568 = vpack.c.b16 %v1777, %v1664
  %v2569 = vpack.c.b16 %v1778, %v1665
  %v2570 = vpack.c.b16 %v1779, %v1666
  %v2571 = vpack.c.b16 %v1780, %v1667
  %v2572 = vpack.c.b16 %v1781, %v1668
  %v2573 = vpack.c.b16 %v1782, %v1669
  %v2574 = vpack.c.b16 %v1783, %v1670
  %v2575 = vpack.c.b16 %v1784, %v1671
  %v2576 = vpack.c.b16 %v1785, %v1672
  %v2577 = vpack.c.b16 %v1786, %v1673
  %v2578 = vpack.c.b16 %v1787, %v1674
  %v2579 = vpack.c.b16 %v1788, %v1675
  %v2580 = vpack.c.b16 %v1789, %v1676
  %v2581 = vpack.c.b16 %v1790, %v1677
  %v2582 = vpack.c.b16 %v1791, %v1678
  %v2583 = vpack.c.b16 %v1792, %v1679
  %v2584 = vpack.c.b16 %v1793, %v1680
  %v2585 = vpack.c.b16 %v1794, %v1681
  %v2586 = vpack.c.b16 %v1795, %v1682
  %v2587 = vpack.c.b16 %v1796, %v1683
  %v2588 = vpack.c.b16 %v1797, %v1684
  %v2589 = vpack.c.b16 %v1798, %v1685
  %v2590 = vpack.c.b16 %v1799, %v1686
  %v2591 = vpack.c.b16 %v1800, %v1687
  %v2592 = vpack.c.b16 %v1801, %v1688
  %v2593 = vpack.c.b16 %v1802, %v1689
  %v2594 = vpack.c.b16 %v1803, %v1690
  %v2595 = vpack.c.b16 %v1804, %v1691
  %v2596 = vpack.c.b16 %v1805, %v1692
  %v2597 = vpack.c.b16 %v1806, %v1693
  %v2598 = vpack.c.b16 %v1807, %v1694
  %v2599 = vpack.c.b16 %v1808, %v1695
  %v2600 = vpack.c.b16 %v1809, %v1696
  %v2601 = vpack.c.b16 %v1810, %v1697
  %v2602 = vpack.c.b16 %v1811, %v1698
  %v2603 = vpack.c.b16 %v1812, %v1699
  %v2604 = vpack.c.b16 %v1813, %v1700
  %v2605 = vpack.c.b16 %v1814, %v1701
  %v2606 = vpack.c.b16 %v1815, %v1702
  %v2607 = vpack.c.b16 %v1816, %v1703
  %v2608 = vpack.c.b16 %v1817, %v1704
  %v2609 = vpack.c.b16 %v1818, %v1705
  %v2610 = vpack.c.b16 %v1819, %v1706
  %v2611 = vpack.c.b16 %v1820, %v1707
  %v2612 = vpack.c.b16 %v1821, %v1708
  %v2613 = vpack.c.b16 %v1822, %v1709
  %v2614 = vpack.c.b16 %v1823, %v1710
  %v2615 = vpack.c.b16 %v1824, %v1711
  %v2616 = vpack.c.b16 %v1825, %v1712
  %v2617 = vpack.c.b16 %v1826, %v1713
  %v2618 = vpack.c.b16 %v1827, %v1714
  %v2619 = vpack.c.b16 %v1828, %v1715
  %v2620 = vpack.c.b16 %v1829, %v1716
  %v2621 = vpack.c.b16 %v1830, %v1717
  %v2622 = vpack.c.b16 %v1831, %v1718
  %v2623 = vpack.c.b16 %v1832, %v1719
  %v2624 = vpack.c.b16 %v1833, %v1720
  %v2625 = vpack.c.b16 %v1834, %v1721
  %v2626 = vpack.c.b16 %v1835, %v1722
  %v2627 = vpack.c.b16 %v1836, %v1723
  %v2628 = vpack.c.b16 %v1950, %v1837
  %v2629 = vpack.c.b16 %v1951, %v1838
  %v2630 = vpack.c.b16 %v1952, %v1839
  %v2631 = vpack.c.b16 %v1953, %v1840
  %v2632 = vpack.c.b16 %v1954, %v1841
  %v2633 = vpack.c.b16 %v1955, %v1842
  %v2634 = vpack.c.b16 %v1956, %v1843
  %v2635 = vpack.c.b16 %v1957, %v1844
  %v2636 = vpack.c.b16 %v1958, %v1845
  %v2637 = vpack.c.b16 %v1959, %v1846
  %v2638 = vpack.c.b16 %v1960, %v1847
  %v2639 = vpack.c.b16 %v1961, %v1848
  %v2640 = vpack.c.b16 %v1962, %v1849
  %v2641 = vpack.c.b16 %v1963, %v1850
  %v2642 = vpack.c.b16 %v1964, %v1851
  %v2643 = vpack.c.b16 %v1965, %v1852
  %v2644 = vpack.c.b16 %v1966, %v1853
  %v2645 = vpack.c.b16 %v1967, %v1854
  %v2646 = vpack.c.b16 %v1968, %v1855
  %v2647 = vpack.c.b16 %v1969, %v1856
  %v2648 = vpack.c.b16 %v1970, %v1857
  %v2649 = vpack.c.b16 %v1971, %v1858
  %v2650 = vpack.c.b16 %v1972, %v1859
  %v2651 = vpack.c.b16 %v1973, %v1860
  %v2652 = vpack.c.b16 %v1974, %v1861
  %v2653 = vpack.c.b16 %v1975, %v1862
  %v2654 = vpack.c.b16 %v1976, %v1863
  %v2655 = vpack.c.b16 %v1977, %v1864
  %v2656 = vpack.c.b16 %v1978, %v1865
  %v2657 = vpack.c.b16 %v1979, %v1866
  %v2658 = vpack.c.b16 %v1980, %v1867
  %v2659 = vpack.c.b16 %v1981, %v1868
  %v2660 = vpack.c.b16 %v1982, %v1869
  %v2661 = vpack.c.b16 %v1983, %v1870
  %v2662 = vpack.c.b16 %v1984, %v1871
  %v2663 = vpack.c.b16 %v1985, %v1872
  %v2664 = vpack.c.b16 %v1986, %v1873
  %v2665 = vpack.c.b16 %v1987, %v1874
  %v2666 = vpack.c.b16 %v1988, %v1875
  %v2667 = vpack.c.b16 %v1989, %v1876
  %v2668 = vpack.c.b16 %v1990, %v1877
  %v2669 = vpack.c.b16 %v1991, %v1878
  %v2670 = vpack.c.b16 %v1992, %v1879
  %v2671 = vpack.c.b16 %v1993, %v1880
  %v2672 = vpack.c.b16 %v1994, %v1881
  %v2673 = vpack.c.b16 %v1995, %v1882
  %v2674 = vpack.c.b16 %v1996, %v1883
  %v2675 = vpack.c.b16 %v1997, %v1884
  %v2676 = vpack.c.b16 %v1998, %v1885
  %v2677 = vpack.c.b16 %v1999, %v1886
  %v2678 = vpack.c.b16 %v2000, %v1887
  %v2679 = vpack.c.b16 %v2001, %v1888
  %v2680 = vpack.c.b16 %v2002, %v1889
  %v2681 = vpack.c.b16 %v2003, %v1890
  %v2682 = vpack.c.b16 %v2004, %v1891
  %v2683 = vpack.c.b16 %v2005, %v1892
  %v2684 = vpack.c.b16 %v2006, %v1893
  %v2685 = vpack.c.b16 %v2007, %v1894
  %v2686 = vpack.c.b16 %v2008, %v1895
  %v2687 = vpack.c.b16 %v2009, %v1896
  %v2688 = vpack.c.b16 %v2010, %v1897
  %v2689 = vpack.c.b16 %v2011, %v1898
  %v2690 = vpack.c.b16 %v2012, %v1899
  %v2691 = vpack.c.b16 %v2013, %v1900
  %v2692 = vpack.c.b16 %v2014, %v1901
  %v2693 = vpack.c.b16 %v2015, %v1902
  %v2694 = vpack.c.b16 %v2016, %v1903
  %v2695 = vpack.c.b16 %v2017, %v1904
  %v2696 = vpack.c.b16 %v2018, %v1905
  %v2697 = vpack.c.b16 %v2019, %v1906
  %v2698 = vpack.c.b16 %v2020, %v1907
  %v2699 = vpack.c.b16 %v2021, %v1908
  %v2700 = vpack.c.b16 %v2022, %v1909
  %v2701 = vpack.c.b16 %v2023, %v1910
  %v2702 = vpack.c.b16 %v2024, %v1911
  %v2703 = vpack.c.b16 %v2025, %v1912
  %v2704 = vpack.c.b16 %v2026, %v1913
  %v2705 = vpack.c.b16 %v2027, %v1914
  %v2706 = vpack.c.b16 %v2028, %v1915
  %v2707 = vpack.c.b16 %v2029, %v1916
  %v2708 = vpack.c.b16 %v2030, %v1917
  %v2709 = vpack.c.b16 %v2031, %v1918
  %v2710 = vpack.c.b16 %v2032, %v1919
  %v2711 = vpack.c.b16 %v2033, %v1920
  %v2712 = vpack.c.b16 %v2034, %v1921
  %v2713 = vpack.c.b16 %v2035, %v1922
  %v2714 = vpack.c.b16 %v2036, %v1923
  %v2715 = vpack.c.b16 %v2037, %v1924
  %v2716 = vpack.c.b16 %v2038, %v1925
  %v2717 = vpack.c.b16 %v2039, %v1926
  %v2718 = vpack.c.b16 %v2040, %v1927
  %v2719 = vpack.c.b16 %v2041, %v1928
  %v2720 = vpack.c.b16 %v2042, %v1929
  %v2721 = vpack.c.b16 %v2043, %v1930
  %v2722 = vpack.c.b16 %v2044, %v1931
  %v2723 = vpack.c.b16 %v2045, %v1932
  %v2724 = vpack.c.b16 %v2046, %v1933
  %v2725 = vpack.c.b16 %v2047, %v1934
  %v2726 = vpack.c.b16 %v2048, %v1935
  %v2727 = vpack.c.b16 %v2049, %v1936
  %v2728 = vpack.c.b16 %v2050, %v1937
  %v2729 = vpack.c.b16 %v2051, %v1938
  %v2730 = vpack.c.b16 %v2052, %v1939
  %v2731 = vpack.c.b16 %v2053, %v1940
  %v2732 = vpack.c.b16 %v2054, %v1941
  %v2733 = vpack.c.b16 %v2055, %v1942
  %v2734 = vpack.c.b16 %v2056, %v1943
  %v2735 = vpack.c.b16 %v2057, %v1944
  %v2736 = vpack.c.b16 %v2058, %v1945
  %v2737 = vpack.c.b16 %v2059, %v1946
  %v2738 = vpack.c.b16 %v2060, %v1947
  %v2739 = vpack.c.b16 %v2061, %v1948
  %v2740 = vpack.c.b16 %v2062, %v1949
  %v2741 = vpack.c.b16 %v2176, %v2063
  %v2742 = vpack.c.b16 %v2177, %v2064
  %v2743 = vpack.c.b16 %v2178, %v2065
  %v2744 = vpack.c.b16 %v2179, %v2066
  %v2745 = vpack.c.b16 %v2180, %v2067
  %v2746 = vpack.c.b16 %v2181, %v2068
  %v2747 = vpack.c.b16 %v2182, %v2069
  %v2748 = vpack.c.b16 %v2183, %v2070
  %v2749 = vpack.c.b16 %v2184, %v2071
  %v2750 = vpack.c.b16 %v2185, %v2072
  %v2751 = vpack.c.b16 %v2186, %v2073
  %v2752 = vpack.c.b16 %v2187, %v2074
  %v2753 = vpack.c.b16 %v2188, %v2075
  %v2754 = vpack.c.b16 %v2189, %v2076
  %v2755 = vpack.c.b16 %v2190, %v2077
  %v2756 = vpack.c.b16 %v2191, %v2078
  %v2757 = vpack.c.b16 %v2192, %v2079
  %v2758 = vpack.c.b16 %v2193, %v2080
  %v2759 = vpack.c.b16 %v2194, %v2081
  %v2760 = vpack.c.b16 %v2195, %v2082
  %v2761 = vpack.c.b16 %v2196, %v2083
  %v2762 = vpack.c.b16 %v2197, %v2084
  %v2763 = vpack.c.b16 %v2198, %v2085
  %v2764 = vpack.c.b16 %v2199, %v2086
  %v2765 = vpack.c.b16 %v2200, %v2087
  %v2766 = vpack.c.b16 %v2201, %v2088
  %v2767 = vpack.c.b16 %v2202, %v2089
  %v2768 = vpack.c.b16 %v2203, %v2090
  %v2769 = vpack.c.b16 %v2204, %v2091
  %v2770 = vpack.c.b16 %v2205, %v2092
  %v2771 = vpack.c.b16 %v2206, %v2093
  %v2772 = vpack.c.b16 %v2207, %v2094
  %v2773 = vpack.c.b16 %v2208, %v2095
  %v2774 = vpack.c.b16 %v2209, %v2096
  %v2775 = vpack.c.b16 %v2210, %v2097
  %v2776 = vpack.c.b16 %v2211, %v2098
  %v2777 = vpack.c.b16 %v2212, %v2099
  %v2778 = vpack.c.b16 %v2213, %v2100
  %v2779 = vpack.c.b16 %v2214, %v2101
  %v2780 = vpack.c.b16 %v2215, %v2102
  %v2781 = vpack.c.b16 %v2216, %v2103
  %v2782 = vpack.c.b16 %v2217, %v2104
  %v2783 = vpack.c.b16 %v2218, %v2105
  %v2784 = vpack.c.b16 %v2219, %v2106
  %v2785 = vpack.c.b16 %v2220, %v2107
  %v2786 = vpack.c.b16 %v2221, %v2108
  %v2787 = vpack.c.b16 %v2222, %v2109
  %v2788 = vpack.c.b16 %v2223, %v2110
  %v2789 = vpack.c.b16 %v2224, %v2111
  %v2790 = vpack.c.b16 %v2225, %v2112
  %v2791 = vpack.c.b16 %v2226, %v2113
  %v2792 = vpack.c.b16 %v2227, %v2114
  %v2793 = vpack.c.b16 %v2228, %v2115
  %v2794 = vpack.c.b16 %v2229, %v2116
  %v2795 = vpack.c.b16 %v2230, %v2117
  %v2796 = vpack.c.b16 %v2231, %v2118
  %v2797 = vpack.c.b16 %v2232, %v2119
  %v2798 = vpack.c.b16 %v2233, %v2120
  %v2799 = vpack.c.b16 %v2234, %v2121
  %v2800 = vpack.c.b16 %v2235, %v2122
  %v2801 = vpack.c.b16 %v2236, %v2123
  %v2802 = vpack.c.b16 %v2237, %v2124
  %v2803 = vpack.c.b16 %v2238, %v2125
  %v2804 = vpack.c.b16 %v2239, %v2126
  %v2805 = vpack.c.b16 %v2240, %v2127
  %v2806 = vpack.c.b16 %v2241, %v2128
  %v2807 = vpack.c.b16 %v2242, %v2129
  %v2808 = vpack.c.b16 %v2243, %v2130
  %v2809 = vpack.c.b16 %v2244, %v2131
  %v2810 = vpack.c.b16 %v2245, %v2132
  %v2811 = vpack.c.b16 %v2246, %v2133
  %v2812 = vpack.c.b16 %v2247, %v2134
  %v2813 = vpack.c.b16 %v2248, %v2135
  %v2814 = vpack.c.b16 %v2249, %v2136
  %v2815 = vpack.c.b16 %v2250, %v2137
  %v2816 = vpack.c.b16 %v2251, %v2138
  %v2817 = vpack.c.b16 %v2252, %v2139
  %v2818 = vpack.c.b16 %v2253, %v2140
  %v2819 = vpack.c.b16 %v2254, %v2141
  %v2820 = vpack.c.b16 %v2255, %v2142
  %v2821 = vpack.c.b16 %v2256, %v2143
  %v2822 = vpack.c.b16 %v2257, %v2144
  %v2823 = vpack.c.b16 %v2258, %v2145
  %v2824 = vpack.c.b16 %v2259, %v2146
  %v2825 = vpack.c.b16 %v2260, %v2147
  %v2826 = vpack.c.b16 %v2261, %v2148
  %v2827 = vpack.c.b16 %v2262, %v2149
  %v2828 = vpack.c.b16 %v2263, %v2150
  %v2829 = vpack.c.b16 %v2264, %v2151
  %v2830 = vpack.c.b16 %v2265, %v2152
  %v2831 = vpack.c.b16 %v2266, %v2153
  %v2832 = vpack.c.b16 %v2267, %v2154
  %v2833 = vpack.c.b16 %v2268, %v2155
  %v2834 = vpack.c.b16 %v2269, %v2156
  %v2835 = vpack.c.b16 %v2270, %v2157
  %v2836 = vpack.c.b16 %v2271, %v2158
  %v2837 = vpack.c.b16 %v2272, %v2159
  %v2838 = vpack.c.b16 %v2273, %v2160
  %v2839 = vpack.c.b16 %v2274, %v2161
  %v2840 = vpack.c.b16 %v2275, %v2162
  %v2841 = vpack.c.b16 %v2276, %v2163
  %v2842 = vpack.c.b16 %v2277, %v2164
  %v2843 = vpack.c.b16 %v2278, %v2165
  %v2844 = vpack.c.b16 %v2279, %v2166
  %v2845 = vpack.c.b16 %v2280, %v2167
  %v2846 = vpack.c.b16 %v2281, %v2168
  %v2847 = vpack.c.b16 %v2282, %v2169
  %v2848 = vpack.c.b16 %v2283, %v2170
  %v2849 = vpack.c.b16 %v2284, %v2171
  %v2850 = vpack.c.b16 %v2285, %v2172
  %v2851 = vpack.c.b16 %v2286, %v2173
  %v2852 = vpack.c.b16 %v2287, %v2174
  %v2853 = vpack.c.b16 %v2288, %v2175
  %vm3306 = vcmask 613376
  %v3308 = vsel %vm3306, %v18, 0
  %vm3310 = vcmask 1044480
  %vm3311 = vcmask 1045504
  %v3312 = vsel %vm3310, 4294967295, 65535
  %v3313 = vsel %vm3311, %v3312, 0
  %v3315 = vand.u32 %v2741, %v3313
  %v3318 = vand.u32 %v2742, %v3313
  %v3321 = vand.u32 %v2743, %v3313
  %v3324 = vand.u32 %v2744, %v3313
  %v3327 = vand.u32 %v2745, %v3313
  %v3330 = vand.u32 %v2746, %v3313
  %v3333 = vand.u32 %v2747, %v3313
  %v3336 = vand.u32 %v2748, %v3313
  %v3339 = vand.u32 %v2749, %v3313
  %v3342 = vand.u32 %v2750, %v3313
  %v3345 = vand.u32 %v2751, %v3313
  %v3348 = vand.u32 %v2752, %v3313
  %v3351 = vand.u32 %v2753, %v3313
  %v3354 = vand.u32 %v2754, %v3313
  %v3357 = vand.u32 %v2755, %v3313
  %v3360 = vand.u32 %v2756, %v3313
  %v3363 = vand.u32 %v2757, %v3313
  %v3366 = vand.u32 %v2758, %v3313
  %v3369 = vand.u32 %v2759, %v3313
  %v3372 = vand.u32 %v2760, %v3313
  %v3375 = vand.u32 %v2761, %v3313
  %v3378 = vand.u32 %v2762, %v3313
  %v3381 = vand.u32 %v2763, %v3313
  %v3384 = vand.u32 %v2764, %v3313
  %v3387 = vand.u32 %v2765, %v3313
  %v3390 = vand.u32 %v2766, %v3313
  %v3393 = vand.u32 %v2767, %v3313
  %v3396 = vand.u32 %v2768, %v3313
  %v3399 = vand.u32 %v2769, %v3313
  %v3402 = vand.u32 %v2770, %v3313
  %v3405 = vand.u32 %v2771, %v3313
  %v3408 = vand.u32 %v2772, %v3313
  %v3411 = vand.u32 %v2773, %v3313
  %v3414 = vand.u32 %v2774, %v3313
  %v3417 = vand.u32 %v2775, %v3313
  %v3420 = vand.u32 %v2776, %v3313
  %v3423 = vand.u32 %v2777, %v3313
  %v3426 = vand.u32 %v2778, %v3313
  %v3429 = vand.u32 %v2779, %v3313
  %v3432 = vand.u32 %v2780, %v3313
  %v3435 = vand.u32 %v2781, %v3313
  %v3438 = vand.u32 %v2782, %v3313
  %v3441 = vand.u32 %v2783, %v3313
  %v3444 = vand.u32 %v2784, %v3313
  %v3447 = vand.u32 %v2785, %v3313
  %v3450 = vand.u32 %v2786, %v3313
  %v3453 = vand.u32 %v2787, %v3313
  %v3456 = vand.u32 %v2788, %v3313
  %v3459 = vand.u32 %v2789, %v3313
  %v3462 = vand.u32 %v2790, %v3313
  %v3465 = vand.u32 %v2791, %v3313
  %v3468 = vand.u32 %v2792, %v3313
  %v3471 = vand.u32 %v2793, %v3313
  %v3474 = vand.u32 %v2794, %v3313
  %v3477 = vand.u32 %v2795, %v3313
  %v3480 = vand.u32 %v2796, %v3313
  %v3483 = vand.u32 %v2797, %v3313
  %v3486 = vand.u32 %v2798, %v3313
  %v3489 = vand.u32 %v2799, %v3313
  %v3492 = vand.u32 %v2800, %v3313
  %v3495 = vand.u32 %v2801, %v3313
  %v3498 = vand.u32 %v2802, %v3313
  %v3501 = vand.u32 %v2803, %v3313
  %v3504 = vand.u32 %v2804, %v3313
  %v3507 = vand.u32 %v2805, %v3313
  %v3510 = vand.u32 %v2806, %v3313
  %v3513 = vand.u32 %v2807, %v3313
  %v3516 = vand.u32 %v2808, %v3313
  %v3519 = vand.u32 %v2809, %v3313
  %v3522 = vand.u32 %v2810, %v3313
  %v3525 = vand.u32 %v2811, %v3313
  %v3528 = vand.u32 %v2812, %v3313
  %v3531 = vand.u32 %v2813, %v3313
  %v3534 = vand.u32 %v2814, %v3313
  %v3537 = vand.u32 %v2815, %v3313
  %v3540 = vand.u32 %v2816, %v3313
  %v3543 = vand.u32 %v2817, %v3313
  %v3546 = vand.u32 %v2818, %v3313
  %v3549 = vand.u32 %v2819, %v3313
  %v3552 = vand.u32 %v2820, %v3313
  %v3555 = vand.u32 %v2821, %v3313
  %v3558 = vand.u32 %v2822, %v3313
  %v3561 = vand.u32 %v2823, %v3313
  %v3564 = vand.u32 %v2824, %v3313
  %v3567 = vand.u32 %v2825, %v3313
  %v3570 = vand.u32 %v2826, %v3313
  %v3573 = vand.u32 %v2827, %v3313
  %v3576 = vand.u32 %v2828, %v3313
  %v3579 = vand.u32 %v2829, %v3313
  %v3582 = vand.u32 %v2830, %v3313
  %v3585 = vand.u32 %v2831, %v3313
  %v3588 = vand.u32 %v2832, %v3313
  %v3591 = vand.u32 %v2833, %v3313
  %v3594 = vand.u32 %v2834, %v3313
  %v3597 = vand.u32 %v2835, %v3313
  %v3600 = vand.u32 %v2836, %v3313
  %v3603 = vand.u32 %v2837, %v3313
  %v3606 = vand.u32 %v2838, %v3313
  %v3609 = vand.u32 %v2839, %v3313
  %v3612 = vand.u32 %v2840, %v3313
  %v3615 = vand.u32 %v2841, %v3313
  %v3618 = vand.u32 %v2842, %v3313
  %v3621 = vand.u32 %v2843, %v3313
  %v3624 = vand.u32 %v2844, %v3313
  %v3627 = vand.u32 %v2845, %v3313
  %v3630 = vand.u32 %v2846, %v3313
  %v3633 = vand.u32 %v2847, %v3313
  %v3636 = vand.u32 %v2848, %v3313
  %v3639 = vand.u32 %v2849, %v3313
  %v3642 = vand.u32 %v2850, %v3313
  %v3645 = vand.u32 %v2851, %v3313
  %v3648 = vand.u32 %v2852, %v3313
  %v3651 = vand.u32 %v2853, %v3313
  %3653 = vmatprep.subr.bf16.mxu0 0
  %3654 = vmatpush1.bf16.msra.mxu0 0
  %3655 = vmatprep.subr.bf16.mxu0 0
  %3656 = vmatpush1.bf16.msra.mxu0 0
  %3657 = vmatprep.subr.bf16.mxu0 0
  %3658 = vmatpush1.bf16.msra.mxu0 0
  %3659 = vmatprep.subr.bf16.mxu0 %v3318
  %3660 = vmatpush1.bf16.msra.mxu0 %v3315
  %3661 = vmatprep.subr.bf16.mxu0 %v2629
  %3662 = vmatpush1.bf16.msra.mxu0 %v2628
  %3663 = vmatprep.subr.bf16.mxu0 %v2516
  %3664 = vmatpush1.bf16.msra.mxu0 %v2515
  %3665 = vmatprep.subr.bf16.mxu0 %v2403
  %3666 = vmatpush1.bf16.msra.mxu0 %v2402
  %3667 = vmatprep.subr.bf16.mxu0 %v2290
  %3668 = vmatpush1.bf16.msra.mxu0 %v2289
  %3669 = vmatprep.subr.bf16.mxu0 0
  %3670 = vmatpush2.bf16.msra.mxu0 0
  %3671 = vmatprep.subr.bf16.mxu0 0
  %3672 = vmatpush2.bf16.msra.mxu0 0
  %3673 = vmatprep.subr.bf16.mxu0 0
  %3674 = vmatpush2.bf16.msra.mxu0 0
  %3675 = vmatprep.subr.bf16.mxu0 0
  %3676 = vmatpush2.bf16.msra.mxu0 0
  %3677 = vmatprep.subr.bf16.mxu0 0
  %3678 = vmatpush2.bf16.msra.mxu0 0
  %3679 = vmatprep.subr.bf16.mxu0 0
  %3680 = vmatpush2.bf16.msra.mxu0 0
  %3681 = vmatprep.subr.bf16.mxu0 0
  %3682 = vmatpush2.bf16.msra.mxu0 0
  %3683 = vmatprep.subr.bf16.mxu0 0
  %3684 = vmatpush2.bf16.msra.mxu0 0
  %3685 = vmatprep.mubr.bf16.mxu0 0
  %3686 = vmatmul.mubr.bf16.gmra.mxu0 %v3308
  %v3687 = vpop.f32.mrf.mxu0
  %v3688 = vadd.f32 0.0, %v3687
  %v3689 = vpop.f32.mrf.mxu0
  %v3690 = vadd.f32 0.0, %v3689
  %v3691 = vpop.f32.mrf.mxu0
  %v3692 = vpop.f32.mrf.mxu0
  %3693 = vdwg.mxu0
  %3694 = vmatprep.subr.bf16.mxu0 0
  %3695 = vmatpush1.bf16.msra.mxu0 0
  %3696 = vmatprep.subr.bf16.mxu0 0
  %3697 = vmatpush1.bf16.msra.mxu0 0
  %3698 = vmatprep.subr.bf16.mxu0 0
  %3699 = vmatpush1.bf16.msra.mxu0 0
  %3700 = vmatprep.subr.bf16.mxu0 %v3324
  %3701 = vmatpush1.bf16.msra.mxu0 %v3321
  %3702 = vmatprep.subr.bf16.mxu0 %v2631
  %3703 = vmatpush1.bf16.msra.mxu0 %v2630
  %3704 = vmatprep.subr.bf16.mxu0 %v2518
  %3705 = vmatpush1.bf16.msra.mxu0 %v2517
  %3706 = vmatprep.subr.bf16.mxu0 %v2405
  %3707 = vmatpush1.bf16.msra.mxu0 %v2404
  %3708 = vmatprep.subr.bf16.mxu0 %v2292
  %3709 = vmatpush1.bf16.msra.mxu0 %v2291
  %3710 = vmatprep.subr.bf16.mxu0 0
  %3711 = vmatpush2.bf16.msra.mxu0 0
  %3712 = vmatprep.subr.bf16.mxu0 0
  %3713 = vmatpush2.bf16.msra.mxu0 0
  %3714 = vmatprep.subr.bf16.mxu0 0
  %3715 = vmatpush2.bf16.msra.mxu0 0
  %3716 = vmatprep.subr.bf16.mxu0 0
  %3717 = vmatpush2.bf16.msra.mxu0 0
  %3718 = vmatprep.subr.bf16.mxu0 0
  %3719 = vmatpush2.bf16.msra.mxu0 0
  %3720 = vmatprep.subr.bf16.mxu0 0
  %3721 = vmatpush2.bf16.msra.mxu0 0
  %3722 = vmatprep.subr.bf16.mxu0 0
  %3723 = vmatpush2.bf16.msra.mxu0 0
  %3724 = vmatprep.subr.bf16.mxu0 0
  %3725 = vmatpush2.bf16.msra.mxu0 0
  %3726 = vmatprep.mubr.bf16.mxu0 0
  %3727 = vmatmul.mubr.bf16.gmra.mxu0 %v3308
  %v3728 = vpop.f32.mrf.mxu0
  %v3729 = vadd.f32 0.0, %v3728
  %v3730 = vpop.f32.mrf.mxu0
  %v3731 = vadd.f32 0.0, %v3730
  %v3732 = vpop.f32.mrf.mxu0
  %v3733 = vpop.f32.mrf.mxu0
  %3734 = vdwg.mxu0
  %3735 = vmatprep.subr.bf16.mxu0 0
  %3736 = vmatpush1.bf16.msra.mxu0 0
  %3737 = vmatprep.subr.bf16.mxu0 0
  %3738 = vmatpush1.bf16.msra.mxu0 0
  %3739 = vmatprep.subr.bf16.mxu0 0
  %3740 = vmatpush1.bf16.msra.mxu0 0
  %3741 = vmatprep.subr.bf16.mxu0 %v3330
  %3742 = vmatpush1.bf16.msra.mxu0 %v3327
  %3743 = vmatprep.subr.bf16.mxu0 %v2633
  %3744 = vmatpush1.bf16.msra.mxu0 %v2632
  %3745 = vmatprep.subr.bf16.mxu0 %v2520
  %3746 = vmatpush1.bf16.msra.mxu0 %v2519
  %3747 = vmatprep.subr.bf16.mxu0 %v2407
  %3748 = vmatpush1.bf16.msra.mxu0 %v2406
  %3749 = vmatprep.subr.bf16.mxu0 %v2294
  %3750 = vmatpush1.bf16.msra.mxu0 %v2293
  %3751 = vmatprep.subr.bf16.mxu0 0
  %3752 = vmatpush2.bf16.msra.mxu0 0
  %3753 = vmatprep.subr.bf16.mxu0 0
  %3754 = vmatpush2.bf16.msra.mxu0 0
  %3755 = vmatprep.subr.bf16.mxu0 0
  %3756 = vmatpush2.bf16.msra.mxu0 0
  %3757 = vmatprep.subr.bf16.mxu0 0
  %3758 = vmatpush2.bf16.msra.mxu0 0
  %3759 = vmatprep.subr.bf16.mxu0 0
  %3760 = vmatpush2.bf16.msra.mxu0 0
  %3761 = vmatprep.subr.bf16.mxu0 0
  %3762 = vmatpush2.bf16.msra.mxu0 0
  %3763 = vmatprep.subr.bf16.mxu0 0
  %3764 = vmatpush2.bf16.msra.mxu0 0
  %3765 = vmatprep.subr.bf16.mxu0 0
  %3766 = vmatpush2.bf16.msra.mxu0 0
  %3767 = vmatprep.mubr.bf16.mxu0 0
  %3768 = vmatmul.mubr.bf16.gmra.mxu0 %v3308
  %v3769 = vpop.f32.mrf.mxu0
  %v3770 = vadd.f32 0.0, %v3769
  %v3771 = vpop.f32.mrf.mxu0
  %v3772 = vadd.f32 0.0, %v3771
  %v3773 = vpop.f32.mrf.mxu0
  %v3774 = vpop.f32.mrf.mxu0
  %3775 = vdwg.mxu0
  %3776 = vmatprep.subr.bf16.mxu0 0
  %3777 = vmatpush1.bf16.msra.mxu0 0
  %3778 = vmatprep.subr.bf16.mxu0 0
  %3779 = vmatpush1.bf16.msra.mxu0 0
  %3780 = vmatprep.subr.bf16.mxu0 0
  %3781 = vmatpush1.bf16.msra.mxu0 0
  %3782 = vmatprep.subr.bf16.mxu0 %v3336
  %3783 = vmatpush1.bf16.msra.mxu0 %v3333
  %3784 = vmatprep.subr.bf16.mxu0 %v2635
  %3785 = vmatpush1.bf16.msra.mxu0 %v2634
  %3786 = vmatprep.subr.bf16.mxu0 %v2522
  %3787 = vmatpush1.bf16.msra.mxu0 %v2521
  %3788 = vmatprep.subr.bf16.mxu0 %v2409
  %3789 = vmatpush1.bf16.msra.mxu0 %v2408
  %3790 = vmatprep.subr.bf16.mxu0 %v2296
  %3791 = vmatpush1.bf16.msra.mxu0 %v2295
  %3792 = vmatprep.subr.bf16.mxu0 0
  %3793 = vmatpush2.bf16.msra.mxu0 0
  %3794 = vmatprep.subr.bf16.mxu0 0
  %3795 = vmatpush2.bf16.msra.mxu0 0
  %3796 = vmatprep.subr.bf16.mxu0 0
  %3797 = vmatpush2.bf16.msra.mxu0 0
  %3798 = vmatprep.subr.bf16.mxu0 0
  %3799 = vmatpush2.bf16.msra.mxu0 0
  %3800 = vmatprep.subr.bf16.mxu0 0
  %3801 = vmatpush2.bf16.msra.mxu0 0
  %3802 = vmatprep.subr.bf16.mxu0 0
  %3803 = vmatpush2.bf16.msra.mxu0 0
  %3804 = vmatprep.subr.bf16.mxu0 0
  %3805 = vmatpush2.bf16.msra.mxu0 0
  %3806 = vmatprep.subr.bf16.mxu0 0
  %3807 = vmatpush2.bf16.msra.mxu0 0
  %3808 = vmatprep.mubr.bf16.mxu0 0
  %3809 = vmatmul.mubr.bf16.gmra.mxu0 %v3308
  %v3810 = vpop.f32.mrf.mxu0
  %v3811 = vadd.f32 0.0, %v3810
  %v3812 = vpop.f32.mrf.mxu0
  %v3813 = vadd.f32 0.0, %v3812
  %v3814 = vpop.f32.mrf.mxu0
  %v3815 = vpop.f32.mrf.mxu0
  %3816 = vdwg.mxu0
  %3817 = vmatprep.subr.bf16.mxu0 0
  %3818 = vmatpush1.bf16.msra.mxu0 0
  %3819 = vmatprep.subr.bf16.mxu0 0
  %3820 = vmatpush1.bf16.msra.mxu0 0
  %3821 = vmatprep.subr.bf16.mxu0 0
  %3822 = vmatpush1.bf16.msra.mxu0 0
  %3823 = vmatprep.subr.bf16.mxu0 %v3342
  %3824 = vmatpush1.bf16.msra.mxu0 %v3339
  %3825 = vmatprep.subr.bf16.mxu0 %v2637
  %3826 = vmatpush1.bf16.msra.mxu0 %v2636
  %3827 = vmatprep.subr.bf16.mxu0 %v2524
  %3828 = vmatpush1.bf16.msra.mxu0 %v2523
  %3829 = vmatprep.subr.bf16.mxu0 %v2411
  %3830 = vmatpush1.bf16.msra.mxu0 %v2410
  %3831 = vmatprep.subr.bf16.mxu0 %v2298
  %3832 = vmatpush1.bf16.msra.mxu0 %v2297
  %3833 = vmatprep.subr.bf16.mxu0 0
  %3834 = vmatpush2.bf16.msra.mxu0 0
  %3835 = vmatprep.subr.bf16.mxu0 0
  %3836 = vmatpush2.bf16.msra.mxu0 0
  %3837 = vmatprep.subr.bf16.mxu0 0
  %3838 = vmatpush2.bf16.msra.mxu0 0
  %3839 = vmatprep.subr.bf16.mxu0 0
  %3840 = vmatpush2.bf16.msra.mxu0 0
  %3841 = vmatprep.subr.bf16.mxu0 0
  %3842 = vmatpush2.bf16.msra.mxu0 0
  %3843 = vmatprep.subr.bf16.mxu0 0
  %3844 = vmatpush2.bf16.msra.mxu0 0
  %3845 = vmatprep.subr.bf16.mxu0 0
  %3846 = vmatpush2.bf16.msra.mxu0 0
  %3847 = vmatprep.subr.bf16.mxu0 0
  %3848 = vmatpush2.bf16.msra.mxu0 0
  %3849 = vmatprep.mubr.bf16.mxu0 0
  %3850 = vmatmul.mubr.bf16.gmra.mxu0 %v3308
  %v3851 = vpop.f32.mrf.mxu0
  %v3852 = vadd.f32 0.0, %v3851
  %v3853 = vpop.f32.mrf.mxu0
  %v3854 = vadd.f32 0.0, %v3853
  %v3855 = vpop.f32.mrf.mxu0
  %v3856 = vpop.f32.mrf.mxu0
  %3857 = vdwg.mxu0
  %3858 = vmatprep.subr.bf16.mxu0 0
  %3859 = vmatpush1.bf16.msra.mxu0 0
  %3860 = vmatprep.subr.bf16.mxu0 0
  %3861 = vmatpush1.bf16.msra.mxu0 0
  %3862 = vmatprep.subr.bf16.mxu0 0
  %3863 = vmatpush1.bf16.msra.mxu0 0
  %3864 = vmatprep.subr.bf16.mxu0 %v3348
  %3865 = vmatpush1.bf16.msra.mxu0 %v3345
  %3866 = vmatprep.subr.bf16.mxu0 %v2639
  %3867 = vmatpush1.bf16.msra.mxu0 %v2638
  %3868 = vmatprep.subr.bf16.mxu0 %v2526
  %3869 = vmatpush1.bf16.msra.mxu0 %v2525
  %3870 = vmatprep.subr.bf16.mxu0 %v2413
  %3871 = vmatpush1.bf16.msra.mxu0 %v2412
  %3872 = vmatprep.subr.bf16.mxu0 %v2300
  %3873 = vmatpush1.bf16.msra.mxu0 %v2299
  %3874 = vmatprep.subr.bf16.mxu0 0
  %3875 = vmatpush2.bf16.msra.mxu0 0
  %3876 = vmatprep.subr.bf16.mxu0 0
  %3877 = vmatpush2.bf16.msra.mxu0 0
  %3878 = vmatprep.subr.bf16.mxu0 0
  %3879 = vmatpush2.bf16.msra.mxu0 0
  %3880 = vmatprep.subr.bf16.mxu0 0
  %3881 = vmatpush2.bf16.msra.mxu0 0
  %3882 = vmatprep.subr.bf16.mxu0 0
  %3883 = vmatpush2.bf16.msra.mxu0 0
  %3884 = vmatprep.subr.bf16.mxu0 0
  %3885 = vmatpush2.bf16.msra.mxu0 0
  %3886 = vmatprep.subr.bf16.mxu0 0
  %3887 = vmatpush2.bf16.msra.mxu0 0
  %3888 = vmatprep.subr.bf16.mxu0 0
  %3889 = vmatpush2.bf16.msra.mxu0 0
  %3890 = vmatprep.mubr.bf16.mxu0 0
  %3891 = vmatmul.mubr.bf16.gmra.mxu0 %v3308
  %v3892 = vpop.f32.mrf.mxu0
  %v3893 = vadd.f32 0.0, %v3892
  %v3894 = vpop.f32.mrf.mxu0
  %v3895 = vadd.f32 0.0, %v3894
  %v3896 = vpop.f32.mrf.mxu0
  %v3897 = vpop.f32.mrf.mxu0
  %3898 = vdwg.mxu0
  %3899 = vmatprep.subr.bf16.mxu0 0
  %3900 = vmatpush1.bf16.msra.mxu0 0
  %3901 = vmatprep.subr.bf16.mxu0 0
  %3902 = vmatpush1.bf16.msra.mxu0 0
  %3903 = vmatprep.subr.bf16.mxu0 0
  %3904 = vmatpush1.bf16.msra.mxu0 0
  %3905 = vmatprep.subr.bf16.mxu0 %v3354
  %3906 = vmatpush1.bf16.msra.mxu0 %v3351
  %3907 = vmatprep.subr.bf16.mxu0 %v2641
  %3908 = vmatpush1.bf16.msra.mxu0 %v2640
  %3909 = vmatprep.subr.bf16.mxu0 %v2528
  %3910 = vmatpush1.bf16.msra.mxu0 %v2527
  %3911 = vmatprep.subr.bf16.mxu0 %v2415
  %3912 = vmatpush1.bf16.msra.mxu0 %v2414
  %3913 = vmatprep.subr.bf16.mxu0 %v2302
  %3914 = vmatpush1.bf16.msra.mxu0 %v2301
  %3915 = vmatprep.subr.bf16.mxu0 0
  %3916 = vmatpush2.bf16.msra.mxu0 0
  %3917 = vmatprep.subr.bf16.mxu0 0
  %3918 = vmatpush2.bf16.msra.mxu0 0
  %3919 = vmatprep.subr.bf16.mxu0 0
  %3920 = vmatpush2.bf16.msra.mxu0 0
  %3921 = vmatprep.subr.bf16.mxu0 0
  %3922 = vmatpush2.bf16.msra.mxu0 0
  %3923 = vmatprep.subr.bf16.mxu0 0
  %3924 = vmatpush2.bf16.msra.mxu0 0
  %3925 = vmatprep.subr.bf16.mxu0 0
  %3926 = vmatpush2.bf16.msra.mxu0 0
  %3927 = vmatprep.subr.bf16.mxu0 0
  %3928 = vmatpush2.bf16.msra.mxu0 0
  %3929 = vmatprep.subr.bf16.mxu0 0
  %3930 = vmatpush2.bf16.msra.mxu0 0
  %3931 = vmatprep.mubr.bf16.mxu0 0
  %3932 = vmatmul.mubr.bf16.gmra.mxu0 %v3308
  %v3933 = vpop.f32.mrf.mxu0
  %v3934 = vadd.f32 0.0, %v3933
  %v3935 = vpop.f32.mrf.mxu0
  %v3936 = vadd.f32 0.0, %v3935
  %v3937 = vpop.f32.mrf.mxu0
  %v3938 = vpop.f32.mrf.mxu0
  %3939 = vdwg.mxu0
  %3940 = vmatprep.subr.bf16.mxu0 0
  %3941 = vmatpush1.bf16.msra.mxu0 0
  %3942 = vmatprep.subr.bf16.mxu0 0
  %3943 = vmatpush1.bf16.msra.mxu0 0
  %3944 = vmatprep.subr.bf16.mxu0 0
  %3945 = vmatpush1.bf16.msra.mxu0 0
  %3946 = vmatprep.subr.bf16.mxu0 %v3360
  %3947 = vmatpush1.bf16.msra.mxu0 %v3357
  %3948 = vmatprep.subr.bf16.mxu0 %v2643
  %3949 = vmatpush1.bf16.msra.mxu0 %v2642
  %3950 = vmatprep.subr.bf16.mxu0 %v2530
  %3951 = vmatpush1.bf16.msra.mxu0 %v2529
  %3952 = vmatprep.subr.bf16.mxu0 %v2417
  %3953 = vmatpush1.bf16.msra.mxu0 %v2416
  %3954 = vmatprep.subr.bf16.mxu0 %v2304
  %3955 = vmatpush1.bf16.msra.mxu0 %v2303
  %3956 = vmatprep.subr.bf16.mxu0 0
  %3957 = vmatpush2.bf16.msra.mxu0 0
  %3958 = vmatprep.subr.bf16.mxu0 0
  %3959 = vmatpush2.bf16.msra.mxu0 0
  %3960 = vmatprep.subr.bf16.mxu0 0
  %3961 = vmatpush2.bf16.msra.mxu0 0
  %3962 = vmatprep.subr.bf16.mxu0 0
  %3963 = vmatpush2.bf16.msra.mxu0 0
  %3964 = vmatprep.subr.bf16.mxu0 0
  %3965 = vmatpush2.bf16.msra.mxu0 0
  %3966 = vmatprep.subr.bf16.mxu0 0
  %3967 = vmatpush2.bf16.msra.mxu0 0
  %3968 = vmatprep.subr.bf16.mxu0 0
  %3969 = vmatpush2.bf16.msra.mxu0 0
  %3970 = vmatprep.subr.bf16.mxu0 0
  %3971 = vmatpush2.bf16.msra.mxu0 0
  %3972 = vmatprep.mubr.bf16.mxu0 0
  %3973 = vmatmul.mubr.bf16.gmra.mxu0 %v3308
  %v3974 = vpop.f32.mrf.mxu0
  %v3975 = vadd.f32 0.0, %v3974
  %v3976 = vpop.f32.mrf.mxu0
  %v3977 = vadd.f32 0.0, %v3976
  %v3978 = vpop.f32.mrf.mxu0
  %v3979 = vpop.f32.mrf.mxu0
  %3980 = vdwg.mxu0
  %3981 = vmatprep.subr.bf16.mxu0 0
  %3982 = vmatpush1.bf16.msra.mxu0 0
  %3983 = vmatprep.subr.bf16.mxu0 0
  %3984 = vmatpush1.bf16.msra.mxu0 0
  %3985 = vmatprep.subr.bf16.mxu0 0
  %3986 = vmatpush1.bf16.msra.mxu0 0
  %3987 = vmatprep.subr.bf16.mxu0 %v3366
  %3988 = vmatpush1.bf16.msra.mxu0 %v3363
  %3989 = vmatprep.subr.bf16.mxu0 %v2645
  %3990 = vmatpush1.bf16.msra.mxu0 %v2644
  %3991 = vmatprep.subr.bf16.mxu0 %v2532
  %3992 = vmatpush1.bf16.msra.mxu0 %v2531
  %3993 = vmatprep.subr.bf16.mxu0 %v2419
  %3994 = vmatpush1.bf16.msra.mxu0 %v2418
  %3995 = vmatprep.subr.bf16.mxu0 %v2306
  %3996 = vmatpush1.bf16.msra.mxu0 %v2305
  %3997 = vmatprep.subr.bf16.mxu0 0
  %3998 = vmatpush2.bf16.msra.mxu0 0
  %3999 = vmatprep.subr.bf16.mxu0 0
  %4000 = vmatpush2.bf16.msra.mxu0 0
  %4001 = vmatprep.subr.bf16.mxu0 0
  %4002 = vmatpush2.bf16.msra.mxu0 0
  %4003 = vmatprep.subr.bf16.mxu0 0
  %4004 = vmatpush2.bf16.msra.mxu0 0
  %4005 = vmatprep.subr.bf16.mxu0 0
  %4006 = vmatpush2.bf16.msra.mxu0 0
  %4007 = vmatprep.subr.bf16.mxu0 0
  %4008 = vmatpush2.bf16.msra.mxu0 0
  %4009 = vmatprep.subr.bf16.mxu0 0
  %4010 = vmatpush2.bf16.msra.mxu0 0
  %4011 = vmatprep.subr.bf16.mxu0 0
  %4012 = vmatpush2.bf16.msra.mxu0 0
  %4013 = vmatprep.mubr.bf16.mxu0 0
  %4014 = vmatmul.mubr.bf16.gmra.mxu0 %v3308
  %v4015 = vpop.f32.mrf.mxu0
  %v4016 = vadd.f32 0.0, %v4015
  %v4017 = vpop.f32.mrf.mxu0
  %v4018 = vadd.f32 0.0, %v4017
  %v4019 = vpop.f32.mrf.mxu0
  %v4020 = vpop.f32.mrf.mxu0
  %4021 = vdwg.mxu0
  %4022 = vmatprep.subr.bf16.mxu0 0
  %4023 = vmatpush1.bf16.msra.mxu0 0
  %4024 = vmatprep.subr.bf16.mxu0 0
  %4025 = vmatpush1.bf16.msra.mxu0 0
  %4026 = vmatprep.subr.bf16.mxu0 0
  %4027 = vmatpush1.bf16.msra.mxu0 0
  %4028 = vmatprep.subr.bf16.mxu0 %v3372
  %4029 = vmatpush1.bf16.msra.mxu0 %v3369
  %4030 = vmatprep.subr.bf16.mxu0 %v2647
  %4031 = vmatpush1.bf16.msra.mxu0 %v2646
  %4032 = vmatprep.subr.bf16.mxu0 %v2534
  %4033 = vmatpush1.bf16.msra.mxu0 %v2533
  %4034 = vmatprep.subr.bf16.mxu0 %v2421
  %4035 = vmatpush1.bf16.msra.mxu0 %v2420
  %4036 = vmatprep.subr.bf16.mxu0 %v2308
  %4037 = vmatpush1.bf16.msra.mxu0 %v2307
  %4038 = vmatprep.subr.bf16.mxu0 0
  %4039 = vmatpush2.bf16.msra.mxu0 0
  %4040 = vmatprep.subr.bf16.mxu0 0
  %4041 = vmatpush2.bf16.msra.mxu0 0
  %4042 = vmatprep.subr.bf16.mxu0 0
  %4043 = vmatpush2.bf16.msra.mxu0 0
  %4044 = vmatprep.subr.bf16.mxu0 0
  %4045 = vmatpush2.bf16.msra.mxu0 0
  %4046 = vmatprep.subr.bf16.mxu0 0
  %4047 = vmatpush2.bf16.msra.mxu0 0
  %4048 = vmatprep.subr.bf16.mxu0 0
  %4049 = vmatpush2.bf16.msra.mxu0 0
  %4050 = vmatprep.subr.bf16.mxu0 0
  %4051 = vmatpush2.bf16.msra.mxu0 0
  %4052 = vmatprep.subr.bf16.mxu0 0
  %4053 = vmatpush2.bf16.msra.mxu0 0
  %4054 = vmatprep.mubr.bf16.mxu0 0
  %4055 = vmatmul.mubr.bf16.gmra.mxu0 %v3308
  %v4056 = vpop.f32.mrf.mxu0
  %v4057 = vadd.f32 0.0, %v4056
  %v4058 = vpop.f32.mrf.mxu0
  %v4059 = vadd.f32 0.0, %v4058
  %v4060 = vpop.f32.mrf.mxu0
  %v4061 = vpop.f32.mrf.mxu0
  %4062 = vdwg.mxu0
  %4063 = vmatprep.subr.bf16.mxu0 0
  %4064 = vmatpush1.bf16.msra.mxu0 0
  %4065 = vmatprep.subr.bf16.mxu0 0
  %4066 = vmatpush1.bf16.msra.mxu0 0
  %4067 = vmatprep.subr.bf16.mxu0 0
  %4068 = vmatpush1.bf16.msra.mxu0 0
  %4069 = vmatprep.subr.bf16.mxu0 %v3378
  %4070 = vmatpush1.bf16.msra.mxu0 %v3375
  %4071 = vmatprep.subr.bf16.mxu0 %v2649
  %4072 = vmatpush1.bf16.msra.mxu0 %v2648
  %4073 = vmatprep.subr.bf16.mxu0 %v2536
  %4074 = vmatpush1.bf16.msra.mxu0 %v2535
  %4075 = vmatprep.subr.bf16.mxu0 %v2423
  %4076 = vmatpush1.bf16.msra.mxu0 %v2422
  %4077 = vmatprep.subr.bf16.mxu0 %v2310
  %4078 = vmatpush1.bf16.msra.mxu0 %v2309
  %4079 = vmatprep.subr.bf16.mxu0 0
  %4080 = vmatpush2.bf16.msra.mxu0 0
  %4081 = vmatprep.subr.bf16.mxu0 0
  %4082 = vmatpush2.bf16.msra.mxu0 0
  %4083 = vmatprep.subr.bf16.mxu0 0
  %4084 = vmatpush2.bf16.msra.mxu0 0
  %4085 = vmatprep.subr.bf16.mxu0 0
  %4086 = vmatpush2.bf16.msra.mxu0 0
  %4087 = vmatprep.subr.bf16.mxu0 0
  %4088 = vmatpush2.bf16.msra.mxu0 0
  %4089 = vmatprep.subr.bf16.mxu0 0
  %4090 = vmatpush2.bf16.msra.mxu0 0
  %4091 = vmatprep.subr.bf16.mxu0 0
  %4092 = vmatpush2.bf16.msra.mxu0 0
  %4093 = vmatprep.subr.bf16.mxu0 0
  %4094 = vmatpush2.bf16.msra.mxu0 0
  %4095 = vmatprep.mubr.bf16.mxu0 0
  %4096 = vmatmul.mubr.bf16.gmra.mxu0 %v3308
  %v4097 = vpop.f32.mrf.mxu0
  %v4098 = vadd.f32 0.0, %v4097
  %v4099 = vpop.f32.mrf.mxu0
  %v4100 = vadd.f32 0.0, %v4099
  %v4101 = vpop.f32.mrf.mxu0
  %v4102 = vpop.f32.mrf.mxu0
  %4103 = vdwg.mxu0
  %4104 = vmatprep.subr.bf16.mxu0 0
  %4105 = vmatpush1.bf16.msra.mxu0 0
  %4106 = vmatprep.subr.bf16.mxu0 0
  %4107 = vmatpush1.bf16.msra.mxu0 0
  %4108 = vmatprep.subr.bf16.mxu0 0
  %4109 = vmatpush1.bf16.msra.mxu0 0
  %4110 = vmatprep.subr.bf16.mxu0 %v3384
  %4111 = vmatpush1.bf16.msra.mxu0 %v3381
  %4112 = vmatprep.subr.bf16.mxu0 %v2651
  %4113 = vmatpush1.bf16.msra.mxu0 %v2650
  %4114 = vmatprep.subr.bf16.mxu0 %v2538
  %4115 = vmatpush1.bf16.msra.mxu0 %v2537
  %4116 = vmatprep.subr.bf16.mxu0 %v2425
  %4117 = vmatpush1.bf16.msra.mxu0 %v2424
  %4118 = vmatprep.subr.bf16.mxu0 %v2312
  %4119 = vmatpush1.bf16.msra.mxu0 %v2311
  %4120 = vmatprep.subr.bf16.mxu0 0
  %4121 = vmatpush2.bf16.msra.mxu0 0
  %4122 = vmatprep.subr.bf16.mxu0 0
  %4123 = vmatpush2.bf16.msra.mxu0 0
  %4124 = vmatprep.subr.bf16.mxu0 0
  %4125 = vmatpush2.bf16.msra.mxu0 0
  %4126 = vmatprep.subr.bf16.mxu0 0
  %4127 = vmatpush2.bf16.msra.mxu0 0
  %4128 = vmatprep.subr.bf16.mxu0 0
  %4129 = vmatpush2.bf16.msra.mxu0 0
  %4130 = vmatprep.subr.bf16.mxu0 0
  %4131 = vmatpush2.bf16.msra.mxu0 0
  %4132 = vmatprep.subr.bf16.mxu0 0
  %4133 = vmatpush2.bf16.msra.mxu0 0
  %4134 = vmatprep.subr.bf16.mxu0 0
  %4135 = vmatpush2.bf16.msra.mxu0 0
  %4136 = vmatprep.mubr.bf16.mxu0 0
  %4137 = vmatmul.mubr.bf16.gmra.mxu0 %v3308
  %v4138 = vpop.f32.mrf.mxu0
  %v4139 = vadd.f32 0.0, %v4138
  %v4140 = vpop.f32.mrf.mxu0
  %v4141 = vadd.f32 0.0, %v4140
  %v4142 = vpop.f32.mrf.mxu0
  %v4143 = vpop.f32.mrf.mxu0
  %4144 = vdwg.mxu0
  %4145 = vmatprep.subr.bf16.mxu0 0
  %4146 = vmatpush1.bf16.msra.mxu0 0
  %4147 = vmatprep.subr.bf16.mxu0 0
  %4148 = vmatpush1.bf16.msra.mxu0 0
  %4149 = vmatprep.subr.bf16.mxu0 0
  %4150 = vmatpush1.bf16.msra.mxu0 0
  %4151 = vmatprep.subr.bf16.mxu0 %v3390
  %4152 = vmatpush1.bf16.msra.mxu0 %v3387
  %4153 = vmatprep.subr.bf16.mxu0 %v2653
  %4154 = vmatpush1.bf16.msra.mxu0 %v2652
  %4155 = vmatprep.subr.bf16.mxu0 %v2540
  %4156 = vmatpush1.bf16.msra.mxu0 %v2539
  %4157 = vmatprep.subr.bf16.mxu0 %v2427
  %4158 = vmatpush1.bf16.msra.mxu0 %v2426
  %4159 = vmatprep.subr.bf16.mxu0 %v2314
  %4160 = vmatpush1.bf16.msra.mxu0 %v2313
  %4161 = vmatprep.subr.bf16.mxu0 0
  %4162 = vmatpush2.bf16.msra.mxu0 0
  %4163 = vmatprep.subr.bf16.mxu0 0
  %4164 = vmatpush2.bf16.msra.mxu0 0
  %4165 = vmatprep.subr.bf16.mxu0 0
  %4166 = vmatpush2.bf16.msra.mxu0 0
  %4167 = vmatprep.subr.bf16.mxu0 0
  %4168 = vmatpush2.bf16.msra.mxu0 0
  %4169 = vmatprep.subr.bf16.mxu0 0
  %4170 = vmatpush2.bf16.msra.mxu0 0
  %4171 = vmatprep.subr.bf16.mxu0 0
  %4172 = vmatpush2.bf16.msra.mxu0 0
  %4173 = vmatprep.subr.bf16.mxu0 0
  %4174 = vmatpush2.bf16.msra.mxu0 0
  %4175 = vmatprep.subr.bf16.mxu0 0
  %4176 = vmatpush2.bf16.msra.mxu0 0
  %4177 = vmatprep.mubr.bf16.mxu0 0
  %4178 = vmatmul.mubr.bf16.gmra.mxu0 %v3308
  %v4179 = vpop.f32.mrf.mxu0
  %v4180 = vadd.f32 0.0, %v4179
  %v4181 = vpop.f32.mrf.mxu0
  %v4182 = vadd.f32 0.0, %v4181
  %v4183 = vpop.f32.mrf.mxu0
  %v4184 = vpop.f32.mrf.mxu0
  %4185 = vdwg.mxu0
  %4186 = vmatprep.subr.bf16.mxu0 0
  %4187 = vmatpush1.bf16.msra.mxu0 0
  %4188 = vmatprep.subr.bf16.mxu0 0
  %4189 = vmatpush1.bf16.msra.mxu0 0
  %4190 = vmatprep.subr.bf16.mxu0 0
  %4191 = vmatpush1.bf16.msra.mxu0 0
  %4192 = vmatprep.subr.bf16.mxu0 %v3396
  %4193 = vmatpush1.bf16.msra.mxu0 %v3393
  %4194 = vmatprep.subr.bf16.mxu0 %v2655
  %4195 = vmatpush1.bf16.msra.mxu0 %v2654
  %4196 = vmatprep.subr.bf16.mxu0 %v2542
  %4197 = vmatpush1.bf16.msra.mxu0 %v2541
  %4198 = vmatprep.subr.bf16.mxu0 %v2429
  %4199 = vmatpush1.bf16.msra.mxu0 %v2428
  %4200 = vmatprep.subr.bf16.mxu0 %v2316
  %4201 = vmatpush1.bf16.msra.mxu0 %v2315
  %4202 = vmatprep.subr.bf16.mxu0 0
  %4203 = vmatpush2.bf16.msra.mxu0 0
  %4204 = vmatprep.subr.bf16.mxu0 0
  %4205 = vmatpush2.bf16.msra.mxu0 0
  %4206 = vmatprep.subr.bf16.mxu0 0
  %4207 = vmatpush2.bf16.msra.mxu0 0
  %4208 = vmatprep.subr.bf16.mxu0 0
  %4209 = vmatpush2.bf16.msra.mxu0 0
  %4210 = vmatprep.subr.bf16.mxu0 0
  %4211 = vmatpush2.bf16.msra.mxu0 0
  %4212 = vmatprep.subr.bf16.mxu0 0
  %4213 = vmatpush2.bf16.msra.mxu0 0
  %4214 = vmatprep.subr.bf16.mxu0 0
  %4215 = vmatpush2.bf16.msra.mxu0 0
  %4216 = vmatprep.subr.bf16.mxu0 0
  %4217 = vmatpush2.bf16.msra.mxu0 0
  %4218 = vmatprep.mubr.bf16.mxu0 0
  %4219 = vmatmul.mubr.bf16.gmra.mxu0 %v3308
  %v4220 = vpop.f32.mrf.mxu0
  %v4221 = vadd.f32 0.0, %v4220
  %v4222 = vpop.f32.mrf.mxu0
  %v4223 = vadd.f32 0.0, %v4222
  %v4224 = vpop.f32.mrf.mxu0
  %v4225 = vpop.f32.mrf.mxu0
  %4226 = vdwg.mxu0
  %4227 = vmatprep.subr.bf16.mxu0 0
  %4228 = vmatpush1.bf16.msra.mxu0 0
  %4229 = vmatprep.subr.bf16.mxu0 0
  %4230 = vmatpush1.bf16.msra.mxu0 0
  %4231 = vmatprep.subr.bf16.mxu0 0
  %4232 = vmatpush1.bf16.msra.mxu0 0
  %4233 = vmatprep.subr.bf16.mxu0 %v3402
  %4234 = vmatpush1.bf16.msra.mxu0 %v3399
  %4235 = vmatprep.subr.bf16.mxu0 %v2657
  %4236 = vmatpush1.bf16.msra.mxu0 %v2656
  %4237 = vmatprep.subr.bf16.mxu0 %v2544
  %4238 = vmatpush1.bf16.msra.mxu0 %v2543
  %4239 = vmatprep.subr.bf16.mxu0 %v2431
  %4240 = vmatpush1.bf16.msra.mxu0 %v2430
  %4241 = vmatprep.subr.bf16.mxu0 %v2318
  %4242 = vmatpush1.bf16.msra.mxu0 %v2317
  %4243 = vmatprep.subr.bf16.mxu0 0
  %4244 = vmatpush2.bf16.msra.mxu0 0
  %4245 = vmatprep.subr.bf16.mxu0 0
  %4246 = vmatpush2.bf16.msra.mxu0 0
  %4247 = vmatprep.subr.bf16.mxu0 0
  %4248 = vmatpush2.bf16.msra.mxu0 0
  %4249 = vmatprep.subr.bf16.mxu0 0
  %4250 = vmatpush2.bf16.msra.mxu0 0
  %4251 = vmatprep.subr.bf16.mxu0 0
  %4252 = vmatpush2.bf16.msra.mxu0 0
  %4253 = vmatprep.subr.bf16.mxu0 0
  %4254 = vmatpush2.bf16.msra.mxu0 0
  %4255 = vmatprep.subr.bf16.mxu0 0
  %4256 = vmatpush2.bf16.msra.mxu0 0
  %4257 = vmatprep.subr.bf16.mxu0 0
  %4258 = vmatpush2.bf16.msra.mxu0 0
  %4259 = vmatprep.mubr.bf16.mxu0 0
  %4260 = vmatmul.mubr.bf16.gmra.mxu0 %v3308
  %v4261 = vpop.f32.mrf.mxu0
  %v4262 = vadd.f32 0.0, %v4261
  %v4263 = vpop.f32.mrf.mxu0
  %v4264 = vadd.f32 0.0, %v4263
  %v4265 = vpop.f32.mrf.mxu0
  %v4266 = vpop.f32.mrf.mxu0
  %4267 = vdwg.mxu0
  %4268 = vmatprep.subr.bf16.mxu0 0
  %4269 = vmatpush1.bf16.msra.mxu0 0
  %4270 = vmatprep.subr.bf16.mxu0 0
  %4271 = vmatpush1.bf16.msra.mxu0 0
  %4272 = vmatprep.subr.bf16.mxu0 0
  %4273 = vmatpush1.bf16.msra.mxu0 0
  %4274 = vmatprep.subr.bf16.mxu0 %v3408
  %4275 = vmatpush1.bf16.msra.mxu0 %v3405
  %4276 = vmatprep.subr.bf16.mxu0 %v2659
  %4277 = vmatpush1.bf16.msra.mxu0 %v2658
  %4278 = vmatprep.subr.bf16.mxu0 %v2546
  %4279 = vmatpush1.bf16.msra.mxu0 %v2545
  %4280 = vmatprep.subr.bf16.mxu0 %v2433
  %4281 = vmatpush1.bf16.msra.mxu0 %v2432
  %4282 = vmatprep.subr.bf16.mxu0 %v2320
  %4283 = vmatpush1.bf16.msra.mxu0 %v2319
  %4284 = vmatprep.subr.bf16.mxu0 0
  %4285 = vmatpush2.bf16.msra.mxu0 0
  %4286 = vmatprep.subr.bf16.mxu0 0
  %4287 = vmatpush2.bf16.msra.mxu0 0
  %4288 = vmatprep.subr.bf16.mxu0 0
  %4289 = vmatpush2.bf16.msra.mxu0 0
  %4290 = vmatprep.subr.bf16.mxu0 0
  %4291 = vmatpush2.bf16.msra.mxu0 0
  %4292 = vmatprep.subr.bf16.mxu0 0
  %4293 = vmatpush2.bf16.msra.mxu0 0
  %4294 = vmatprep.subr.bf16.mxu0 0
  %4295 = vmatpush2.bf16.msra.mxu0 0
  %4296 = vmatprep.subr.bf16.mxu0 0
  %4297 = vmatpush2.bf16.msra.mxu0 0
  %4298 = vmatprep.subr.bf16.mxu0 0
  %4299 = vmatpush2.bf16.msra.mxu0 0
  %4300 = vmatprep.mubr.bf16.mxu0 0
  %4301 = vmatmul.mubr.bf16.gmra.mxu0 %v3308
  %v4302 = vpop.f32.mrf.mxu0
  %v4303 = vadd.f32 0.0, %v4302
  %v4304 = vpop.f32.mrf.mxu0
  %v4305 = vadd.f32 0.0, %v4304
  %v4306 = vpop.f32.mrf.mxu0
  %v4307 = vpop.f32.mrf.mxu0
  %4308 = vdwg.mxu0
  %4309 = vmatprep.subr.bf16.mxu0 0
  %4310 = vmatpush1.bf16.msra.mxu0 0
  %4311 = vmatprep.subr.bf16.mxu0 0
  %4312 = vmatpush1.bf16.msra.mxu0 0
  %4313 = vmatprep.subr.bf16.mxu0 0
  %4314 = vmatpush1.bf16.msra.mxu0 0
  %4315 = vmatprep.subr.bf16.mxu0 %v3414
  %4316 = vmatpush1.bf16.msra.mxu0 %v3411
  %4317 = vmatprep.subr.bf16.mxu0 %v2661
  %4318 = vmatpush1.bf16.msra.mxu0 %v2660
  %4319 = vmatprep.subr.bf16.mxu0 %v2548
  %4320 = vmatpush1.bf16.msra.mxu0 %v2547
  %4321 = vmatprep.subr.bf16.mxu0 %v2435
  %4322 = vmatpush1.bf16.msra.mxu0 %v2434
  %4323 = vmatprep.subr.bf16.mxu0 %v2322
  %4324 = vmatpush1.bf16.msra.mxu0 %v2321
  %4325 = vmatprep.subr.bf16.mxu0 0
  %4326 = vmatpush2.bf16.msra.mxu0 0
  %4327 = vmatprep.subr.bf16.mxu0 0
  %4328 = vmatpush2.bf16.msra.mxu0 0
  %4329 = vmatprep.subr.bf16.mxu0 0
  %4330 = vmatpush2.bf16.msra.mxu0 0
  %4331 = vmatprep.subr.bf16.mxu0 0
  %4332 = vmatpush2.bf16.msra.mxu0 0
  %4333 = vmatprep.subr.bf16.mxu0 0
  %4334 = vmatpush2.bf16.msra.mxu0 0
  %4335 = vmatprep.subr.bf16.mxu0 0
  %4336 = vmatpush2.bf16.msra.mxu0 0
  %4337 = vmatprep.subr.bf16.mxu0 0
  %4338 = vmatpush2.bf16.msra.mxu0 0
  %4339 = vmatprep.subr.bf16.mxu0 0
  %4340 = vmatpush2.bf16.msra.mxu0 0
  %4341 = vmatprep.mubr.bf16.mxu0 0
  %4342 = vmatmul.mubr.bf16.gmra.mxu0 %v3308
  %v4343 = vpop.f32.mrf.mxu0
  %v4344 = vadd.f32 0.0, %v4343
  %v4345 = vpop.f32.mrf.mxu0
  %v4346 = vadd.f32 0.0, %v4345
  %v4347 = vpop.f32.mrf.mxu0
  %v4348 = vpop.f32.mrf.mxu0
  %4349 = vdwg.mxu0
  %4350 = vmatprep.subr.bf16.mxu0 0
  %4351 = vmatpush1.bf16.msra.mxu0 0
  %4352 = vmatprep.subr.bf16.mxu0 0
  %4353 = vmatpush1.bf16.msra.mxu0 0
  %4354 = vmatprep.subr.bf16.mxu0 0
  %4355 = vmatpush1.bf16.msra.mxu0 0
  %4356 = vmatprep.subr.bf16.mxu0 %v3420
  %4357 = vmatpush1.bf16.msra.mxu0 %v3417
  %4358 = vmatprep.subr.bf16.mxu0 %v2663
  %4359 = vmatpush1.bf16.msra.mxu0 %v2662
  %4360 = vmatprep.subr.bf16.mxu0 %v2550
  %4361 = vmatpush1.bf16.msra.mxu0 %v2549
  %4362 = vmatprep.subr.bf16.mxu0 %v2437
  %4363 = vmatpush1.bf16.msra.mxu0 %v2436
  %4364 = vmatprep.subr.bf16.mxu0 %v2324
  %4365 = vmatpush1.bf16.msra.mxu0 %v2323
  %4366 = vmatprep.subr.bf16.mxu0 0
  %4367 = vmatpush2.bf16.msra.mxu0 0
  %4368 = vmatprep.subr.bf16.mxu0 0
  %4369 = vmatpush2.bf16.msra.mxu0 0
  %4370 = vmatprep.subr.bf16.mxu0 0
  %4371 = vmatpush2.bf16.msra.mxu0 0
  %4372 = vmatprep.subr.bf16.mxu0 0
  %4373 = vmatpush2.bf16.msra.mxu0 0
  %4374 = vmatprep.subr.bf16.mxu0 0
  %4375 = vmatpush2.bf16.msra.mxu0 0
  %4376 = vmatprep.subr.bf16.mxu0 0
  %4377 = vmatpush2.bf16.msra.mxu0 0
  %4378 = vmatprep.subr.bf16.mxu0 0
  %4379 = vmatpush2.bf16.msra.mxu0 0
  %4380 = vmatprep.subr.bf16.mxu0 0
  %4381 = vmatpush2.bf16.msra.mxu0 0
  %4382 = vmatprep.mubr.bf16.mxu0 0
  %4383 = vmatmul.mubr.bf16.gmra.mxu0 %v3308
  %v4384 = vpop.f32.mrf.mxu0
  %v4385 = vadd.f32 0.0, %v4384
  %v4386 = vpop.f32.mrf.mxu0
  %v4387 = vadd.f32 0.0, %v4386
  %v4388 = vpop.f32.mrf.mxu0
  %v4389 = vpop.f32.mrf.mxu0
  %4390 = vdwg.mxu0
  %4391 = vmatprep.subr.bf16.mxu0 0
  %4392 = vmatpush1.bf16.msra.mxu0 0
  %4393 = vmatprep.subr.bf16.mxu0 0
  %4394 = vmatpush1.bf16.msra.mxu0 0
  %4395 = vmatprep.subr.bf16.mxu0 0
  %4396 = vmatpush1.bf16.msra.mxu0 0
  %4397 = vmatprep.subr.bf16.mxu0 %v3426
  %4398 = vmatpush1.bf16.msra.mxu0 %v3423
  %4399 = vmatprep.subr.bf16.mxu0 %v2665
  %4400 = vmatpush1.bf16.msra.mxu0 %v2664
  %4401 = vmatprep.subr.bf16.mxu0 %v2552
  %4402 = vmatpush1.bf16.msra.mxu0 %v2551
  %4403 = vmatprep.subr.bf16.mxu0 %v2439
  %4404 = vmatpush1.bf16.msra.mxu0 %v2438
  %4405 = vmatprep.subr.bf16.mxu0 %v2326
  %4406 = vmatpush1.bf16.msra.mxu0 %v2325
  %4407 = vmatprep.subr.bf16.mxu0 0
  %4408 = vmatpush2.bf16.msra.mxu0 0
  %4409 = vmatprep.subr.bf16.mxu0 0
  %4410 = vmatpush2.bf16.msra.mxu0 0
  %4411 = vmatprep.subr.bf16.mxu0 0
  %4412 = vmatpush2.bf16.msra.mxu0 0
  %4413 = vmatprep.subr.bf16.mxu0 0
  %4414 = vmatpush2.bf16.msra.mxu0 0
  %4415 = vmatprep.subr.bf16.mxu0 0
  %4416 = vmatpush2.bf16.msra.mxu0 0
  %4417 = vmatprep.subr.bf16.mxu0 0
  %4418 = vmatpush2.bf16.msra.mxu0 0
  %4419 = vmatprep.subr.bf16.mxu0 0
  %4420 = vmatpush2.bf16.msra.mxu0 0
  %4421 = vmatprep.subr.bf16.mxu0 0
  %4422 = vmatpush2.bf16.msra.mxu0 0
  %4423 = vmatprep.mubr.bf16.mxu0 0
  %4424 = vmatmul.mubr.bf16.gmra.mxu0 %v3308
  %v4425 = vpop.f32.mrf.mxu0
  %v4426 = vadd.f32 0.0, %v4425
  %v4427 = vpop.f32.mrf.mxu0
  %v4428 = vadd.f32 0.0, %v4427
  %v4429 = vpop.f32.mrf.mxu0
  %v4430 = vpop.f32.mrf.mxu0
  %4431 = vdwg.mxu0
  %4432 = vmatprep.subr.bf16.mxu0 0
  %4433 = vmatpush1.bf16.msra.mxu0 0
  %4434 = vmatprep.subr.bf16.mxu0 0
  %4435 = vmatpush1.bf16.msra.mxu0 0
  %4436 = vmatprep.subr.bf16.mxu0 0
  %4437 = vmatpush1.bf16.msra.mxu0 0
  %4438 = vmatprep.subr.bf16.mxu0 %v3432
  %4439 = vmatpush1.bf16.msra.mxu0 %v3429
  %4440 = vmatprep.subr.bf16.mxu0 %v2667
  %4441 = vmatpush1.bf16.msra.mxu0 %v2666
  %4442 = vmatprep.subr.bf16.mxu0 %v2554
  %4443 = vmatpush1.bf16.msra.mxu0 %v2553
  %4444 = vmatprep.subr.bf16.mxu0 %v2441
  %4445 = vmatpush1.bf16.msra.mxu0 %v2440
  %4446 = vmatprep.subr.bf16.mxu0 %v2328
  %4447 = vmatpush1.bf16.msra.mxu0 %v2327
  %4448 = vmatprep.subr.bf16.mxu0 0
  %4449 = vmatpush2.bf16.msra.mxu0 0
  %4450 = vmatprep.subr.bf16.mxu0 0
  %4451 = vmatpush2.bf16.msra.mxu0 0
  %4452 = vmatprep.subr.bf16.mxu0 0
  %4453 = vmatpush2.bf16.msra.mxu0 0
  %4454 = vmatprep.subr.bf16.mxu0 0
  %4455 = vmatpush2.bf16.msra.mxu0 0
  %4456 = vmatprep.subr.bf16.mxu0 0
  %4457 = vmatpush2.bf16.msra.mxu0 0
  %4458 = vmatprep.subr.bf16.mxu0 0
  %4459 = vmatpush2.bf16.msra.mxu0 0
  %4460 = vmatprep.subr.bf16.mxu0 0
  %4461 = vmatpush2.bf16.msra.mxu0 0
  %4462 = vmatprep.subr.bf16.mxu0 0
  %4463 = vmatpush2.bf16.msra.mxu0 0
  %4464 = vmatprep.mubr.bf16.mxu0 0
  %4465 = vmatmul.mubr.bf16.gmra.mxu0 %v3308
  %v4466 = vpop.f32.mrf.mxu0
  %v4467 = vadd.f32 0.0, %v4466
  %v4468 = vpop.f32.mrf.mxu0
  %v4469 = vadd.f32 0.0, %v4468
  %v4470 = vpop.f32.mrf.mxu0
  %v4471 = vpop.f32.mrf.mxu0
  %4472 = vdwg.mxu0
  %4473 = vmatprep.subr.bf16.mxu0 0
  %4474 = vmatpush1.bf16.msra.mxu0 0
  %4475 = vmatprep.subr.bf16.mxu0 0
  %4476 = vmatpush1.bf16.msra.mxu0 0
  %4477 = vmatprep.subr.bf16.mxu0 0
  %4478 = vmatpush1.bf16.msra.mxu0 0
  %4479 = vmatprep.subr.bf16.mxu0 %v3438
  %4480 = vmatpush1.bf16.msra.mxu0 %v3435
  %4481 = vmatprep.subr.bf16.mxu0 %v2669
  %4482 = vmatpush1.bf16.msra.mxu0 %v2668
  %4483 = vmatprep.subr.bf16.mxu0 %v2556
  %4484 = vmatpush1.bf16.msra.mxu0 %v2555
  %4485 = vmatprep.subr.bf16.mxu0 %v2443
  %4486 = vmatpush1.bf16.msra.mxu0 %v2442
  %4487 = vmatprep.subr.bf16.mxu0 %v2330
  %4488 = vmatpush1.bf16.msra.mxu0 %v2329
  %4489 = vmatprep.subr.bf16.mxu0 0
  %4490 = vmatpush2.bf16.msra.mxu0 0
  %4491 = vmatprep.subr.bf16.mxu0 0
  %4492 = vmatpush2.bf16.msra.mxu0 0
  %4493 = vmatprep.subr.bf16.mxu0 0
  %4494 = vmatpush2.bf16.msra.mxu0 0
  %4495 = vmatprep.subr.bf16.mxu0 0
  %4496 = vmatpush2.bf16.msra.mxu0 0
  %4497 = vmatprep.subr.bf16.mxu0 0
  %4498 = vmatpush2.bf16.msra.mxu0 0
  %4499 = vmatprep.subr.bf16.mxu0 0
  %4500 = vmatpush2.bf16.msra.mxu0 0
  %4501 = vmatprep.subr.bf16.mxu0 0
  %4502 = vmatpush2.bf16.msra.mxu0 0
  %4503 = vmatprep.subr.bf16.mxu0 0
  %4504 = vmatpush2.bf16.msra.mxu0 0
  %4505 = vmatprep.mubr.bf16.mxu0 0
  %4506 = vmatmul.mubr.bf16.gmra.mxu0 %v3308
  %v4507 = vpop.f32.mrf.mxu0
  %v4508 = vadd.f32 0.0, %v4507
  %v4509 = vpop.f32.mrf.mxu0
  %v4510 = vadd.f32 0.0, %v4509
  %v4511 = vpop.f32.mrf.mxu0
  %v4512 = vpop.f32.mrf.mxu0
  %4513 = vdwg.mxu0
  %4514 = vmatprep.subr.bf16.mxu0 0
  %4515 = vmatpush1.bf16.msra.mxu0 0
  %4516 = vmatprep.subr.bf16.mxu0 0
  %4517 = vmatpush1.bf16.msra.mxu0 0
  %4518 = vmatprep.subr.bf16.mxu0 0
  %4519 = vmatpush1.bf16.msra.mxu0 0
  %4520 = vmatprep.subr.bf16.mxu0 %v3444
  %4521 = vmatpush1.bf16.msra.mxu0 %v3441
  %4522 = vmatprep.subr.bf16.mxu0 %v2671
  %4523 = vmatpush1.bf16.msra.mxu0 %v2670
  %4524 = vmatprep.subr.bf16.mxu0 %v2558
  %4525 = vmatpush1.bf16.msra.mxu0 %v2557
  %4526 = vmatprep.subr.bf16.mxu0 %v2445
  %4527 = vmatpush1.bf16.msra.mxu0 %v2444
  %4528 = vmatprep.subr.bf16.mxu0 %v2332
  %4529 = vmatpush1.bf16.msra.mxu0 %v2331
  %4530 = vmatprep.subr.bf16.mxu0 0
  %4531 = vmatpush2.bf16.msra.mxu0 0
  %4532 = vmatprep.subr.bf16.mxu0 0
  %4533 = vmatpush2.bf16.msra.mxu0 0
  %4534 = vmatprep.subr.bf16.mxu0 0
  %4535 = vmatpush2.bf16.msra.mxu0 0
  %4536 = vmatprep.subr.bf16.mxu0 0
  %4537 = vmatpush2.bf16.msra.mxu0 0
  %4538 = vmatprep.subr.bf16.mxu0 0
  %4539 = vmatpush2.bf16.msra.mxu0 0
  %4540 = vmatprep.subr.bf16.mxu0 0
  %4541 = vmatpush2.bf16.msra.mxu0 0
  %4542 = vmatprep.subr.bf16.mxu0 0
  %4543 = vmatpush2.bf16.msra.mxu0 0
  %4544 = vmatprep.subr.bf16.mxu0 0
  %4545 = vmatpush2.bf16.msra.mxu0 0
  %4546 = vmatprep.mubr.bf16.mxu0 0
  %4547 = vmatmul.mubr.bf16.gmra.mxu0 %v3308
  %v4548 = vpop.f32.mrf.mxu0
  %v4549 = vadd.f32 0.0, %v4548
  %v4550 = vpop.f32.mrf.mxu0
  %v4551 = vadd.f32 0.0, %v4550
  %v4552 = vpop.f32.mrf.mxu0
  %v4553 = vpop.f32.mrf.mxu0
  %4554 = vdwg.mxu0
  %4555 = vmatprep.subr.bf16.mxu0 0
  %4556 = vmatpush1.bf16.msra.mxu0 0
  %4557 = vmatprep.subr.bf16.mxu0 0
  %4558 = vmatpush1.bf16.msra.mxu0 0
  %4559 = vmatprep.subr.bf16.mxu0 0
  %4560 = vmatpush1.bf16.msra.mxu0 0
  %4561 = vmatprep.subr.bf16.mxu0 %v3450
  %4562 = vmatpush1.bf16.msra.mxu0 %v3447
  %4563 = vmatprep.subr.bf16.mxu0 %v2673
  %4564 = vmatpush1.bf16.msra.mxu0 %v2672
  %4565 = vmatprep.subr.bf16.mxu0 %v2560
  %4566 = vmatpush1.bf16.msra.mxu0 %v2559
  %4567 = vmatprep.subr.bf16.mxu0 %v2447
  %4568 = vmatpush1.bf16.msra.mxu0 %v2446
  %4569 = vmatprep.subr.bf16.mxu0 %v2334
  %4570 = vmatpush1.bf16.msra.mxu0 %v2333
  %4571 = vmatprep.subr.bf16.mxu0 0
  %4572 = vmatpush2.bf16.msra.mxu0 0
  %4573 = vmatprep.subr.bf16.mxu0 0
  %4574 = vmatpush2.bf16.msra.mxu0 0
  %4575 = vmatprep.subr.bf16.mxu0 0
  %4576 = vmatpush2.bf16.msra.mxu0 0
  %4577 = vmatprep.subr.bf16.mxu0 0
  %4578 = vmatpush2.bf16.msra.mxu0 0
  %4579 = vmatprep.subr.bf16.mxu0 0
  %4580 = vmatpush2.bf16.msra.mxu0 0
  %4581 = vmatprep.subr.bf16.mxu0 0
  %4582 = vmatpush2.bf16.msra.mxu0 0
  %4583 = vmatprep.subr.bf16.mxu0 0
  %4584 = vmatpush2.bf16.msra.mxu0 0
  %4585 = vmatprep.subr.bf16.mxu0 0
  %4586 = vmatpush2.bf16.msra.mxu0 0
  %4587 = vmatprep.mubr.bf16.mxu0 0
  %4588 = vmatmul.mubr.bf16.gmra.mxu0 %v3308
  %v4589 = vpop.f32.mrf.mxu0
  %v4590 = vadd.f32 0.0, %v4589
  %v4591 = vpop.f32.mrf.mxu0
  %v4592 = vadd.f32 0.0, %v4591
  %v4593 = vpop.f32.mrf.mxu0
  %v4594 = vpop.f32.mrf.mxu0
  %4595 = vdwg.mxu0
  %4596 = vmatprep.subr.bf16.mxu0 0
  %4597 = vmatpush1.bf16.msra.mxu0 0
  %4598 = vmatprep.subr.bf16.mxu0 0
  %4599 = vmatpush1.bf16.msra.mxu0 0
  %4600 = vmatprep.subr.bf16.mxu0 0
  %4601 = vmatpush1.bf16.msra.mxu0 0
  %4602 = vmatprep.subr.bf16.mxu0 %v3456
  %4603 = vmatpush1.bf16.msra.mxu0 %v3453
  %4604 = vmatprep.subr.bf16.mxu0 %v2675
  %4605 = vmatpush1.bf16.msra.mxu0 %v2674
  %4606 = vmatprep.subr.bf16.mxu0 %v2562
  %4607 = vmatpush1.bf16.msra.mxu0 %v2561
  %4608 = vmatprep.subr.bf16.mxu0 %v2449
  %4609 = vmatpush1.bf16.msra.mxu0 %v2448
  %4610 = vmatprep.subr.bf16.mxu0 %v2336
  %4611 = vmatpush1.bf16.msra.mxu0 %v2335
  %4612 = vmatprep.subr.bf16.mxu0 0
  %4613 = vmatpush2.bf16.msra.mxu0 0
  %4614 = vmatprep.subr.bf16.mxu0 0
  %4615 = vmatpush2.bf16.msra.mxu0 0
  %4616 = vmatprep.subr.bf16.mxu0 0
  %4617 = vmatpush2.bf16.msra.mxu0 0
  %4618 = vmatprep.subr.bf16.mxu0 0
  %4619 = vmatpush2.bf16.msra.mxu0 0
  %4620 = vmatprep.subr.bf16.mxu0 0
  %4621 = vmatpush2.bf16.msra.mxu0 0
  %4622 = vmatprep.subr.bf16.mxu0 0
  %4623 = vmatpush2.bf16.msra.mxu0 0
  %4624 = vmatprep.subr.bf16.mxu0 0
  %4625 = vmatpush2.bf16.msra.mxu0 0
  %4626 = vmatprep.subr.bf16.mxu0 0
  %4627 = vmatpush2.bf16.msra.mxu0 0
  %4628 = vmatprep.mubr.bf16.mxu0 0
  %4629 = vmatmul.mubr.bf16.gmra.mxu0 %v3308
  %v4630 = vpop.f32.mrf.mxu0
  %v4631 = vadd.f32 0.0, %v4630
  %v4632 = vpop.f32.mrf.mxu0
  %v4633 = vadd.f32 0.0, %v4632
  %v4634 = vpop.f32.mrf.mxu0
  %v4635 = vpop.f32.mrf.mxu0
  %4636 = vdwg.mxu0
  %4637 = vmatprep.subr.bf16.mxu0 0
  %4638 = vmatpush1.bf16.msra.mxu0 0
  %4639 = vmatprep.subr.bf16.mxu0 0
  %4640 = vmatpush1.bf16.msra.mxu0 0
  %4641 = vmatprep.subr.bf16.mxu0 0
  %4642 = vmatpush1.bf16.msra.mxu0 0
  %4643 = vmatprep.subr.bf16.mxu0 %v3462
  %4644 = vmatpush1.bf16.msra.mxu0 %v3459
  %4645 = vmatprep.subr.bf16.mxu0 %v2677
  %4646 = vmatpush1.bf16.msra.mxu0 %v2676
  %4647 = vmatprep.subr.bf16.mxu0 %v2564
  %4648 = vmatpush1.bf16.msra.mxu0 %v2563
  %4649 = vmatprep.subr.bf16.mxu0 %v2451
  %4650 = vmatpush1.bf16.msra.mxu0 %v2450
  %4651 = vmatprep.subr.bf16.mxu0 %v2338
  %4652 = vmatpush1.bf16.msra.mxu0 %v2337
  %4653 = vmatprep.subr.bf16.mxu0 0
  %4654 = vmatpush2.bf16.msra.mxu0 0
  %4655 = vmatprep.subr.bf16.mxu0 0
  %4656 = vmatpush2.bf16.msra.mxu0 0
  %4657 = vmatprep.subr.bf16.mxu0 0
  %4658 = vmatpush2.bf16.msra.mxu0 0
  %4659 = vmatprep.subr.bf16.mxu0 0
  %4660 = vmatpush2.bf16.msra.mxu0 0
  %4661 = vmatprep.subr.bf16.mxu0 0
  %4662 = vmatpush2.bf16.msra.mxu0 0
  %4663 = vmatprep.subr.bf16.mxu0 0
  %4664 = vmatpush2.bf16.msra.mxu0 0
  %4665 = vmatprep.subr.bf16.mxu0 0
  %4666 = vmatpush2.bf16.msra.mxu0 0
  %4667 = vmatprep.subr.bf16.mxu0 0
  %4668 = vmatpush2.bf16.msra.mxu0 0
  %4669 = vmatprep.mubr.bf16.mxu0 0
  %4670 = vmatmul.mubr.bf16.gmra.mxu0 %v3308
  %v4671 = vpop.f32.mrf.mxu0
  %v4672 = vadd.f32 0.0, %v4671
  %v4673 = vpop.f32.mrf.mxu0
  %v4674 = vadd.f32 0.0, %v4673
  %v4675 = vpop.f32.mrf.mxu0
  %v4676 = vpop.f32.mrf.mxu0
  %4677 = vdwg.mxu0
  %4678 = vmatprep.subr.bf16.mxu0 0
  %4679 = vmatpush1.bf16.msra.mxu0 0
  %4680 = vmatprep.subr.bf16.mxu0 0
  %4681 = vmatpush1.bf16.msra.mxu0 0
  %4682 = vmatprep.subr.bf16.mxu0 0
  %4683 = vmatpush1.bf16.msra.mxu0 0
  %4684 = vmatprep.subr.bf16.mxu0 %v3468
  %4685 = vmatpush1.bf16.msra.mxu0 %v3465
  %4686 = vmatprep.subr.bf16.mxu0 %v2679
  %4687 = vmatpush1.bf16.msra.mxu0 %v2678
  %4688 = vmatprep.subr.bf16.mxu0 %v2566
  %4689 = vmatpush1.bf16.msra.mxu0 %v2565
  %4690 = vmatprep.subr.bf16.mxu0 %v2453
  %4691 = vmatpush1.bf16.msra.mxu0 %v2452
  %4692 = vmatprep.subr.bf16.mxu0 %v2340
  %4693 = vmatpush1.bf16.msra.mxu0 %v2339
  %4694 = vmatprep.subr.bf16.mxu0 0
  %4695 = vmatpush2.bf16.msra.mxu0 0
  %4696 = vmatprep.subr.bf16.mxu0 0
  %4697 = vmatpush2.bf16.msra.mxu0 0
  %4698 = vmatprep.subr.bf16.mxu0 0
  %4699 = vmatpush2.bf16.msra.mxu0 0
  %4700 = vmatprep.subr.bf16.mxu0 0
  %4701 = vmatpush2.bf16.msra.mxu0 0
  %4702 = vmatprep.subr.bf16.mxu0 0
  %4703 = vmatpush2.bf16.msra.mxu0 0
  %4704 = vmatprep.subr.bf16.mxu0 0
  %4705 = vmatpush2.bf16.msra.mxu0 0
  %4706 = vmatprep.subr.bf16.mxu0 0
  %4707 = vmatpush2.bf16.msra.mxu0 0
  %4708 = vmatprep.subr.bf16.mxu0 0
  %4709 = vmatpush2.bf16.msra.mxu0 0
  %4710 = vmatprep.mubr.bf16.mxu0 0
  %4711 = vmatmul.mubr.bf16.gmra.mxu0 %v3308
  %v4712 = vpop.f32.mrf.mxu0
  %v4713 = vadd.f32 0.0, %v4712
  %v4714 = vpop.f32.mrf.mxu0
  %v4715 = vadd.f32 0.0, %v4714
  %v4716 = vpop.f32.mrf.mxu0
  %v4717 = vpop.f32.mrf.mxu0
  %4718 = vdwg.mxu0
  %4719 = vmatprep.subr.bf16.mxu0 0
  %4720 = vmatpush1.bf16.msra.mxu0 0
  %4721 = vmatprep.subr.bf16.mxu0 0
  %4722 = vmatpush1.bf16.msra.mxu0 0
  %4723 = vmatprep.subr.bf16.mxu0 0
  %4724 = vmatpush1.bf16.msra.mxu0 0
  %4725 = vmatprep.subr.bf16.mxu0 %v3474
  %4726 = vmatpush1.bf16.msra.mxu0 %v3471
  %4727 = vmatprep.subr.bf16.mxu0 %v2681
  %4728 = vmatpush1.bf16.msra.mxu0 %v2680
  %4729 = vmatprep.subr.bf16.mxu0 %v2568
  %4730 = vmatpush1.bf16.msra.mxu0 %v2567
  %4731 = vmatprep.subr.bf16.mxu0 %v2455
  %4732 = vmatpush1.bf16.msra.mxu0 %v2454
  %4733 = vmatprep.subr.bf16.mxu0 %v2342
  %4734 = vmatpush1.bf16.msra.mxu0 %v2341
  %4735 = vmatprep.subr.bf16.mxu0 0
  %4736 = vmatpush2.bf16.msra.mxu0 0
  %4737 = vmatprep.subr.bf16.mxu0 0
  %4738 = vmatpush2.bf16.msra.mxu0 0
  %4739 = vmatprep.subr.bf16.mxu0 0
  %4740 = vmatpush2.bf16.msra.mxu0 0
  %4741 = vmatprep.subr.bf16.mxu0 0
  %4742 = vmatpush2.bf16.msra.mxu0 0
  %4743 = vmatprep.subr.bf16.mxu0 0
  %4744 = vmatpush2.bf16.msra.mxu0 0
  %4745 = vmatprep.subr.bf16.mxu0 0
  %4746 = vmatpush2.bf16.msra.mxu0 0
  %4747 = vmatprep.subr.bf16.mxu0 0
  %4748 = vmatpush2.bf16.msra.mxu0 0
  %4749 = vmatprep.subr.bf16.mxu0 0
  %4750 = vmatpush2.bf16.msra.mxu0 0
  %4751 = vmatprep.mubr.bf16.mxu0 0
  %4752 = vmatmul.mubr.bf16.gmra.mxu0 %v3308
  %v4753 = vpop.f32.mrf.mxu0
  %v4754 = vadd.f32 0.0, %v4753
  %v4755 = vpop.f32.mrf.mxu0
  %v4756 = vadd.f32 0.0, %v4755
  %v4757 = vpop.f32.mrf.mxu0
  %v4758 = vpop.f32.mrf.mxu0
  %4759 = vdwg.mxu0
  %4760 = vmatprep.subr.bf16.mxu0 0
  %4761 = vmatpush1.bf16.msra.mxu0 0
  %4762 = vmatprep.subr.bf16.mxu0 0
  %4763 = vmatpush1.bf16.msra.mxu0 0
  %4764 = vmatprep.subr.bf16.mxu0 0
  %4765 = vmatpush1.bf16.msra.mxu0 0
  %4766 = vmatprep.subr.bf16.mxu0 %v3480
  %4767 = vmatpush1.bf16.msra.mxu0 %v3477
  %4768 = vmatprep.subr.bf16.mxu0 %v2683
  %4769 = vmatpush1.bf16.msra.mxu0 %v2682
  %4770 = vmatprep.subr.bf16.mxu0 %v2570
  %4771 = vmatpush1.bf16.msra.mxu0 %v2569
  %4772 = vmatprep.subr.bf16.mxu0 %v2457
  %4773 = vmatpush1.bf16.msra.mxu0 %v2456
  %4774 = vmatprep.subr.bf16.mxu0 %v2344
  %4775 = vmatpush1.bf16.msra.mxu0 %v2343
  %4776 = vmatprep.subr.bf16.mxu0 0
  %4777 = vmatpush2.bf16.msra.mxu0 0
  %4778 = vmatprep.subr.bf16.mxu0 0
  %4779 = vmatpush2.bf16.msra.mxu0 0
  %4780 = vmatprep.subr.bf16.mxu0 0
  %4781 = vmatpush2.bf16.msra.mxu0 0
  %4782 = vmatprep.subr.bf16.mxu0 0
  %4783 = vmatpush2.bf16.msra.mxu0 0
  %4784 = vmatprep.subr.bf16.mxu0 0
  %4785 = vmatpush2.bf16.msra.mxu0 0
  %4786 = vmatprep.subr.bf16.mxu0 0
  %4787 = vmatpush2.bf16.msra.mxu0 0
  %4788 = vmatprep.subr.bf16.mxu0 0
  %4789 = vmatpush2.bf16.msra.mxu0 0
  %4790 = vmatprep.subr.bf16.mxu0 0
  %4791 = vmatpush2.bf16.msra.mxu0 0
  %4792 = vmatprep.mubr.bf16.mxu0 0
  %4793 = vmatmul.mubr.bf16.gmra.mxu0 %v3308
  %v4794 = vpop.f32.mrf.mxu0
  %v4795 = vadd.f32 0.0, %v4794
  %v4796 = vpop.f32.mrf.mxu0
  %v4797 = vadd.f32 0.0, %v4796
  %v4798 = vpop.f32.mrf.mxu0
  %v4799 = vpop.f32.mrf.mxu0
  %4800 = vdwg.mxu0
  %4801 = vmatprep.subr.bf16.mxu0 0
  %4802 = vmatpush1.bf16.msra.mxu0 0
  %4803 = vmatprep.subr.bf16.mxu0 0
  %4804 = vmatpush1.bf16.msra.mxu0 0
  %4805 = vmatprep.subr.bf16.mxu0 0
  %4806 = vmatpush1.bf16.msra.mxu0 0
  %4807 = vmatprep.subr.bf16.mxu0 %v3486
  %4808 = vmatpush1.bf16.msra.mxu0 %v3483
  %4809 = vmatprep.subr.bf16.mxu0 %v2685
  %4810 = vmatpush1.bf16.msra.mxu0 %v2684
  %4811 = vmatprep.subr.bf16.mxu0 %v2572
  %4812 = vmatpush1.bf16.msra.mxu0 %v2571
  %4813 = vmatprep.subr.bf16.mxu0 %v2459
  %4814 = vmatpush1.bf16.msra.mxu0 %v2458
  %4815 = vmatprep.subr.bf16.mxu0 %v2346
  %4816 = vmatpush1.bf16.msra.mxu0 %v2345
  %4817 = vmatprep.subr.bf16.mxu0 0
  %4818 = vmatpush2.bf16.msra.mxu0 0
  %4819 = vmatprep.subr.bf16.mxu0 0
  %4820 = vmatpush2.bf16.msra.mxu0 0
  %4821 = vmatprep.subr.bf16.mxu0 0
  %4822 = vmatpush2.bf16.msra.mxu0 0
  %4823 = vmatprep.subr.bf16.mxu0 0
  %4824 = vmatpush2.bf16.msra.mxu0 0
  %4825 = vmatprep.subr.bf16.mxu0 0
  %4826 = vmatpush2.bf16.msra.mxu0 0
  %4827 = vmatprep.subr.bf16.mxu0 0
  %4828 = vmatpush2.bf16.msra.mxu0 0
  %4829 = vmatprep.subr.bf16.mxu0 0
  %4830 = vmatpush2.bf16.msra.mxu0 0
  %4831 = vmatprep.subr.bf16.mxu0 0
  %4832 = vmatpush2.bf16.msra.mxu0 0
  %4833 = vmatprep.mubr.bf16.mxu0 0
  %4834 = vmatmul.mubr.bf16.gmra.mxu0 %v3308
  %v4835 = vpop.f32.mrf.mxu0
  %v4836 = vadd.f32 0.0, %v4835
  %v4837 = vpop.f32.mrf.mxu0
  %v4838 = vadd.f32 0.0, %v4837
  %v4839 = vpop.f32.mrf.mxu0
  %v4840 = vpop.f32.mrf.mxu0
  %4841 = vdwg.mxu0
  %4842 = vmatprep.subr.bf16.mxu0 0
  %4843 = vmatpush1.bf16.msra.mxu0 0
  %4844 = vmatprep.subr.bf16.mxu0 0
  %4845 = vmatpush1.bf16.msra.mxu0 0
  %4846 = vmatprep.subr.bf16.mxu0 0
  %4847 = vmatpush1.bf16.msra.mxu0 0
  %4848 = vmatprep.subr.bf16.mxu0 %v3492
  %4849 = vmatpush1.bf16.msra.mxu0 %v3489
  %4850 = vmatprep.subr.bf16.mxu0 %v2687
  %4851 = vmatpush1.bf16.msra.mxu0 %v2686
  %4852 = vmatprep.subr.bf16.mxu0 %v2574
  %4853 = vmatpush1.bf16.msra.mxu0 %v2573
  %4854 = vmatprep.subr.bf16.mxu0 %v2461
  %4855 = vmatpush1.bf16.msra.mxu0 %v2460
  %4856 = vmatprep.subr.bf16.mxu0 %v2348
  %4857 = vmatpush1.bf16.msra.mxu0 %v2347
  %4858 = vmatprep.subr.bf16.mxu0 0
  %4859 = vmatpush2.bf16.msra.mxu0 0
  %4860 = vmatprep.subr.bf16.mxu0 0
  %4861 = vmatpush2.bf16.msra.mxu0 0
  %4862 = vmatprep.subr.bf16.mxu0 0
  %4863 = vmatpush2.bf16.msra.mxu0 0
  %4864 = vmatprep.subr.bf16.mxu0 0
  %4865 = vmatpush2.bf16.msra.mxu0 0
  %4866 = vmatprep.subr.bf16.mxu0 0
  %4867 = vmatpush2.bf16.msra.mxu0 0
  %4868 = vmatprep.subr.bf16.mxu0 0
  %4869 = vmatpush2.bf16.msra.mxu0 0
  %4870 = vmatprep.subr.bf16.mxu0 0
  %4871 = vmatpush2.bf16.msra.mxu0 0
  %4872 = vmatprep.subr.bf16.mxu0 0
  %4873 = vmatpush2.bf16.msra.mxu0 0
  %4874 = vmatprep.mubr.bf16.mxu0 0
  %4875 = vmatmul.mubr.bf16.gmra.mxu0 %v3308
  %v4876 = vpop.f32.mrf.mxu0
  %v4877 = vadd.f32 0.0, %v4876
  %v4878 = vpop.f32.mrf.mxu0
  %v4879 = vadd.f32 0.0, %v4878
  %v4880 = vpop.f32.mrf.mxu0
  %v4881 = vpop.f32.mrf.mxu0
  %4882 = vdwg.mxu0
  %4883 = vmatprep.subr.bf16.mxu0 0
  %4884 = vmatpush1.bf16.msra.mxu0 0
  %4885 = vmatprep.subr.bf16.mxu0 0
  %4886 = vmatpush1.bf16.msra.mxu0 0
  %4887 = vmatprep.subr.bf16.mxu0 0
  %4888 = vmatpush1.bf16.msra.mxu0 0
  %4889 = vmatprep.subr.bf16.mxu0 %v3498
  %4890 = vmatpush1.bf16.msra.mxu0 %v3495
  %4891 = vmatprep.subr.bf16.mxu0 %v2689
  %4892 = vmatpush1.bf16.msra.mxu0 %v2688
  %4893 = vmatprep.subr.bf16.mxu0 %v2576
  %4894 = vmatpush1.bf16.msra.mxu0 %v2575
  %4895 = vmatprep.subr.bf16.mxu0 %v2463
  %4896 = vmatpush1.bf16.msra.mxu0 %v2462
  %4897 = vmatprep.subr.bf16.mxu0 %v2350
  %4898 = vmatpush1.bf16.msra.mxu0 %v2349
  %4899 = vmatprep.subr.bf16.mxu0 0
  %4900 = vmatpush2.bf16.msra.mxu0 0
  %4901 = vmatprep.subr.bf16.mxu0 0
  %4902 = vmatpush2.bf16.msra.mxu0 0
  %4903 = vmatprep.subr.bf16.mxu0 0
  %4904 = vmatpush2.bf16.msra.mxu0 0
  %4905 = vmatprep.subr.bf16.mxu0 0
  %4906 = vmatpush2.bf16.msra.mxu0 0
  %4907 = vmatprep.subr.bf16.mxu0 0
  %4908 = vmatpush2.bf16.msra.mxu0 0
  %4909 = vmatprep.subr.bf16.mxu0 0
  %4910 = vmatpush2.bf16.msra.mxu0 0
  %4911 = vmatprep.subr.bf16.mxu0 0
  %4912 = vmatpush2.bf16.msra.mxu0 0
  %4913 = vmatprep.subr.bf16.mxu0 0
  %4914 = vmatpush2.bf16.msra.mxu0 0
  %4915 = vmatprep.mubr.bf16.mxu0 0
  %4916 = vmatmul.mubr.bf16.gmra.mxu0 %v3308
  %v4917 = vpop.f32.mrf.mxu0
  %v4918 = vadd.f32 0.0, %v4917
  %v4919 = vpop.f32.mrf.mxu0
  %v4920 = vadd.f32 0.0, %v4919
  %v4921 = vpop.f32.mrf.mxu0
  %v4922 = vpop.f32.mrf.mxu0
  %4923 = vdwg.mxu0
  %4924 = vmatprep.subr.bf16.mxu0 0
  %4925 = vmatpush1.bf16.msra.mxu0 0
  %4926 = vmatprep.subr.bf16.mxu0 0
  %4927 = vmatpush1.bf16.msra.mxu0 0
  %4928 = vmatprep.subr.bf16.mxu0 0
  %4929 = vmatpush1.bf16.msra.mxu0 0
  %4930 = vmatprep.subr.bf16.mxu0 %v3504
  %4931 = vmatpush1.bf16.msra.mxu0 %v3501
  %4932 = vmatprep.subr.bf16.mxu0 %v2691
  %4933 = vmatpush1.bf16.msra.mxu0 %v2690
  %4934 = vmatprep.subr.bf16.mxu0 %v2578
  %4935 = vmatpush1.bf16.msra.mxu0 %v2577
  %4936 = vmatprep.subr.bf16.mxu0 %v2465
  %4937 = vmatpush1.bf16.msra.mxu0 %v2464
  %4938 = vmatprep.subr.bf16.mxu0 %v2352
  %4939 = vmatpush1.bf16.msra.mxu0 %v2351
  %4940 = vmatprep.subr.bf16.mxu0 0
  %4941 = vmatpush2.bf16.msra.mxu0 0
  %4942 = vmatprep.subr.bf16.mxu0 0
  %4943 = vmatpush2.bf16.msra.mxu0 0
  %4944 = vmatprep.subr.bf16.mxu0 0
  %4945 = vmatpush2.bf16.msra.mxu0 0
  %4946 = vmatprep.subr.bf16.mxu0 0
  %4947 = vmatpush2.bf16.msra.mxu0 0
  %4948 = vmatprep.subr.bf16.mxu0 0
  %4949 = vmatpush2.bf16.msra.mxu0 0
  %4950 = vmatprep.subr.bf16.mxu0 0
  %4951 = vmatpush2.bf16.msra.mxu0 0
  %4952 = vmatprep.subr.bf16.mxu0 0
  %4953 = vmatpush2.bf16.msra.mxu0 0
  %4954 = vmatprep.subr.bf16.mxu0 0
  %4955 = vmatpush2.bf16.msra.mxu0 0
  %4956 = vmatprep.mubr.bf16.mxu0 0
  %4957 = vmatmul.mubr.bf16.gmra.mxu0 %v3308
  %v4958 = vpop.f32.mrf.mxu0
  %v4959 = vadd.f32 0.0, %v4958
  %v4960 = vpop.f32.mrf.mxu0
  %v4961 = vadd.f32 0.0, %v4960
  %v4962 = vpop.f32.mrf.mxu0
  %v4963 = vpop.f32.mrf.mxu0
  %4964 = vdwg.mxu0
  %4965 = vmatprep.subr.bf16.mxu0 0
  %4966 = vmatpush1.bf16.msra.mxu0 0
  %4967 = vmatprep.subr.bf16.mxu0 0
  %4968 = vmatpush1.bf16.msra.mxu0 0
  %4969 = vmatprep.subr.bf16.mxu0 0
  %4970 = vmatpush1.bf16.msra.mxu0 0
  %4971 = vmatprep.subr.bf16.mxu0 %v3510
  %4972 = vmatpush1.bf16.msra.mxu0 %v3507
  %4973 = vmatprep.subr.bf16.mxu0 %v2693
  %4974 = vmatpush1.bf16.msra.mxu0 %v2692
  %4975 = vmatprep.subr.bf16.mxu0 %v2580
  %4976 = vmatpush1.bf16.msra.mxu0 %v2579
  %4977 = vmatprep.subr.bf16.mxu0 %v2467
  %4978 = vmatpush1.bf16.msra.mxu0 %v2466
  %4979 = vmatprep.subr.bf16.mxu0 %v2354
  %4980 = vmatpush1.bf16.msra.mxu0 %v2353
  %4981 = vmatprep.subr.bf16.mxu0 0
  %4982 = vmatpush2.bf16.msra.mxu0 0
  %4983 = vmatprep.subr.bf16.mxu0 0
  %4984 = vmatpush2.bf16.msra.mxu0 0
  %4985 = vmatprep.subr.bf16.mxu0 0
  %4986 = vmatpush2.bf16.msra.mxu0 0
  %4987 = vmatprep.subr.bf16.mxu0 0
  %4988 = vmatpush2.bf16.msra.mxu0 0
  %4989 = vmatprep.subr.bf16.mxu0 0
  %4990 = vmatpush2.bf16.msra.mxu0 0
  %4991 = vmatprep.subr.bf16.mxu0 0
  %4992 = vmatpush2.bf16.msra.mxu0 0
  %4993 = vmatprep.subr.bf16.mxu0 0
  %4994 = vmatpush2.bf16.msra.mxu0 0
  %4995 = vmatprep.subr.bf16.mxu0 0
  %4996 = vmatpush2.bf16.msra.mxu0 0
  %4997 = vmatprep.mubr.bf16.mxu0 0
  %4998 = vmatmul.mubr.bf16.gmra.mxu0 %v3308
  %v4999 = vpop.f32.mrf.mxu0
  %v5000 = vadd.f32 0.0, %v4999
  %v5001 = vpop.f32.mrf.mxu0
  %v5002 = vadd.f32 0.0, %v5001
  %v5003 = vpop.f32.mrf.mxu0
  %v5004 = vpop.f32.mrf.mxu0
  %5005 = vdwg.mxu0
  %5006 = vmatprep.subr.bf16.mxu0 0
  %5007 = vmatpush1.bf16.msra.mxu0 0
  %5008 = vmatprep.subr.bf16.mxu0 0
  %5009 = vmatpush1.bf16.msra.mxu0 0
  %5010 = vmatprep.subr.bf16.mxu0 0
  %5011 = vmatpush1.bf16.msra.mxu0 0
  %5012 = vmatprep.subr.bf16.mxu0 %v3516
  %5013 = vmatpush1.bf16.msra.mxu0 %v3513
  %5014 = vmatprep.subr.bf16.mxu0 %v2695
  %5015 = vmatpush1.bf16.msra.mxu0 %v2694
  %5016 = vmatprep.subr.bf16.mxu0 %v2582
  %5017 = vmatpush1.bf16.msra.mxu0 %v2581
  %5018 = vmatprep.subr.bf16.mxu0 %v2469
  %5019 = vmatpush1.bf16.msra.mxu0 %v2468
  %5020 = vmatprep.subr.bf16.mxu0 %v2356
  %5021 = vmatpush1.bf16.msra.mxu0 %v2355
  %5022 = vmatprep.subr.bf16.mxu0 0
  %5023 = vmatpush2.bf16.msra.mxu0 0
  %5024 = vmatprep.subr.bf16.mxu0 0
  %5025 = vmatpush2.bf16.msra.mxu0 0
  %5026 = vmatprep.subr.bf16.mxu0 0
  %5027 = vmatpush2.bf16.msra.mxu0 0
  %5028 = vmatprep.subr.bf16.mxu0 0
  %5029 = vmatpush2.bf16.msra.mxu0 0
  %5030 = vmatprep.subr.bf16.mxu0 0
  %5031 = vmatpush2.bf16.msra.mxu0 0
  %5032 = vmatprep.subr.bf16.mxu0 0
  %5033 = vmatpush2.bf16.msra.mxu0 0
  %5034 = vmatprep.subr.bf16.mxu0 0
  %5035 = vmatpush2.bf16.msra.mxu0 0
  %5036 = vmatprep.subr.bf16.mxu0 0
  %5037 = vmatpush2.bf16.msra.mxu0 0
  %5038 = vmatprep.mubr.bf16.mxu0 0
  %5039 = vmatmul.mubr.bf16.gmra.mxu0 %v3308
  %v5040 = vpop.f32.mrf.mxu0
  %v5041 = vadd.f32 0.0, %v5040
  %v5042 = vpop.f32.mrf.mxu0
  %v5043 = vadd.f32 0.0, %v5042
  %v5044 = vpop.f32.mrf.mxu0
  %v5045 = vpop.f32.mrf.mxu0
  %5046 = vdwg.mxu0
  %5047 = vmatprep.subr.bf16.mxu0 0
  %5048 = vmatpush1.bf16.msra.mxu0 0
  %5049 = vmatprep.subr.bf16.mxu0 0
  %5050 = vmatpush1.bf16.msra.mxu0 0
  %5051 = vmatprep.subr.bf16.mxu0 0
  %5052 = vmatpush1.bf16.msra.mxu0 0
  %5053 = vmatprep.subr.bf16.mxu0 %v3522
  %5054 = vmatpush1.bf16.msra.mxu0 %v3519
  %5055 = vmatprep.subr.bf16.mxu0 %v2697
  %5056 = vmatpush1.bf16.msra.mxu0 %v2696
  %5057 = vmatprep.subr.bf16.mxu0 %v2584
  %5058 = vmatpush1.bf16.msra.mxu0 %v2583
  %5059 = vmatprep.subr.bf16.mxu0 %v2471
  %5060 = vmatpush1.bf16.msra.mxu0 %v2470
  %5061 = vmatprep.subr.bf16.mxu0 %v2358
  %5062 = vmatpush1.bf16.msra.mxu0 %v2357
  %5063 = vmatprep.subr.bf16.mxu0 0
  %5064 = vmatpush2.bf16.msra.mxu0 0
  %5065 = vmatprep.subr.bf16.mxu0 0
  %5066 = vmatpush2.bf16.msra.mxu0 0
  %5067 = vmatprep.subr.bf16.mxu0 0
  %5068 = vmatpush2.bf16.msra.mxu0 0
  %5069 = vmatprep.subr.bf16.mxu0 0
  %5070 = vmatpush2.bf16.msra.mxu0 0
  %5071 = vmatprep.subr.bf16.mxu0 0
  %5072 = vmatpush2.bf16.msra.mxu0 0
  %5073 = vmatprep.subr.bf16.mxu0 0
  %5074 = vmatpush2.bf16.msra.mxu0 0
  %5075 = vmatprep.subr.bf16.mxu0 0
  %5076 = vmatpush2.bf16.msra.mxu0 0
  %5077 = vmatprep.subr.bf16.mxu0 0
  %5078 = vmatpush2.bf16.msra.mxu0 0
  %5079 = vmatprep.mubr.bf16.mxu0 0
  %5080 = vmatmul.mubr.bf16.gmra.mxu0 %v3308
  %v5081 = vpop.f32.mrf.mxu0
  %v5082 = vadd.f32 0.0, %v5081
  %v5083 = vpop.f32.mrf.mxu0
  %v5084 = vadd.f32 0.0, %v5083
  %v5085 = vpop.f32.mrf.mxu0
  %v5086 = vpop.f32.mrf.mxu0
  %5087 = vdwg.mxu0
  %5088 = vmatprep.subr.bf16.mxu0 0
  %5089 = vmatpush1.bf16.msra.mxu0 0
  %5090 = vmatprep.subr.bf16.mxu0 0
  %5091 = vmatpush1.bf16.msra.mxu0 0
  %5092 = vmatprep.subr.bf16.mxu0 0
  %5093 = vmatpush1.bf16.msra.mxu0 0
  %5094 = vmatprep.subr.bf16.mxu0 %v3528
  %5095 = vmatpush1.bf16.msra.mxu0 %v3525
  %5096 = vmatprep.subr.bf16.mxu0 %v2699
  %5097 = vmatpush1.bf16.msra.mxu0 %v2698
  %5098 = vmatprep.subr.bf16.mxu0 %v2586
  %5099 = vmatpush1.bf16.msra.mxu0 %v2585
  %5100 = vmatprep.subr.bf16.mxu0 %v2473
  %5101 = vmatpush1.bf16.msra.mxu0 %v2472
  %5102 = vmatprep.subr.bf16.mxu0 %v2360
  %5103 = vmatpush1.bf16.msra.mxu0 %v2359
  %5104 = vmatprep.subr.bf16.mxu0 0
  %5105 = vmatpush2.bf16.msra.mxu0 0
  %5106 = vmatprep.subr.bf16.mxu0 0
  %5107 = vmatpush2.bf16.msra.mxu0 0
  %5108 = vmatprep.subr.bf16.mxu0 0
  %5109 = vmatpush2.bf16.msra.mxu0 0
  %5110 = vmatprep.subr.bf16.mxu0 0
  %5111 = vmatpush2.bf16.msra.mxu0 0
  %5112 = vmatprep.subr.bf16.mxu0 0
  %5113 = vmatpush2.bf16.msra.mxu0 0
  %5114 = vmatprep.subr.bf16.mxu0 0
  %5115 = vmatpush2.bf16.msra.mxu0 0
  %5116 = vmatprep.subr.bf16.mxu0 0
  %5117 = vmatpush2.bf16.msra.mxu0 0
  %5118 = vmatprep.subr.bf16.mxu0 0
  %5119 = vmatpush2.bf16.msra.mxu0 0
  %5120 = vmatprep.mubr.bf16.mxu0 0
  %5121 = vmatmul.mubr.bf16.gmra.mxu0 %v3308
  %v5122 = vpop.f32.mrf.mxu0
  %v5123 = vadd.f32 0.0, %v5122
  %v5124 = vpop.f32.mrf.mxu0
  %v5125 = vadd.f32 0.0, %v5124
  %v5126 = vpop.f32.mrf.mxu0
  %v5127 = vpop.f32.mrf.mxu0
  %5128 = vdwg.mxu0
  %5129 = vmatprep.subr.bf16.mxu0 0
  %5130 = vmatpush1.bf16.msra.mxu0 0
  %5131 = vmatprep.subr.bf16.mxu0 0
  %5132 = vmatpush1.bf16.msra.mxu0 0
  %5133 = vmatprep.subr.bf16.mxu0 0
  %5134 = vmatpush1.bf16.msra.mxu0 0
  %5135 = vmatprep.subr.bf16.mxu0 %v3534
  %5136 = vmatpush1.bf16.msra.mxu0 %v3531
  %5137 = vmatprep.subr.bf16.mxu0 %v2701
  %5138 = vmatpush1.bf16.msra.mxu0 %v2700
  %5139 = vmatprep.subr.bf16.mxu0 %v2588
  %5140 = vmatpush1.bf16.msra.mxu0 %v2587
  %5141 = vmatprep.subr.bf16.mxu0 %v2475
  %5142 = vmatpush1.bf16.msra.mxu0 %v2474
  %5143 = vmatprep.subr.bf16.mxu0 %v2362
  %5144 = vmatpush1.bf16.msra.mxu0 %v2361
  %5145 = vmatprep.subr.bf16.mxu0 0
  %5146 = vmatpush2.bf16.msra.mxu0 0
  %5147 = vmatprep.subr.bf16.mxu0 0
  %5148 = vmatpush2.bf16.msra.mxu0 0
  %5149 = vmatprep.subr.bf16.mxu0 0
  %5150 = vmatpush2.bf16.msra.mxu0 0
  %5151 = vmatprep.subr.bf16.mxu0 0
  %5152 = vmatpush2.bf16.msra.mxu0 0
  %5153 = vmatprep.subr.bf16.mxu0 0
  %5154 = vmatpush2.bf16.msra.mxu0 0
  %5155 = vmatprep.subr.bf16.mxu0 0
  %5156 = vmatpush2.bf16.msra.mxu0 0
  %5157 = vmatprep.subr.bf16.mxu0 0
  %5158 = vmatpush2.bf16.msra.mxu0 0
  %5159 = vmatprep.subr.bf16.mxu0 0
  %5160 = vmatpush2.bf16.msra.mxu0 0
  %5161 = vmatprep.mubr.bf16.mxu0 0
  %5162 = vmatmul.mubr.bf16.gmra.mxu0 %v3308
  %v5163 = vpop.f32.mrf.mxu0
  %v5164 = vadd.f32 0.0, %v5163
  %v5165 = vpop.f32.mrf.mxu0
  %v5166 = vadd.f32 0.0, %v5165
  %v5167 = vpop.f32.mrf.mxu0
  %v5168 = vpop.f32.mrf.mxu0
  %5169 = vdwg.mxu0
  %5170 = vmatprep.subr.bf16.mxu0 0
  %5171 = vmatpush1.bf16.msra.mxu0 0
  %5172 = vmatprep.subr.bf16.mxu0 0
  %5173 = vmatpush1.bf16.msra.mxu0 0
  %5174 = vmatprep.subr.bf16.mxu0 0
  %5175 = vmatpush1.bf16.msra.mxu0 0
  %5176 = vmatprep.subr.bf16.mxu0 %v3540
  %5177 = vmatpush1.bf16.msra.mxu0 %v3537
  %5178 = vmatprep.subr.bf16.mxu0 %v2703
  %5179 = vmatpush1.bf16.msra.mxu0 %v2702
  %5180 = vmatprep.subr.bf16.mxu0 %v2590
  %5181 = vmatpush1.bf16.msra.mxu0 %v2589
  %5182 = vmatprep.subr.bf16.mxu0 %v2477
  %5183 = vmatpush1.bf16.msra.mxu0 %v2476
  %5184 = vmatprep.subr.bf16.mxu0 %v2364
  %5185 = vmatpush1.bf16.msra.mxu0 %v2363
  %5186 = vmatprep.subr.bf16.mxu0 0
  %5187 = vmatpush2.bf16.msra.mxu0 0
  %5188 = vmatprep.subr.bf16.mxu0 0
  %5189 = vmatpush2.bf16.msra.mxu0 0
  %5190 = vmatprep.subr.bf16.mxu0 0
  %5191 = vmatpush2.bf16.msra.mxu0 0
  %5192 = vmatprep.subr.bf16.mxu0 0
  %5193 = vmatpush2.bf16.msra.mxu0 0
  %5194 = vmatprep.subr.bf16.mxu0 0
  %5195 = vmatpush2.bf16.msra.mxu0 0
  %5196 = vmatprep.subr.bf16.mxu0 0
  %5197 = vmatpush2.bf16.msra.mxu0 0
  %5198 = vmatprep.subr.bf16.mxu0 0
  %5199 = vmatpush2.bf16.msra.mxu0 0
  %5200 = vmatprep.subr.bf16.mxu0 0
  %5201 = vmatpush2.bf16.msra.mxu0 0
  %5202 = vmatprep.mubr.bf16.mxu0 0
  %5203 = vmatmul.mubr.bf16.gmra.mxu0 %v3308
  %v5204 = vpop.f32.mrf.mxu0
  %v5205 = vadd.f32 0.0, %v5204
  %v5206 = vpop.f32.mrf.mxu0
  %v5207 = vadd.f32 0.0, %v5206
  %v5208 = vpop.f32.mrf.mxu0
  %v5209 = vpop.f32.mrf.mxu0
  %5210 = vdwg.mxu0
  %5211 = vmatprep.subr.bf16.mxu0 0
  %5212 = vmatpush1.bf16.msra.mxu0 0
  %5213 = vmatprep.subr.bf16.mxu0 0
  %5214 = vmatpush1.bf16.msra.mxu0 0
  %5215 = vmatprep.subr.bf16.mxu0 0
  %5216 = vmatpush1.bf16.msra.mxu0 0
  %5217 = vmatprep.subr.bf16.mxu0 %v3546
  %5218 = vmatpush1.bf16.msra.mxu0 %v3543
  %5219 = vmatprep.subr.bf16.mxu0 %v2705
  %5220 = vmatpush1.bf16.msra.mxu0 %v2704
  %5221 = vmatprep.subr.bf16.mxu0 %v2592
  %5222 = vmatpush1.bf16.msra.mxu0 %v2591
  %5223 = vmatprep.subr.bf16.mxu0 %v2479
  %5224 = vmatpush1.bf16.msra.mxu0 %v2478
  %5225 = vmatprep.subr.bf16.mxu0 %v2366
  %5226 = vmatpush1.bf16.msra.mxu0 %v2365
  %5227 = vmatprep.subr.bf16.mxu0 0
  %5228 = vmatpush2.bf16.msra.mxu0 0
  %5229 = vmatprep.subr.bf16.mxu0 0
  %5230 = vmatpush2.bf16.msra.mxu0 0
  %5231 = vmatprep.subr.bf16.mxu0 0
  %5232 = vmatpush2.bf16.msra.mxu0 0
  %5233 = vmatprep.subr.bf16.mxu0 0
  %5234 = vmatpush2.bf16.msra.mxu0 0
  %5235 = vmatprep.subr.bf16.mxu0 0
  %5236 = vmatpush2.bf16.msra.mxu0 0
  %5237 = vmatprep.subr.bf16.mxu0 0
  %5238 = vmatpush2.bf16.msra.mxu0 0
  %5239 = vmatprep.subr.bf16.mxu0 0
  %5240 = vmatpush2.bf16.msra.mxu0 0
  %5241 = vmatprep.subr.bf16.mxu0 0
  %5242 = vmatpush2.bf16.msra.mxu0 0
  %5243 = vmatprep.mubr.bf16.mxu0 0
  %5244 = vmatmul.mubr.bf16.gmra.mxu0 %v3308
  %v5245 = vpop.f32.mrf.mxu0
  %v5246 = vadd.f32 0.0, %v5245
  %v5247 = vpop.f32.mrf.mxu0
  %v5248 = vadd.f32 0.0, %v5247
  %v5249 = vpop.f32.mrf.mxu0
  %v5250 = vpop.f32.mrf.mxu0
  %5251 = vdwg.mxu0
  %5252 = vmatprep.subr.bf16.mxu0 0
  %5253 = vmatpush1.bf16.msra.mxu0 0
  %5254 = vmatprep.subr.bf16.mxu0 0
  %5255 = vmatpush1.bf16.msra.mxu0 0
  %5256 = vmatprep.subr.bf16.mxu0 0
  %5257 = vmatpush1.bf16.msra.mxu0 0
  %5258 = vmatprep.subr.bf16.mxu0 %v3552
  %5259 = vmatpush1.bf16.msra.mxu0 %v3549
  %5260 = vmatprep.subr.bf16.mxu0 %v2707
  %5261 = vmatpush1.bf16.msra.mxu0 %v2706
  %5262 = vmatprep.subr.bf16.mxu0 %v2594
  %5263 = vmatpush1.bf16.msra.mxu0 %v2593
  %5264 = vmatprep.subr.bf16.mxu0 %v2481
  %5265 = vmatpush1.bf16.msra.mxu0 %v2480
  %5266 = vmatprep.subr.bf16.mxu0 %v2368
  %5267 = vmatpush1.bf16.msra.mxu0 %v2367
  %5268 = vmatprep.subr.bf16.mxu0 0
  %5269 = vmatpush2.bf16.msra.mxu0 0
  %5270 = vmatprep.subr.bf16.mxu0 0
  %5271 = vmatpush2.bf16.msra.mxu0 0
  %5272 = vmatprep.subr.bf16.mxu0 0
  %5273 = vmatpush2.bf16.msra.mxu0 0
  %5274 = vmatprep.subr.bf16.mxu0 0
  %5275 = vmatpush2.bf16.msra.mxu0 0
  %5276 = vmatprep.subr.bf16.mxu0 0
  %5277 = vmatpush2.bf16.msra.mxu0 0
  %5278 = vmatprep.subr.bf16.mxu0 0
  %5279 = vmatpush2.bf16.msra.mxu0 0
  %5280 = vmatprep.subr.bf16.mxu0 0
  %5281 = vmatpush2.bf16.msra.mxu0 0
  %5282 = vmatprep.subr.bf16.mxu0 0
  %5283 = vmatpush2.bf16.msra.mxu0 0
  %5284 = vmatprep.mubr.bf16.mxu0 0
  %5285 = vmatmul.mubr.bf16.gmra.mxu0 %v3308
  %v5286 = vpop.f32.mrf.mxu0
  %v5287 = vadd.f32 0.0, %v5286
  %v5288 = vpop.f32.mrf.mxu0
  %v5289 = vadd.f32 0.0, %v5288
  %v5290 = vpop.f32.mrf.mxu0
  %v5291 = vpop.f32.mrf.mxu0
  %5292 = vdwg.mxu0
  %5293 = vmatprep.subr.bf16.mxu0 0
  %5294 = vmatpush1.bf16.msra.mxu0 0
  %5295 = vmatprep.subr.bf16.mxu0 0
  %5296 = vmatpush1.bf16.msra.mxu0 0
  %5297 = vmatprep.subr.bf16.mxu0 0
  %5298 = vmatpush1.bf16.msra.mxu0 0
  %5299 = vmatprep.subr.bf16.mxu0 %v3558
  %5300 = vmatpush1.bf16.msra.mxu0 %v3555
  %5301 = vmatprep.subr.bf16.mxu0 %v2709
  %5302 = vmatpush1.bf16.msra.mxu0 %v2708
  %5303 = vmatprep.subr.bf16.mxu0 %v2596
  %5304 = vmatpush1.bf16.msra.mxu0 %v2595
  %5305 = vmatprep.subr.bf16.mxu0 %v2483
  %5306 = vmatpush1.bf16.msra.mxu0 %v2482
  %5307 = vmatprep.subr.bf16.mxu0 %v2370
  %5308 = vmatpush1.bf16.msra.mxu0 %v2369
  %5309 = vmatprep.subr.bf16.mxu0 0
  %5310 = vmatpush2.bf16.msra.mxu0 0
  %5311 = vmatprep.subr.bf16.mxu0 0
  %5312 = vmatpush2.bf16.msra.mxu0 0
  %5313 = vmatprep.subr.bf16.mxu0 0
  %5314 = vmatpush2.bf16.msra.mxu0 0
  %5315 = vmatprep.subr.bf16.mxu0 0
  %5316 = vmatpush2.bf16.msra.mxu0 0
  %5317 = vmatprep.subr.bf16.mxu0 0
  %5318 = vmatpush2.bf16.msra.mxu0 0
  %5319 = vmatprep.subr.bf16.mxu0 0
  %5320 = vmatpush2.bf16.msra.mxu0 0
  %5321 = vmatprep.subr.bf16.mxu0 0
  %5322 = vmatpush2.bf16.msra.mxu0 0
  %5323 = vmatprep.subr.bf16.mxu0 0
  %5324 = vmatpush2.bf16.msra.mxu0 0
  %5325 = vmatprep.mubr.bf16.mxu0 0
  %5326 = vmatmul.mubr.bf16.gmra.mxu0 %v3308
  %v5327 = vpop.f32.mrf.mxu0
  %v5328 = vadd.f32 0.0, %v5327
  %v5329 = vpop.f32.mrf.mxu0
  %v5330 = vadd.f32 0.0, %v5329
  %v5331 = vpop.f32.mrf.mxu0
  %v5332 = vpop.f32.mrf.mxu0
  %5333 = vdwg.mxu0
  %5334 = vmatprep.subr.bf16.mxu0 0
  %5335 = vmatpush1.bf16.msra.mxu0 0
  %5336 = vmatprep.subr.bf16.mxu0 0
  %5337 = vmatpush1.bf16.msra.mxu0 0
  %5338 = vmatprep.subr.bf16.mxu0 0
  %5339 = vmatpush1.bf16.msra.mxu0 0
  %5340 = vmatprep.subr.bf16.mxu0 %v3564
  %5341 = vmatpush1.bf16.msra.mxu0 %v3561
  %5342 = vmatprep.subr.bf16.mxu0 %v2711
  %5343 = vmatpush1.bf16.msra.mxu0 %v2710
  %5344 = vmatprep.subr.bf16.mxu0 %v2598
  %5345 = vmatpush1.bf16.msra.mxu0 %v2597
  %5346 = vmatprep.subr.bf16.mxu0 %v2485
  %5347 = vmatpush1.bf16.msra.mxu0 %v2484
  %5348 = vmatprep.subr.bf16.mxu0 %v2372
  %5349 = vmatpush1.bf16.msra.mxu0 %v2371
  %5350 = vmatprep.subr.bf16.mxu0 0
  %5351 = vmatpush2.bf16.msra.mxu0 0
  %5352 = vmatprep.subr.bf16.mxu0 0
  %5353 = vmatpush2.bf16.msra.mxu0 0
  %5354 = vmatprep.subr.bf16.mxu0 0
  %5355 = vmatpush2.bf16.msra.mxu0 0
  %5356 = vmatprep.subr.bf16.mxu0 0
  %5357 = vmatpush2.bf16.msra.mxu0 0
  %5358 = vmatprep.subr.bf16.mxu0 0
  %5359 = vmatpush2.bf16.msra.mxu0 0
  %5360 = vmatprep.subr.bf16.mxu0 0
  %5361 = vmatpush2.bf16.msra.mxu0 0
  %5362 = vmatprep.subr.bf16.mxu0 0
  %5363 = vmatpush2.bf16.msra.mxu0 0
  %5364 = vmatprep.subr.bf16.mxu0 0
  %5365 = vmatpush2.bf16.msra.mxu0 0
  %5366 = vmatprep.mubr.bf16.mxu0 0
  %5367 = vmatmul.mubr.bf16.gmra.mxu0 %v3308
  %v5368 = vpop.f32.mrf.mxu0
  %v5369 = vadd.f32 0.0, %v5368
  %v5370 = vpop.f32.mrf.mxu0
  %v5371 = vadd.f32 0.0, %v5370
  %v5372 = vpop.f32.mrf.mxu0
  %v5373 = vpop.f32.mrf.mxu0
  %5374 = vdwg.mxu0
  %5375 = vmatprep.subr.bf16.mxu0 0
  %5376 = vmatpush1.bf16.msra.mxu0 0
  %5377 = vmatprep.subr.bf16.mxu0 0
  %5378 = vmatpush1.bf16.msra.mxu0 0
  %5379 = vmatprep.subr.bf16.mxu0 0
  %5380 = vmatpush1.bf16.msra.mxu0 0
  %5381 = vmatprep.subr.bf16.mxu0 %v3570
  %5382 = vmatpush1.bf16.msra.mxu0 %v3567
  %5383 = vmatprep.subr.bf16.mxu0 %v2713
  %5384 = vmatpush1.bf16.msra.mxu0 %v2712
  %5385 = vmatprep.subr.bf16.mxu0 %v2600
  %5386 = vmatpush1.bf16.msra.mxu0 %v2599
  %5387 = vmatprep.subr.bf16.mxu0 %v2487
  %5388 = vmatpush1.bf16.msra.mxu0 %v2486
  %5389 = vmatprep.subr.bf16.mxu0 %v2374
  %5390 = vmatpush1.bf16.msra.mxu0 %v2373
  %5391 = vmatprep.subr.bf16.mxu0 0
  %5392 = vmatpush2.bf16.msra.mxu0 0
  %5393 = vmatprep.subr.bf16.mxu0 0
  %5394 = vmatpush2.bf16.msra.mxu0 0
  %5395 = vmatprep.subr.bf16.mxu0 0
  %5396 = vmatpush2.bf16.msra.mxu0 0
  %5397 = vmatprep.subr.bf16.mxu0 0
  %5398 = vmatpush2.bf16.msra.mxu0 0
  %5399 = vmatprep.subr.bf16.mxu0 0
  %5400 = vmatpush2.bf16.msra.mxu0 0
  %5401 = vmatprep.subr.bf16.mxu0 0
  %5402 = vmatpush2.bf16.msra.mxu0 0
  %5403 = vmatprep.subr.bf16.mxu0 0
  %5404 = vmatpush2.bf16.msra.mxu0 0
  %5405 = vmatprep.subr.bf16.mxu0 0
  %5406 = vmatpush2.bf16.msra.mxu0 0
  %5407 = vmatprep.mubr.bf16.mxu0 0
  %5408 = vmatmul.mubr.bf16.gmra.mxu0 %v3308
  %v5409 = vpop.f32.mrf.mxu0
  %v5410 = vadd.f32 0.0, %v5409
  %v5411 = vpop.f32.mrf.mxu0
  %v5412 = vadd.f32 0.0, %v5411
  %v5413 = vpop.f32.mrf.mxu0
  %v5414 = vpop.f32.mrf.mxu0
  %5415 = vdwg.mxu0
  %5416 = vmatprep.subr.bf16.mxu0 0
  %5417 = vmatpush1.bf16.msra.mxu0 0
  %5418 = vmatprep.subr.bf16.mxu0 0
  %5419 = vmatpush1.bf16.msra.mxu0 0
  %5420 = vmatprep.subr.bf16.mxu0 0
  %5421 = vmatpush1.bf16.msra.mxu0 0
  %5422 = vmatprep.subr.bf16.mxu0 %v3576
  %5423 = vmatpush1.bf16.msra.mxu0 %v3573
  %5424 = vmatprep.subr.bf16.mxu0 %v2715
  %5425 = vmatpush1.bf16.msra.mxu0 %v2714
  %5426 = vmatprep.subr.bf16.mxu0 %v2602
  %5427 = vmatpush1.bf16.msra.mxu0 %v2601
  %5428 = vmatprep.subr.bf16.mxu0 %v2489
  %5429 = vmatpush1.bf16.msra.mxu0 %v2488
  %5430 = vmatprep.subr.bf16.mxu0 %v2376
  %5431 = vmatpush1.bf16.msra.mxu0 %v2375
  %5432 = vmatprep.subr.bf16.mxu0 0
  %5433 = vmatpush2.bf16.msra.mxu0 0
  %5434 = vmatprep.subr.bf16.mxu0 0
  %5435 = vmatpush2.bf16.msra.mxu0 0
  %5436 = vmatprep.subr.bf16.mxu0 0
  %5437 = vmatpush2.bf16.msra.mxu0 0
  %5438 = vmatprep.subr.bf16.mxu0 0
  %5439 = vmatpush2.bf16.msra.mxu0 0
  %5440 = vmatprep.subr.bf16.mxu0 0
  %5441 = vmatpush2.bf16.msra.mxu0 0
  %5442 = vmatprep.subr.bf16.mxu0 0
  %5443 = vmatpush2.bf16.msra.mxu0 0
  %5444 = vmatprep.subr.bf16.mxu0 0
  %5445 = vmatpush2.bf16.msra.mxu0 0
  %5446 = vmatprep.subr.bf16.mxu0 0
  %5447 = vmatpush2.bf16.msra.mxu0 0
  %5448 = vmatprep.mubr.bf16.mxu0 0
  %5449 = vmatmul.mubr.bf16.gmra.mxu0 %v3308
  %v5450 = vpop.f32.mrf.mxu0
  %v5451 = vadd.f32 0.0, %v5450
  %v5452 = vpop.f32.mrf.mxu0
  %v5453 = vadd.f32 0.0, %v5452
  %v5454 = vpop.f32.mrf.mxu0
  %v5455 = vpop.f32.mrf.mxu0
  %5456 = vdwg.mxu0
  %5457 = vmatprep.subr.bf16.mxu0 0
  %5458 = vmatpush1.bf16.msra.mxu0 0
  %5459 = vmatprep.subr.bf16.mxu0 0
  %5460 = vmatpush1.bf16.msra.mxu0 0
  %5461 = vmatprep.subr.bf16.mxu0 0
  %5462 = vmatpush1.bf16.msra.mxu0 0
  %5463 = vmatprep.subr.bf16.mxu0 %v3582
  %5464 = vmatpush1.bf16.msra.mxu0 %v3579
  %5465 = vmatprep.subr.bf16.mxu0 %v2717
  %5466 = vmatpush1.bf16.msra.mxu0 %v2716
  %5467 = vmatprep.subr.bf16.mxu0 %v2604
  %5468 = vmatpush1.bf16.msra.mxu0 %v2603
  %5469 = vmatprep.subr.bf16.mxu0 %v2491
  %5470 = vmatpush1.bf16.msra.mxu0 %v2490
  %5471 = vmatprep.subr.bf16.mxu0 %v2378
  %5472 = vmatpush1.bf16.msra.mxu0 %v2377
  %5473 = vmatprep.subr.bf16.mxu0 0
  %5474 = vmatpush2.bf16.msra.mxu0 0
  %5475 = vmatprep.subr.bf16.mxu0 0
  %5476 = vmatpush2.bf16.msra.mxu0 0
  %5477 = vmatprep.subr.bf16.mxu0 0
  %5478 = vmatpush2.bf16.msra.mxu0 0
  %5479 = vmatprep.subr.bf16.mxu0 0
  %5480 = vmatpush2.bf16.msra.mxu0 0
  %5481 = vmatprep.subr.bf16.mxu0 0
  %5482 = vmatpush2.bf16.msra.mxu0 0
  %5483 = vmatprep.subr.bf16.mxu0 0
  %5484 = vmatpush2.bf16.msra.mxu0 0
  %5485 = vmatprep.subr.bf16.mxu0 0
  %5486 = vmatpush2.bf16.msra.mxu0 0
  %5487 = vmatprep.subr.bf16.mxu0 0
  %5488 = vmatpush2.bf16.msra.mxu0 0
  %5489 = vmatprep.mubr.bf16.mxu0 0
  %5490 = vmatmul.mubr.bf16.gmra.mxu0 %v3308
  %v5491 = vpop.f32.mrf.mxu0
  %v5492 = vadd.f32 0.0, %v5491
  %v5493 = vpop.f32.mrf.mxu0
  %v5494 = vadd.f32 0.0, %v5493
  %v5495 = vpop.f32.mrf.mxu0
  %v5496 = vpop.f32.mrf.mxu0
  %5497 = vdwg.mxu0
  %5498 = vmatprep.subr.bf16.mxu0 0
  %5499 = vmatpush1.bf16.msra.mxu0 0
  %5500 = vmatprep.subr.bf16.mxu0 0
  %5501 = vmatpush1.bf16.msra.mxu0 0
  %5502 = vmatprep.subr.bf16.mxu0 0
  %5503 = vmatpush1.bf16.msra.mxu0 0
  %5504 = vmatprep.subr.bf16.mxu0 %v3588
  %5505 = vmatpush1.bf16.msra.mxu0 %v3585
  %5506 = vmatprep.subr.bf16.mxu0 %v2719
  %5507 = vmatpush1.bf16.msra.mxu0 %v2718
  %5508 = vmatprep.subr.bf16.mxu0 %v2606
  %5509 = vmatpush1.bf16.msra.mxu0 %v2605
  %5510 = vmatprep.subr.bf16.mxu0 %v2493
  %5511 = vmatpush1.bf16.msra.mxu0 %v2492
  %5512 = vmatprep.subr.bf16.mxu0 %v2380
  %5513 = vmatpush1.bf16.msra.mxu0 %v2379
  %5514 = vmatprep.subr.bf16.mxu0 0
  %5515 = vmatpush2.bf16.msra.mxu0 0
  %5516 = vmatprep.subr.bf16.mxu0 0
  %5517 = vmatpush2.bf16.msra.mxu0 0
  %5518 = vmatprep.subr.bf16.mxu0 0
  %5519 = vmatpush2.bf16.msra.mxu0 0
  %5520 = vmatprep.subr.bf16.mxu0 0
  %5521 = vmatpush2.bf16.msra.mxu0 0
  %5522 = vmatprep.subr.bf16.mxu0 0
  %5523 = vmatpush2.bf16.msra.mxu0 0
  %5524 = vmatprep.subr.bf16.mxu0 0
  %5525 = vmatpush2.bf16.msra.mxu0 0
  %5526 = vmatprep.subr.bf16.mxu0 0
  %5527 = vmatpush2.bf16.msra.mxu0 0
  %5528 = vmatprep.subr.bf16.mxu0 0
  %5529 = vmatpush2.bf16.msra.mxu0 0
  %5530 = vmatprep.mubr.bf16.mxu0 0
  %5531 = vmatmul.mubr.bf16.gmra.mxu0 %v3308
  %v5532 = vpop.f32.mrf.mxu0
  %v5533 = vadd.f32 0.0, %v5532
  %v5534 = vpop.f32.mrf.mxu0
  %v5535 = vadd.f32 0.0, %v5534
  %v5536 = vpop.f32.mrf.mxu0
  %v5537 = vpop.f32.mrf.mxu0
  %5538 = vdwg.mxu0
  %5539 = vmatprep.subr.bf16.mxu0 0
  %5540 = vmatpush1.bf16.msra.mxu0 0
  %5541 = vmatprep.subr.bf16.mxu0 0
  %5542 = vmatpush1.bf16.msra.mxu0 0
  %5543 = vmatprep.subr.bf16.mxu0 0
  %5544 = vmatpush1.bf16.msra.mxu0 0
  %5545 = vmatprep.subr.bf16.mxu0 %v3594
  %5546 = vmatpush1.bf16.msra.mxu0 %v3591
  %5547 = vmatprep.subr.bf16.mxu0 %v2721
  %5548 = vmatpush1.bf16.msra.mxu0 %v2720
  %5549 = vmatprep.subr.bf16.mxu0 %v2608
  %5550 = vmatpush1.bf16.msra.mxu0 %v2607
  %5551 = vmatprep.subr.bf16.mxu0 %v2495
  %5552 = vmatpush1.bf16.msra.mxu0 %v2494
  %5553 = vmatprep.subr.bf16.mxu0 %v2382
  %5554 = vmatpush1.bf16.msra.mxu0 %v2381
  %5555 = vmatprep.subr.bf16.mxu0 0
  %5556 = vmatpush2.bf16.msra.mxu0 0
  %5557 = vmatprep.subr.bf16.mxu0 0
  %5558 = vmatpush2.bf16.msra.mxu0 0
  %5559 = vmatprep.subr.bf16.mxu0 0
  %5560 = vmatpush2.bf16.msra.mxu0 0
  %5561 = vmatprep.subr.bf16.mxu0 0
  %5562 = vmatpush2.bf16.msra.mxu0 0
  %5563 = vmatprep.subr.bf16.mxu0 0
  %5564 = vmatpush2.bf16.msra.mxu0 0
  %5565 = vmatprep.subr.bf16.mxu0 0
  %5566 = vmatpush2.bf16.msra.mxu0 0
  %5567 = vmatprep.subr.bf16.mxu0 0
  %5568 = vmatpush2.bf16.msra.mxu0 0
  %5569 = vmatprep.subr.bf16.mxu0 0
  %5570 = vmatpush2.bf16.msra.mxu0 0
  %5571 = vmatprep.mubr.bf16.mxu0 0
  %5572 = vmatmul.mubr.bf16.gmra.mxu0 %v3308
  %v5573 = vpop.f32.mrf.mxu0
  %v5574 = vadd.f32 0.0, %v5573
  %v5575 = vpop.f32.mrf.mxu0
  %v5576 = vadd.f32 0.0, %v5575
  %v5577 = vpop.f32.mrf.mxu0
  %v5578 = vpop.f32.mrf.mxu0
  %5579 = vdwg.mxu0
  %5580 = vmatprep.subr.bf16.mxu0 0
  %5581 = vmatpush1.bf16.msra.mxu0 0
  %5582 = vmatprep.subr.bf16.mxu0 0
  %5583 = vmatpush1.bf16.msra.mxu0 0
  %5584 = vmatprep.subr.bf16.mxu0 0
  %5585 = vmatpush1.bf16.msra.mxu0 0
  %5586 = vmatprep.subr.bf16.mxu0 %v3600
  %5587 = vmatpush1.bf16.msra.mxu0 %v3597
  %5588 = vmatprep.subr.bf16.mxu0 %v2723
  %5589 = vmatpush1.bf16.msra.mxu0 %v2722
  %5590 = vmatprep.subr.bf16.mxu0 %v2610
  %5591 = vmatpush1.bf16.msra.mxu0 %v2609
  %5592 = vmatprep.subr.bf16.mxu0 %v2497
  %5593 = vmatpush1.bf16.msra.mxu0 %v2496
  %5594 = vmatprep.subr.bf16.mxu0 %v2384
  %5595 = vmatpush1.bf16.msra.mxu0 %v2383
  %5596 = vmatprep.subr.bf16.mxu0 0
  %5597 = vmatpush2.bf16.msra.mxu0 0
  %5598 = vmatprep.subr.bf16.mxu0 0
  %5599 = vmatpush2.bf16.msra.mxu0 0
  %5600 = vmatprep.subr.bf16.mxu0 0
  %5601 = vmatpush2.bf16.msra.mxu0 0
  %5602 = vmatprep.subr.bf16.mxu0 0
  %5603 = vmatpush2.bf16.msra.mxu0 0
  %5604 = vmatprep.subr.bf16.mxu0 0
  %5605 = vmatpush2.bf16.msra.mxu0 0
  %5606 = vmatprep.subr.bf16.mxu0 0
  %5607 = vmatpush2.bf16.msra.mxu0 0
  %5608 = vmatprep.subr.bf16.mxu0 0
  %5609 = vmatpush2.bf16.msra.mxu0 0
  %5610 = vmatprep.subr.bf16.mxu0 0
  %5611 = vmatpush2.bf16.msra.mxu0 0
  %5612 = vmatprep.mubr.bf16.mxu0 0
  %5613 = vmatmul.mubr.bf16.gmra.mxu0 %v3308
  %v5614 = vpop.f32.mrf.mxu0
  %v5615 = vadd.f32 0.0, %v5614
  %v5616 = vpop.f32.mrf.mxu0
  %v5617 = vadd.f32 0.0, %v5616
  %v5618 = vpop.f32.mrf.mxu0
  %v5619 = vpop.f32.mrf.mxu0
  %5620 = vdwg.mxu0
  %5621 = vmatprep.subr.bf16.mxu0 0
  %5622 = vmatpush1.bf16.msra.mxu0 0
  %5623 = vmatprep.subr.bf16.mxu0 0
  %5624 = vmatpush1.bf16.msra.mxu0 0
  %5625 = vmatprep.subr.bf16.mxu0 0
  %5626 = vmatpush1.bf16.msra.mxu0 0
  %5627 = vmatprep.subr.bf16.mxu0 %v3606
  %5628 = vmatpush1.bf16.msra.mxu0 %v3603
  %5629 = vmatprep.subr.bf16.mxu0 %v2725
  %5630 = vmatpush1.bf16.msra.mxu0 %v2724
  %5631 = vmatprep.subr.bf16.mxu0 %v2612
  %5632 = vmatpush1.bf16.msra.mxu0 %v2611
  %5633 = vmatprep.subr.bf16.mxu0 %v2499
  %5634 = vmatpush1.bf16.msra.mxu0 %v2498
  %5635 = vmatprep.subr.bf16.mxu0 %v2386
  %5636 = vmatpush1.bf16.msra.mxu0 %v2385
  %5637 = vmatprep.subr.bf16.mxu0 0
  %5638 = vmatpush2.bf16.msra.mxu0 0
  %5639 = vmatprep.subr.bf16.mxu0 0
  %5640 = vmatpush2.bf16.msra.mxu0 0
  %5641 = vmatprep.subr.bf16.mxu0 0
  %5642 = vmatpush2.bf16.msra.mxu0 0
  %5643 = vmatprep.subr.bf16.mxu0 0
  %5644 = vmatpush2.bf16.msra.mxu0 0
  %5645 = vmatprep.subr.bf16.mxu0 0
  %5646 = vmatpush2.bf16.msra.mxu0 0
  %5647 = vmatprep.subr.bf16.mxu0 0
  %5648 = vmatpush2.bf16.msra.mxu0 0
  %5649 = vmatprep.subr.bf16.mxu0 0
  %5650 = vmatpush2.bf16.msra.mxu0 0
  %5651 = vmatprep.subr.bf16.mxu0 0
  %5652 = vmatpush2.bf16.msra.mxu0 0
  %5653 = vmatprep.mubr.bf16.mxu0 0
  %5654 = vmatmul.mubr.bf16.gmra.mxu0 %v3308
  %v5655 = vpop.f32.mrf.mxu0
  %v5656 = vadd.f32 0.0, %v5655
  %v5657 = vpop.f32.mrf.mxu0
  %v5658 = vadd.f32 0.0, %v5657
  %v5659 = vpop.f32.mrf.mxu0
  %v5660 = vpop.f32.mrf.mxu0
  %5661 = vdwg.mxu0
  %5662 = vmatprep.subr.bf16.mxu0 0
  %5663 = vmatpush1.bf16.msra.mxu0 0
  %5664 = vmatprep.subr.bf16.mxu0 0
  %5665 = vmatpush1.bf16.msra.mxu0 0
  %5666 = vmatprep.subr.bf16.mxu0 0
  %5667 = vmatpush1.bf16.msra.mxu0 0
  %5668 = vmatprep.subr.bf16.mxu0 %v3612
  %5669 = vmatpush1.bf16.msra.mxu0 %v3609
  %5670 = vmatprep.subr.bf16.mxu0 %v2727
  %5671 = vmatpush1.bf16.msra.mxu0 %v2726
  %5672 = vmatprep.subr.bf16.mxu0 %v2614
  %5673 = vmatpush1.bf16.msra.mxu0 %v2613
  %5674 = vmatprep.subr.bf16.mxu0 %v2501
  %5675 = vmatpush1.bf16.msra.mxu0 %v2500
  %5676 = vmatprep.subr.bf16.mxu0 %v2388
  %5677 = vmatpush1.bf16.msra.mxu0 %v2387
  %5678 = vmatprep.subr.bf16.mxu0 0
  %5679 = vmatpush2.bf16.msra.mxu0 0
  %5680 = vmatprep.subr.bf16.mxu0 0
  %5681 = vmatpush2.bf16.msra.mxu0 0
  %5682 = vmatprep.subr.bf16.mxu0 0
  %5683 = vmatpush2.bf16.msra.mxu0 0
  %5684 = vmatprep.subr.bf16.mxu0 0
  %5685 = vmatpush2.bf16.msra.mxu0 0
  %5686 = vmatprep.subr.bf16.mxu0 0
  %5687 = vmatpush2.bf16.msra.mxu0 0
  %5688 = vmatprep.subr.bf16.mxu0 0
  %5689 = vmatpush2.bf16.msra.mxu0 0
  %5690 = vmatprep.subr.bf16.mxu0 0
  %5691 = vmatpush2.bf16.msra.mxu0 0
  %5692 = vmatprep.subr.bf16.mxu0 0
  %5693 = vmatpush2.bf16.msra.mxu0 0
  %5694 = vmatprep.mubr.bf16.mxu0 0
  %5695 = vmatmul.mubr.bf16.gmra.mxu0 %v3308
  %v5696 = vpop.f32.mrf.mxu0
  %v5697 = vadd.f32 0.0, %v5696
  %v5698 = vpop.f32.mrf.mxu0
  %v5699 = vadd.f32 0.0, %v5698
  %v5700 = vpop.f32.mrf.mxu0
  %v5701 = vpop.f32.mrf.mxu0
  %5702 = vdwg.mxu0
  %5703 = vmatprep.subr.bf16.mxu0 0
  %5704 = vmatpush1.bf16.msra.mxu0 0
  %5705 = vmatprep.subr.bf16.mxu0 0
  %5706 = vmatpush1.bf16.msra.mxu0 0
  %5707 = vmatprep.subr.bf16.mxu0 0
  %5708 = vmatpush1.bf16.msra.mxu0 0
  %5709 = vmatprep.subr.bf16.mxu0 %v3618
  %5710 = vmatpush1.bf16.msra.mxu0 %v3615
  %5711 = vmatprep.subr.bf16.mxu0 %v2729
  %5712 = vmatpush1.bf16.msra.mxu0 %v2728
  %5713 = vmatprep.subr.bf16.mxu0 %v2616
  %5714 = vmatpush1.bf16.msra.mxu0 %v2615
  %5715 = vmatprep.subr.bf16.mxu0 %v2503
  %5716 = vmatpush1.bf16.msra.mxu0 %v2502
  %5717 = vmatprep.subr.bf16.mxu0 %v2390
  %5718 = vmatpush1.bf16.msra.mxu0 %v2389
  %5719 = vmatprep.subr.bf16.mxu0 0
  %5720 = vmatpush2.bf16.msra.mxu0 0
  %5721 = vmatprep.subr.bf16.mxu0 0
  %5722 = vmatpush2.bf16.msra.mxu0 0
  %5723 = vmatprep.subr.bf16.mxu0 0
  %5724 = vmatpush2.bf16.msra.mxu0 0
  %5725 = vmatprep.subr.bf16.mxu0 0
  %5726 = vmatpush2.bf16.msra.mxu0 0
  %5727 = vmatprep.subr.bf16.mxu0 0
  %5728 = vmatpush2.bf16.msra.mxu0 0
  %5729 = vmatprep.subr.bf16.mxu0 0
  %5730 = vmatpush2.bf16.msra.mxu0 0
  %5731 = vmatprep.subr.bf16.mxu0 0
  %5732 = vmatpush2.bf16.msra.mxu0 0
  %5733 = vmatprep.subr.bf16.mxu0 0
  %5734 = vmatpush2.bf16.msra.mxu0 0
  %5735 = vmatprep.mubr.bf16.mxu0 0
  %5736 = vmatmul.mubr.bf16.gmra.mxu0 %v3308
  %v5737 = vpop.f32.mrf.mxu0
  %v5738 = vadd.f32 0.0, %v5737
  %v5739 = vpop.f32.mrf.mxu0
  %v5740 = vadd.f32 0.0, %v5739
  %v5741 = vpop.f32.mrf.mxu0
  %v5742 = vpop.f32.mrf.mxu0
  %5743 = vdwg.mxu0
  %5744 = vmatprep.subr.bf16.mxu0 0
  %5745 = vmatpush1.bf16.msra.mxu0 0
  %5746 = vmatprep.subr.bf16.mxu0 0
  %5747 = vmatpush1.bf16.msra.mxu0 0
  %5748 = vmatprep.subr.bf16.mxu0 0
  %5749 = vmatpush1.bf16.msra.mxu0 0
  %5750 = vmatprep.subr.bf16.mxu0 %v3624
  %5751 = vmatpush1.bf16.msra.mxu0 %v3621
  %5752 = vmatprep.subr.bf16.mxu0 %v2731
  %5753 = vmatpush1.bf16.msra.mxu0 %v2730
  %5754 = vmatprep.subr.bf16.mxu0 %v2618
  %5755 = vmatpush1.bf16.msra.mxu0 %v2617
  %5756 = vmatprep.subr.bf16.mxu0 %v2505
  %5757 = vmatpush1.bf16.msra.mxu0 %v2504
  %5758 = vmatprep.subr.bf16.mxu0 %v2392
  %5759 = vmatpush1.bf16.msra.mxu0 %v2391
  %5760 = vmatprep.subr.bf16.mxu0 0
  %5761 = vmatpush2.bf16.msra.mxu0 0
  %5762 = vmatprep.subr.bf16.mxu0 0
  %5763 = vmatpush2.bf16.msra.mxu0 0
  %5764 = vmatprep.subr.bf16.mxu0 0
  %5765 = vmatpush2.bf16.msra.mxu0 0
  %5766 = vmatprep.subr.bf16.mxu0 0
  %5767 = vmatpush2.bf16.msra.mxu0 0
  %5768 = vmatprep.subr.bf16.mxu0 0
  %5769 = vmatpush2.bf16.msra.mxu0 0
  %5770 = vmatprep.subr.bf16.mxu0 0
  %5771 = vmatpush2.bf16.msra.mxu0 0
  %5772 = vmatprep.subr.bf16.mxu0 0
  %5773 = vmatpush2.bf16.msra.mxu0 0
  %5774 = vmatprep.subr.bf16.mxu0 0
  %5775 = vmatpush2.bf16.msra.mxu0 0
  %5776 = vmatprep.mubr.bf16.mxu0 0
  %5777 = vmatmul.mubr.bf16.gmra.mxu0 %v3308
  %v5778 = vpop.f32.mrf.mxu0
  %v5779 = vadd.f32 0.0, %v5778
  %v5780 = vpop.f32.mrf.mxu0
  %v5781 = vadd.f32 0.0, %v5780
  %v5782 = vpop.f32.mrf.mxu0
  %v5783 = vpop.f32.mrf.mxu0
  %5784 = vdwg.mxu0
  %5785 = vmatprep.subr.bf16.mxu0 0
  %5786 = vmatpush1.bf16.msra.mxu0 0
  %5787 = vmatprep.subr.bf16.mxu0 0
  %5788 = vmatpush1.bf16.msra.mxu0 0
  %5789 = vmatprep.subr.bf16.mxu0 0
  %5790 = vmatpush1.bf16.msra.mxu0 0
  %5791 = vmatprep.subr.bf16.mxu0 %v3630
  %5792 = vmatpush1.bf16.msra.mxu0 %v3627
  %5793 = vmatprep.subr.bf16.mxu0 %v2733
  %5794 = vmatpush1.bf16.msra.mxu0 %v2732
  %5795 = vmatprep.subr.bf16.mxu0 %v2620
  %5796 = vmatpush1.bf16.msra.mxu0 %v2619
  %5797 = vmatprep.subr.bf16.mxu0 %v2507
  %5798 = vmatpush1.bf16.msra.mxu0 %v2506
  %5799 = vmatprep.subr.bf16.mxu0 %v2394
  %5800 = vmatpush1.bf16.msra.mxu0 %v2393
  %5801 = vmatprep.subr.bf16.mxu0 0
  %5802 = vmatpush2.bf16.msra.mxu0 0
  %5803 = vmatprep.subr.bf16.mxu0 0
  %5804 = vmatpush2.bf16.msra.mxu0 0
  %5805 = vmatprep.subr.bf16.mxu0 0
  %5806 = vmatpush2.bf16.msra.mxu0 0
  %5807 = vmatprep.subr.bf16.mxu0 0
  %5808 = vmatpush2.bf16.msra.mxu0 0
  %5809 = vmatprep.subr.bf16.mxu0 0
  %5810 = vmatpush2.bf16.msra.mxu0 0
  %5811 = vmatprep.subr.bf16.mxu0 0
  %5812 = vmatpush2.bf16.msra.mxu0 0
  %5813 = vmatprep.subr.bf16.mxu0 0
  %5814 = vmatpush2.bf16.msra.mxu0 0
  %5815 = vmatprep.subr.bf16.mxu0 0
  %5816 = vmatpush2.bf16.msra.mxu0 0
  %5817 = vmatprep.mubr.bf16.mxu0 0
  %5818 = vmatmul.mubr.bf16.gmra.mxu0 %v3308
  %v5819 = vpop.f32.mrf.mxu0
  %v5820 = vadd.f32 0.0, %v5819
  %v5821 = vpop.f32.mrf.mxu0
  %v5822 = vadd.f32 0.0, %v5821
  %v5823 = vpop.f32.mrf.mxu0
  %v5824 = vpop.f32.mrf.mxu0
  %5825 = vdwg.mxu0
  %5826 = vmatprep.subr.bf16.mxu0 0
  %5827 = vmatpush1.bf16.msra.mxu0 0
  %5828 = vmatprep.subr.bf16.mxu0 0
  %5829 = vmatpush1.bf16.msra.mxu0 0
  %5830 = vmatprep.subr.bf16.mxu0 0
  %5831 = vmatpush1.bf16.msra.mxu0 0
  %5832 = vmatprep.subr.bf16.mxu0 %v3636
  %5833 = vmatpush1.bf16.msra.mxu0 %v3633
  %5834 = vmatprep.subr.bf16.mxu0 %v2735
  %5835 = vmatpush1.bf16.msra.mxu0 %v2734
  %5836 = vmatprep.subr.bf16.mxu0 %v2622
  %5837 = vmatpush1.bf16.msra.mxu0 %v2621
  %5838 = vmatprep.subr.bf16.mxu0 %v2509
  %5839 = vmatpush1.bf16.msra.mxu0 %v2508
  %5840 = vmatprep.subr.bf16.mxu0 %v2396
  %5841 = vmatpush1.bf16.msra.mxu0 %v2395
  %5842 = vmatprep.subr.bf16.mxu0 0
  %5843 = vmatpush2.bf16.msra.mxu0 0
  %5844 = vmatprep.subr.bf16.mxu0 0
  %5845 = vmatpush2.bf16.msra.mxu0 0
  %5846 = vmatprep.subr.bf16.mxu0 0
  %5847 = vmatpush2.bf16.msra.mxu0 0
  %5848 = vmatprep.subr.bf16.mxu0 0
  %5849 = vmatpush2.bf16.msra.mxu0 0
  %5850 = vmatprep.subr.bf16.mxu0 0
  %5851 = vmatpush2.bf16.msra.mxu0 0
  %5852 = vmatprep.subr.bf16.mxu0 0
  %5853 = vmatpush2.bf16.msra.mxu0 0
  %5854 = vmatprep.subr.bf16.mxu0 0
  %5855 = vmatpush2.bf16.msra.mxu0 0
  %5856 = vmatprep.subr.bf16.mxu0 0
  %5857 = vmatpush2.bf16.msra.mxu0 0
  %5858 = vmatprep.mubr.bf16.mxu0 0
  %5859 = vmatmul.mubr.bf16.gmra.mxu0 %v3308
  %v5860 = vpop.f32.mrf.mxu0
  %v5861 = vadd.f32 0.0, %v5860
  %v5862 = vpop.f32.mrf.mxu0
  %v5863 = vadd.f32 0.0, %v5862
  %v5864 = vpop.f32.mrf.mxu0
  %v5865 = vpop.f32.mrf.mxu0
  %5866 = vdwg.mxu0
  %5867 = vmatprep.subr.bf16.mxu0 0
  %5868 = vmatpush1.bf16.msra.mxu0 0
  %5869 = vmatprep.subr.bf16.mxu0 0
  %5870 = vmatpush1.bf16.msra.mxu0 0
  %5871 = vmatprep.subr.bf16.mxu0 0
  %5872 = vmatpush1.bf16.msra.mxu0 0
  %5873 = vmatprep.subr.bf16.mxu0 %v3642
  %5874 = vmatpush1.bf16.msra.mxu0 %v3639
  %5875 = vmatprep.subr.bf16.mxu0 %v2737
  %5876 = vmatpush1.bf16.msra.mxu0 %v2736
  %5877 = vmatprep.subr.bf16.mxu0 %v2624
  %5878 = vmatpush1.bf16.msra.mxu0 %v2623
  %5879 = vmatprep.subr.bf16.mxu0 %v2511
  %5880 = vmatpush1.bf16.msra.mxu0 %v2510
  %5881 = vmatprep.subr.bf16.mxu0 %v2398
  %5882 = vmatpush1.bf16.msra.mxu0 %v2397
  %5883 = vmatprep.subr.bf16.mxu0 0
  %5884 = vmatpush2.bf16.msra.mxu0 0
  %5885 = vmatprep.subr.bf16.mxu0 0
  %5886 = vmatpush2.bf16.msra.mxu0 0
  %5887 = vmatprep.subr.bf16.mxu0 0
  %5888 = vmatpush2.bf16.msra.mxu0 0
  %5889 = vmatprep.subr.bf16.mxu0 0
  %5890 = vmatpush2.bf16.msra.mxu0 0
  %5891 = vmatprep.subr.bf16.mxu0 0
  %5892 = vmatpush2.bf16.msra.mxu0 0
  %5893 = vmatprep.subr.bf16.mxu0 0
  %5894 = vmatpush2.bf16.msra.mxu0 0
  %5895 = vmatprep.subr.bf16.mxu0 0
  %5896 = vmatpush2.bf16.msra.mxu0 0
  %5897 = vmatprep.subr.bf16.mxu0 0
  %5898 = vmatpush2.bf16.msra.mxu0 0
  %5899 = vmatprep.mubr.bf16.mxu0 0
  %5900 = vmatmul.mubr.bf16.gmra.mxu0 %v3308
  %v5901 = vpop.f32.mrf.mxu0
  %v5902 = vadd.f32 0.0, %v5901
  %v5903 = vpop.f32.mrf.mxu0
  %v5904 = vadd.f32 0.0, %v5903
  %v5905 = vpop.f32.mrf.mxu0
  %v5906 = vpop.f32.mrf.mxu0
  %5907 = vdwg.mxu0
  %5908 = vmatprep.subr.bf16.mxu0 0
  %5909 = vmatpush1.bf16.msra.mxu0 0
  %5910 = vmatprep.subr.bf16.mxu0 0
  %5911 = vmatpush1.bf16.msra.mxu0 0
  %5912 = vmatprep.subr.bf16.mxu0 0
  %5913 = vmatpush1.bf16.msra.mxu0 0
  %5914 = vmatprep.subr.bf16.mxu0 %v3648
  %5915 = vmatpush1.bf16.msra.mxu0 %v3645
  %5916 = vmatprep.subr.bf16.mxu0 %v2739
  %5917 = vmatpush1.bf16.msra.mxu0 %v2738
  %5918 = vmatprep.subr.bf16.mxu0 %v2626
  %5919 = vmatpush1.bf16.msra.mxu0 %v2625
  %5920 = vmatprep.subr.bf16.mxu0 %v2513
  %5921 = vmatpush1.bf16.msra.mxu0 %v2512
  %5922 = vmatprep.subr.bf16.mxu0 %v2400
  %5923 = vmatpush1.bf16.msra.mxu0 %v2399
  %5924 = vmatprep.subr.bf16.mxu0 0
  %5925 = vmatpush2.bf16.msra.mxu0 0
  %5926 = vmatprep.subr.bf16.mxu0 0
  %5927 = vmatpush2.bf16.msra.mxu0 0
  %5928 = vmatprep.subr.bf16.mxu0 0
  %5929 = vmatpush2.bf16.msra.mxu0 0
  %5930 = vmatprep.subr.bf16.mxu0 0
  %5931 = vmatpush2.bf16.msra.mxu0 0
  %5932 = vmatprep.subr.bf16.mxu0 0
  %5933 = vmatpush2.bf16.msra.mxu0 0
  %5934 = vmatprep.subr.bf16.mxu0 0
  %5935 = vmatpush2.bf16.msra.mxu0 0
  %5936 = vmatprep.subr.bf16.mxu0 0
  %5937 = vmatpush2.bf16.msra.mxu0 0
  %5938 = vmatprep.subr.bf16.mxu0 0
  %5939 = vmatpush2.bf16.msra.mxu0 0
  %5940 = vmatprep.mubr.bf16.mxu0 0
  %5941 = vmatmul.mubr.bf16.gmra.mxu0 %v3308
  %v5942 = vpop.f32.mrf.mxu0
  %v5943 = vadd.f32 0.0, %v5942
  %v5944 = vpop.f32.mrf.mxu0
  %v5945 = vadd.f32 0.0, %v5944
  %v5946 = vpop.f32.mrf.mxu0
  %v5947 = vpop.f32.mrf.mxu0
  %5948 = vdwg.mxu0
  %5949 = vmatprep.subr.bf16.mxu0 0
  %5950 = vmatpush1.bf16.msra.mxu0 0
  %5951 = vmatprep.subr.bf16.mxu0 0
  %5952 = vmatpush1.bf16.msra.mxu0 0
  %5953 = vmatprep.subr.bf16.mxu0 0
  %5954 = vmatpush1.bf16.msra.mxu0 0
  %5955 = vmatprep.subr.bf16.mxu0 0
  %5956 = vmatpush1.bf16.msra.mxu0 %v3651
  %5957 = vmatprep.subr.bf16.mxu0 0
  %5958 = vmatpush1.bf16.msra.mxu0 %v2740
  %5959 = vmatprep.subr.bf16.mxu0 0
  %5960 = vmatpush1.bf16.msra.mxu0 %v2627
  %5961 = vmatprep.subr.bf16.mxu0 0
  %5962 = vmatpush1.bf16.msra.mxu0 %v2514
  %5963 = vmatprep.subr.bf16.mxu0 0
  %5964 = vmatpush1.bf16.msra.mxu0 %v2401
  %5965 = vmatprep.subr.bf16.mxu0 0
  %5966 = vmatpush2.bf16.msra.mxu0 0
  %5967 = vmatprep.subr.bf16.mxu0 0
  %5968 = vmatpush2.bf16.msra.mxu0 0
  %5969 = vmatprep.subr.bf16.mxu0 0
  %5970 = vmatpush2.bf16.msra.mxu0 0
  %5971 = vmatprep.subr.bf16.mxu0 0
  %5972 = vmatpush2.bf16.msra.mxu0 0
  %5973 = vmatprep.subr.bf16.mxu0 0
  %5974 = vmatpush2.bf16.msra.mxu0 0
  %5975 = vmatprep.subr.bf16.mxu0 0
  %5976 = vmatpush2.bf16.msra.mxu0 0
  %5977 = vmatprep.subr.bf16.mxu0 0
  %5978 = vmatpush2.bf16.msra.mxu0 0
  %5979 = vmatprep.subr.bf16.mxu0 0
  %5980 = vmatpush2.bf16.msra.mxu0 0
  %5981 = vmatprep.mubr.bf16.mxu0 0
  %5982 = vmatmul.mubr.bf16.gmra.mxu0 %v3308
  %v5983 = vpop.f32.mrf.mxu0
  %v5984 = vadd.f32 0.0, %v5983
  %v5985 = vpop.f32.mrf.mxu0
  %v5986 = vpop.f32.mrf.mxu0
  %v5987 = vpop.f32.mrf.mxu0
  %5988 = vdwg.mxu0
  %v5989 = vld [vmem:[%s2] sm:$0xff]
  %v5990 = vld [vmem:[%s3] sm:$0xff]
  %v5991 = vadd.f32 %v3688, %v3690
  %v5992 = vadd.f32 %v5991, %v3729
  %v5993 = vadd.f32 %v5992, %v3731
  %v5994 = vadd.f32 %v5993, %v3770
  %v5995 = vadd.f32 %v5994, %v3772
  %v5996 = vadd.f32 %v5995, %v3811
  %v5997 = vadd.f32 %v5996, %v3813
  %v5998 = vadd.f32 %v5997, %v3852
  %v5999 = vadd.f32 %v5998, %v3854
  %v6000 = vadd.f32 %v5999, %v3893
  %v6001 = vadd.f32 %v6000, %v3895
  %v6002 = vadd.f32 %v6001, %v3934
  %v6003 = vadd.f32 %v6002, %v3936
  %v6004 = vadd.f32 %v6003, %v3975
  %v6005 = vadd.f32 %v6004, %v3977
  %v6006 = vadd.f32 %v6005, %v4016
  %v6007 = vadd.f32 %v6006, %v4018
  %v6008 = vadd.f32 %v6007, %v4057
  %v6009 = vadd.f32 %v6008, %v4059
  %v6010 = vadd.f32 %v6009, %v4098
  %v6011 = vadd.f32 %v6010, %v4100
  %v6012 = vadd.f32 %v6011, %v4139
  %v6013 = vadd.f32 %v6012, %v4141
  %v6014 = vadd.f32 %v6013, %v4180
  %v6015 = vadd.f32 %v6014, %v4182
  %v6016 = vadd.f32 %v6015, %v4221
  %v6017 = vadd.f32 %v6016, %v4223
  %v6018 = vadd.f32 %v6017, %v4262
  %v6019 = vadd.f32 %v6018, %v4264
  %v6020 = vadd.f32 %v6019, %v4303
  %v6021 = vadd.f32 %v6020, %v4305
  %v6022 = vadd.f32 %v6021, %v4344
  %v6023 = vadd.f32 %v6022, %v4346
  %v6024 = vadd.f32 %v6023, %v4385
  %v6025 = vadd.f32 %v6024, %v4387
  %v6026 = vadd.f32 %v6025, %v4426
  %v6027 = vadd.f32 %v6026, %v4428
  %v6028 = vadd.f32 %v6027, %v4467
  %v6029 = vadd.f32 %v6028, %v4469
  %v6030 = vadd.f32 %v6029, %v4508
  %v6031 = vadd.f32 %v6030, %v4510
  %v6032 = vadd.f32 %v6031, %v4549
  %v6033 = vadd.f32 %v6032, %v4551
  %v6034 = vadd.f32 %v6033, %v4590
  %v6035 = vadd.f32 %v6034, %v4592
  %v6036 = vadd.f32 %v6035, %v4631
  %v6037 = vadd.f32 %v6036, %v4633
  %v6038 = vadd.f32 %v6037, %v4672
  %v6039 = vadd.f32 %v6038, %v4674
  %v6040 = vadd.f32 %v6039, %v4713
  %v6041 = vadd.f32 %v6040, %v4715
  %v6042 = vadd.f32 %v6041, %v4754
  %v6043 = vadd.f32 %v6042, %v4756
  %v6044 = vadd.f32 %v6043, %v4795
  %v6045 = vadd.f32 %v6044, %v4797
  %v6046 = vadd.f32 %v6045, %v4836
  %v6047 = vadd.f32 %v6046, %v4838
  %v6048 = vadd.f32 %v6047, %v4877
  %v6049 = vadd.f32 %v6048, %v4879
  %v6050 = vadd.f32 %v6049, %v4918
  %v6051 = vadd.f32 %v6050, %v4920
  %v6052 = vadd.f32 %v6051, %v4959
  %v6053 = vadd.f32 %v6052, %v4961
  %v6054 = vadd.f32 %v6053, %v5000
  %v6055 = vadd.f32 %v6054, %v5002
  %v6056 = vadd.f32 %v6055, %v5041
  %v6057 = vadd.f32 %v6056, %v5043
  %v6058 = vadd.f32 %v6057, %v5082
  %v6059 = vadd.f32 %v6058, %v5084
  %v6060 = vadd.f32 %v6059, %v5123
  %v6061 = vadd.f32 %v6060, %v5125
  %v6062 = vadd.f32 %v6061, %v5164
  %v6063 = vadd.f32 %v6062, %v5166
  %v6064 = vadd.f32 %v6063, %v5205
  %v6065 = vadd.f32 %v6064, %v5207
  %v6066 = vadd.f32 %v6065, %v5246
  %v6067 = vadd.f32 %v6066, %v5248
  %v6068 = vadd.f32 %v6067, %v5287
  %v6069 = vadd.f32 %v6068, %v5289
  %v6070 = vadd.f32 %v6069, %v5328
  %v6071 = vadd.f32 %v6070, %v5330
  %v6072 = vadd.f32 %v6071, %v5369
  %v6073 = vadd.f32 %v6072, %v5371
  %v6074 = vadd.f32 %v6073, %v5410
  %v6075 = vadd.f32 %v6074, %v5412
  %v6076 = vadd.f32 %v6075, %v5451
  %v6077 = vadd.f32 %v6076, %v5453
  %v6078 = vadd.f32 %v6077, %v5492
  %v6079 = vadd.f32 %v6078, %v5494
  %v6080 = vadd.f32 %v6079, %v5533
  %v6081 = vadd.f32 %v6080, %v5535
  %v6082 = vadd.f32 %v6081, %v5574
  %v6083 = vadd.f32 %v6082, %v5576
  %v6084 = vadd.f32 %v6083, %v5615
  %v6085 = vadd.f32 %v6084, %v5617
  %v6086 = vadd.f32 %v6085, %v5656
  %v6087 = vadd.f32 %v6086, %v5658
  %v6088 = vadd.f32 %v6087, %v5697
  %v6089 = vadd.f32 %v6088, %v5699
  %v6090 = vadd.f32 %v6089, %v5738
  %v6091 = vadd.f32 %v6090, %v5740
  %v6092 = vadd.f32 %v6091, %v5779
  %v6093 = vadd.f32 %v6092, %v5781
  %v6094 = vadd.f32 %v6093, %v5820
  %v6095 = vadd.f32 %v6094, %v5822
  %v6096 = vadd.f32 %v6095, %v5861
  %v6097 = vadd.f32 %v6096, %v5863
  %v6098 = vadd.f32 %v6097, %v5902
  %v6099 = vadd.f32 %v6098, %v5904
  %v6100 = vadd.f32 %v6099, %v5943
  %v6101 = vadd.f32 %v6100, %v5945
  %vm6102 = vcmask 523264
  %v6103 = vsel %vm6102, %v5984, 0.0
  %v6104 = vadd.f32 %v6101, %v6103
  %6105 = vadd.xlane.f32.xlu0 %v6104
  %v6106 = vpop.xlane.xlu0 %6105
  %v6107 = vmul.f32 %v3688, %v3688
  %v6108 = vmul.f32 %v3690, %v3690
  %v6109 = vmul.f32 %v3729, %v3729
  %v6110 = vmul.f32 %v3731, %v3731
  %v6111 = vmul.f32 %v3770, %v3770
  %v6112 = vmul.f32 %v3772, %v3772
  %v6113 = vmul.f32 %v3811, %v3811
  %v6114 = vmul.f32 %v3813, %v3813
  %v6115 = vmul.f32 %v3852, %v3852
  %v6116 = vmul.f32 %v3854, %v3854
  %v6117 = vmul.f32 %v3893, %v3893
  %v6118 = vmul.f32 %v3895, %v3895
  %v6119 = vmul.f32 %v3934, %v3934
  %v6120 = vmul.f32 %v3936, %v3936
  %v6121 = vmul.f32 %v3975, %v3975
  %v6122 = vmul.f32 %v3977, %v3977
  %v6123 = vmul.f32 %v4016, %v4016
  %v6124 = vmul.f32 %v4018, %v4018
  %v6125 = vmul.f32 %v4057, %v4057
  %v6126 = vmul.f32 %v4059, %v4059
  %v6127 = vmul.f32 %v4098, %v4098
  %v6128 = vmul.f32 %v4100, %v4100
  %v6129 = vmul.f32 %v4139, %v4139
  %v6130 = vmul.f32 %v4141, %v4141
  %v6131 = vmul.f32 %v4180, %v4180
  %v6132 = vmul.f32 %v4182, %v4182
  %v6133 = vmul.f32 %v4221, %v4221
  %v6134 = vmul.f32 %v4223, %v4223
  %v6135 = vmul.f32 %v4262, %v4262
  %v6136 = vmul.f32 %v4264, %v4264
  %v6137 = vmul.f32 %v4303, %v4303
  %v6138 = vmul.f32 %v4305, %v4305
  %v6139 = vmul.f32 %v4344, %v4344
  %v6140 = vmul.f32 %v4346, %v4346
  %v6141 = vmul.f32 %v4385, %v4385
  %v6142 = vmul.f32 %v4387, %v4387
  %v6143 = vmul.f32 %v4426, %v4426
  %v6144 = vmul.f32 %v4428, %v4428
  %v6145 = vmul.f32 %v4467, %v4467
  %v6146 = vmul.f32 %v4469, %v4469
  %v6147 = vmul.f32 %v4508, %v4508
  %v6148 = vmul.f32 %v4510, %v4510
  %v6149 = vmul.f32 %v4549, %v4549
  %v6150 = vmul.f32 %v4551, %v4551
  %v6151 = vmul.f32 %v4590, %v4590
  %v6152 = vmul.f32 %v4592, %v4592
  %v6153 = vmul.f32 %v4631, %v4631
  %v6154 = vmul.f32 %v4633, %v4633
  %v6155 = vmul.f32 %v4672, %v4672
  %v6156 = vmul.f32 %v4674, %v4674
  %v6157 = vmul.f32 %v4713, %v4713
  %v6158 = vmul.f32 %v4715, %v4715
  %v6159 = vmul.f32 %v4754, %v4754
  %v6160 = vmul.f32 %v4756, %v4756
  %v6161 = vmul.f32 %v4795, %v4795
  %v6162 = vmul.f32 %v4797, %v4797
  %v6163 = vmul.f32 %v4836, %v4836
  %v6164 = vmul.f32 %v4838, %v4838
  %v6165 = vmul.f32 %v4877, %v4877
  %v6166 = vmul.f32 %v4879, %v4879
  %v6167 = vmul.f32 %v4918, %v4918
  %v6168 = vmul.f32 %v4920, %v4920
  %v6169 = vmul.f32 %v4959, %v4959
  %v6170 = vmul.f32 %v4961, %v4961
  %v6171 = vmul.f32 %v5000, %v5000
  %v6172 = vmul.f32 %v5002, %v5002
  %v6173 = vmul.f32 %v5041, %v5041
  %v6174 = vmul.f32 %v5043, %v5043
  %v6175 = vmul.f32 %v5082, %v5082
  %v6176 = vmul.f32 %v5084, %v5084
  %v6177 = vmul.f32 %v5123, %v5123
  %v6178 = vmul.f32 %v5125, %v5125
  %v6179 = vmul.f32 %v5164, %v5164
  %v6180 = vmul.f32 %v5166, %v5166
  %v6181 = vmul.f32 %v5205, %v5205
  %v6182 = vmul.f32 %v5207, %v5207
  %v6183 = vmul.f32 %v5246, %v5246
  %v6184 = vmul.f32 %v5248, %v5248
  %v6185 = vmul.f32 %v5287, %v5287
  %v6186 = vmul.f32 %v5289, %v5289
  %v6187 = vmul.f32 %v5328, %v5328
  %v6188 = vmul.f32 %v5330, %v5330
  %v6189 = vmul.f32 %v5369, %v5369
  %v6190 = vmul.f32 %v5371, %v5371
  %v6191 = vmul.f32 %v5410, %v5410
  %v6192 = vmul.f32 %v5412, %v5412
  %v6193 = vmul.f32 %v5451, %v5451
  %v6194 = vmul.f32 %v5453, %v5453
  %v6195 = vmul.f32 %v5492, %v5492
  %v6196 = vmul.f32 %v5494, %v5494
  %v6197 = vmul.f32 %v5533, %v5533
  %v6198 = vmul.f32 %v5535, %v5535
  %v6199 = vmul.f32 %v5574, %v5574
  %v6200 = vmul.f32 %v5576, %v5576
  %v6201 = vmul.f32 %v5615, %v5615
  %v6202 = vmul.f32 %v5617, %v5617
  %v6203 = vmul.f32 %v5656, %v5656
  %v6204 = vmul.f32 %v5658, %v5658
  %v6205 = vmul.f32 %v5697, %v5697
  %v6206 = vmul.f32 %v5699, %v5699
  %v6207 = vmul.f32 %v5738, %v5738
  %v6208 = vmul.f32 %v5740, %v5740
  %v6209 = vmul.f32 %v5779, %v5779
  %v6210 = vmul.f32 %v5781, %v5781
  %v6211 = vmul.f32 %v5820, %v5820
  %v6212 = vmul.f32 %v5822, %v5822
  %v6213 = vmul.f32 %v5861, %v5861
  %v6214 = vmul.f32 %v5863, %v5863
  %v6215 = vmul.f32 %v5902, %v5902
  %v6216 = vmul.f32 %v5904, %v5904
  %v6217 = vmul.f32 %v5943, %v5943
  %v6218 = vmul.f32 %v5945, %v5945
  %v6219 = vmul.f32 %v5984, %v5984
  %v6220 = vadd.f32 %v6107, %v6108
  %v6221 = vadd.f32 %v6220, %v6109
  %v6222 = vadd.f32 %v6221, %v6110
  %v6223 = vadd.f32 %v6222, %v6111
  %v6224 = vadd.f32 %v6223, %v6112
  %v6225 = vadd.f32 %v6224, %v6113
  %v6226 = vadd.f32 %v6225, %v6114
  %v6227 = vadd.f32 %v6226, %v6115
  %v6228 = vadd.f32 %v6227, %v6116
  %v6229 = vadd.f32 %v6228, %v6117
  %v6230 = vadd.f32 %v6229, %v6118
  %v6231 = vadd.f32 %v6230, %v6119
  %v6232 = vadd.f32 %v6231, %v6120
  %v6233 = vadd.f32 %v6232, %v6121
  %v6234 = vadd.f32 %v6233, %v6122
  %v6235 = vadd.f32 %v6234, %v6123
  %v6236 = vadd.f32 %v6235, %v6124
  %v6237 = vadd.f32 %v6236, %v6125
  %v6238 = vadd.f32 %v6237, %v6126
  %v6239 = vadd.f32 %v6238, %v6127
  %v6240 = vadd.f32 %v6239, %v6128
  %v6241 = vadd.f32 %v6240, %v6129
  %v6242 = vadd.f32 %v6241, %v6130
  %v6243 = vadd.f32 %v6242, %v6131
  %v6244 = vadd.f32 %v6243, %v6132
  %v6245 = vadd.f32 %v6244, %v6133
  %v6246 = vadd.f32 %v6245, %v6134
  %v6247 = vadd.f32 %v6246, %v6135
  %v6248 = vadd.f32 %v6247, %v6136
  %v6249 = vadd.f32 %v6248, %v6137
  %v6250 = vadd.f32 %v6249, %v6138
  %v6251 = vadd.f32 %v6250, %v6139
  %v6252 = vadd.f32 %v6251, %v6140
  %v6253 = vadd.f32 %v6252, %v6141
  %v6254 = vadd.f32 %v6253, %v6142
  %v6255 = vadd.f32 %v6254, %v6143
  %v6256 = vadd.f32 %v6255, %v6144
  %v6257 = vadd.f32 %v6256, %v6145
  %v6258 = vadd.f32 %v6257, %v6146
  %v6259 = vadd.f32 %v6258, %v6147
  %v6260 = vadd.f32 %v6259, %v6148
  %v6261 = vadd.f32 %v6260, %v6149
  %v6262 = vadd.f32 %v6261, %v6150
  %v6263 = vadd.f32 %v6262, %v6151
  %v6264 = vadd.f32 %v6263, %v6152
  %v6265 = vadd.f32 %v6264, %v6153
  %v6266 = vadd.f32 %v6265, %v6154
  %v6267 = vadd.f32 %v6266, %v6155
  %v6268 = vadd.f32 %v6267, %v6156
  %v6269 = vadd.f32 %v6268, %v6157
  %v6270 = vadd.f32 %v6269, %v6158
  %v6271 = vadd.f32 %v6270, %v6159
  %v6272 = vadd.f32 %v6271, %v6160
  %v6273 = vadd.f32 %v6272, %v6161
  %v6274 = vadd.f32 %v6273, %v6162
  %v6275 = vadd.f32 %v6274, %v6163
  %v6276 = vadd.f32 %v6275, %v6164
  %v6277 = vadd.f32 %v6276, %v6165
  %v6278 = vadd.f32 %v6277, %v6166
  %v6279 = vadd.f32 %v6278, %v6167
  %v6280 = vadd.f32 %v6279, %v6168
  %v6281 = vadd.f32 %v6280, %v6169
  %v6282 = vadd.f32 %v6281, %v6170
  %v6283 = vadd.f32 %v6282, %v6171
  %v6284 = vadd.f32 %v6283, %v6172
  %v6285 = vadd.f32 %v6284, %v6173
  %v6286 = vadd.f32 %v6285, %v6174
  %v6287 = vadd.f32 %v6286, %v6175
  %v6288 = vadd.f32 %v6287, %v6176
  %v6289 = vadd.f32 %v6288, %v6177
  %v6290 = vadd.f32 %v6289, %v6178
  %v6291 = vadd.f32 %v6290, %v6179
  %v6292 = vadd.f32 %v6291, %v6180
  %v6293 = vadd.f32 %v6292, %v6181
  %v6294 = vadd.f32 %v6293, %v6182
  %v6295 = vadd.f32 %v6294, %v6183
  %v6296 = vadd.f32 %v6295, %v6184
  %v6297 = vadd.f32 %v6296, %v6185
  %v6298 = vadd.f32 %v6297, %v6186
  %v6299 = vadd.f32 %v6298, %v6187
  %v6300 = vadd.f32 %v6299, %v6188
  %v6301 = vadd.f32 %v6300, %v6189
  %v6302 = vadd.f32 %v6301, %v6190
  %v6303 = vadd.f32 %v6302, %v6191
  %v6304 = vadd.f32 %v6303, %v6192
  %v6305 = vadd.f32 %v6304, %v6193
  %v6306 = vadd.f32 %v6305, %v6194
  %v6307 = vadd.f32 %v6306, %v6195
  %v6308 = vadd.f32 %v6307, %v6196
  %v6309 = vadd.f32 %v6308, %v6197
  %v6310 = vadd.f32 %v6309, %v6198
  %v6311 = vadd.f32 %v6310, %v6199
  %v6312 = vadd.f32 %v6311, %v6200
  %v6313 = vadd.f32 %v6312, %v6201
  %v6314 = vadd.f32 %v6313, %v6202
  %v6315 = vadd.f32 %v6314, %v6203
  %v6316 = vadd.f32 %v6315, %v6204
  %v6317 = vadd.f32 %v6316, %v6205
  %v6318 = vadd.f32 %v6317, %v6206
  %v6319 = vadd.f32 %v6318, %v6207
  %v6320 = vadd.f32 %v6319, %v6208
  %v6321 = vadd.f32 %v6320, %v6209
  %v6322 = vadd.f32 %v6321, %v6210
  %v6323 = vadd.f32 %v6322, %v6211
  %v6324 = vadd.f32 %v6323, %v6212
  %v6325 = vadd.f32 %v6324, %v6213
  %v6326 = vadd.f32 %v6325, %v6214
  %v6327 = vadd.f32 %v6326, %v6215
  %v6328 = vadd.f32 %v6327, %v6216
  %v6329 = vadd.f32 %v6328, %v6217
  %v6330 = vadd.f32 %v6329, %v6218
  %v6331 = vsel %vm6102, %v6219, 0.0
  %v6332 = vadd.f32 %v6330, %v6331
  %6333 = vadd.xlane.f32.xlu0 %v6332
  %v6334 = vpop.xlane.xlu0 %6333
  %v6335 = vmul.f32 %v6106, 6.9444446e-05
  %v6336 = vmul.f32 %v6334, 6.9444446e-05
  %v6337 = vmul.f32 %v6335, %v6335
  %v6338 = vsub.f32 %v6336, %v6337
  %v6339 = vmax.f32 %v6338, 0.0
  %v6340 = vadd.f32 %v6339, 1e-05
  %v6341 = vrsqrt.pop %v6340
  %v6342 = vmul.f32 %v5989, %v6341
  %v6343 = vmul.f32 %v6335, %v6342
  %v6344 = vsub.f32 %v5990, %v6343
  %6346 = vset.pattern.permute.xlu0 0
  %6347 = vperm.xlu0 %6346, %v6342
  %v6348 = vpop.permute.xlu0 %6347
  %v6350 = vmul.f32 %v3688, %v6348
  %v6351 = vmul.f32 %v3690, %v6348
  %v6352 = vmul.f32 %v3729, %v6348
  %v6353 = vmul.f32 %v3731, %v6348
  %v6354 = vmul.f32 %v3770, %v6348
  %v6355 = vmul.f32 %v3772, %v6348
  %v6356 = vmul.f32 %v3811, %v6348
  %v6357 = vmul.f32 %v3813, %v6348
  %v6358 = vmul.f32 %v3852, %v6348
  %v6359 = vmul.f32 %v3854, %v6348
  %v6360 = vmul.f32 %v3893, %v6348
  %v6361 = vmul.f32 %v3895, %v6348
  %v6362 = vmul.f32 %v3934, %v6348
  %v6363 = vmul.f32 %v3936, %v6348
  %v6364 = vmul.f32 %v3975, %v6348
  %v6365 = vmul.f32 %v3977, %v6348
  %v6366 = vmul.f32 %v4016, %v6348
  %v6367 = vmul.f32 %v4018, %v6348
  %v6368 = vmul.f32 %v4057, %v6348
  %v6369 = vmul.f32 %v4059, %v6348
  %v6370 = vmul.f32 %v4098, %v6348
  %v6371 = vmul.f32 %v4100, %v6348
  %v6372 = vmul.f32 %v4139, %v6348
  %v6373 = vmul.f32 %v4141, %v6348
  %v6374 = vmul.f32 %v4180, %v6348
  %v6375 = vmul.f32 %v4182, %v6348
  %v6376 = vmul.f32 %v4221, %v6348
  %v6377 = vmul.f32 %v4223, %v6348
  %v6378 = vmul.f32 %v4262, %v6348
  %v6379 = vmul.f32 %v4264, %v6348
  %v6380 = vmul.f32 %v4303, %v6348
  %v6381 = vmul.f32 %v4305, %v6348
  %v6382 = vmul.f32 %v4344, %v6348
  %v6383 = vmul.f32 %v4346, %v6348
  %v6384 = vmul.f32 %v4385, %v6348
  %v6385 = vmul.f32 %v4387, %v6348
  %v6386 = vmul.f32 %v4426, %v6348
  %v6387 = vmul.f32 %v4428, %v6348
  %v6388 = vmul.f32 %v4467, %v6348
  %v6389 = vmul.f32 %v4469, %v6348
  %v6390 = vmul.f32 %v4508, %v6348
  %v6391 = vmul.f32 %v4510, %v6348
  %v6392 = vmul.f32 %v4549, %v6348
  %v6393 = vmul.f32 %v4551, %v6348
  %v6394 = vmul.f32 %v4590, %v6348
  %v6395 = vmul.f32 %v4592, %v6348
  %v6396 = vmul.f32 %v4631, %v6348
  %v6397 = vmul.f32 %v4633, %v6348
  %v6398 = vmul.f32 %v4672, %v6348
  %v6399 = vmul.f32 %v4674, %v6348
  %v6400 = vmul.f32 %v4713, %v6348
  %v6401 = vmul.f32 %v4715, %v6348
  %v6402 = vmul.f32 %v4754, %v6348
  %v6403 = vmul.f32 %v4756, %v6348
  %v6404 = vmul.f32 %v4795, %v6348
  %v6405 = vmul.f32 %v4797, %v6348
  %v6406 = vmul.f32 %v4836, %v6348
  %v6407 = vmul.f32 %v4838, %v6348
  %v6408 = vmul.f32 %v4877, %v6348
  %v6409 = vmul.f32 %v4879, %v6348
  %v6410 = vmul.f32 %v4918, %v6348
  %v6411 = vmul.f32 %v4920, %v6348
  %v6412 = vmul.f32 %v4959, %v6348
  %v6413 = vmul.f32 %v4961, %v6348
  %v6414 = vmul.f32 %v5000, %v6348
  %v6415 = vmul.f32 %v5002, %v6348
  %v6416 = vmul.f32 %v5041, %v6348
  %v6417 = vmul.f32 %v5043, %v6348
  %v6418 = vmul.f32 %v5082, %v6348
  %v6419 = vmul.f32 %v5084, %v6348
  %v6420 = vmul.f32 %v5123, %v6348
  %v6421 = vmul.f32 %v5125, %v6348
  %v6422 = vmul.f32 %v5164, %v6348
  %v6423 = vmul.f32 %v5166, %v6348
  %v6424 = vmul.f32 %v5205, %v6348
  %v6425 = vmul.f32 %v5207, %v6348
  %v6426 = vmul.f32 %v5246, %v6348
  %v6427 = vmul.f32 %v5248, %v6348
  %v6428 = vmul.f32 %v5287, %v6348
  %v6429 = vmul.f32 %v5289, %v6348
  %v6430 = vmul.f32 %v5328, %v6348
  %v6431 = vmul.f32 %v5330, %v6348
  %v6432 = vmul.f32 %v5369, %v6348
  %v6433 = vmul.f32 %v5371, %v6348
  %v6434 = vmul.f32 %v5410, %v6348
  %v6435 = vmul.f32 %v5412, %v6348
  %v6436 = vmul.f32 %v5451, %v6348
  %v6437 = vmul.f32 %v5453, %v6348
  %v6438 = vmul.f32 %v5492, %v6348
  %v6439 = vmul.f32 %v5494, %v6348
  %v6440 = vmul.f32 %v5533, %v6348
  %v6441 = vmul.f32 %v5535, %v6348
  %v6442 = vmul.f32 %v5574, %v6348
  %v6443 = vmul.f32 %v5576, %v6348
  %v6444 = vmul.f32 %v5615, %v6348
  %v6445 = vmul.f32 %v5617, %v6348
  %v6446 = vmul.f32 %v5656, %v6348
  %v6447 = vmul.f32 %v5658, %v6348
  %v6448 = vmul.f32 %v5697, %v6348
  %v6449 = vmul.f32 %v5699, %v6348
  %v6450 = vmul.f32 %v5738, %v6348
  %v6451 = vmul.f32 %v5740, %v6348
  %v6452 = vmul.f32 %v5779, %v6348
  %v6453 = vmul.f32 %v5781, %v6348
  %v6454 = vmul.f32 %v5820, %v6348
  %v6455 = vmul.f32 %v5822, %v6348
  %v6456 = vmul.f32 %v5861, %v6348
  %v6457 = vmul.f32 %v5863, %v6348
  %v6458 = vmul.f32 %v5902, %v6348
  %v6459 = vmul.f32 %v5904, %v6348
  %v6460 = vmul.f32 %v5943, %v6348
  %v6461 = vmul.f32 %v5945, %v6348
  %v6462 = vmul.f32 %v5984, %v6348
  %6464 = vset.pattern.permute.xlu0 0
  %6465 = vperm.xlu0 %6464, %v6344
  %v6466 = vpop.permute.xlu0 %6465
  %v6468 = vadd.f32 %v6350, %v6466
  %v6469 = vadd.f32 %v6351, %v6466
  %v6470 = vadd.f32 %v6352, %v6466
  %v6471 = vadd.f32 %v6353, %v6466
  %v6472 = vadd.f32 %v6354, %v6466
  %v6473 = vadd.f32 %v6355, %v6466
  %v6474 = vadd.f32 %v6356, %v6466
  %v6475 = vadd.f32 %v6357, %v6466
  %v6476 = vadd.f32 %v6358, %v6466
  %v6477 = vadd.f32 %v6359, %v6466
  %v6478 = vadd.f32 %v6360, %v6466
  %v6479 = vadd.f32 %v6361, %v6466
  %v6480 = vadd.f32 %v6362, %v6466
  %v6481 = vadd.f32 %v6363, %v6466
  %v6482 = vadd.f32 %v6364, %v6466
  %v6483 = vadd.f32 %v6365, %v6466
  %v6484 = vadd.f32 %v6366, %v6466
  %v6485 = vadd.f32 %v6367, %v6466
  %v6486 = vadd.f32 %v6368, %v6466
  %v6487 = vadd.f32 %v6369, %v6466
  %v6488 = vadd.f32 %v6370, %v6466
  %v6489 = vadd.f32 %v6371, %v6466
  %v6490 = vadd.f32 %v6372, %v6466
  %v6491 = vadd.f32 %v6373, %v6466
  %v6492 = vadd.f32 %v6374, %v6466
  %v6493 = vadd.f32 %v6375, %v6466
  %v6494 = vadd.f32 %v6376, %v6466
  %v6495 = vadd.f32 %v6377, %v6466
  %v6496 = vadd.f32 %v6378, %v6466
  %v6497 = vadd.f32 %v6379, %v6466
  %v6498 = vadd.f32 %v6380, %v6466
  %v6499 = vadd.f32 %v6381, %v6466
  %v6500 = vadd.f32 %v6382, %v6466
  %v6501 = vadd.f32 %v6383, %v6466
  %v6502 = vadd.f32 %v6384, %v6466
  %v6503 = vadd.f32 %v6385, %v6466
  %v6504 = vadd.f32 %v6386, %v6466
  %v6505 = vadd.f32 %v6387, %v6466
  %v6506 = vadd.f32 %v6388, %v6466
  %v6507 = vadd.f32 %v6389, %v6466
  %v6508 = vadd.f32 %v6390, %v6466
  %v6509 = vadd.f32 %v6391, %v6466
  %v6510 = vadd.f32 %v6392, %v6466
  %v6511 = vadd.f32 %v6393, %v6466
  %v6512 = vadd.f32 %v6394, %v6466
  %v6513 = vadd.f32 %v6395, %v6466
  %v6514 = vadd.f32 %v6396, %v6466
  %v6515 = vadd.f32 %v6397, %v6466
  %v6516 = vadd.f32 %v6398, %v6466
  %v6517 = vadd.f32 %v6399, %v6466
  %v6518 = vadd.f32 %v6400, %v6466
  %v6519 = vadd.f32 %v6401, %v6466
  %v6520 = vadd.f32 %v6402, %v6466
  %v6521 = vadd.f32 %v6403, %v6466
  %v6522 = vadd.f32 %v6404, %v6466
  %v6523 = vadd.f32 %v6405, %v6466
  %v6524 = vadd.f32 %v6406, %v6466
  %v6525 = vadd.f32 %v6407, %v6466
  %v6526 = vadd.f32 %v6408, %v6466
  %v6527 = vadd.f32 %v6409, %v6466
  %v6528 = vadd.f32 %v6410, %v6466
  %v6529 = vadd.f32 %v6411, %v6466
  %v6530 = vadd.f32 %v6412, %v6466
  %v6531 = vadd.f32 %v6413, %v6466
  %v6532 = vadd.f32 %v6414, %v6466
  %v6533 = vadd.f32 %v6415, %v6466
  %v6534 = vadd.f32 %v6416, %v6466
  %v6535 = vadd.f32 %v6417, %v6466
  %v6536 = vadd.f32 %v6418, %v6466
  %v6537 = vadd.f32 %v6419, %v6466
  %v6538 = vadd.f32 %v6420, %v6466
  %v6539 = vadd.f32 %v6421, %v6466
  %v6540 = vadd.f32 %v6422, %v6466
  %v6541 = vadd.f32 %v6423, %v6466
  %v6542 = vadd.f32 %v6424, %v6466
  %v6543 = vadd.f32 %v6425, %v6466
  %v6544 = vadd.f32 %v6426, %v6466
  %v6545 = vadd.f32 %v6427, %v6466
  %v6546 = vadd.f32 %v6428, %v6466
  %v6547 = vadd.f32 %v6429, %v6466
  %v6548 = vadd.f32 %v6430, %v6466
  %v6549 = vadd.f32 %v6431, %v6466
  %v6550 = vadd.f32 %v6432, %v6466
  %v6551 = vadd.f32 %v6433, %v6466
  %v6552 = vadd.f32 %v6434, %v6466
  %v6553 = vadd.f32 %v6435, %v6466
  %v6554 = vadd.f32 %v6436, %v6466
  %v6555 = vadd.f32 %v6437, %v6466
  %v6556 = vadd.f32 %v6438, %v6466
  %v6557 = vadd.f32 %v6439, %v6466
  %v6558 = vadd.f32 %v6440, %v6466
  %v6559 = vadd.f32 %v6441, %v6466
  %v6560 = vadd.f32 %v6442, %v6466
  %v6561 = vadd.f32 %v6443, %v6466
  %v6562 = vadd.f32 %v6444, %v6466
  %v6563 = vadd.f32 %v6445, %v6466
  %v6564 = vadd.f32 %v6446, %v6466
  %v6565 = vadd.f32 %v6447, %v6466
  %v6566 = vadd.f32 %v6448, %v6466
  %v6567 = vadd.f32 %v6449, %v6466
  %v6568 = vadd.f32 %v6450, %v6466
  %v6569 = vadd.f32 %v6451, %v6466
  %v6570 = vadd.f32 %v6452, %v6466
  %v6571 = vadd.f32 %v6453, %v6466
  %v6572 = vadd.f32 %v6454, %v6466
  %v6573 = vadd.f32 %v6455, %v6466
  %v6574 = vadd.f32 %v6456, %v6466
  %v6575 = vadd.f32 %v6457, %v6466
  %v6576 = vadd.f32 %v6458, %v6466
  %v6577 = vadd.f32 %v6459, %v6466
  %v6578 = vadd.f32 %v6460, %v6466
  %v6579 = vadd.f32 %v6461, %v6466
  %v6580 = vadd.f32 %v6462, %v6466
  %v6581 = vmax.f32 %v6468, 0.0
  %v6582 = vmax.f32 %v6469, 0.0
  %v6583 = vmax.f32 %v6470, 0.0
  %v6584 = vmax.f32 %v6471, 0.0
  %v6585 = vmax.f32 %v6472, 0.0
  %v6586 = vmax.f32 %v6473, 0.0
  %v6587 = vmax.f32 %v6474, 0.0
  %v6588 = vmax.f32 %v6475, 0.0
  %v6589 = vmax.f32 %v6476, 0.0
  %v6590 = vmax.f32 %v6477, 0.0
  %v6591 = vmax.f32 %v6478, 0.0
  %v6592 = vmax.f32 %v6479, 0.0
  %v6593 = vmax.f32 %v6480, 0.0
  %v6594 = vmax.f32 %v6481, 0.0
  %v6595 = vmax.f32 %v6482, 0.0
  %v6596 = vmax.f32 %v6483, 0.0
  %v6597 = vmax.f32 %v6484, 0.0
  %v6598 = vmax.f32 %v6485, 0.0
  %v6599 = vmax.f32 %v6486, 0.0
  %v6600 = vmax.f32 %v6487, 0.0
  %v6601 = vmax.f32 %v6488, 0.0
  %v6602 = vmax.f32 %v6489, 0.0
  %v6603 = vmax.f32 %v6490, 0.0
  %v6604 = vmax.f32 %v6491, 0.0
  %v6605 = vmax.f32 %v6492, 0.0
  %v6606 = vmax.f32 %v6493, 0.0
  %v6607 = vmax.f32 %v6494, 0.0
  %v6608 = vmax.f32 %v6495, 0.0
  %v6609 = vmax.f32 %v6496, 0.0
  %v6610 = vmax.f32 %v6497, 0.0
  %v6611 = vmax.f32 %v6498, 0.0
  %v6612 = vmax.f32 %v6499, 0.0
  %v6613 = vmax.f32 %v6500, 0.0
  %v6614 = vmax.f32 %v6501, 0.0
  %v6615 = vmax.f32 %v6502, 0.0
  %v6616 = vmax.f32 %v6503, 0.0
  %v6617 = vmax.f32 %v6504, 0.0
  %v6618 = vmax.f32 %v6505, 0.0
  %v6619 = vmax.f32 %v6506, 0.0
  %v6620 = vmax.f32 %v6507, 0.0
  %v6621 = vmax.f32 %v6508, 0.0
  %v6622 = vmax.f32 %v6509, 0.0
  %v6623 = vmax.f32 %v6510, 0.0
  %v6624 = vmax.f32 %v6511, 0.0
  %v6625 = vmax.f32 %v6512, 0.0
  %v6626 = vmax.f32 %v6513, 0.0
  %v6627 = vmax.f32 %v6514, 0.0
  %v6628 = vmax.f32 %v6515, 0.0
  %v6629 = vmax.f32 %v6516, 0.0
  %v6630 = vmax.f32 %v6517, 0.0
  %v6631 = vmax.f32 %v6518, 0.0
  %v6632 = vmax.f32 %v6519, 0.0
  %v6633 = vmax.f32 %v6520, 0.0
  %v6634 = vmax.f32 %v6521, 0.0
  %v6635 = vmax.f32 %v6522, 0.0
  %v6636 = vmax.f32 %v6523, 0.0
  %v6637 = vmax.f32 %v6524, 0.0
  %v6638 = vmax.f32 %v6525, 0.0
  %v6639 = vmax.f32 %v6526, 0.0
  %v6640 = vmax.f32 %v6527, 0.0
  %v6641 = vmax.f32 %v6528, 0.0
  %v6642 = vmax.f32 %v6529, 0.0
  %v6643 = vmax.f32 %v6530, 0.0
  %v6644 = vmax.f32 %v6531, 0.0
  %v6645 = vmax.f32 %v6532, 0.0
  %v6646 = vmax.f32 %v6533, 0.0
  %v6647 = vmax.f32 %v6534, 0.0
  %v6648 = vmax.f32 %v6535, 0.0
  %v6649 = vmax.f32 %v6536, 0.0
  %v6650 = vmax.f32 %v6537, 0.0
  %v6651 = vmax.f32 %v6538, 0.0
  %v6652 = vmax.f32 %v6539, 0.0
  %v6653 = vmax.f32 %v6540, 0.0
  %v6654 = vmax.f32 %v6541, 0.0
  %v6655 = vmax.f32 %v6542, 0.0
  %v6656 = vmax.f32 %v6543, 0.0
  %v6657 = vmax.f32 %v6544, 0.0
  %v6658 = vmax.f32 %v6545, 0.0
  %v6659 = vmax.f32 %v6546, 0.0
  %v6660 = vmax.f32 %v6547, 0.0
  %v6661 = vmax.f32 %v6548, 0.0
  %v6662 = vmax.f32 %v6549, 0.0
  %v6663 = vmax.f32 %v6550, 0.0
  %v6664 = vmax.f32 %v6551, 0.0
  %v6665 = vmax.f32 %v6552, 0.0
  %v6666 = vmax.f32 %v6553, 0.0
  %v6667 = vmax.f32 %v6554, 0.0
  %v6668 = vmax.f32 %v6555, 0.0
  %v6669 = vmax.f32 %v6556, 0.0
  %v6670 = vmax.f32 %v6557, 0.0
  %v6671 = vmax.f32 %v6558, 0.0
  %v6672 = vmax.f32 %v6559, 0.0
  %v6673 = vmax.f32 %v6560, 0.0
  %v6674 = vmax.f32 %v6561, 0.0
  %v6675 = vmax.f32 %v6562, 0.0
  %v6676 = vmax.f32 %v6563, 0.0
  %v6677 = vmax.f32 %v6564, 0.0
  %v6678 = vmax.f32 %v6565, 0.0
  %v6679 = vmax.f32 %v6566, 0.0
  %v6680 = vmax.f32 %v6567, 0.0
  %v6681 = vmax.f32 %v6568, 0.0
  %v6682 = vmax.f32 %v6569, 0.0
  %v6683 = vmax.f32 %v6570, 0.0
  %v6684 = vmax.f32 %v6571, 0.0
  %v6685 = vmax.f32 %v6572, 0.0
  %v6686 = vmax.f32 %v6573, 0.0
  %v6687 = vmax.f32 %v6574, 0.0
  %v6688 = vmax.f32 %v6575, 0.0
  %v6689 = vmax.f32 %v6576, 0.0
  %v6690 = vmax.f32 %v6577, 0.0
  %v6691 = vmax.f32 %v6578, 0.0
  %v6692 = vmax.f32 %v6579, 0.0
  %v6693 = vmax.f32 %v6580, 0.0
  %v6694 = vpack.c.bf16 %v6581, %v6581
  %v6695 = vpack.c.bf16 %v6582, %v6582
  %v6696 = vpack.c.bf16 %v6583, %v6583
  %v6697 = vpack.c.bf16 %v6584, %v6584
  %v6698 = vpack.c.bf16 %v6585, %v6585
  %v6699 = vpack.c.bf16 %v6586, %v6586
  %v6700 = vpack.c.bf16 %v6587, %v6587
  %v6701 = vpack.c.bf16 %v6588, %v6588
  %v6702 = vpack.c.bf16 %v6589, %v6589
  %v6703 = vpack.c.bf16 %v6590, %v6590
  %v6704 = vpack.c.bf16 %v6591, %v6591
  %v6705 = vpack.c.bf16 %v6592, %v6592
  %v6706 = vpack.c.bf16 %v6593, %v6593
  %v6707 = vpack.c.bf16 %v6594, %v6594
  %v6708 = vpack.c.bf16 %v6595, %v6595
  %v6709 = vpack.c.bf16 %v6596, %v6596
  %v6710 = vpack.c.bf16 %v6597, %v6597
  %v6711 = vpack.c.bf16 %v6598, %v6598
  %v6712 = vpack.c.bf16 %v6599, %v6599
  %v6713 = vpack.c.bf16 %v6600, %v6600
  %v6714 = vpack.c.bf16 %v6601, %v6601
  %v6715 = vpack.c.bf16 %v6602, %v6602
  %v6716 = vpack.c.bf16 %v6603, %v6603
  %v6717 = vpack.c.bf16 %v6604, %v6604
  %v6718 = vpack.c.bf16 %v6605, %v6605
  %v6719 = vpack.c.bf16 %v6606, %v6606
  %v6720 = vpack.c.bf16 %v6607, %v6607
  %v6721 = vpack.c.bf16 %v6608, %v6608
  %v6722 = vpack.c.bf16 %v6609, %v6609
  %v6723 = vpack.c.bf16 %v6610, %v6610
  %v6724 = vpack.c.bf16 %v6611, %v6611
  %v6725 = vpack.c.bf16 %v6612, %v6612
  %v6726 = vpack.c.bf16 %v6613, %v6613
  %v6727 = vpack.c.bf16 %v6614, %v6614
  %v6728 = vpack.c.bf16 %v6615, %v6615
  %v6729 = vpack.c.bf16 %v6616, %v6616
  %v6730 = vpack.c.bf16 %v6617, %v6617
  %v6731 = vpack.c.bf16 %v6618, %v6618
  %v6732 = vpack.c.bf16 %v6619, %v6619
  %v6733 = vpack.c.bf16 %v6620, %v6620
  %v6734 = vpack.c.bf16 %v6621, %v6621
  %v6735 = vpack.c.bf16 %v6622, %v6622
  %v6736 = vpack.c.bf16 %v6623, %v6623
  %v6737 = vpack.c.bf16 %v6624, %v6624
  %v6738 = vpack.c.bf16 %v6625, %v6625
  %v6739 = vpack.c.bf16 %v6626, %v6626
  %v6740 = vpack.c.bf16 %v6627, %v6627
  %v6741 = vpack.c.bf16 %v6628, %v6628
  %v6742 = vpack.c.bf16 %v6629, %v6629
  %v6743 = vpack.c.bf16 %v6630, %v6630
  %v6744 = vpack.c.bf16 %v6631, %v6631
  %v6745 = vpack.c.bf16 %v6632, %v6632
  %v6746 = vpack.c.bf16 %v6633, %v6633
  %v6747 = vpack.c.bf16 %v6634, %v6634
  %v6748 = vpack.c.bf16 %v6635, %v6635
  %v6749 = vpack.c.bf16 %v6636, %v6636
  %v6750 = vpack.c.bf16 %v6637, %v6637
  %v6751 = vpack.c.bf16 %v6638, %v6638
  %v6752 = vpack.c.bf16 %v6639, %v6639
  %v6753 = vpack.c.bf16 %v6640, %v6640
  %v6754 = vpack.c.bf16 %v6641, %v6641
  %v6755 = vpack.c.bf16 %v6642, %v6642
  %v6756 = vpack.c.bf16 %v6643, %v6643
  %v6757 = vpack.c.bf16 %v6644, %v6644
  %v6758 = vpack.c.bf16 %v6645, %v6645
  %v6759 = vpack.c.bf16 %v6646, %v6646
  %v6760 = vpack.c.bf16 %v6647, %v6647
  %v6761 = vpack.c.bf16 %v6648, %v6648
  %v6762 = vpack.c.bf16 %v6649, %v6649
  %v6763 = vpack.c.bf16 %v6650, %v6650
  %v6764 = vpack.c.bf16 %v6651, %v6651
  %v6765 = vpack.c.bf16 %v6652, %v6652
  %v6766 = vpack.c.bf16 %v6653, %v6653
  %v6767 = vpack.c.bf16 %v6654, %v6654
  %v6768 = vpack.c.bf16 %v6655, %v6655
  %v6769 = vpack.c.bf16 %v6656, %v6656
  %v6770 = vpack.c.bf16 %v6657, %v6657
  %v6771 = vpack.c.bf16 %v6658, %v6658
  %v6772 = vpack.c.bf16 %v6659, %v6659
  %v6773 = vpack.c.bf16 %v6660, %v6660
  %v6774 = vpack.c.bf16 %v6661, %v6661
  %v6775 = vpack.c.bf16 %v6662, %v6662
  %v6776 = vpack.c.bf16 %v6663, %v6663
  %v6777 = vpack.c.bf16 %v6664, %v6664
  %v6778 = vpack.c.bf16 %v6665, %v6665
  %v6779 = vpack.c.bf16 %v6666, %v6666
  %v6780 = vpack.c.bf16 %v6667, %v6667
  %v6781 = vpack.c.bf16 %v6668, %v6668
  %v6782 = vpack.c.bf16 %v6669, %v6669
  %v6783 = vpack.c.bf16 %v6670, %v6670
  %v6784 = vpack.c.bf16 %v6671, %v6671
  %v6785 = vpack.c.bf16 %v6672, %v6672
  %v6786 = vpack.c.bf16 %v6673, %v6673
  %v6787 = vpack.c.bf16 %v6674, %v6674
  %v6788 = vpack.c.bf16 %v6675, %v6675
  %v6789 = vpack.c.bf16 %v6676, %v6676
  %v6790 = vpack.c.bf16 %v6677, %v6677
  %v6791 = vpack.c.bf16 %v6678, %v6678
  %v6792 = vpack.c.bf16 %v6679, %v6679
  %v6793 = vpack.c.bf16 %v6680, %v6680
  %v6794 = vpack.c.bf16 %v6681, %v6681
  %v6795 = vpack.c.bf16 %v6682, %v6682
  %v6796 = vpack.c.bf16 %v6683, %v6683
  %v6797 = vpack.c.bf16 %v6684, %v6684
  %v6798 = vpack.c.bf16 %v6685, %v6685
  %v6799 = vpack.c.bf16 %v6686, %v6686
  %v6800 = vpack.c.bf16 %v6687, %v6687
  %v6801 = vpack.c.bf16 %v6688, %v6688
  %v6802 = vpack.c.bf16 %v6689, %v6689
  %v6803 = vpack.c.bf16 %v6690, %v6690
  %v6804 = vpack.c.bf16 %v6691, %v6691
  %v6805 = vpack.c.bf16 %v6692, %v6692
  %v6806 = vpack.c.bf16 %v6693, %v6693
  %v6920 = vunpack.c.l.b16 %v6694
  %v6921 = vunpack.c.l.b16 %v6695
  %v6922 = vunpack.c.l.b16 %v6696
  %v6923 = vunpack.c.l.b16 %v6697
  %v6924 = vunpack.c.l.b16 %v6698
  %v6925 = vunpack.c.l.b16 %v6699
  %v6926 = vunpack.c.l.b16 %v6700
  %v6927 = vunpack.c.l.b16 %v6701
  %v6928 = vunpack.c.l.b16 %v6702
  %v6929 = vunpack.c.l.b16 %v6703
  %v6930 = vunpack.c.l.b16 %v6704
  %v6931 = vunpack.c.l.b16 %v6705
  %v6932 = vunpack.c.l.b16 %v6706
  %v6933 = vunpack.c.l.b16 %v6707
  %v6934 = vunpack.c.l.b16 %v6708
  %v6935 = vunpack.c.l.b16 %v6709
  %v6936 = vunpack.c.l.b16 %v6710
  %v6937 = vunpack.c.l.b16 %v6711
  %v6938 = vunpack.c.l.b16 %v6712
  %v6939 = vunpack.c.l.b16 %v6713
  %v6940 = vunpack.c.l.b16 %v6714
  %v6941 = vunpack.c.l.b16 %v6715
  %v6942 = vunpack.c.l.b16 %v6716
  %v6943 = vunpack.c.l.b16 %v6717
  %v6944 = vunpack.c.l.b16 %v6718
  %v6945 = vunpack.c.l.b16 %v6719
  %v6946 = vunpack.c.l.b16 %v6720
  %v6947 = vunpack.c.l.b16 %v6721
  %v6948 = vunpack.c.l.b16 %v6722
  %v6949 = vunpack.c.l.b16 %v6723
  %v6950 = vunpack.c.l.b16 %v6724
  %v6951 = vunpack.c.l.b16 %v6725
  %v6952 = vunpack.c.l.b16 %v6726
  %v6953 = vunpack.c.l.b16 %v6727
  %v6954 = vunpack.c.l.b16 %v6728
  %v6955 = vunpack.c.l.b16 %v6729
  %v6956 = vunpack.c.l.b16 %v6730
  %v6957 = vunpack.c.l.b16 %v6731
  %v6958 = vunpack.c.l.b16 %v6732
  %v6959 = vunpack.c.l.b16 %v6733
  %v6960 = vunpack.c.l.b16 %v6734
  %v6961 = vunpack.c.l.b16 %v6735
  %v6962 = vunpack.c.l.b16 %v6736
  %v6963 = vunpack.c.l.b16 %v6737
  %v6964 = vunpack.c.l.b16 %v6738
  %v6965 = vunpack.c.l.b16 %v6739
  %v6966 = vunpack.c.l.b16 %v6740
  %v6967 = vunpack.c.l.b16 %v6741
  %v6968 = vunpack.c.l.b16 %v6742
  %v6969 = vunpack.c.l.b16 %v6743
  %v6970 = vunpack.c.l.b16 %v6744
  %v6971 = vunpack.c.l.b16 %v6745
  %v6972 = vunpack.c.l.b16 %v6746
  %v6973 = vunpack.c.l.b16 %v6747
  %v6974 = vunpack.c.l.b16 %v6748
  %v6975 = vunpack.c.l.b16 %v6749
  %v6976 = vunpack.c.l.b16 %v6750
  %v6977 = vunpack.c.l.b16 %v6751
  %v6978 = vunpack.c.l.b16 %v6752
  %v6979 = vunpack.c.l.b16 %v6753
  %v6980 = vunpack.c.l.b16 %v6754
  %v6981 = vunpack.c.l.b16 %v6755
  %v6982 = vunpack.c.l.b16 %v6756
  %v6983 = vunpack.c.l.b16 %v6757
  %v6984 = vunpack.c.l.b16 %v6758
  %v6985 = vunpack.c.l.b16 %v6759
  %v6986 = vunpack.c.l.b16 %v6760
  %v6987 = vunpack.c.l.b16 %v6761
  %v6988 = vunpack.c.l.b16 %v6762
  %v6989 = vunpack.c.l.b16 %v6763
  %v6990 = vunpack.c.l.b16 %v6764
  %v6991 = vunpack.c.l.b16 %v6765
  %v6992 = vunpack.c.l.b16 %v6766
  %v6993 = vunpack.c.l.b16 %v6767
  %v6994 = vunpack.c.l.b16 %v6768
  %v6995 = vunpack.c.l.b16 %v6769
  %v6996 = vunpack.c.l.b16 %v6770
  %v6997 = vunpack.c.l.b16 %v6771
  %v6998 = vunpack.c.l.b16 %v6772
  %v6999 = vunpack.c.l.b16 %v6773
  %v7000 = vunpack.c.l.b16 %v6774
  %v7001 = vunpack.c.l.b16 %v6775
  %v7002 = vunpack.c.l.b16 %v6776
  %v7003 = vunpack.c.l.b16 %v6777
  %v7004 = vunpack.c.l.b16 %v6778
  %v7005 = vunpack.c.l.b16 %v6779
  %v7006 = vunpack.c.l.b16 %v6780
  %v7007 = vunpack.c.l.b16 %v6781
  %v7008 = vunpack.c.l.b16 %v6782
  %v7009 = vunpack.c.l.b16 %v6783
  %v7010 = vunpack.c.l.b16 %v6784
  %v7011 = vunpack.c.l.b16 %v6785
  %v7012 = vunpack.c.l.b16 %v6786
  %v7013 = vunpack.c.l.b16 %v6787
  %v7014 = vunpack.c.l.b16 %v6788
  %v7015 = vunpack.c.l.b16 %v6789
  %v7016 = vunpack.c.l.b16 %v6790
  %v7017 = vunpack.c.l.b16 %v6791
  %v7018 = vunpack.c.l.b16 %v6792
  %v7019 = vunpack.c.l.b16 %v6793
  %v7020 = vunpack.c.l.b16 %v6794
  %v7021 = vunpack.c.l.b16 %v6795
  %v7022 = vunpack.c.l.b16 %v6796
  %v7023 = vunpack.c.l.b16 %v6797
  %v7024 = vunpack.c.l.b16 %v6798
  %v7025 = vunpack.c.l.b16 %v6799
  %v7026 = vunpack.c.l.b16 %v6800
  %v7027 = vunpack.c.l.b16 %v6801
  %v7028 = vunpack.c.l.b16 %v6802
  %v7029 = vunpack.c.l.b16 %v6803
  %v7030 = vunpack.c.l.b16 %v6804
  %v7031 = vunpack.c.l.b16 %v6805
  %v7032 = vunpack.c.l.b16 %v6806
  %v7033 = vpack.c.b16 %v6921, %v6920
  %v7034 = vpack.c.b16 %v6923, %v6922
  %v7035 = vpack.c.b16 %v6925, %v6924
  %v7036 = vpack.c.b16 %v6927, %v6926
  %v7037 = vpack.c.b16 %v6929, %v6928
  %v7038 = vpack.c.b16 %v6931, %v6930
  %v7039 = vpack.c.b16 %v6933, %v6932
  %v7040 = vpack.c.b16 %v6935, %v6934
  %v7041 = vpack.c.b16 %v6937, %v6936
  %v7042 = vpack.c.b16 %v6939, %v6938
  %v7043 = vpack.c.b16 %v6941, %v6940
  %v7044 = vpack.c.b16 %v6943, %v6942
  %v7045 = vpack.c.b16 %v6945, %v6944
  %v7046 = vpack.c.b16 %v6947, %v6946
  %v7047 = vpack.c.b16 %v6949, %v6948
  %v7048 = vpack.c.b16 %v6951, %v6950
  %v7049 = vpack.c.b16 %v6953, %v6952
  %v7050 = vpack.c.b16 %v6955, %v6954
  %v7051 = vpack.c.b16 %v6957, %v6956
  %v7052 = vpack.c.b16 %v6959, %v6958
  %v7053 = vpack.c.b16 %v6961, %v6960
  %v7054 = vpack.c.b16 %v6963, %v6962
  %v7055 = vpack.c.b16 %v6965, %v6964
  %v7056 = vpack.c.b16 %v6967, %v6966
  %v7057 = vpack.c.b16 %v6969, %v6968
  %v7058 = vpack.c.b16 %v6971, %v6970
  %v7059 = vpack.c.b16 %v6973, %v6972
  %v7060 = vpack.c.b16 %v6975, %v6974
  %v7061 = vpack.c.b16 %v6977, %v6976
  %v7062 = vpack.c.b16 %v6979, %v6978
  %v7063 = vpack.c.b16 %v6981, %v6980
  %v7064 = vpack.c.b16 %v6983, %v6982
  %v7065 = vpack.c.b16 %v6985, %v6984
  %v7066 = vpack.c.b16 %v6987, %v6986
  %v7067 = vpack.c.b16 %v6989, %v6988
  %v7068 = vpack.c.b16 %v6991, %v6990
  %v7069 = vpack.c.b16 %v6993, %v6992
  %v7070 = vpack.c.b16 %v6995, %v6994
  %v7071 = vpack.c.b16 %v6997, %v6996
  %v7072 = vpack.c.b16 %v6999, %v6998
  %v7073 = vpack.c.b16 %v7001, %v7000
  %v7074 = vpack.c.b16 %v7003, %v7002
  %v7075 = vpack.c.b16 %v7005, %v7004
  %v7076 = vpack.c.b16 %v7007, %v7006
  %v7077 = vpack.c.b16 %v7009, %v7008
  %v7078 = vpack.c.b16 %v7011, %v7010
  %v7079 = vpack.c.b16 %v7013, %v7012
  %v7080 = vpack.c.b16 %v7015, %v7014
  %v7081 = vpack.c.b16 %v7017, %v7016
  %v7082 = vpack.c.b16 %v7019, %v7018
  %v7083 = vpack.c.b16 %v7021, %v7020
  %v7084 = vpack.c.b16 %v7023, %v7022
  %v7085 = vpack.c.b16 %v7025, %v7024
  %v7086 = vpack.c.b16 %v7027, %v7026
  %v7087 = vpack.c.b16 %v7029, %v7028
  %v7088 = vpack.c.b16 %v7031, %v7030
  %v7089 = vpack.c.b16 %v7032, %v7032
  %7147 = vst [vmem:[%s4] sm:$0xff] %v7033
  %7148 = vst [vmem:[%s4 + $0x8] sm:$0xff] %v7034
  %7149 = vst [vmem:[%s4 + $0x10] sm:$0xff] %v7035
  %7150 = vst [vmem:[%s4 + $0x18] sm:$0xff] %v7036
  %7151 = vst [vmem:[%s4 + $0x20] sm:$0xff] %v7037
  %7152 = vst [vmem:[%s4 + $0x28] sm:$0xff] %v7038
  %7153 = vst [vmem:[%s4 + $0x30] sm:$0xff] %v7039
  %7154 = vst [vmem:[%s4 + $0x38] sm:$0xff] %v7040
  %7155 = vst [vmem:[%s4 + $0x40] sm:$0xff] %v7041
  %7156 = vst [vmem:[%s4 + $0x48] sm:$0xff] %v7042
  %7157 = vst [vmem:[%s4 + $0x50] sm:$0xff] %v7043
  %7158 = vst [vmem:[%s4 + $0x58] sm:$0xff] %v7044
  %7159 = vst [vmem:[%s4 + $0x60] sm:$0xff] %v7045
  %7160 = vst [vmem:[%s4 + $0x68] sm:$0xff] %v7046
  %7161 = vst [vmem:[%s4 + $0x70] sm:$0xff] %v7047
  %7162 = vst [vmem:[%s4 + $0x78] sm:$0xff] %v7048
  %7163 = vst [vmem:[%s4 + $0x80] sm:$0xff] %v7049
  %7164 = vst [vmem:[%s4 + $0x88] sm:$0xff] %v7050
  %7165 = vst [vmem:[%s4 + $0x90] sm:$0xff] %v7051
  %7166 = vst [vmem:[%s4 + $0x98] sm:$0xff] %v7052
  %7167 = vst [vmem:[%s4 + $0xa0] sm:$0xff] %v7053
  %7168 = vst [vmem:[%s4 + $0xa8] sm:$0xff] %v7054
  %7169 = vst [vmem:[%s4 + $0xb0] sm:$0xff] %v7055
  %7170 = vst [vmem:[%s4 + $0xb8] sm:$0xff] %v7056
  %7171 = vst [vmem:[%s4 + $0xc0] sm:$0xff] %v7057
  %7172 = vst [vmem:[%s4 + $0xc8] sm:$0xff] %v7058
  %7173 = vst [vmem:[%s4 + $0xd0] sm:$0xff] %v7059
  %7174 = vst [vmem:[%s4 + $0xd8] sm:$0xff] %v7060
  %7175 = vst [vmem:[%s4 + $0xe0] sm:$0xff] %v7061
  %7176 = vst [vmem:[%s4 + $0xe8] sm:$0xff] %v7062
  %7177 = vst [vmem:[%s4 + $0xf0] sm:$0xff] %v7063
  %7178 = vst [vmem:[%s4 + $0xf8] sm:$0xff] %v7064
  %7179 = vst [vmem:[%s4 + $0x100] sm:$0xff] %v7065
  %7180 = vst [vmem:[%s4 + $0x108] sm:$0xff] %v7066
  %7181 = vst [vmem:[%s4 + $0x110] sm:$0xff] %v7067
  %7182 = vst [vmem:[%s4 + $0x118] sm:$0xff] %v7068
  %7183 = vst [vmem:[%s4 + $0x120] sm:$0xff] %v7069
  %7184 = vst [vmem:[%s4 + $0x128] sm:$0xff] %v7070
  %7185 = vst [vmem:[%s4 + $0x130] sm:$0xff] %v7071
  %7186 = vst [vmem:[%s4 + $0x138] sm:$0xff] %v7072
  %7187 = vst [vmem:[%s4 + $0x140] sm:$0xff] %v7073
  %7188 = vst [vmem:[%s4 + $0x148] sm:$0xff] %v7074
  %7189 = vst [vmem:[%s4 + $0x150] sm:$0xff] %v7075
  %7190 = vst [vmem:[%s4 + $0x158] sm:$0xff] %v7076
  %7191 = vst [vmem:[%s4 + $0x160] sm:$0xff] %v7077
  %7192 = vst [vmem:[%s4 + $0x168] sm:$0xff] %v7078
  %7193 = vst [vmem:[%s4 + $0x170] sm:$0xff] %v7079
  %7194 = vst [vmem:[%s4 + $0x178] sm:$0xff] %v7080
  %7195 = vst [vmem:[%s4 + $0x180] sm:$0xff] %v7081
  %7196 = vst [vmem:[%s4 + $0x188] sm:$0xff] %v7082
  %7197 = vst [vmem:[%s4 + $0x190] sm:$0xff] %v7083
  %7198 = vst [vmem:[%s4 + $0x198] sm:$0xff] %v7084
  %7199 = vst [vmem:[%s4 + $0x1a0] sm:$0xff] %v7085
  %7200 = vst [vmem:[%s4 + $0x1a8] sm:$0xff] %v7086
  %7201 = vst [vmem:[%s4 + $0x1b0] sm:$0xff] %v7087
  %7202 = vst [vmem:[%s4 + $0x1b8] sm:$0xff] %v7088
  %vm7203 = vcmask 519168
  %7204 = vst.msk [vmem:[%s4 + $0x1c0] sm:$0xf] %vm7203, %v7089
  // Predicated region
  $region18: #{forward.3} parent=0 // pred_check
    _
  $region19: #{forward.3} parent=0 // pred_check_branch
    %7206 = sbr.rel (0) target = $region21
  $region20: #{forward.3} parent=0 // pred_region
    _
  $region21: #{forward.3} parent=0 // pred_fallthru
    _
  // Predicated region
  $region22: #{forward.3} parent=0 // pred_check
    _
  $region23: #{forward.3} parent=0 // pred_check_branch
    %7208 = sbr.rel (0) target = $region25
  $region24: #{forward.3} parent=0 // pred_region
    _
  $region25: #{forward.3} parent=0 // pred_fallthru
    _

// kernel: forward.4
$region0: #{forward.4}
  #allocation0 [shape = 'u32[]', space=smem, size = 0x4, offset = 0x4, fixed_abs, tag = 'smem constant byte address 0x4 - core index']
  #allocation1 [shape = 'u32[144,128]{1,0:T(1,128)}', space=vmem, size = 0x12000, scoped, tag = 'internal scratch']
  %s0 = inlined_call_operand.vmem [shape: bf16[16,200], index: 0, kind: input, shape index: {}]
  %s1 = inlined_call_operand.vmem [shape: bf16[200,2704], index: 1, kind: input, shape index: {}]
  %s2 = inlined_call_operand.vmem [shape: f32[16,1], index: 2, kind: input, shape index: {}]
  %s3 = inlined_call_operand.vmem [shape: f32[16,1], index: 3, kind: input, shape index: {}]
  %s4 = inlined_call_operand.vmem [shape: bf16[16,2704], index: 4, kind: output, shape index: {}]
  %s5 = sld [smem:[#allocation0]]
  $region26: #{forward.4} parent=0
    _
  %s7 = ssub.s32 1, %s5
  %s8 = scalar_select 0, %s7, %s5
  // Predicated region
  $region2: #{forward.4} parent=0 // pred_check
    _
  $region3: #{forward.4} parent=0 // pred_check_branch
    %10 = sbr.rel (0) target = $region5
  $region4: #{forward.4} parent=0 // pred_region
    _
  $region5: #{forward.4} parent=0 // pred_fallthru
    _
  // Predicated region
  $region6: #{forward.4} parent=0 // pred_check
    _
  $region7: #{forward.4} parent=0 // pred_check_branch
    %12 = sbr.rel (0) target = $region9
  $region8: #{forward.4} parent=0 // pred_region
    _
  $region9: #{forward.4} parent=0 // pred_fallthru
    _
  // Predicated region
  $region10: #{forward.4} parent=0 // pred_check
    _
  $region11: #{forward.4} parent=0 // pred_check_branch
    %14 = sbr.rel (0) target = $region13
  $region12: #{forward.4} parent=0 // pred_region
    _
  $region13: #{forward.4} parent=0 // pred_fallthru
    _
  // Predicated region
  $region14: #{forward.4} parent=0 // pred_check
    _
  $region15: #{forward.4} parent=0 // pred_check_branch
    %16 = sbr.rel (0) target = $region17
  $region16: #{forward.4} parent=0 // pred_region
    _
  $region17: #{forward.4} parent=0 // pred_fallthru
    _
  %v18 = vld [vmem:[%s0] sm:$0xff]
  %v19 = vld [vmem:[%s0 + $0x8] sm:$0xff]
  %v20 = vld [vmem:[%s1] sm:$0xff]
  %v21 = vld [vmem:[%s1 + $0x8] sm:$0xff]
  %v22 = vld [vmem:[%s1 + $0x10] sm:$0xff]
  %v23 = vld [vmem:[%s1 + $0x18] sm:$0xff]
  %v24 = vld [vmem:[%s1 + $0x20] sm:$0xff]
  %v25 = vld [vmem:[%s1 + $0x28] sm:$0xff]
  %v26 = vld [vmem:[%s1 + $0x30] sm:$0xff]
  %v27 = vld [vmem:[%s1 + $0x38] sm:$0xff]
  %v28 = vld [vmem:[%s1 + $0x40] sm:$0xff]
  %v29 = vld [vmem:[%s1 + $0x48] sm:$0xff]
  %v30 = vld [vmem:[%s1 + $0x50] sm:$0xff]
  %v31 = vld [vmem:[%s1 + $0x58] sm:$0xff]
  %v32 = vld [vmem:[%s1 + $0x60] sm:$0xff]
  %v33 = vld [vmem:[%s1 + $0x68] sm:$0xff]
  %v34 = vld [vmem:[%s1 + $0x70] sm:$0xff]
  %v35 = vld [vmem:[%s1 + $0x78] sm:$0xff]
  %v36 = vld [vmem:[%s1 + $0x80] sm:$0xff]
  %v37 = vld [vmem:[%s1 + $0x88] sm:$0xff]
  %v38 = vld [vmem:[%s1 + $0x90] sm:$0xff]
  %v39 = vld [vmem:[%s1 + $0x98] sm:$0xff]
  %v40 = vld [vmem:[%s1 + $0xa0] sm:$0xff]
  %v41 = vld [vmem:[%s1 + $0xa8] sm:$0xff]
  %v42 = vld [vmem:[%s1 + $0xb0] sm:$0xff]
  %v43 = vld [vmem:[%s1 + $0xb8] sm:$0xff]
  %v44 = vld [vmem:[%s1 + $0xc0] sm:$0xff]
  %v45 = vld [vmem:[%s1 + $0xc8] sm:$0xff]
  %v46 = vld [vmem:[%s1 + $0xd0] sm:$0xff]
  %v47 = vld [vmem:[%s1 + $0xd8] sm:$0xff]
  %v48 = vld [vmem:[%s1 + $0xe0] sm:$0xff]
  %v49 = vld [vmem:[%s1 + $0xe8] sm:$0xff]
  %v50 = vld [vmem:[%s1 + $0xf0] sm:$0xff]
  %v51 = vld [vmem:[%s1 + $0xf8] sm:$0xff]
  %v52 = vld [vmem:[%s1 + $0x100] sm:$0xff]
  %v53 = vld [vmem:[%s1 + $0x108] sm:$0xff]
  %v54 = vld [vmem:[%s1 + $0x110] sm:$0xff]
  %v55 = vld [vmem:[%s1 + $0x118] sm:$0xff]
  %v56 = vld [vmem:[%s1 + $0x120] sm:$0xff]
  %v57 = vld [vmem:[%s1 + $0x128] sm:$0xff]
  %v58 = vld [vmem:[%s1 + $0x130] sm:$0xff]
  %v59 = vld [vmem:[%s1 + $0x138] sm:$0xff]
  %v60 = vld [vmem:[%s1 + $0x140] sm:$0xff]
  %v61 = vld [vmem:[%s1 + $0x148] sm:$0xff]
  %v62 = vld [vmem:[%s1 + $0x150] sm:$0xff]
  %v63 = vld [vmem:[%s1 + $0x158] sm:$0xff]
  %v64 = vld [vmem:[%s1 + $0x160] sm:$0xff]
  %v65 = vld [vmem:[%s1 + $0x168] sm:$0xff]
  %v66 = vld [vmem:[%s1 + $0x170] sm:$0xff]
  %v67 = vld [vmem:[%s1 + $0x178] sm:$0xff]
  %v68 = vld [vmem:[%s1 + $0x180] sm:$0xff]
  %v69 = vld [vmem:[%s1 + $0x188] sm:$0xff]
  %v70 = vld [vmem:[%s1 + $0x190] sm:$0xff]
  %v71 = vld [vmem:[%s1 + $0x198] sm:$0xff]
  %v72 = vld [vmem:[%s1 + $0x1a0] sm:$0xff]
  %v73 = vld [vmem:[%s1 + $0x1a8] sm:$0xff]
  %v74 = vld [vmem:[%s1 + $0x1b0] sm:$0xff]
  %v75 = vld [vmem:[%s1 + $0x1b8] sm:$0xff]
  %v76 = vld [vmem:[%s1 + $0x1c0] sm:$0xff]
  %v77 = vld [vmem:[%s1 + $0x1c8] sm:$0xff]
  %v78 = vld [vmem:[%s1 + $0x1d0] sm:$0xff]
  %v79 = vld [vmem:[%s1 + $0x1d8] sm:$0xff]
  %v80 = vld [vmem:[%s1 + $0x1e0] sm:$0xff]
  %v81 = vld [vmem:[%s1 + $0x1e8] sm:$0xff]
  %v82 = vld [vmem:[%s1 + $0x1f0] sm:$0xff]
  %v83 = vld [vmem:[%s1 + $0x1f8] sm:$0xff]
  %v84 = vld [vmem:[%s1 + $0x200] sm:$0xff]
  %v85 = vld [vmem:[%s1 + $0x208] sm:$0xff]
  %v86 = vld [vmem:[%s1 + $0x210] sm:$0xff]
  %v87 = vld [vmem:[%s1 + $0x218] sm:$0xff]
  %v88 = vld [vmem:[%s1 + $0x220] sm:$0xff]
  %v89 = vld [vmem:[%s1 + $0x228] sm:$0xff]
  %v90 = vld [vmem:[%s1 + $0x230] sm:$0xff]
  %v91 = vld [vmem:[%s1 + $0x238] sm:$0xff]
  %v92 = vld [vmem:[%s1 + $0x240] sm:$0xff]
  %v93 = vld [vmem:[%s1 + $0x248] sm:$0xff]
  %v94 = vld [vmem:[%s1 + $0x250] sm:$0xff]
  %v95 = vld [vmem:[%s1 + $0x258] sm:$0xff]
  %v96 = vld [vmem:[%s1 + $0x260] sm:$0xff]
  %v97 = vld [vmem:[%s1 + $0x268] sm:$0xff]
  %v98 = vld [vmem:[%s1 + $0x270] sm:$0xff]
  %v99 = vld [vmem:[%s1 + $0x278] sm:$0xff]
  %v100 = vld [vmem:[%s1 + $0x280] sm:$0xff]
  %v101 = vld [vmem:[%s1 + $0x288] sm:$0xff]
  %v102 = vld [vmem:[%s1 + $0x290] sm:$0xff]
  %v103 = vld [vmem:[%s1 + $0x298] sm:$0xff]
  %v104 = vld [vmem:[%s1 + $0x2a0] sm:$0xff]
  %v105 = vld [vmem:[%s1 + $0x2a8] sm:$0xff]
  %v106 = vld [vmem:[%s1 + $0x2b0] sm:$0xff]
  %v107 = vld [vmem:[%s1 + $0x2b8] sm:$0xff]
  %v108 = vld [vmem:[%s1 + $0x2c0] sm:$0xff]
  %v109 = vld [vmem:[%s1 + $0x2c8] sm:$0xff]
  %v110 = vld [vmem:[%s1 + $0x2d0] sm:$0xff]
  %v111 = vld [vmem:[%s1 + $0x2d8] sm:$0xff]
  %v112 = vld [vmem:[%s1 + $0x2e0] sm:$0xff]
  %v113 = vld [vmem:[%s1 + $0x2e8] sm:$0xff]
  %v114 = vld [vmem:[%s1 + $0x2f0] sm:$0xff]
  %v115 = vld [vmem:[%s1 + $0x2f8] sm:$0xff]
  %v116 = vld [vmem:[%s1 + $0x300] sm:$0xff]
  %v117 = vld [vmem:[%s1 + $0x308] sm:$0xff]
  %v118 = vld [vmem:[%s1 + $0x310] sm:$0xff]
  %v119 = vld [vmem:[%s1 + $0x318] sm:$0xff]
  %v120 = vld [vmem:[%s1 + $0x320] sm:$0xff]
  %v121 = vld [vmem:[%s1 + $0x328] sm:$0xff]
  %v122 = vld [vmem:[%s1 + $0x330] sm:$0xff]
  %v123 = vld [vmem:[%s1 + $0x338] sm:$0xff]
  %v124 = vld [vmem:[%s1 + $0x340] sm:$0xff]
  %v125 = vld [vmem:[%s1 + $0x348] sm:$0xff]
  %v126 = vld [vmem:[%s1 + $0x350] sm:$0xff]
  %v127 = vld [vmem:[%s1 + $0x358] sm:$0xff]
  %v128 = vld [vmem:[%s1 + $0x360] sm:$0xff]
  %v129 = vld [vmem:[%s1 + $0x368] sm:$0xff]
  %v130 = vld [vmem:[%s1 + $0x370] sm:$0xff]
  %v131 = vld [vmem:[%s1 + $0x378] sm:$0xff]
  %v132 = vld [vmem:[%s1 + $0x380] sm:$0xff]
  %v133 = vld [vmem:[%s1 + $0x388] sm:$0xff]
  %v134 = vld [vmem:[%s1 + $0x390] sm:$0xff]
  %v135 = vld [vmem:[%s1 + $0x398] sm:$0xff]
  %v136 = vld [vmem:[%s1 + $0x3a0] sm:$0xff]
  %v137 = vld [vmem:[%s1 + $0x3a8] sm:$0xff]
  %v138 = vld [vmem:[%s1 + $0x3b0] sm:$0xff]
  %v139 = vld [vmem:[%s1 + $0x3b8] sm:$0xff]
  %v140 = vld [vmem:[%s1 + $0x3c0] sm:$0xff]
  %v141 = vld [vmem:[%s1 + $0x3c8] sm:$0xff]
  %v142 = vld [vmem:[%s1 + $0x3d0] sm:$0xff]
  %v143 = vld [vmem:[%s1 + $0x3d8] sm:$0xff]
  %v144 = vld [vmem:[%s1 + $0x3e0] sm:$0xff]
  %v145 = vld [vmem:[%s1 + $0x3e8] sm:$0xff]
  %v146 = vld [vmem:[%s1 + $0x3f0] sm:$0xff]
  %v147 = vld [vmem:[%s1 + $0x3f8] sm:$0xff]
  %v148 = vld [vmem:[%s1 + $0x400] sm:$0xff]
  %v149 = vld [vmem:[%s1 + $0x408] sm:$0xff]
  %v150 = vld [vmem:[%s1 + $0x410] sm:$0xff]
  %v151 = vld [vmem:[%s1 + $0x418] sm:$0xff]
  %v152 = vld [vmem:[%s1 + $0x420] sm:$0xff]
  %v153 = vld [vmem:[%s1 + $0x428] sm:$0xff]
  %v154 = vld [vmem:[%s1 + $0x430] sm:$0xff]
  %v155 = vld [vmem:[%s1 + $0x438] sm:$0xff]
  %v156 = vld [vmem:[%s1 + $0x440] sm:$0xff]
  %v157 = vld [vmem:[%s1 + $0x448] sm:$0xff]
  %v158 = vld [vmem:[%s1 + $0x450] sm:$0xff]
  %v159 = vld [vmem:[%s1 + $0x458] sm:$0xff]
  %v160 = vld [vmem:[%s1 + $0x460] sm:$0xff]
  %v161 = vld [vmem:[%s1 + $0x468] sm:$0xff]
  %v162 = vld [vmem:[%s1 + $0x470] sm:$0xff]
  %v163 = vld [vmem:[%s1 + $0x478] sm:$0xff]
  %v164 = vld [vmem:[%s1 + $0x480] sm:$0xff]
  %v165 = vld [vmem:[%s1 + $0x488] sm:$0xff]
  %v166 = vld [vmem:[%s1 + $0x490] sm:$0xff]
  %v167 = vld [vmem:[%s1 + $0x498] sm:$0xff]
  %v168 = vld [vmem:[%s1 + $0x4a0] sm:$0xff]
  %v169 = vld [vmem:[%s1 + $0x4a8] sm:$0xff]
  %v170 = vld [vmem:[%s1 + $0x4b0] sm:$0xff]
  %v171 = vld [vmem:[%s1 + $0x4b8] sm:$0xff]
  %v172 = vld [vmem:[%s1 + $0x4c0] sm:$0xff]
  %v173 = vld [vmem:[%s1 + $0x4c8] sm:$0xff]
  %v174 = vld [vmem:[%s1 + $0x4d0] sm:$0xff]
  %v175 = vld [vmem:[%s1 + $0x4d8] sm:$0xff]
  %v176 = vld [vmem:[%s1 + $0x4e0] sm:$0xff]
  %v177 = vld [vmem:[%s1 + $0x4e8] sm:$0xff]
  %v178 = vld [vmem:[%s1 + $0x4f0] sm:$0xff]
  %v179 = vld [vmem:[%s1 + $0x4f8] sm:$0xff]
  %v180 = vld [vmem:[%s1 + $0x500] sm:$0xff]
  %v181 = vld [vmem:[%s1 + $0x508] sm:$0xff]
  %v182 = vld [vmem:[%s1 + $0x510] sm:$0xff]
  %v183 = vld [vmem:[%s1 + $0x518] sm:$0xff]
  %v184 = vld [vmem:[%s1 + $0x520] sm:$0xff]
  %v185 = vld [vmem:[%s1 + $0x528] sm:$0xff]
  %v186 = vld [vmem:[%s1 + $0x530] sm:$0xff]
  %v187 = vld [vmem:[%s1 + $0x538] sm:$0xff]
  %v188 = vld [vmem:[%s1 + $0x540] sm:$0xff]
  %v189 = vld [vmem:[%s1 + $0x548] sm:$0xff]
  %v190 = vld [vmem:[%s1 + $0x550] sm:$0xff]
  %v191 = vld [vmem:[%s1 + $0x558] sm:$0xff]
  %v192 = vld [vmem:[%s1 + $0x560] sm:$0xff]
  %v193 = vld [vmem:[%s1 + $0x568] sm:$0xff]
  %v194 = vld [vmem:[%s1 + $0x570] sm:$0xff]
  %v195 = vld [vmem:[%s1 + $0x578] sm:$0xff]
  %v196 = vld [vmem:[%s1 + $0x580] sm:$0xff]
  %v197 = vld [vmem:[%s1 + $0x588] sm:$0xff]
  %v198 = vld [vmem:[%s1 + $0x590] sm:$0xff]
  %v199 = vld [vmem:[%s1 + $0x598] sm:$0xff]
  %v200 = vld [vmem:[%s1 + $0x5a0] sm:$0xff]
  %v201 = vld [vmem:[%s1 + $0x5a8] sm:$0xff]
  %v202 = vld [vmem:[%s1 + $0x5b0] sm:$0xff]
  %v203 = vld [vmem:[%s1 + $0x5b8] sm:$0xff]
  %v204 = vld [vmem:[%s1 + $0x5c0] sm:$0xff]
  %v205 = vld [vmem:[%s1 + $0x5c8] sm:$0xff]
  %v206 = vld [vmem:[%s1 + $0x5d0] sm:$0xff]
  %v207 = vld [vmem:[%s1 + $0x5d8] sm:$0xff]
  %v208 = vld [vmem:[%s1 + $0x5e0] sm:$0xff]
  %v209 = vld [vmem:[%s1 + $0x5e8] sm:$0xff]
  %v210 = vld [vmem:[%s1 + $0x5f0] sm:$0xff]
  %v211 = vld [vmem:[%s1 + $0x5f8] sm:$0xff]
  %v212 = vld [vmem:[%s1 + $0x600] sm:$0xff]
  %v213 = vld [vmem:[%s1 + $0x608] sm:$0xff]
  %v214 = vld [vmem:[%s1 + $0x610] sm:$0xff]
  %v215 = vld [vmem:[%s1 + $0x618] sm:$0xff]
  %v216 = vld [vmem:[%s1 + $0x620] sm:$0xff]
  %v217 = vld [vmem:[%s1 + $0x628] sm:$0xff]
  %v218 = vld [vmem:[%s1 + $0x630] sm:$0xff]
  %v219 = vld [vmem:[%s1 + $0x638] sm:$0xff]
  %v220 = vld [vmem:[%s1 + $0x640] sm:$0xff]
  %v221 = vld [vmem:[%s1 + $0x648] sm:$0xff]
  %v222 = vld [vmem:[%s1 + $0x650] sm:$0xff]
  %v223 = vld [vmem:[%s1 + $0x658] sm:$0xff]
  %v224 = vld [vmem:[%s1 + $0x660] sm:$0xff]
  %v225 = vld [vmem:[%s1 + $0x668] sm:$0xff]
  %v226 = vld [vmem:[%s1 + $0x670] sm:$0xff]
  %v227 = vld [vmem:[%s1 + $0x678] sm:$0xff]
  %v228 = vld [vmem:[%s1 + $0x680] sm:$0xff]
  %v229 = vld [vmem:[%s1 + $0x688] sm:$0xff]
  %v230 = vld [vmem:[%s1 + $0x690] sm:$0xff]
  %v231 = vld [vmem:[%s1 + $0x698] sm:$0xff]
  %v232 = vld [vmem:[%s1 + $0x6a0] sm:$0xff]
  %v233 = vld [vmem:[%s1 + $0x6a8] sm:$0xff]
  %v234 = vld [vmem:[%s1 + $0x6b0] sm:$0xff]
  %v235 = vld [vmem:[%s1 + $0x6b8] sm:$0xff]
  %v236 = vld [vmem:[%s1 + $0x6c0] sm:$0xff]
  %v237 = vld [vmem:[%s1 + $0x6c8] sm:$0xff]
  %v238 = vld [vmem:[%s1 + $0x6d0] sm:$0xff]
  %v239 = vld [vmem:[%s1 + $0x6d8] sm:$0xff]
  %v240 = vld [vmem:[%s1 + $0x6e0] sm:$0xff]
  %v241 = vld [vmem:[%s1 + $0x6e8] sm:$0xff]
  %v242 = vld [vmem:[%s1 + $0x6f0] sm:$0xff]
  %v243 = vld [vmem:[%s1 + $0x6f8] sm:$0xff]
  %v244 = vld [vmem:[%s1 + $0x700] sm:$0xff]
  %v245 = vld [vmem:[%s1 + $0x708] sm:$0xff]
  %v246 = vld [vmem:[%s1 + $0x710] sm:$0xff]
  %v247 = vld [vmem:[%s1 + $0x718] sm:$0xff]
  %v248 = vld [vmem:[%s1 + $0x720] sm:$0xff]
  %v249 = vld [vmem:[%s1 + $0x728] sm:$0xff]
  %v250 = vld [vmem:[%s1 + $0x730] sm:$0xff]
  %v251 = vld [vmem:[%s1 + $0x738] sm:$0xff]
  %v252 = vld [vmem:[%s1 + $0x740] sm:$0xff]
  %v253 = vld [vmem:[%s1 + $0x748] sm:$0xff]
  %v254 = vld [vmem:[%s1 + $0x750] sm:$0xff]
  %v255 = vld [vmem:[%s1 + $0x758] sm:$0xff]
  %v256 = vld [vmem:[%s1 + $0x760] sm:$0xff]
  %v257 = vld [vmem:[%s1 + $0x768] sm:$0xff]
  %v258 = vld [vmem:[%s1 + $0x770] sm:$0xff]
  %v259 = vld [vmem:[%s1 + $0x778] sm:$0xff]
  %v260 = vld [vmem:[%s1 + $0x780] sm:$0xff]
  %v261 = vld [vmem:[%s1 + $0x788] sm:$0xff]
  %v262 = vld [vmem:[%s1 + $0x790] sm:$0xff]
  %v263 = vld [vmem:[%s1 + $0x798] sm:$0xff]
  %v264 = vld [vmem:[%s1 + $0x7a0] sm:$0xff]
  %v265 = vld [vmem:[%s1 + $0x7a8] sm:$0xff]
  %v266 = vld [vmem:[%s1 + $0x7b0] sm:$0xff]
  %v267 = vld [vmem:[%s1 + $0x7b8] sm:$0xff]
  %v268 = vld [vmem:[%s1 + $0x7c0] sm:$0xff]
  %v269 = vld [vmem:[%s1 + $0x7c8] sm:$0xff]
  %v270 = vld [vmem:[%s1 + $0x7d0] sm:$0xff]
  %v271 = vld [vmem:[%s1 + $0x7d8] sm:$0xff]
  %v272 = vld [vmem:[%s1 + $0x7e0] sm:$0xff]
  %v273 = vld [vmem:[%s1 + $0x7e8] sm:$0xff]
  %v274 = vld [vmem:[%s1 + $0x7f0] sm:$0xff]
  %v275 = vld [vmem:[%s1 + $0x7f8] sm:$0xff]
  %v276 = vld [vmem:[%s1 + $0x800] sm:$0xff]
  %v277 = vld [vmem:[%s1 + $0x808] sm:$0xff]
  %v278 = vld [vmem:[%s1 + $0x810] sm:$0xff]
  %v279 = vld [vmem:[%s1 + $0x818] sm:$0xff]
  %v280 = vld [vmem:[%s1 + $0x820] sm:$0xff]
  %v281 = vld [vmem:[%s1 + $0x828] sm:$0xff]
  %v282 = vld [vmem:[%s1 + $0x830] sm:$0xff]
  %v283 = vld [vmem:[%s1 + $0x838] sm:$0xff]
  %v284 = vld [vmem:[%s1 + $0x840] sm:$0xff]
  %v285 = vld [vmem:[%s1 + $0x848] sm:$0xff]
  %v286 = vld [vmem:[%s1 + $0x850] sm:$0xff]
  %v287 = vld [vmem:[%s1 + $0x858] sm:$0xff]
  %v288 = vld [vmem:[%s1 + $0x860] sm:$0xff]
  %v289 = vld [vmem:[%s1 + $0x868] sm:$0xff]
  %v290 = vld [vmem:[%s1 + $0x870] sm:$0xff]
  %v291 = vld [vmem:[%s1 + $0x878] sm:$0xff]
  %v292 = vld [vmem:[%s1 + $0x880] sm:$0xff]
  %v293 = vld [vmem:[%s1 + $0x888] sm:$0xff]
  %v294 = vld [vmem:[%s1 + $0x890] sm:$0xff]
  %v297 = vunpack.c.l.b16 %v18
  %v298 = vunpack.c.h.b16 %v18
  %v299 = vunpack.c.l.b16 %v19
  %v300 = vunpack.c.h.b16 %v19
  %v301 = vpack.c.b16 %v299, %v297
  %v302 = vpack.c.b16 %v300, %v298
  %v579 = vunpack.c.l.b16 %v20
  %v580 = vunpack.c.h.b16 %v20
  %v581 = vunpack.c.l.b16 %v21
  %v582 = vunpack.c.h.b16 %v21
  %v583 = vunpack.c.l.b16 %v22
  %v584 = vunpack.c.h.b16 %v22
  %v585 = vunpack.c.l.b16 %v23
  %v586 = vunpack.c.h.b16 %v23
  %v587 = vunpack.c.l.b16 %v24
  %v588 = vunpack.c.h.b16 %v24
  %v589 = vunpack.c.l.b16 %v25
  %v590 = vunpack.c.h.b16 %v25
  %v591 = vunpack.c.l.b16 %v26
  %v592 = vunpack.c.h.b16 %v26
  %v593 = vunpack.c.l.b16 %v27
  %v594 = vunpack.c.h.b16 %v27
  %v595 = vunpack.c.l.b16 %v28
  %v596 = vunpack.c.h.b16 %v28
  %v597 = vunpack.c.l.b16 %v29
  %v598 = vunpack.c.h.b16 %v29
  %v599 = vunpack.c.l.b16 %v30
  %v600 = vunpack.c.h.b16 %v30
  %v601 = vunpack.c.l.b16 %v31
  %v602 = vunpack.c.h.b16 %v31
  %v603 = vunpack.c.l.b16 %v32
  %v604 = vunpack.c.h.b16 %v32
  %v605 = vunpack.c.l.b16 %v33
  %v606 = vunpack.c.h.b16 %v33
  %v607 = vunpack.c.l.b16 %v34
  %v608 = vunpack.c.h.b16 %v34
  %v609 = vunpack.c.l.b16 %v35
  %v610 = vunpack.c.h.b16 %v35
  %v611 = vunpack.c.l.b16 %v36
  %v612 = vunpack.c.h.b16 %v36
  %v613 = vunpack.c.l.b16 %v37
  %v614 = vunpack.c.h.b16 %v37
  %v615 = vunpack.c.l.b16 %v38
  %v616 = vunpack.c.h.b16 %v38
  %v617 = vunpack.c.l.b16 %v39
  %v618 = vunpack.c.h.b16 %v39
  %v619 = vunpack.c.l.b16 %v40
  %v620 = vunpack.c.h.b16 %v40
  %v621 = vunpack.c.l.b16 %v41
  %v622 = vunpack.c.h.b16 %v41
  %v623 = vunpack.c.l.b16 %v42
  %v624 = vunpack.c.h.b16 %v42
  %v625 = vunpack.c.l.b16 %v43
  %v626 = vunpack.c.h.b16 %v43
  %v627 = vunpack.c.l.b16 %v44
  %v628 = vunpack.c.h.b16 %v44
  %v629 = vunpack.c.l.b16 %v45
  %v630 = vunpack.c.h.b16 %v45
  %v631 = vunpack.c.l.b16 %v46
  %v632 = vunpack.c.h.b16 %v46
  %v633 = vunpack.c.l.b16 %v47
  %v634 = vunpack.c.h.b16 %v47
  %v635 = vunpack.c.l.b16 %v48
  %v636 = vunpack.c.h.b16 %v48
  %v637 = vunpack.c.l.b16 %v49
  %v638 = vunpack.c.h.b16 %v49
  %v639 = vunpack.c.l.b16 %v50
  %v640 = vunpack.c.h.b16 %v50
  %v641 = vunpack.c.l.b16 %v51
  %v642 = vunpack.c.h.b16 %v51
  %v643 = vunpack.c.l.b16 %v52
  %v644 = vunpack.c.h.b16 %v52
  %v645 = vunpack.c.l.b16 %v53
  %v646 = vunpack.c.h.b16 %v53
  %v647 = vunpack.c.l.b16 %v54
  %v648 = vunpack.c.h.b16 %v54
  %v649 = vunpack.c.l.b16 %v55
  %v650 = vunpack.c.h.b16 %v55
  %v651 = vunpack.c.l.b16 %v56
  %v652 = vunpack.c.h.b16 %v56
  %v653 = vunpack.c.l.b16 %v57
  %v654 = vunpack.c.h.b16 %v57
  %v655 = vunpack.c.l.b16 %v58
  %v656 = vunpack.c.h.b16 %v58
  %v657 = vunpack.c.l.b16 %v59
  %v658 = vunpack.c.h.b16 %v59
  %v659 = vunpack.c.l.b16 %v60
  %v660 = vunpack.c.h.b16 %v60
  %v661 = vunpack.c.l.b16 %v61
  %v662 = vunpack.c.h.b16 %v61
  %v663 = vunpack.c.l.b16 %v62
  %v664 = vunpack.c.h.b16 %v62
  %v665 = vunpack.c.l.b16 %v63
  %v666 = vunpack.c.h.b16 %v63
  %v667 = vunpack.c.l.b16 %v64
  %v668 = vunpack.c.h.b16 %v64
  %v669 = vunpack.c.l.b16 %v65
  %v670 = vunpack.c.h.b16 %v65
  %v671 = vunpack.c.l.b16 %v66
  %v672 = vunpack.c.h.b16 %v66
  %v673 = vunpack.c.l.b16 %v67
  %v674 = vunpack.c.h.b16 %v67
  %v675 = vunpack.c.l.b16 %v68
  %v676 = vunpack.c.h.b16 %v68
  %v677 = vunpack.c.l.b16 %v69
  %v678 = vunpack.c.h.b16 %v69
  %v679 = vunpack.c.l.b16 %v70
  %v680 = vunpack.c.h.b16 %v70
  %v681 = vunpack.c.l.b16 %v71
  %v682 = vunpack.c.h.b16 %v71
  %v683 = vunpack.c.l.b16 %v72
  %v684 = vunpack.c.h.b16 %v72
  %v685 = vunpack.c.l.b16 %v73
  %v686 = vunpack.c.h.b16 %v73
  %v687 = vunpack.c.l.b16 %v74
  %v688 = vunpack.c.h.b16 %v74
  %v689 = vunpack.c.l.b16 %v75
  %v690 = vunpack.c.h.b16 %v75
  %v691 = vunpack.c.l.b16 %v76
  %v692 = vunpack.c.h.b16 %v76
  %v693 = vunpack.c.l.b16 %v77
  %v694 = vunpack.c.h.b16 %v77
  %v695 = vunpack.c.l.b16 %v78
  %v696 = vunpack.c.h.b16 %v78
  %v697 = vunpack.c.l.b16 %v79
  %v698 = vunpack.c.h.b16 %v79
  %v699 = vunpack.c.l.b16 %v80
  %v700 = vunpack.c.h.b16 %v80
  %v701 = vunpack.c.l.b16 %v81
  %v702 = vunpack.c.h.b16 %v81
  %v703 = vunpack.c.l.b16 %v82
  %v704 = vunpack.c.h.b16 %v82
  %v705 = vunpack.c.l.b16 %v83
  %v706 = vunpack.c.h.b16 %v83
  %v707 = vunpack.c.l.b16 %v84
  %v708 = vunpack.c.h.b16 %v84
  %v709 = vunpack.c.l.b16 %v85
  %v710 = vunpack.c.h.b16 %v85
  %v711 = vunpack.c.l.b16 %v86
  %v712 = vunpack.c.h.b16 %v86
  %v713 = vunpack.c.l.b16 %v87
  %v714 = vunpack.c.h.b16 %v87
  %v715 = vunpack.c.l.b16 %v88
  %v716 = vunpack.c.h.b16 %v88
  %v717 = vunpack.c.l.b16 %v89
  %v718 = vunpack.c.h.b16 %v89
  %v719 = vunpack.c.l.b16 %v90
  %v720 = vunpack.c.h.b16 %v90
  %v721 = vunpack.c.l.b16 %v91
  %v722 = vunpack.c.h.b16 %v91
  %v723 = vunpack.c.l.b16 %v92
  %v724 = vunpack.c.h.b16 %v92
  %v725 = vunpack.c.l.b16 %v93
  %v726 = vunpack.c.h.b16 %v93
  %v727 = vunpack.c.l.b16 %v94
  %v728 = vunpack.c.h.b16 %v94
  %v729 = vunpack.c.l.b16 %v95
  %v730 = vunpack.c.h.b16 %v95
  %v731 = vunpack.c.l.b16 %v96
  %v732 = vunpack.c.h.b16 %v96
  %v733 = vunpack.c.l.b16 %v97
  %v734 = vunpack.c.h.b16 %v97
  %v735 = vunpack.c.l.b16 %v98
  %v736 = vunpack.c.h.b16 %v98
  %v737 = vunpack.c.l.b16 %v99
  %v738 = vunpack.c.h.b16 %v99
  %v739 = vunpack.c.l.b16 %v100
  %v740 = vunpack.c.h.b16 %v100
  %v741 = vunpack.c.l.b16 %v101
  %v742 = vunpack.c.h.b16 %v101
  %v743 = vunpack.c.l.b16 %v102
  %v744 = vunpack.c.h.b16 %v102
  %v745 = vunpack.c.l.b16 %v103
  %v746 = vunpack.c.h.b16 %v103
  %v747 = vunpack.c.l.b16 %v104
  %v748 = vunpack.c.h.b16 %v104
  %v749 = vunpack.c.l.b16 %v105
  %v750 = vunpack.c.h.b16 %v105
  %v751 = vunpack.c.l.b16 %v106
  %v752 = vunpack.c.h.b16 %v106
  %v753 = vunpack.c.l.b16 %v107
  %v754 = vunpack.c.h.b16 %v107
  %v755 = vunpack.c.l.b16 %v108
  %v756 = vunpack.c.h.b16 %v108
  %v757 = vunpack.c.l.b16 %v109
  %v758 = vunpack.c.h.b16 %v109
  %v759 = vunpack.c.l.b16 %v110
  %v760 = vunpack.c.h.b16 %v110
  %v761 = vunpack.c.l.b16 %v111
  %v762 = vunpack.c.h.b16 %v111
  %v763 = vunpack.c.l.b16 %v112
  %v764 = vunpack.c.h.b16 %v112
  %v765 = vunpack.c.l.b16 %v113
  %v766 = vunpack.c.h.b16 %v113
  %v767 = vunpack.c.l.b16 %v114
  %v768 = vunpack.c.h.b16 %v114
  %v769 = vunpack.c.l.b16 %v115
  %v770 = vunpack.c.h.b16 %v115
  %v771 = vunpack.c.l.b16 %v116
  %v772 = vunpack.c.h.b16 %v116
  %v773 = vunpack.c.l.b16 %v117
  %v774 = vunpack.c.h.b16 %v117
  %v775 = vunpack.c.l.b16 %v118
  %v776 = vunpack.c.h.b16 %v118
  %v777 = vunpack.c.l.b16 %v119
  %v778 = vunpack.c.h.b16 %v119
  %v779 = vunpack.c.l.b16 %v120
  %v780 = vunpack.c.h.b16 %v120
  %v781 = vunpack.c.l.b16 %v121
  %v782 = vunpack.c.h.b16 %v121
  %v783 = vunpack.c.l.b16 %v122
  %v784 = vunpack.c.h.b16 %v122
  %v785 = vunpack.c.l.b16 %v123
  %v786 = vunpack.c.h.b16 %v123
  %v787 = vunpack.c.l.b16 %v124
  %v788 = vunpack.c.h.b16 %v124
  %v789 = vunpack.c.l.b16 %v125
  %v790 = vunpack.c.h.b16 %v125
  %v791 = vunpack.c.l.b16 %v126
  %v792 = vunpack.c.h.b16 %v126
  %v793 = vunpack.c.l.b16 %v127
  %v794 = vunpack.c.h.b16 %v127
  %v795 = vunpack.c.l.b16 %v128
  %v796 = vunpack.c.h.b16 %v128
  %v797 = vunpack.c.l.b16 %v129
  %v798 = vunpack.c.h.b16 %v129
  %v799 = vunpack.c.l.b16 %v130
  %v800 = vunpack.c.h.b16 %v130
  %v801 = vunpack.c.l.b16 %v131
  %v802 = vunpack.c.h.b16 %v131
  %v803 = vunpack.c.l.b16 %v132
  %v804 = vunpack.c.h.b16 %v132
  %v805 = vunpack.c.l.b16 %v133
  %v806 = vunpack.c.h.b16 %v133
  %v807 = vunpack.c.l.b16 %v134
  %v808 = vunpack.c.h.b16 %v134
  %v809 = vunpack.c.l.b16 %v135
  %v810 = vunpack.c.h.b16 %v135
  %v811 = vunpack.c.l.b16 %v136
  %v812 = vunpack.c.h.b16 %v136
  %v813 = vunpack.c.l.b16 %v137
  %v814 = vunpack.c.h.b16 %v137
  %v815 = vunpack.c.l.b16 %v138
  %v816 = vunpack.c.h.b16 %v138
  %v817 = vunpack.c.l.b16 %v139
  %v818 = vunpack.c.h.b16 %v139
  %v819 = vunpack.c.l.b16 %v140
  %v820 = vunpack.c.h.b16 %v140
  %v821 = vunpack.c.l.b16 %v141
  %v822 = vunpack.c.h.b16 %v141
  %v823 = vunpack.c.l.b16 %v142
  %v824 = vunpack.c.h.b16 %v142
  %v825 = vunpack.c.l.b16 %v143
  %v826 = vunpack.c.h.b16 %v143
  %v827 = vunpack.c.l.b16 %v144
  %v828 = vunpack.c.h.b16 %v144
  %v829 = vunpack.c.l.b16 %v145
  %v830 = vunpack.c.h.b16 %v145
  %v831 = vunpack.c.l.b16 %v146
  %v832 = vunpack.c.h.b16 %v146
  %v833 = vunpack.c.l.b16 %v147
  %v834 = vunpack.c.h.b16 %v147
  %v835 = vunpack.c.l.b16 %v148
  %v836 = vunpack.c.h.b16 %v148
  %v837 = vunpack.c.l.b16 %v149
  %v838 = vunpack.c.h.b16 %v149
  %v839 = vunpack.c.l.b16 %v150
  %v840 = vunpack.c.h.b16 %v150
  %v841 = vunpack.c.l.b16 %v151
  %v842 = vunpack.c.h.b16 %v151
  %v843 = vunpack.c.l.b16 %v152
  %v844 = vunpack.c.h.b16 %v152
  %v845 = vunpack.c.l.b16 %v153
  %v846 = vunpack.c.h.b16 %v153
  %v847 = vunpack.c.l.b16 %v154
  %v848 = vunpack.c.h.b16 %v154
  %v849 = vunpack.c.l.b16 %v155
  %v850 = vunpack.c.h.b16 %v155
  %v851 = vunpack.c.l.b16 %v156
  %v852 = vunpack.c.h.b16 %v156
  %v853 = vunpack.c.l.b16 %v157
  %v854 = vunpack.c.h.b16 %v157
  %v855 = vunpack.c.l.b16 %v158
  %v856 = vunpack.c.h.b16 %v158
  %v857 = vunpack.c.l.b16 %v159
  %v858 = vunpack.c.h.b16 %v159
  %v859 = vunpack.c.l.b16 %v160
  %v860 = vunpack.c.h.b16 %v160
  %v861 = vunpack.c.l.b16 %v161
  %v862 = vunpack.c.h.b16 %v161
  %v863 = vunpack.c.l.b16 %v162
  %v864 = vunpack.c.h.b16 %v162
  %v865 = vunpack.c.l.b16 %v163
  %v866 = vunpack.c.h.b16 %v163
  %v867 = vunpack.c.l.b16 %v164
  %v868 = vunpack.c.h.b16 %v164
  %v869 = vunpack.c.l.b16 %v165
  %v870 = vunpack.c.h.b16 %v165
  %v871 = vunpack.c.l.b16 %v166
  %v872 = vunpack.c.h.b16 %v166
  %v873 = vunpack.c.l.b16 %v167
  %v874 = vunpack.c.h.b16 %v167
  %v875 = vunpack.c.l.b16 %v168
  %v876 = vunpack.c.h.b16 %v168
  %v877 = vunpack.c.l.b16 %v169
  %v878 = vunpack.c.h.b16 %v169
  %v879 = vunpack.c.l.b16 %v170
  %v880 = vunpack.c.h.b16 %v170
  %v881 = vunpack.c.l.b16 %v171
  %v882 = vunpack.c.h.b16 %v171
  %v883 = vunpack.c.l.b16 %v172
  %v884 = vunpack.c.h.b16 %v172
  %v885 = vunpack.c.l.b16 %v173
  %v886 = vunpack.c.h.b16 %v173
  %v887 = vunpack.c.l.b16 %v174
  %v888 = vunpack.c.h.b16 %v174
  %v889 = vunpack.c.l.b16 %v175
  %v890 = vunpack.c.h.b16 %v175
  %v891 = vunpack.c.l.b16 %v176
  %v892 = vunpack.c.h.b16 %v176
  %v893 = vunpack.c.l.b16 %v177
  %v894 = vunpack.c.h.b16 %v177
  %v895 = vunpack.c.l.b16 %v178
  %v896 = vunpack.c.h.b16 %v178
  %v897 = vunpack.c.l.b16 %v179
  %v898 = vunpack.c.h.b16 %v179
  %v899 = vunpack.c.l.b16 %v180
  %v900 = vunpack.c.h.b16 %v180
  %v901 = vunpack.c.l.b16 %v181
  %v902 = vunpack.c.h.b16 %v181
  %v903 = vunpack.c.l.b16 %v182
  %v904 = vunpack.c.h.b16 %v182
  %v905 = vunpack.c.l.b16 %v183
  %v906 = vunpack.c.h.b16 %v183
  %v907 = vunpack.c.l.b16 %v184
  %v908 = vunpack.c.h.b16 %v184
  %v909 = vunpack.c.l.b16 %v185
  %v910 = vunpack.c.h.b16 %v185
  %v911 = vunpack.c.l.b16 %v186
  %v912 = vunpack.c.h.b16 %v186
  %v913 = vunpack.c.l.b16 %v187
  %v914 = vunpack.c.h.b16 %v187
  %v915 = vunpack.c.l.b16 %v188
  %v916 = vunpack.c.h.b16 %v188
  %v917 = vunpack.c.l.b16 %v189
  %v918 = vunpack.c.h.b16 %v189
  %v919 = vunpack.c.l.b16 %v190
  %v920 = vunpack.c.h.b16 %v190
  %v921 = vunpack.c.l.b16 %v191
  %v922 = vunpack.c.h.b16 %v191
  %v923 = vunpack.c.l.b16 %v192
  %v924 = vunpack.c.h.b16 %v192
  %v925 = vunpack.c.l.b16 %v193
  %v926 = vunpack.c.h.b16 %v193
  %v927 = vunpack.c.l.b16 %v194
  %v928 = vunpack.c.h.b16 %v194
  %v929 = vunpack.c.l.b16 %v195
  %v930 = vunpack.c.h.b16 %v195
  %v931 = vunpack.c.l.b16 %v196
  %v932 = vunpack.c.h.b16 %v196
  %v933 = vunpack.c.l.b16 %v197
  %v934 = vunpack.c.h.b16 %v197
  %v935 = vunpack.c.l.b16 %v198
  %v936 = vunpack.c.h.b16 %v198
  %v937 = vunpack.c.l.b16 %v199
  %v938 = vunpack.c.h.b16 %v199
  %v939 = vunpack.c.l.b16 %v200
  %v940 = vunpack.c.h.b16 %v200
  %v941 = vunpack.c.l.b16 %v201
  %v942 = vunpack.c.h.b16 %v201
  %v943 = vunpack.c.l.b16 %v202
  %v944 = vunpack.c.h.b16 %v202
  %v945 = vunpack.c.l.b16 %v203
  %v946 = vunpack.c.h.b16 %v203
  %v947 = vunpack.c.l.b16 %v204
  %v948 = vunpack.c.h.b16 %v204
  %v949 = vunpack.c.l.b16 %v205
  %v950 = vunpack.c.h.b16 %v205
  %v951 = vunpack.c.l.b16 %v206
  %v952 = vunpack.c.h.b16 %v206
  %v953 = vunpack.c.l.b16 %v207
  %v954 = vunpack.c.h.b16 %v207
  %v955 = vunpack.c.l.b16 %v208
  %v956 = vunpack.c.h.b16 %v208
  %v957 = vunpack.c.l.b16 %v209
  %v958 = vunpack.c.h.b16 %v209
  %v959 = vunpack.c.l.b16 %v210
  %v960 = vunpack.c.h.b16 %v210
  %v961 = vunpack.c.l.b16 %v211
  %v962 = vunpack.c.h.b16 %v211
  %v963 = vunpack.c.l.b16 %v212
  %v964 = vunpack.c.h.b16 %v212
  %v965 = vunpack.c.l.b16 %v213
  %v966 = vunpack.c.h.b16 %v213
  %v967 = vunpack.c.l.b16 %v214
  %v968 = vunpack.c.h.b16 %v214
  %v969 = vunpack.c.l.b16 %v215
  %v970 = vunpack.c.h.b16 %v215
  %v971 = vunpack.c.l.b16 %v216
  %v972 = vunpack.c.h.b16 %v216
  %v973 = vunpack.c.l.b16 %v217
  %v974 = vunpack.c.h.b16 %v217
  %v975 = vunpack.c.l.b16 %v218
  %v976 = vunpack.c.h.b16 %v218
  %v977 = vunpack.c.l.b16 %v219
  %v978 = vunpack.c.h.b16 %v219
  %v979 = vunpack.c.l.b16 %v220
  %v980 = vunpack.c.h.b16 %v220
  %v981 = vunpack.c.l.b16 %v221
  %v982 = vunpack.c.h.b16 %v221
  %v983 = vunpack.c.l.b16 %v222
  %v984 = vunpack.c.h.b16 %v222
  %v985 = vunpack.c.l.b16 %v223
  %v986 = vunpack.c.h.b16 %v223
  %v987 = vunpack.c.l.b16 %v224
  %v988 = vunpack.c.h.b16 %v224
  %v989 = vunpack.c.l.b16 %v225
  %v990 = vunpack.c.h.b16 %v225
  %v991 = vunpack.c.l.b16 %v226
  %v992 = vunpack.c.h.b16 %v226
  %v993 = vunpack.c.l.b16 %v227
  %v994 = vunpack.c.h.b16 %v227
  %v995 = vunpack.c.l.b16 %v228
  %v996 = vunpack.c.h.b16 %v228
  %v997 = vunpack.c.l.b16 %v229
  %v998 = vunpack.c.h.b16 %v229
  %v999 = vunpack.c.l.b16 %v230
  %v1000 = vunpack.c.h.b16 %v230
  %v1001 = vunpack.c.l.b16 %v231
  %v1002 = vunpack.c.h.b16 %v231
  %v1003 = vunpack.c.l.b16 %v232
  %v1004 = vunpack.c.h.b16 %v232
  %v1005 = vunpack.c.l.b16 %v233
  %v1006 = vunpack.c.h.b16 %v233
  %v1007 = vunpack.c.l.b16 %v234
  %v1008 = vunpack.c.h.b16 %v234
  %v1009 = vunpack.c.l.b16 %v235
  %v1010 = vunpack.c.h.b16 %v235
  %v1011 = vunpack.c.l.b16 %v236
  %v1012 = vunpack.c.h.b16 %v236
  %v1013 = vunpack.c.l.b16 %v237
  %v1014 = vunpack.c.h.b16 %v237
  %v1015 = vunpack.c.l.b16 %v238
  %v1016 = vunpack.c.h.b16 %v238
  %v1017 = vunpack.c.l.b16 %v239
  %v1018 = vunpack.c.h.b16 %v239
  %v1019 = vunpack.c.l.b16 %v240
  %v1020 = vunpack.c.h.b16 %v240
  %v1021 = vunpack.c.l.b16 %v241
  %v1022 = vunpack.c.h.b16 %v241
  %v1023 = vunpack.c.l.b16 %v242
  %v1024 = vunpack.c.h.b16 %v242
  %v1025 = vunpack.c.l.b16 %v243
  %v1026 = vunpack.c.h.b16 %v243
  %v1027 = vunpack.c.l.b16 %v244
  %v1028 = vunpack.c.h.b16 %v244
  %v1029 = vunpack.c.l.b16 %v245
  %v1030 = vunpack.c.h.b16 %v245
  %v1031 = vunpack.c.l.b16 %v246
  %v1032 = vunpack.c.h.b16 %v246
  %v1033 = vunpack.c.l.b16 %v247
  %v1034 = vunpack.c.h.b16 %v247
  %v1035 = vunpack.c.l.b16 %v248
  %v1036 = vunpack.c.h.b16 %v248
  %v1037 = vunpack.c.l.b16 %v249
  %v1038 = vunpack.c.h.b16 %v249
  %v1039 = vunpack.c.l.b16 %v250
  %v1040 = vunpack.c.h.b16 %v250
  %v1041 = vunpack.c.l.b16 %v251
  %v1042 = vunpack.c.h.b16 %v251
  %v1043 = vunpack.c.l.b16 %v252
  %v1044 = vunpack.c.h.b16 %v252
  %v1045 = vunpack.c.l.b16 %v253
  %v1046 = vunpack.c.h.b16 %v253
  %v1047 = vunpack.c.l.b16 %v254
  %v1048 = vunpack.c.h.b16 %v254
  %v1049 = vunpack.c.l.b16 %v255
  %v1050 = vunpack.c.h.b16 %v255
  %v1051 = vunpack.c.l.b16 %v256
  %v1052 = vunpack.c.h.b16 %v256
  %v1053 = vunpack.c.l.b16 %v257
  %v1054 = vunpack.c.h.b16 %v257
  %v1055 = vunpack.c.l.b16 %v258
  %v1056 = vunpack.c.h.b16 %v258
  %v1057 = vunpack.c.l.b16 %v259
  %v1058 = vunpack.c.h.b16 %v259
  %v1059 = vunpack.c.l.b16 %v260
  %v1060 = vunpack.c.h.b16 %v260
  %v1061 = vunpack.c.l.b16 %v261
  %v1062 = vunpack.c.h.b16 %v261
  %v1063 = vunpack.c.l.b16 %v262
  %v1064 = vunpack.c.h.b16 %v262
  %v1065 = vunpack.c.l.b16 %v263
  %v1066 = vunpack.c.h.b16 %v263
  %v1067 = vunpack.c.l.b16 %v264
  %v1068 = vunpack.c.h.b16 %v264
  %v1069 = vunpack.c.l.b16 %v265
  %v1070 = vunpack.c.h.b16 %v265
  %v1071 = vunpack.c.l.b16 %v266
  %v1072 = vunpack.c.h.b16 %v266
  %v1073 = vunpack.c.l.b16 %v267
  %v1074 = vunpack.c.h.b16 %v267
  %v1075 = vunpack.c.l.b16 %v268
  %v1076 = vunpack.c.h.b16 %v268
  %v1077 = vunpack.c.l.b16 %v269
  %v1078 = vunpack.c.h.b16 %v269
  %v1079 = vunpack.c.l.b16 %v270
  %v1080 = vunpack.c.h.b16 %v270
  %v1081 = vunpack.c.l.b16 %v271
  %v1082 = vunpack.c.h.b16 %v271
  %v1083 = vunpack.c.l.b16 %v272
  %v1084 = vunpack.c.h.b16 %v272
  %v1085 = vunpack.c.l.b16 %v273
  %v1086 = vunpack.c.h.b16 %v273
  %v1087 = vunpack.c.l.b16 %v274
  %v1088 = vunpack.c.h.b16 %v274
  %v1089 = vunpack.c.l.b16 %v275
  %v1090 = vunpack.c.h.b16 %v275
  %v1091 = vunpack.c.l.b16 %v276
  %v1092 = vunpack.c.h.b16 %v276
  %v1093 = vunpack.c.l.b16 %v277
  %v1094 = vunpack.c.h.b16 %v277
  %v1095 = vunpack.c.l.b16 %v278
  %v1096 = vunpack.c.h.b16 %v278
  %v1097 = vunpack.c.l.b16 %v279
  %v1098 = vunpack.c.h.b16 %v279
  %v1099 = vunpack.c.l.b16 %v280
  %v1100 = vunpack.c.h.b16 %v280
  %v1101 = vunpack.c.l.b16 %v281
  %v1102 = vunpack.c.h.b16 %v281
  %v1103 = vunpack.c.l.b16 %v282
  %v1104 = vunpack.c.h.b16 %v282
  %v1105 = vunpack.c.l.b16 %v283
  %v1106 = vunpack.c.h.b16 %v283
  %v1107 = vunpack.c.l.b16 %v284
  %v1108 = vunpack.c.h.b16 %v284
  %v1109 = vunpack.c.l.b16 %v285
  %v1110 = vunpack.c.h.b16 %v285
  %v1111 = vunpack.c.l.b16 %v286
  %v1112 = vunpack.c.h.b16 %v286
  %v1113 = vunpack.c.l.b16 %v287
  %v1114 = vunpack.c.h.b16 %v287
  %v1115 = vunpack.c.l.b16 %v288
  %v1116 = vunpack.c.h.b16 %v288
  %v1117 = vunpack.c.l.b16 %v289
  %v1118 = vunpack.c.h.b16 %v289
  %v1119 = vunpack.c.l.b16 %v290
  %v1120 = vunpack.c.h.b16 %v290
  %v1121 = vunpack.c.l.b16 %v291
  %v1122 = vunpack.c.h.b16 %v291
  %v1123 = vunpack.c.l.b16 %v292
  %v1124 = vunpack.c.h.b16 %v292
  %v1125 = vunpack.c.l.b16 %v293
  %v1126 = vunpack.c.h.b16 %v293
  %v1127 = vunpack.c.l.b16 %v294
  %v1128 = vunpack.c.h.b16 %v294
  %v1129 = vpack.c.b16 %v601, %v579
  %v1130 = vpack.c.b16 %v602, %v580
  %v1131 = vpack.c.b16 %v603, %v581
  %v1132 = vpack.c.b16 %v604, %v582
  %v1133 = vpack.c.b16 %v605, %v583
  %v1134 = vpack.c.b16 %v606, %v584
  %v1135 = vpack.c.b16 %v607, %v585
  %v1136 = vpack.c.b16 %v608, %v586
  %v1137 = vpack.c.b16 %v609, %v587
  %v1138 = vpack.c.b16 %v610, %v588
  %v1139 = vpack.c.b16 %v611, %v589
  %v1140 = vpack.c.b16 %v612, %v590
  %v1141 = vpack.c.b16 %v613, %v591
  %v1142 = vpack.c.b16 %v614, %v592
  %v1143 = vpack.c.b16 %v615, %v593
  %v1144 = vpack.c.b16 %v616, %v594
  %v1145 = vpack.c.b16 %v617, %v595
  %v1146 = vpack.c.b16 %v618, %v596
  %v1147 = vpack.c.b16 %v619, %v597
  %v1148 = vpack.c.b16 %v620, %v598
  %v1149 = vpack.c.b16 %v621, %v599
  %v1150 = vpack.c.b16 %v622, %v600
  %v1151 = vpack.c.b16 %v645, %v623
  %v1152 = vpack.c.b16 %v646, %v624
  %v1153 = vpack.c.b16 %v647, %v625
  %v1154 = vpack.c.b16 %v648, %v626
  %v1155 = vpack.c.b16 %v649, %v627
  %v1156 = vpack.c.b16 %v650, %v628
  %v1157 = vpack.c.b16 %v651, %v629
  %v1158 = vpack.c.b16 %v652, %v630
  %v1159 = vpack.c.b16 %v653, %v631
  %v1160 = vpack.c.b16 %v654, %v632
  %v1161 = vpack.c.b16 %v655, %v633
  %v1162 = vpack.c.b16 %v656, %v634
  %v1163 = vpack.c.b16 %v657, %v635
  %v1164 = vpack.c.b16 %v658, %v636
  %v1165 = vpack.c.b16 %v659, %v637
  %v1166 = vpack.c.b16 %v660, %v638
  %v1167 = vpack.c.b16 %v661, %v639
  %v1168 = vpack.c.b16 %v662, %v640
  %v1169 = vpack.c.b16 %v663, %v641
  %v1170 = vpack.c.b16 %v664, %v642
  %v1171 = vpack.c.b16 %v665, %v643
  %v1172 = vpack.c.b16 %v666, %v644
  %v1173 = vpack.c.b16 %v689, %v667
  %v1174 = vpack.c.b16 %v690, %v668
  %v1175 = vpack.c.b16 %v691, %v669
  %v1176 = vpack.c.b16 %v692, %v670
  %v1177 = vpack.c.b16 %v693, %v671
  %v1178 = vpack.c.b16 %v694, %v672
  %v1179 = vpack.c.b16 %v695, %v673
  %v1180 = vpack.c.b16 %v696, %v674
  %v1181 = vpack.c.b16 %v697, %v675
  %v1182 = vpack.c.b16 %v698, %v676
  %v1183 = vpack.c.b16 %v699, %v677
  %v1184 = vpack.c.b16 %v700, %v678
  %v1185 = vpack.c.b16 %v701, %v679
  %v1186 = vpack.c.b16 %v702, %v680
  %v1187 = vpack.c.b16 %v703, %v681
  %v1188 = vpack.c.b16 %v704, %v682
  %v1189 = vpack.c.b16 %v705, %v683
  %v1190 = vpack.c.b16 %v706, %v684
  %v1191 = vpack.c.b16 %v707, %v685
  %v1192 = vpack.c.b16 %v708, %v686
  %v1193 = vpack.c.b16 %v709, %v687
  %v1194 = vpack.c.b16 %v710, %v688
  %v1195 = vpack.c.b16 %v733, %v711
  %v1196 = vpack.c.b16 %v734, %v712
  %v1197 = vpack.c.b16 %v735, %v713
  %v1198 = vpack.c.b16 %v736, %v714
  %v1199 = vpack.c.b16 %v737, %v715
  %v1200 = vpack.c.b16 %v738, %v716
  %v1201 = vpack.c.b16 %v739, %v717
  %v1202 = vpack.c.b16 %v740, %v718
  %v1203 = vpack.c.b16 %v741, %v719
  %v1204 = vpack.c.b16 %v742, %v720
  %v1205 = vpack.c.b16 %v743, %v721
  %v1206 = vpack.c.b16 %v744, %v722
  %v1207 = vpack.c.b16 %v745, %v723
  %v1208 = vpack.c.b16 %v746, %v724
  %v1209 = vpack.c.b16 %v747, %v725
  %v1210 = vpack.c.b16 %v748, %v726
  %v1211 = vpack.c.b16 %v749, %v727
  %v1212 = vpack.c.b16 %v750, %v728
  %v1213 = vpack.c.b16 %v751, %v729
  %v1214 = vpack.c.b16 %v752, %v730
  %v1215 = vpack.c.b16 %v753, %v731
  %v1216 = vpack.c.b16 %v754, %v732
  %v1217 = vpack.c.b16 %v777, %v755
  %v1218 = vpack.c.b16 %v778, %v756
  %v1219 = vpack.c.b16 %v779, %v757
  %v1220 = vpack.c.b16 %v780, %v758
  %v1221 = vpack.c.b16 %v781, %v759
  %v1222 = vpack.c.b16 %v782, %v760
  %v1223 = vpack.c.b16 %v783, %v761
  %v1224 = vpack.c.b16 %v784, %v762
  %v1225 = vpack.c.b16 %v785, %v763
  %v1226 = vpack.c.b16 %v786, %v764
  %v1227 = vpack.c.b16 %v787, %v765
  %v1228 = vpack.c.b16 %v788, %v766
  %v1229 = vpack.c.b16 %v789, %v767
  %v1230 = vpack.c.b16 %v790, %v768
  %v1231 = vpack.c.b16 %v791, %v769
  %v1232 = vpack.c.b16 %v792, %v770
  %v1233 = vpack.c.b16 %v793, %v771
  %v1234 = vpack.c.b16 %v794, %v772
  %v1235 = vpack.c.b16 %v795, %v773
  %v1236 = vpack.c.b16 %v796, %v774
  %v1237 = vpack.c.b16 %v797, %v775
  %v1238 = vpack.c.b16 %v798, %v776
  %v1239 = vpack.c.b16 %v821, %v799
  %v1240 = vpack.c.b16 %v822, %v800
  %v1241 = vpack.c.b16 %v823, %v801
  %v1242 = vpack.c.b16 %v824, %v802
  %v1243 = vpack.c.b16 %v825, %v803
  %v1244 = vpack.c.b16 %v826, %v804
  %v1245 = vpack.c.b16 %v827, %v805
  %v1246 = vpack.c.b16 %v828, %v806
  %v1247 = vpack.c.b16 %v829, %v807
  %v1248 = vpack.c.b16 %v830, %v808
  %v1249 = vpack.c.b16 %v831, %v809
  %v1250 = vpack.c.b16 %v832, %v810
  %v1251 = vpack.c.b16 %v833, %v811
  %v1252 = vpack.c.b16 %v834, %v812
  %v1253 = vpack.c.b16 %v835, %v813
  %v1254 = vpack.c.b16 %v836, %v814
  %v1255 = vpack.c.b16 %v837, %v815
  %v1256 = vpack.c.b16 %v838, %v816
  %v1257 = vpack.c.b16 %v839, %v817
  %v1258 = vpack.c.b16 %v840, %v818
  %v1259 = vpack.c.b16 %v841, %v819
  %v1260 = vpack.c.b16 %v842, %v820
  %v1261 = vpack.c.b16 %v865, %v843
  %v1262 = vpack.c.b16 %v866, %v844
  %v1263 = vpack.c.b16 %v867, %v845
  %v1264 = vpack.c.b16 %v868, %v846
  %v1265 = vpack.c.b16 %v869, %v847
  %v1266 = vpack.c.b16 %v870, %v848
  %v1267 = vpack.c.b16 %v871, %v849
  %v1268 = vpack.c.b16 %v872, %v850
  %v1269 = vpack.c.b16 %v873, %v851
  %v1270 = vpack.c.b16 %v874, %v852
  %v1271 = vpack.c.b16 %v875, %v853
  %v1272 = vpack.c.b16 %v876, %v854
  %v1273 = vpack.c.b16 %v877, %v855
  %v1274 = vpack.c.b16 %v878, %v856
  %v1275 = vpack.c.b16 %v879, %v857
  %v1276 = vpack.c.b16 %v880, %v858
  %v1277 = vpack.c.b16 %v881, %v859
  %v1278 = vpack.c.b16 %v882, %v860
  %v1279 = vpack.c.b16 %v883, %v861
  %v1280 = vpack.c.b16 %v884, %v862
  %v1281 = vpack.c.b16 %v885, %v863
  %v1282 = vpack.c.b16 %v886, %v864
  %v1283 = vpack.c.b16 %v909, %v887
  %v1284 = vpack.c.b16 %v910, %v888
  %v1285 = vpack.c.b16 %v911, %v889
  %v1286 = vpack.c.b16 %v912, %v890
  %v1287 = vpack.c.b16 %v913, %v891
  %v1288 = vpack.c.b16 %v914, %v892
  %v1289 = vpack.c.b16 %v915, %v893
  %v1290 = vpack.c.b16 %v916, %v894
  %v1291 = vpack.c.b16 %v917, %v895
  %v1292 = vpack.c.b16 %v918, %v896
  %v1293 = vpack.c.b16 %v919, %v897
  %v1294 = vpack.c.b16 %v920, %v898
  %v1295 = vpack.c.b16 %v921, %v899
  %v1296 = vpack.c.b16 %v922, %v900
  %v1297 = vpack.c.b16 %v923, %v901
  %v1298 = vpack.c.b16 %v924, %v902
  %v1299 = vpack.c.b16 %v925, %v903
  %v1300 = vpack.c.b16 %v926, %v904
  %v1301 = vpack.c.b16 %v927, %v905
  %v1302 = vpack.c.b16 %v928, %v906
  %v1303 = vpack.c.b16 %v929, %v907
  %v1304 = vpack.c.b16 %v930, %v908
  %v1305 = vpack.c.b16 %v953, %v931
  %v1306 = vpack.c.b16 %v954, %v932
  %v1307 = vpack.c.b16 %v955, %v933
  %v1308 = vpack.c.b16 %v956, %v934
  %v1309 = vpack.c.b16 %v957, %v935
  %v1310 = vpack.c.b16 %v958, %v936
  %v1311 = vpack.c.b16 %v959, %v937
  %v1312 = vpack.c.b16 %v960, %v938
  %v1313 = vpack.c.b16 %v961, %v939
  %v1314 = vpack.c.b16 %v962, %v940
  %v1315 = vpack.c.b16 %v963, %v941
  %v1316 = vpack.c.b16 %v964, %v942
  %v1317 = vpack.c.b16 %v965, %v943
  %v1318 = vpack.c.b16 %v966, %v944
  %v1319 = vpack.c.b16 %v967, %v945
  %v1320 = vpack.c.b16 %v968, %v946
  %v1321 = vpack.c.b16 %v969, %v947
  %v1322 = vpack.c.b16 %v970, %v948
  %v1323 = vpack.c.b16 %v971, %v949
  %v1324 = vpack.c.b16 %v972, %v950
  %v1325 = vpack.c.b16 %v973, %v951
  %v1326 = vpack.c.b16 %v974, %v952
  %v1327 = vpack.c.b16 %v997, %v975
  %v1328 = vpack.c.b16 %v998, %v976
  %v1329 = vpack.c.b16 %v999, %v977
  %v1330 = vpack.c.b16 %v1000, %v978
  %v1331 = vpack.c.b16 %v1001, %v979
  %v1332 = vpack.c.b16 %v1002, %v980
  %v1333 = vpack.c.b16 %v1003, %v981
  %v1334 = vpack.c.b16 %v1004, %v982
  %v1335 = vpack.c.b16 %v1005, %v983
  %v1336 = vpack.c.b16 %v1006, %v984
  %v1337 = vpack.c.b16 %v1007, %v985
  %v1338 = vpack.c.b16 %v1008, %v986
  %v1339 = vpack.c.b16 %v1009, %v987
  %v1340 = vpack.c.b16 %v1010, %v988
  %v1341 = vpack.c.b16 %v1011, %v989
  %v1342 = vpack.c.b16 %v1012, %v990
  %v1343 = vpack.c.b16 %v1013, %v991
  %v1344 = vpack.c.b16 %v1014, %v992
  %v1345 = vpack.c.b16 %v1015, %v993
  %v1346 = vpack.c.b16 %v1016, %v994
  %v1347 = vpack.c.b16 %v1017, %v995
  %v1348 = vpack.c.b16 %v1018, %v996
  %v1349 = vpack.c.b16 %v1041, %v1019
  %v1350 = vpack.c.b16 %v1042, %v1020
  %v1351 = vpack.c.b16 %v1043, %v1021
  %v1352 = vpack.c.b16 %v1044, %v1022
  %v1353 = vpack.c.b16 %v1045, %v1023
  %v1354 = vpack.c.b16 %v1046, %v1024
  %v1355 = vpack.c.b16 %v1047, %v1025
  %v1356 = vpack.c.b16 %v1048, %v1026
  %v1357 = vpack.c.b16 %v1049, %v1027
  %v1358 = vpack.c.b16 %v1050, %v1028
  %v1359 = vpack.c.b16 %v1051, %v1029
  %v1360 = vpack.c.b16 %v1052, %v1030
  %v1361 = vpack.c.b16 %v1053, %v1031
  %v1362 = vpack.c.b16 %v1054, %v1032
  %v1363 = vpack.c.b16 %v1055, %v1033
  %v1364 = vpack.c.b16 %v1056, %v1034
  %v1365 = vpack.c.b16 %v1057, %v1035
  %v1366 = vpack.c.b16 %v1058, %v1036
  %v1367 = vpack.c.b16 %v1059, %v1037
  %v1368 = vpack.c.b16 %v1060, %v1038
  %v1369 = vpack.c.b16 %v1061, %v1039
  %v1370 = vpack.c.b16 %v1062, %v1040
  %v1371 = vpack.c.b16 %v1085, %v1063
  %v1372 = vpack.c.b16 %v1086, %v1064
  %v1373 = vpack.c.b16 %v1087, %v1065
  %v1374 = vpack.c.b16 %v1088, %v1066
  %v1375 = vpack.c.b16 %v1089, %v1067
  %v1376 = vpack.c.b16 %v1090, %v1068
  %v1377 = vpack.c.b16 %v1091, %v1069
  %v1378 = vpack.c.b16 %v1092, %v1070
  %v1379 = vpack.c.b16 %v1093, %v1071
  %v1380 = vpack.c.b16 %v1094, %v1072
  %v1381 = vpack.c.b16 %v1095, %v1073
  %v1382 = vpack.c.b16 %v1096, %v1074
  %v1383 = vpack.c.b16 %v1097, %v1075
  %v1384 = vpack.c.b16 %v1098, %v1076
  %v1385 = vpack.c.b16 %v1099, %v1077
  %v1386 = vpack.c.b16 %v1100, %v1078
  %v1387 = vpack.c.b16 %v1101, %v1079
  %v1388 = vpack.c.b16 %v1102, %v1080
  %v1389 = vpack.c.b16 %v1103, %v1081
  %v1390 = vpack.c.b16 %v1104, %v1082
  %v1391 = vpack.c.b16 %v1105, %v1083
  %v1392 = vpack.c.b16 %v1106, %v1084
  %v1393 = vpack.c.b16 %v1107, %v1107
  %v1394 = vpack.c.b16 %v1108, %v1108
  %v1395 = vpack.c.b16 %v1109, %v1109
  %v1396 = vpack.c.b16 %v1110, %v1110
  %v1397 = vpack.c.b16 %v1111, %v1111
  %v1398 = vpack.c.b16 %v1112, %v1112
  %v1399 = vpack.c.b16 %v1113, %v1113
  %v1400 = vpack.c.b16 %v1114, %v1114
  %v1401 = vpack.c.b16 %v1115, %v1115
  %v1402 = vpack.c.b16 %v1116, %v1116
  %v1403 = vpack.c.b16 %v1117, %v1117
  %v1404 = vpack.c.b16 %v1118, %v1118
  %v1405 = vpack.c.b16 %v1119, %v1119
  %v1406 = vpack.c.b16 %v1120, %v1120
  %v1407 = vpack.c.b16 %v1121, %v1121
  %v1408 = vpack.c.b16 %v1122, %v1122
  %v1409 = vpack.c.b16 %v1123, %v1123
  %v1410 = vpack.c.b16 %v1124, %v1124
  %v1411 = vpack.c.b16 %v1125, %v1125
  %v1412 = vpack.c.b16 %v1126, %v1126
  %v1413 = vpack.c.b16 %v1127, %v1127
  %v1414 = vpack.c.b16 %v1128, %v1128
  %vm1679 = vcmask 588800
  %v1681 = vsel %vm1679, %v302, 0
  %vm1683 = vcmask 1043456
  %v1685 = vsel %vm1683, %v1393, 0
  %v1688 = vsel %vm1683, %v1394, 0
  %v1691 = vsel %vm1683, %v1395, 0
  %v1694 = vsel %vm1683, %v1396, 0
  %v1697 = vsel %vm1683, %v1397, 0
  %v1700 = vsel %vm1683, %v1398, 0
  %v1703 = vsel %vm1683, %v1399, 0
  %v1706 = vsel %vm1683, %v1400, 0
  %v1709 = vsel %vm1683, %v1401, 0
  %v1712 = vsel %vm1683, %v1402, 0
  %v1715 = vsel %vm1683, %v1403, 0
  %v1718 = vsel %vm1683, %v1404, 0
  %v1721 = vsel %vm1683, %v1405, 0
  %v1724 = vsel %vm1683, %v1406, 0
  %v1727 = vsel %vm1683, %v1407, 0
  %v1730 = vsel %vm1683, %v1408, 0
  %v1733 = vsel %vm1683, %v1409, 0
  %v1736 = vsel %vm1683, %v1410, 0
  %v1739 = vsel %vm1683, %v1411, 0
  %v1742 = vsel %vm1683, %v1412, 0
  %v1745 = vsel %vm1683, %v1413, 0
  %v1748 = vsel %vm1683, %v1414, 0
  %1750 = vmatprep.subr.bf16.mxu0 %v1284
  %1751 = vmatpush1.bf16.msra.mxu0 %v1283
  %1752 = vmatprep.subr.bf16.mxu0 %v1262
  %1753 = vmatpush1.bf16.msra.mxu0 %v1261
  %1754 = vmatprep.subr.bf16.mxu0 %v1240
  %1755 = vmatpush1.bf16.msra.mxu0 %v1239
  %1756 = vmatprep.subr.bf16.mxu0 %v1218
  %1757 = vmatpush1.bf16.msra.mxu0 %v1217
  %1758 = vmatprep.subr.bf16.mxu0 %v1196
  %1759 = vmatpush1.bf16.msra.mxu0 %v1195
  %1760 = vmatprep.subr.bf16.mxu0 %v1174
  %1761 = vmatpush1.bf16.msra.mxu0 %v1173
  %1762 = vmatprep.subr.bf16.mxu0 %v1152
  %1763 = vmatpush1.bf16.msra.mxu0 %v1151
  %1764 = vmatprep.subr.bf16.mxu0 %v1130
  %1765 = vmatpush1.bf16.msra.mxu0 %v1129
  %1766 = vmatprep.subr.bf16.mxu0 0
  %1767 = vmatpush2.bf16.msra.mxu0 0
  %1768 = vmatprep.subr.bf16.mxu0 0
  %1769 = vmatpush2.bf16.msra.mxu0 0
  %1770 = vmatprep.subr.bf16.mxu0 0
  %1771 = vmatpush2.bf16.msra.mxu0 0
  %1772 = vmatprep.subr.bf16.mxu0 %v1688
  %1773 = vmatpush2.bf16.msra.mxu0 %v1685
  %1774 = vmatprep.subr.bf16.mxu0 %v1372
  %1775 = vmatpush2.bf16.msra.mxu0 %v1371
  %1776 = vmatprep.subr.bf16.mxu0 %v1350
  %1777 = vmatpush2.bf16.msra.mxu0 %v1349
  %1778 = vmatprep.subr.bf16.mxu0 %v1328
  %1779 = vmatpush2.bf16.msra.mxu0 %v1327
  %1780 = vmatprep.subr.bf16.mxu0 %v1306
  %1781 = vmatpush2.bf16.msra.mxu0 %v1305
  %1782 = vmatprep.mubr.bf16.mxu0 %v1681
  %1783 = vmatmul.mubr.bf16.gmra.mxu0 %v301
  %v1784 = vpop.f32.mrf.mxu0
  %v1785 = vadd.f32 0.0, %v1784
  %v1786 = vpop.f32.mrf.mxu0
  %v1787 = vadd.f32 0.0, %v1786
  %v1788 = vpop.f32.mrf.mxu0
  %v1789 = vadd.f32 0.0, %v1788
  %v1790 = vpop.f32.mrf.mxu0
  %v1791 = vadd.f32 0.0, %v1790
  %1792 = vdwg.mxu0
  %1793 = vmatprep.subr.bf16.mxu0 %v1286
  %1794 = vmatpush1.bf16.msra.mxu0 %v1285
  %1795 = vmatprep.subr.bf16.mxu0 %v1264
  %1796 = vmatpush1.bf16.msra.mxu0 %v1263
  %1797 = vmatprep.subr.bf16.mxu0 %v1242
  %1798 = vmatpush1.bf16.msra.mxu0 %v1241
  %1799 = vmatprep.subr.bf16.mxu0 %v1220
  %1800 = vmatpush1.bf16.msra.mxu0 %v1219
  %1801 = vmatprep.subr.bf16.mxu0 %v1198
  %1802 = vmatpush1.bf16.msra.mxu0 %v1197
  %1803 = vmatprep.subr.bf16.mxu0 %v1176
  %1804 = vmatpush1.bf16.msra.mxu0 %v1175
  %1805 = vmatprep.subr.bf16.mxu0 %v1154
  %1806 = vmatpush1.bf16.msra.mxu0 %v1153
  %1807 = vmatprep.subr.bf16.mxu0 %v1132
  %1808 = vmatpush1.bf16.msra.mxu0 %v1131
  %1809 = vmatprep.subr.bf16.mxu0 0
  %1810 = vmatpush2.bf16.msra.mxu0 0
  %1811 = vmatprep.subr.bf16.mxu0 0
  %1812 = vmatpush2.bf16.msra.mxu0 0
  %1813 = vmatprep.subr.bf16.mxu0 0
  %1814 = vmatpush2.bf16.msra.mxu0 0
  %1815 = vmatprep.subr.bf16.mxu0 %v1694
  %1816 = vmatpush2.bf16.msra.mxu0 %v1691
  %1817 = vmatprep.subr.bf16.mxu0 %v1374
  %1818 = vmatpush2.bf16.msra.mxu0 %v1373
  %1819 = vmatprep.subr.bf16.mxu0 %v1352
  %1820 = vmatpush2.bf16.msra.mxu0 %v1351
  %1821 = vmatprep.subr.bf16.mxu0 %v1330
  %1822 = vmatpush2.bf16.msra.mxu0 %v1329
  %1823 = vmatprep.subr.bf16.mxu0 %v1308
  %1824 = vmatpush2.bf16.msra.mxu0 %v1307
  %1825 = vmatprep.mubr.bf16.mxu0 %v1681
  %1826 = vmatmul.mubr.bf16.gmra.mxu0 %v301
  %v1827 = vpop.f32.mrf.mxu0
  %v1828 = vadd.f32 0.0, %v1827
  %v1829 = vpop.f32.mrf.mxu0
  %v1830 = vadd.f32 0.0, %v1829
  %v1831 = vpop.f32.mrf.mxu0
  %v1832 = vadd.f32 0.0, %v1831
  %v1833 = vpop.f32.mrf.mxu0
  %v1834 = vadd.f32 0.0, %v1833
  %1835 = vdwg.mxu0
  %1836 = vmatprep.subr.bf16.mxu0 %v1288
  %1837 = vmatpush1.bf16.msra.mxu0 %v1287
  %1838 = vmatprep.subr.bf16.mxu0 %v1266
  %1839 = vmatpush1.bf16.msra.mxu0 %v1265
  %1840 = vmatprep.subr.bf16.mxu0 %v1244
  %1841 = vmatpush1.bf16.msra.mxu0 %v1243
  %1842 = vmatprep.subr.bf16.mxu0 %v1222
  %1843 = vmatpush1.bf16.msra.mxu0 %v1221
  %1844 = vmatprep.subr.bf16.mxu0 %v1200
  %1845 = vmatpush1.bf16.msra.mxu0 %v1199
  %1846 = vmatprep.subr.bf16.mxu0 %v1178
  %1847 = vmatpush1.bf16.msra.mxu0 %v1177
  %1848 = vmatprep.subr.bf16.mxu0 %v1156
  %1849 = vmatpush1.bf16.msra.mxu0 %v1155
  %1850 = vmatprep.subr.bf16.mxu0 %v1134
  %1851 = vmatpush1.bf16.msra.mxu0 %v1133
  %1852 = vmatprep.subr.bf16.mxu0 0
  %1853 = vmatpush2.bf16.msra.mxu0 0
  %1854 = vmatprep.subr.bf16.mxu0 0
  %1855 = vmatpush2.bf16.msra.mxu0 0
  %1856 = vmatprep.subr.bf16.mxu0 0
  %1857 = vmatpush2.bf16.msra.mxu0 0
  %1858 = vmatprep.subr.bf16.mxu0 %v1700
  %1859 = vmatpush2.bf16.msra.mxu0 %v1697
  %1860 = vmatprep.subr.bf16.mxu0 %v1376
  %1861 = vmatpush2.bf16.msra.mxu0 %v1375
  %1862 = vmatprep.subr.bf16.mxu0 %v1354
  %1863 = vmatpush2.bf16.msra.mxu0 %v1353
  %1864 = vmatprep.subr.bf16.mxu0 %v1332
  %1865 = vmatpush2.bf16.msra.mxu0 %v1331
  %1866 = vmatprep.subr.bf16.mxu0 %v1310
  %1867 = vmatpush2.bf16.msra.mxu0 %v1309
  %1868 = vmatprep.mubr.bf16.mxu0 %v1681
  %1869 = vmatmul.mubr.bf16.gmra.mxu0 %v301
  %v1870 = vpop.f32.mrf.mxu0
  %v1871 = vadd.f32 0.0, %v1870
  %v1872 = vpop.f32.mrf.mxu0
  %v1873 = vadd.f32 0.0, %v1872
  %v1874 = vpop.f32.mrf.mxu0
  %v1875 = vadd.f32 0.0, %v1874
  %v1876 = vpop.f32.mrf.mxu0
  %v1877 = vadd.f32 0.0, %v1876
  %1878 = vdwg.mxu0
  %1879 = vmatprep.subr.bf16.mxu0 %v1290
  %1880 = vmatpush1.bf16.msra.mxu0 %v1289
  %1881 = vmatprep.subr.bf16.mxu0 %v1268
  %1882 = vmatpush1.bf16.msra.mxu0 %v1267
  %1883 = vmatprep.subr.bf16.mxu0 %v1246
  %1884 = vmatpush1.bf16.msra.mxu0 %v1245
  %1885 = vmatprep.subr.bf16.mxu0 %v1224
  %1886 = vmatpush1.bf16.msra.mxu0 %v1223
  %1887 = vmatprep.subr.bf16.mxu0 %v1202
  %1888 = vmatpush1.bf16.msra.mxu0 %v1201
  %1889 = vmatprep.subr.bf16.mxu0 %v1180
  %1890 = vmatpush1.bf16.msra.mxu0 %v1179
  %1891 = vmatprep.subr.bf16.mxu0 %v1158
  %1892 = vmatpush1.bf16.msra.mxu0 %v1157
  %1893 = vmatprep.subr.bf16.mxu0 %v1136
  %1894 = vmatpush1.bf16.msra.mxu0 %v1135
  %1895 = vmatprep.subr.bf16.mxu0 0
  %1896 = vmatpush2.bf16.msra.mxu0 0
  %1897 = vmatprep.subr.bf16.mxu0 0
  %1898 = vmatpush2.bf16.msra.mxu0 0
  %1899 = vmatprep.subr.bf16.mxu0 0
  %1900 = vmatpush2.bf16.msra.mxu0 0
  %1901 = vmatprep.subr.bf16.mxu0 %v1706
  %1902 = vmatpush2.bf16.msra.mxu0 %v1703
  %1903 = vmatprep.subr.bf16.mxu0 %v1378
  %1904 = vmatpush2.bf16.msra.mxu0 %v1377
  %1905 = vmatprep.subr.bf16.mxu0 %v1356
  %1906 = vmatpush2.bf16.msra.mxu0 %v1355
  %1907 = vmatprep.subr.bf16.mxu0 %v1334
  %1908 = vmatpush2.bf16.msra.mxu0 %v1333
  %1909 = vmatprep.subr.bf16.mxu0 %v1312
  %1910 = vmatpush2.bf16.msra.mxu0 %v1311
  %1911 = vmatprep.mubr.bf16.mxu0 %v1681
  %1912 = vmatmul.mubr.bf16.gmra.mxu0 %v301
  %v1913 = vpop.f32.mrf.mxu0
  %v1914 = vadd.f32 0.0, %v1913
  %v1915 = vpop.f32.mrf.mxu0
  %v1916 = vadd.f32 0.0, %v1915
  %v1917 = vpop.f32.mrf.mxu0
  %v1918 = vadd.f32 0.0, %v1917
  %v1919 = vpop.f32.mrf.mxu0
  %v1920 = vadd.f32 0.0, %v1919
  %1921 = vdwg.mxu0
  %1922 = vmatprep.subr.bf16.mxu0 %v1292
  %1923 = vmatpush1.bf16.msra.mxu0 %v1291
  %1924 = vmatprep.subr.bf16.mxu0 %v1270
  %1925 = vmatpush1.bf16.msra.mxu0 %v1269
  %1926 = vmatprep.subr.bf16.mxu0 %v1248
  %1927 = vmatpush1.bf16.msra.mxu0 %v1247
  %1928 = vmatprep.subr.bf16.mxu0 %v1226
  %1929 = vmatpush1.bf16.msra.mxu0 %v1225
  %1930 = vmatprep.subr.bf16.mxu0 %v1204
  %1931 = vmatpush1.bf16.msra.mxu0 %v1203
  %1932 = vmatprep.subr.bf16.mxu0 %v1182
  %1933 = vmatpush1.bf16.msra.mxu0 %v1181
  %1934 = vmatprep.subr.bf16.mxu0 %v1160
  %1935 = vmatpush1.bf16.msra.mxu0 %v1159
  %1936 = vmatprep.subr.bf16.mxu0 %v1138
  %1937 = vmatpush1.bf16.msra.mxu0 %v1137
  %1938 = vmatprep.subr.bf16.mxu0 0
  %1939 = vmatpush2.bf16.msra.mxu0 0
  %1940 = vmatprep.subr.bf16.mxu0 0
  %1941 = vmatpush2.bf16.msra.mxu0 0
  %1942 = vmatprep.subr.bf16.mxu0 0
  %1943 = vmatpush2.bf16.msra.mxu0 0
  %1944 = vmatprep.subr.bf16.mxu0 %v1712
  %1945 = vmatpush2.bf16.msra.mxu0 %v1709
  %1946 = vmatprep.subr.bf16.mxu0 %v1380
  %1947 = vmatpush2.bf16.msra.mxu0 %v1379
  %1948 = vmatprep.subr.bf16.mxu0 %v1358
  %1949 = vmatpush2.bf16.msra.mxu0 %v1357
  %1950 = vmatprep.subr.bf16.mxu0 %v1336
  %1951 = vmatpush2.bf16.msra.mxu0 %v1335
  %1952 = vmatprep.subr.bf16.mxu0 %v1314
  %1953 = vmatpush2.bf16.msra.mxu0 %v1313
  %1954 = vmatprep.mubr.bf16.mxu0 %v1681
  %1955 = vmatmul.mubr.bf16.gmra.mxu0 %v301
  %v1956 = vpop.f32.mrf.mxu0
  %v1957 = vadd.f32 0.0, %v1956
  %v1958 = vpop.f32.mrf.mxu0
  %v1959 = vadd.f32 0.0, %v1958
  %v1960 = vpop.f32.mrf.mxu0
  %v1961 = vadd.f32 0.0, %v1960
  %v1962 = vpop.f32.mrf.mxu0
  %v1963 = vadd.f32 0.0, %v1962
  %1964 = vdwg.mxu0
  %1965 = vmatprep.subr.bf16.mxu0 %v1294
  %1966 = vmatpush1.bf16.msra.mxu0 %v1293
  %1967 = vmatprep.subr.bf16.mxu0 %v1272
  %1968 = vmatpush1.bf16.msra.mxu0 %v1271
  %1969 = vmatprep.subr.bf16.mxu0 %v1250
  %1970 = vmatpush1.bf16.msra.mxu0 %v1249
  %1971 = vmatprep.subr.bf16.mxu0 %v1228
  %1972 = vmatpush1.bf16.msra.mxu0 %v1227
  %1973 = vmatprep.subr.bf16.mxu0 %v1206
  %1974 = vmatpush1.bf16.msra.mxu0 %v1205
  %1975 = vmatprep.subr.bf16.mxu0 %v1184
  %1976 = vmatpush1.bf16.msra.mxu0 %v1183
  %1977 = vmatprep.subr.bf16.mxu0 %v1162
  %1978 = vmatpush1.bf16.msra.mxu0 %v1161
  %1979 = vmatprep.subr.bf16.mxu0 %v1140
  %1980 = vmatpush1.bf16.msra.mxu0 %v1139
  %1981 = vmatprep.subr.bf16.mxu0 0
  %1982 = vmatpush2.bf16.msra.mxu0 0
  %1983 = vmatprep.subr.bf16.mxu0 0
  %1984 = vmatpush2.bf16.msra.mxu0 0
  %1985 = vmatprep.subr.bf16.mxu0 0
  %1986 = vmatpush2.bf16.msra.mxu0 0
  %1987 = vmatprep.subr.bf16.mxu0 %v1718
  %1988 = vmatpush2.bf16.msra.mxu0 %v1715
  %1989 = vmatprep.subr.bf16.mxu0 %v1382
  %1990 = vmatpush2.bf16.msra.mxu0 %v1381
  %1991 = vmatprep.subr.bf16.mxu0 %v1360
  %1992 = vmatpush2.bf16.msra.mxu0 %v1359
  %1993 = vmatprep.subr.bf16.mxu0 %v1338
  %1994 = vmatpush2.bf16.msra.mxu0 %v1337
  %1995 = vmatprep.subr.bf16.mxu0 %v1316
  %1996 = vmatpush2.bf16.msra.mxu0 %v1315
  %1997 = vmatprep.mubr.bf16.mxu0 %v1681
  %1998 = vmatmul.mubr.bf16.gmra.mxu0 %v301
  %v1999 = vpop.f32.mrf.mxu0
  %v2000 = vadd.f32 0.0, %v1999
  %v2001 = vpop.f32.mrf.mxu0
  %v2002 = vadd.f32 0.0, %v2001
  %v2003 = vpop.f32.mrf.mxu0
  %v2004 = vadd.f32 0.0, %v2003
  %v2005 = vpop.f32.mrf.mxu0
  %v2006 = vadd.f32 0.0, %v2005
  %2007 = vdwg.mxu0
  %2008 = vmatprep.subr.bf16.mxu0 %v1296
  %2009 = vmatpush1.bf16.msra.mxu0 %v1295
  %2010 = vmatprep.subr.bf16.mxu0 %v1274
  %2011 = vmatpush1.bf16.msra.mxu0 %v1273
  %2012 = vmatprep.subr.bf16.mxu0 %v1252
  %2013 = vmatpush1.bf16.msra.mxu0 %v1251
  %2014 = vmatprep.subr.bf16.mxu0 %v1230
  %2015 = vmatpush1.bf16.msra.mxu0 %v1229
  %2016 = vmatprep.subr.bf16.mxu0 %v1208
  %2017 = vmatpush1.bf16.msra.mxu0 %v1207
  %2018 = vmatprep.subr.bf16.mxu0 %v1186
  %2019 = vmatpush1.bf16.msra.mxu0 %v1185
  %2020 = vmatprep.subr.bf16.mxu0 %v1164
  %2021 = vmatpush1.bf16.msra.mxu0 %v1163
  %2022 = vmatprep.subr.bf16.mxu0 %v1142
  %2023 = vmatpush1.bf16.msra.mxu0 %v1141
  %2024 = vmatprep.subr.bf16.mxu0 0
  %2025 = vmatpush2.bf16.msra.mxu0 0
  %2026 = vmatprep.subr.bf16.mxu0 0
  %2027 = vmatpush2.bf16.msra.mxu0 0
  %2028 = vmatprep.subr.bf16.mxu0 0
  %2029 = vmatpush2.bf16.msra.mxu0 0
  %2030 = vmatprep.subr.bf16.mxu0 %v1724
  %2031 = vmatpush2.bf16.msra.mxu0 %v1721
  %2032 = vmatprep.subr.bf16.mxu0 %v1384
  %2033 = vmatpush2.bf16.msra.mxu0 %v1383
  %2034 = vmatprep.subr.bf16.mxu0 %v1362
  %2035 = vmatpush2.bf16.msra.mxu0 %v1361
  %2036 = vmatprep.subr.bf16.mxu0 %v1340
  %2037 = vmatpush2.bf16.msra.mxu0 %v1339
  %2038 = vmatprep.subr.bf16.mxu0 %v1318
  %2039 = vmatpush2.bf16.msra.mxu0 %v1317
  %2040 = vmatprep.mubr.bf16.mxu0 %v1681
  %2041 = vmatmul.mubr.bf16.gmra.mxu0 %v301
  %v2042 = vpop.f32.mrf.mxu0
  %v2043 = vadd.f32 0.0, %v2042
  %v2044 = vpop.f32.mrf.mxu0
  %v2045 = vadd.f32 0.0, %v2044
  %v2046 = vpop.f32.mrf.mxu0
  %v2047 = vadd.f32 0.0, %v2046
  %v2048 = vpop.f32.mrf.mxu0
  %v2049 = vadd.f32 0.0, %v2048
  %2050 = vdwg.mxu0
  %2051 = vmatprep.subr.bf16.mxu0 %v1298
  %2052 = vmatpush1.bf16.msra.mxu0 %v1297
  %2053 = vmatprep.subr.bf16.mxu0 %v1276
  %2054 = vmatpush1.bf16.msra.mxu0 %v1275
  %2055 = vmatprep.subr.bf16.mxu0 %v1254
  %2056 = vmatpush1.bf16.msra.mxu0 %v1253
  %2057 = vmatprep.subr.bf16.mxu0 %v1232
  %2058 = vmatpush1.bf16.msra.mxu0 %v1231
  %2059 = vmatprep.subr.bf16.mxu0 %v1210
  %2060 = vmatpush1.bf16.msra.mxu0 %v1209
  %2061 = vmatprep.subr.bf16.mxu0 %v1188
  %2062 = vmatpush1.bf16.msra.mxu0 %v1187
  %2063 = vmatprep.subr.bf16.mxu0 %v1166
  %2064 = vmatpush1.bf16.msra.mxu0 %v1165
  %2065 = vmatprep.subr.bf16.mxu0 %v1144
  %2066 = vmatpush1.bf16.msra.mxu0 %v1143
  %2067 = vmatprep.subr.bf16.mxu0 0
  %2068 = vmatpush2.bf16.msra.mxu0 0
  %2069 = vmatprep.subr.bf16.mxu0 0
  %2070 = vmatpush2.bf16.msra.mxu0 0
  %2071 = vmatprep.subr.bf16.mxu0 0
  %2072 = vmatpush2.bf16.msra.mxu0 0
  %2073 = vmatprep.subr.bf16.mxu0 %v1730
  %2074 = vmatpush2.bf16.msra.mxu0 %v1727
  %2075 = vmatprep.subr.bf16.mxu0 %v1386
  %2076 = vmatpush2.bf16.msra.mxu0 %v1385
  %2077 = vmatprep.subr.bf16.mxu0 %v1364
  %2078 = vmatpush2.bf16.msra.mxu0 %v1363
  %2079 = vmatprep.subr.bf16.mxu0 %v1342
  %2080 = vmatpush2.bf16.msra.mxu0 %v1341
  %2081 = vmatprep.subr.bf16.mxu0 %v1320
  %2082 = vmatpush2.bf16.msra.mxu0 %v1319
  %2083 = vmatprep.mubr.bf16.mxu0 %v1681
  %2084 = vmatmul.mubr.bf16.gmra.mxu0 %v301
  %v2085 = vpop.f32.mrf.mxu0
  %v2086 = vadd.f32 0.0, %v2085
  %v2087 = vpop.f32.mrf.mxu0
  %v2088 = vadd.f32 0.0, %v2087
  %v2089 = vpop.f32.mrf.mxu0
  %v2090 = vadd.f32 0.0, %v2089
  %v2091 = vpop.f32.mrf.mxu0
  %v2092 = vadd.f32 0.0, %v2091
  %2093 = vdwg.mxu0
  %2094 = vmatprep.subr.bf16.mxu0 %v1300
  %2095 = vmatpush1.bf16.msra.mxu0 %v1299
  %2096 = vmatprep.subr.bf16.mxu0 %v1278
  %2097 = vmatpush1.bf16.msra.mxu0 %v1277
  %2098 = vmatprep.subr.bf16.mxu0 %v1256
  %2099 = vmatpush1.bf16.msra.mxu0 %v1255
  %2100 = vmatprep.subr.bf16.mxu0 %v1234
  %2101 = vmatpush1.bf16.msra.mxu0 %v1233
  %2102 = vmatprep.subr.bf16.mxu0 %v1212
  %2103 = vmatpush1.bf16.msra.mxu0 %v1211
  %2104 = vmatprep.subr.bf16.mxu0 %v1190
  %2105 = vmatpush1.bf16.msra.mxu0 %v1189
  %2106 = vmatprep.subr.bf16.mxu0 %v1168
  %2107 = vmatpush1.bf16.msra.mxu0 %v1167
  %2108 = vmatprep.subr.bf16.mxu0 %v1146
  %2109 = vmatpush1.bf16.msra.mxu0 %v1145
  %2110 = vmatprep.subr.bf16.mxu0 0
  %2111 = vmatpush2.bf16.msra.mxu0 0
  %2112 = vmatprep.subr.bf16.mxu0 0
  %2113 = vmatpush2.bf16.msra.mxu0 0
  %2114 = vmatprep.subr.bf16.mxu0 0
  %2115 = vmatpush2.bf16.msra.mxu0 0
  %2116 = vmatprep.subr.bf16.mxu0 %v1736
  %2117 = vmatpush2.bf16.msra.mxu0 %v1733
  %2118 = vmatprep.subr.bf16.mxu0 %v1388
  %2119 = vmatpush2.bf16.msra.mxu0 %v1387
  %2120 = vmatprep.subr.bf16.mxu0 %v1366
  %2121 = vmatpush2.bf16.msra.mxu0 %v1365
  %2122 = vmatprep.subr.bf16.mxu0 %v1344
  %2123 = vmatpush2.bf16.msra.mxu0 %v1343
  %2124 = vmatprep.subr.bf16.mxu0 %v1322
  %2125 = vmatpush2.bf16.msra.mxu0 %v1321
  %2126 = vmatprep.mubr.bf16.mxu0 %v1681
  %2127 = vmatmul.mubr.bf16.gmra.mxu0 %v301
  %v2128 = vpop.f32.mrf.mxu0
  %v2129 = vadd.f32 0.0, %v2128
  %v2130 = vpop.f32.mrf.mxu0
  %v2131 = vadd.f32 0.0, %v2130
  %v2132 = vpop.f32.mrf.mxu0
  %v2133 = vadd.f32 0.0, %v2132
  %v2134 = vpop.f32.mrf.mxu0
  %v2135 = vadd.f32 0.0, %v2134
  %2136 = vdwg.mxu0
  %2137 = vmatprep.subr.bf16.mxu0 %v1302
  %2138 = vmatpush1.bf16.msra.mxu0 %v1301
  %2139 = vmatprep.subr.bf16.mxu0 %v1280
  %2140 = vmatpush1.bf16.msra.mxu0 %v1279
  %2141 = vmatprep.subr.bf16.mxu0 %v1258
  %2142 = vmatpush1.bf16.msra.mxu0 %v1257
  %2143 = vmatprep.subr.bf16.mxu0 %v1236
  %2144 = vmatpush1.bf16.msra.mxu0 %v1235
  %2145 = vmatprep.subr.bf16.mxu0 %v1214
  %2146 = vmatpush1.bf16.msra.mxu0 %v1213
  %2147 = vmatprep.subr.bf16.mxu0 %v1192
  %2148 = vmatpush1.bf16.msra.mxu0 %v1191
  %2149 = vmatprep.subr.bf16.mxu0 %v1170
  %2150 = vmatpush1.bf16.msra.mxu0 %v1169
  %2151 = vmatprep.subr.bf16.mxu0 %v1148
  %2152 = vmatpush1.bf16.msra.mxu0 %v1147
  %2153 = vmatprep.subr.bf16.mxu0 0
  %2154 = vmatpush2.bf16.msra.mxu0 0
  %2155 = vmatprep.subr.bf16.mxu0 0
  %2156 = vmatpush2.bf16.msra.mxu0 0
  %2157 = vmatprep.subr.bf16.mxu0 0
  %2158 = vmatpush2.bf16.msra.mxu0 0
  %2159 = vmatprep.subr.bf16.mxu0 %v1742
  %2160 = vmatpush2.bf16.msra.mxu0 %v1739
  %2161 = vmatprep.subr.bf16.mxu0 %v1390
  %2162 = vmatpush2.bf16.msra.mxu0 %v1389
  %2163 = vmatprep.subr.bf16.mxu0 %v1368
  %2164 = vmatpush2.bf16.msra.mxu0 %v1367
  %2165 = vmatprep.subr.bf16.mxu0 %v1346
  %2166 = vmatpush2.bf16.msra.mxu0 %v1345
  %2167 = vmatprep.subr.bf16.mxu0 %v1324
  %2168 = vmatpush2.bf16.msra.mxu0 %v1323
  %2169 = vmatprep.mubr.bf16.mxu0 %v1681
  %2170 = vmatmul.mubr.bf16.gmra.mxu0 %v301
  %v2171 = vpop.f32.mrf.mxu0
  %v2172 = vadd.f32 0.0, %v2171
  %v2173 = vpop.f32.mrf.mxu0
  %v2174 = vadd.f32 0.0, %v2173
  %v2175 = vpop.f32.mrf.mxu0
  %v2176 = vadd.f32 0.0, %v2175
  %v2177 = vpop.f32.mrf.mxu0
  %v2178 = vadd.f32 0.0, %v2177
  %2179 = vdwg.mxu0
  %2180 = vmatprep.subr.bf16.mxu0 %v1304
  %2181 = vmatpush1.bf16.msra.mxu0 %v1303
  %2182 = vmatprep.subr.bf16.mxu0 %v1282
  %2183 = vmatpush1.bf16.msra.mxu0 %v1281
  %2184 = vmatprep.subr.bf16.mxu0 %v1260
  %2185 = vmatpush1.bf16.msra.mxu0 %v1259
  %2186 = vmatprep.subr.bf16.mxu0 %v1238
  %2187 = vmatpush1.bf16.msra.mxu0 %v1237
  %2188 = vmatprep.subr.bf16.mxu0 %v1216
  %2189 = vmatpush1.bf16.msra.mxu0 %v1215
  %2190 = vmatprep.subr.bf16.mxu0 %v1194
  %2191 = vmatpush1.bf16.msra.mxu0 %v1193
  %2192 = vmatprep.subr.bf16.mxu0 %v1172
  %2193 = vmatpush1.bf16.msra.mxu0 %v1171
  %2194 = vmatprep.subr.bf16.mxu0 %v1150
  %2195 = vmatpush1.bf16.msra.mxu0 %v1149
  %2196 = vmatprep.subr.bf16.mxu0 0
  %2197 = vmatpush2.bf16.msra.mxu0 0
  %2198 = vmatprep.subr.bf16.mxu0 0
  %2199 = vmatpush2.bf16.msra.mxu0 0
  %2200 = vmatprep.subr.bf16.mxu0 0
  %2201 = vmatpush2.bf16.msra.mxu0 0
  %2202 = vmatprep.subr.bf16.mxu0 %v1748
  %2203 = vmatpush2.bf16.msra.mxu0 %v1745
  %2204 = vmatprep.subr.bf16.mxu0 %v1392
  %2205 = vmatpush2.bf16.msra.mxu0 %v1391
  %2206 = vmatprep.subr.bf16.mxu0 %v1370
  %2207 = vmatpush2.bf16.msra.mxu0 %v1369
  %2208 = vmatprep.subr.bf16.mxu0 %v1348
  %2209 = vmatpush2.bf16.msra.mxu0 %v1347
  %2210 = vmatprep.subr.bf16.mxu0 %v1326
  %2211 = vmatpush2.bf16.msra.mxu0 %v1325
  %2212 = vmatprep.mubr.bf16.mxu0 %v1681
  %2213 = vmatmul.mubr.bf16.gmra.mxu0 %v301
  %v2214 = vpop.f32.mrf.mxu0
  %v2215 = vadd.f32 0.0, %v2214
  %v2216 = vpop.f32.mrf.mxu0
  %v2217 = vadd.f32 0.0, %v2216
  %v2218 = vpop.f32.mrf.mxu0
  %v2219 = vadd.f32 0.0, %v2218
  %v2220 = vpop.f32.mrf.mxu0
  %v2221 = vadd.f32 0.0, %v2220
  %2222 = vdwg.mxu0
  %v2223 = vld [vmem:[%s2] sm:$0xff]
  %v2224 = vld [vmem:[%s2 + $0x8] sm:$0xff]
  %v2225 = vld [vmem:[%s3] sm:$0xff]
  %v2226 = vld [vmem:[%s3 + $0x8] sm:$0xff]
  %v2227 = vadd.f32 %v1785, %v1787
  %v2228 = vadd.f32 %v2227, %v1828
  %v2229 = vadd.f32 %v2228, %v1830
  %v2230 = vadd.f32 %v2229, %v1871
  %v2231 = vadd.f32 %v2230, %v1873
  %v2232 = vadd.f32 %v2231, %v1914
  %v2233 = vadd.f32 %v2232, %v1916
  %v2234 = vadd.f32 %v2233, %v1957
  %v2235 = vadd.f32 %v2234, %v1959
  %v2236 = vadd.f32 %v2235, %v2000
  %v2237 = vadd.f32 %v2236, %v2002
  %v2238 = vadd.f32 %v2237, %v2043
  %v2239 = vadd.f32 %v2238, %v2045
  %v2240 = vadd.f32 %v2239, %v2086
  %v2241 = vadd.f32 %v2240, %v2088
  %v2242 = vadd.f32 %v2241, %v2129
  %v2243 = vadd.f32 %v2242, %v2131
  %v2244 = vadd.f32 %v2243, %v2172
  %v2245 = vadd.f32 %v2244, %v2174
  %v2246 = vadd.f32 %v2245, %v2215
  %vm2247 = vcmask 130048
  %v2248 = vsel %vm2247, %v2217, 0.0
  %v2249 = vadd.f32 %v2246, %v2248
  %2250 = vadd.xlane.f32.xlu0 %v2249
  %v2251 = vpop.xlane.xlu0 %2250
  %v2252 = vadd.f32 %v1789, %v1791
  %v2253 = vadd.f32 %v2252, %v1832
  %v2254 = vadd.f32 %v2253, %v1834
  %v2255 = vadd.f32 %v2254, %v1875
  %v2256 = vadd.f32 %v2255, %v1877
  %v2257 = vadd.f32 %v2256, %v1918
  %v2258 = vadd.f32 %v2257, %v1920
  %v2259 = vadd.f32 %v2258, %v1961
  %v2260 = vadd.f32 %v2259, %v1963
  %v2261 = vadd.f32 %v2260, %v2004
  %v2262 = vadd.f32 %v2261, %v2006
  %v2263 = vadd.f32 %v2262, %v2047
  %v2264 = vadd.f32 %v2263, %v2049
  %v2265 = vadd.f32 %v2264, %v2090
  %v2266 = vadd.f32 %v2265, %v2092
  %v2267 = vadd.f32 %v2266, %v2133
  %v2268 = vadd.f32 %v2267, %v2135
  %v2269 = vadd.f32 %v2268, %v2176
  %v2270 = vadd.f32 %v2269, %v2178
  %v2271 = vadd.f32 %v2270, %v2219
  %v2272 = vsel %vm2247, %v2221, 0.0
  %v2273 = vadd.f32 %v2271, %v2272
  %2274 = vadd.xlane.f32.xlu0 %v2273
  %v2275 = vpop.xlane.xlu0 %2274
  %v2276 = vmul.f32 %v1785, %v1785
  %v2277 = vmul.f32 %v1787, %v1787
  %v2278 = vmul.f32 %v1828, %v1828
  %v2279 = vmul.f32 %v1830, %v1830
  %v2280 = vmul.f32 %v1871, %v1871
  %v2281 = vmul.f32 %v1873, %v1873
  %v2282 = vmul.f32 %v1914, %v1914
  %v2283 = vmul.f32 %v1916, %v1916
  %v2284 = vmul.f32 %v1957, %v1957
  %v2285 = vmul.f32 %v1959, %v1959
  %v2286 = vmul.f32 %v2000, %v2000
  %v2287 = vmul.f32 %v2002, %v2002
  %v2288 = vmul.f32 %v2043, %v2043
  %v2289 = vmul.f32 %v2045, %v2045
  %v2290 = vmul.f32 %v2086, %v2086
  %v2291 = vmul.f32 %v2088, %v2088
  %v2292 = vmul.f32 %v2129, %v2129
  %v2293 = vmul.f32 %v2131, %v2131
  %v2294 = vmul.f32 %v2172, %v2172
  %v2295 = vmul.f32 %v2174, %v2174
  %v2296 = vmul.f32 %v2215, %v2215
  %v2297 = vmul.f32 %v2217, %v2217
  %v2298 = vmul.f32 %v1789, %v1789
  %v2299 = vmul.f32 %v1791, %v1791
  %v2300 = vmul.f32 %v1832, %v1832
  %v2301 = vmul.f32 %v1834, %v1834
  %v2302 = vmul.f32 %v1875, %v1875
  %v2303 = vmul.f32 %v1877, %v1877
  %v2304 = vmul.f32 %v1918, %v1918
  %v2305 = vmul.f32 %v1920, %v1920
  %v2306 = vmul.f32 %v1961, %v1961
  %v2307 = vmul.f32 %v1963, %v1963
  %v2308 = vmul.f32 %v2004, %v2004
  %v2309 = vmul.f32 %v2006, %v2006
  %v2310 = vmul.f32 %v2047, %v2047
  %v2311 = vmul.f32 %v2049, %v2049
  %v2312 = vmul.f32 %v2090, %v2090
  %v2313 = vmul.f32 %v2092, %v2092
  %v2314 = vmul.f32 %v2133, %v2133
  %v2315 = vmul.f32 %v2135, %v2135
  %v2316 = vmul.f32 %v2176, %v2176
  %v2317 = vmul.f32 %v2178, %v2178
  %v2318 = vmul.f32 %v2219, %v2219
  %v2319 = vmul.f32 %v2221, %v2221
  %v2320 = vadd.f32 %v2276, %v2277
  %v2321 = vadd.f32 %v2320, %v2278
  %v2322 = vadd.f32 %v2321, %v2279
  %v2323 = vadd.f32 %v2322, %v2280
  %v2324 = vadd.f32 %v2323, %v2281
  %v2325 = vadd.f32 %v2324, %v2282
  %v2326 = vadd.f32 %v2325, %v2283
  %v2327 = vadd.f32 %v2326, %v2284
  %v2328 = vadd.f32 %v2327, %v2285
  %v2329 = vadd.f32 %v2328, %v2286
  %v2330 = vadd.f32 %v2329, %v2287
  %v2331 = vadd.f32 %v2330, %v2288
  %v2332 = vadd.f32 %v2331, %v2289
  %v2333 = vadd.f32 %v2332, %v2290
  %v2334 = vadd.f32 %v2333, %v2291
  %v2335 = vadd.f32 %v2334, %v2292
  %v2336 = vadd.f32 %v2335, %v2293
  %v2337 = vadd.f32 %v2336, %v2294
  %v2338 = vadd.f32 %v2337, %v2295
  %v2339 = vadd.f32 %v2338, %v2296
  %v2340 = vsel %vm2247, %v2297, 0.0
  %v2341 = vadd.f32 %v2339, %v2340
  %2342 = vadd.xlane.f32.xlu0 %v2341
  %v2343 = vpop.xlane.xlu0 %2342
  %v2344 = vadd.f32 %v2298, %v2299
  %v2345 = vadd.f32 %v2344, %v2300
  %v2346 = vadd.f32 %v2345, %v2301
  %v2347 = vadd.f32 %v2346, %v2302
  %v2348 = vadd.f32 %v2347, %v2303
  %v2349 = vadd.f32 %v2348, %v2304
  %v2350 = vadd.f32 %v2349, %v2305
  %v2351 = vadd.f32 %v2350, %v2306
  %v2352 = vadd.f32 %v2351, %v2307
  %v2353 = vadd.f32 %v2352, %v2308
  %v2354 = vadd.f32 %v2353, %v2309
  %v2355 = vadd.f32 %v2354, %v2310
  %v2356 = vadd.f32 %v2355, %v2311
  %v2357 = vadd.f32 %v2356, %v2312
  %v2358 = vadd.f32 %v2357, %v2313
  %v2359 = vadd.f32 %v2358, %v2314
  %v2360 = vadd.f32 %v2359, %v2315
  %v2361 = vadd.f32 %v2360, %v2316
  %v2362 = vadd.f32 %v2361, %v2317
  %v2363 = vadd.f32 %v2362, %v2318
  %v2364 = vsel %vm2247, %v2319, 0.0
  %v2365 = vadd.f32 %v2363, %v2364
  %2366 = vadd.xlane.f32.xlu0 %v2365
  %v2367 = vpop.xlane.xlu0 %2366
  %v2368 = vmul.f32 %v2251, 0.0003698225
  %v2369 = vmul.f32 %v2275, 0.0003698225
  %v2370 = vmul.f32 %v2343, 0.0003698225
  %v2371 = vmul.f32 %v2367, 0.0003698225
  %v2372 = vmul.f32 %v2368, %v2368
  %v2373 = vmul.f32 %v2369, %v2369
  %v2374 = vsub.f32 %v2370, %v2372
  %v2375 = vsub.f32 %v2371, %v2373
  %v2376 = vmax.f32 %v2374, 0.0
  %v2377 = vmax.f32 %v2375, 0.0
  %v2378 = vadd.f32 %v2376, 1e-05
  %v2379 = vadd.f32 %v2377, 1e-05
  %v2380 = vrsqrt.pop %v2378
  %v2381 = vrsqrt.pop %v2379
  %v2382 = vmul.f32 %v2223, %v2380
  %v2383 = vmul.f32 %v2224, %v2381
  %v2384 = vmul.f32 %v2368, %v2382
  %v2385 = vmul.f32 %v2369, %v2383
  %v2386 = vsub.f32 %v2225, %v2384
  %v2387 = vsub.f32 %v2226, %v2385
  %2389 = vset.pattern.permute.xlu0 0
  %2390 = vperm.xlu0 %2389, %v2382
  %v2391 = vpop.permute.xlu0 %2390
  %2394 = vset.pattern.permute.xlu0 0
  %2395 = vperm.xlu0 %2394, %v2383
  %v2396 = vpop.permute.xlu0 %2395
  %v2398 = vmul.f32 %v1785, %v2391
  %v2399 = vmul.f32 %v1787, %v2391
  %v2400 = vmul.f32 %v1828, %v2391
  %v2401 = vmul.f32 %v1830, %v2391
  %v2402 = vmul.f32 %v1871, %v2391
  %v2403 = vmul.f32 %v1873, %v2391
  %v2404 = vmul.f32 %v1914, %v2391
  %v2405 = vmul.f32 %v1916, %v2391
  %v2406 = vmul.f32 %v1957, %v2391
  %v2407 = vmul.f32 %v1959, %v2391
  %v2408 = vmul.f32 %v2000, %v2391
  %v2409 = vmul.f32 %v2002, %v2391
  %v2410 = vmul.f32 %v2043, %v2391
  %v2411 = vmul.f32 %v2045, %v2391
  %v2412 = vmul.f32 %v2086, %v2391
  %v2413 = vmul.f32 %v2088, %v2391
  %v2414 = vmul.f32 %v2129, %v2391
  %v2415 = vmul.f32 %v2131, %v2391
  %v2416 = vmul.f32 %v2172, %v2391
  %v2417 = vmul.f32 %v2174, %v2391
  %v2418 = vmul.f32 %v2215, %v2391
  %v2419 = vmul.f32 %v2217, %v2391
  %v2420 = vmul.f32 %v1789, %v2396
  %v2421 = vmul.f32 %v1791, %v2396
  %v2422 = vmul.f32 %v1832, %v2396
  %v2423 = vmul.f32 %v1834, %v2396
  %v2424 = vmul.f32 %v1875, %v2396
  %v2425 = vmul.f32 %v1877, %v2396
  %v2426 = vmul.f32 %v1918, %v2396
  %v2427 = vmul.f32 %v1920, %v2396
  %v2428 = vmul.f32 %v1961, %v2396
  %v2429 = vmul.f32 %v1963, %v2396
  %v2430 = vmul.f32 %v2004, %v2396
  %v2431 = vmul.f32 %v2006, %v2396
  %v2432 = vmul.f32 %v2047, %v2396
  %v2433 = vmul.f32 %v2049, %v2396
  %v2434 = vmul.f32 %v2090, %v2396
  %v2435 = vmul.f32 %v2092, %v2396
  %v2436 = vmul.f32 %v2133, %v2396
  %v2437 = vmul.f32 %v2135, %v2396
  %v2438 = vmul.f32 %v2176, %v2396
  %v2439 = vmul.f32 %v2178, %v2396
  %v2440 = vmul.f32 %v2219, %v2396
  %v2441 = vmul.f32 %v2221, %v2396
  %2443 = vset.pattern.permute.xlu0 0
  %2444 = vperm.xlu0 %2443, %v2386
  %v2445 = vpop.permute.xlu0 %2444
  %2448 = vset.pattern.permute.xlu0 0
  %2449 = vperm.xlu0 %2448, %v2387
  %v2450 = vpop.permute.xlu0 %2449
  %v2452 = vadd.f32 %v2398, %v2445
  %v2453 = vadd.f32 %v2399, %v2445
  %v2454 = vadd.f32 %v2400, %v2445
  %v2455 = vadd.f32 %v2401, %v2445
  %v2456 = vadd.f32 %v2402, %v2445
  %v2457 = vadd.f32 %v2403, %v2445
  %v2458 = vadd.f32 %v2404, %v2445
  %v2459 = vadd.f32 %v2405, %v2445
  %v2460 = vadd.f32 %v2406, %v2445
  %v2461 = vadd.f32 %v2407, %v2445
  %v2462 = vadd.f32 %v2408, %v2445
  %v2463 = vadd.f32 %v2409, %v2445
  %v2464 = vadd.f32 %v2410, %v2445
  %v2465 = vadd.f32 %v2411, %v2445
  %v2466 = vadd.f32 %v2412, %v2445
  %v2467 = vadd.f32 %v2413, %v2445
  %v2468 = vadd.f32 %v2414, %v2445
  %v2469 = vadd.f32 %v2415, %v2445
  %v2470 = vadd.f32 %v2416, %v2445
  %v2471 = vadd.f32 %v2417, %v2445
  %v2472 = vadd.f32 %v2418, %v2445
  %v2473 = vadd.f32 %v2419, %v2445
  %v2474 = vadd.f32 %v2420, %v2450
  %v2475 = vadd.f32 %v2421, %v2450
  %v2476 = vadd.f32 %v2422, %v2450
  %v2477 = vadd.f32 %v2423, %v2450
  %v2478 = vadd.f32 %v2424, %v2450
  %v2479 = vadd.f32 %v2425, %v2450
  %v2480 = vadd.f32 %v2426, %v2450
  %v2481 = vadd.f32 %v2427, %v2450
  %v2482 = vadd.f32 %v2428, %v2450
  %v2483 = vadd.f32 %v2429, %v2450
  %v2484 = vadd.f32 %v2430, %v2450
  %v2485 = vadd.f32 %v2431, %v2450
  %v2486 = vadd.f32 %v2432, %v2450
  %v2487 = vadd.f32 %v2433, %v2450
  %v2488 = vadd.f32 %v2434, %v2450
  %v2489 = vadd.f32 %v2435, %v2450
  %v2490 = vadd.f32 %v2436, %v2450
  %v2491 = vadd.f32 %v2437, %v2450
  %v2492 = vadd.f32 %v2438, %v2450
  %v2493 = vadd.f32 %v2439, %v2450
  %v2494 = vadd.f32 %v2440, %v2450
  %v2495 = vadd.f32 %v2441, %v2450
  %v2496 = vmax.f32 %v2452, 0.0
  %v2497 = vmax.f32 %v2453, 0.0
  %v2498 = vmax.f32 %v2454, 0.0
  %v2499 = vmax.f32 %v2455, 0.0
  %v2500 = vmax.f32 %v2456, 0.0
  %v2501 = vmax.f32 %v2457, 0.0
  %v2502 = vmax.f32 %v2458, 0.0
  %v2503 = vmax.f32 %v2459, 0.0
  %v2504 = vmax.f32 %v2460, 0.0
  %v2505 = vmax.f32 %v2461, 0.0
  %v2506 = vmax.f32 %v2462, 0.0
  %v2507 = vmax.f32 %v2463, 0.0
  %v2508 = vmax.f32 %v2464, 0.0
  %v2509 = vmax.f32 %v2465, 0.0
  %v2510 = vmax.f32 %v2466, 0.0
  %v2511 = vmax.f32 %v2467, 0.0
  %v2512 = vmax.f32 %v2468, 0.0
  %v2513 = vmax.f32 %v2469, 0.0
  %v2514 = vmax.f32 %v2470, 0.0
  %v2515 = vmax.f32 %v2471, 0.0
  %v2516 = vmax.f32 %v2472, 0.0
  %v2517 = vmax.f32 %v2473, 0.0
  %v2518 = vmax.f32 %v2474, 0.0
  %v2519 = vmax.f32 %v2475, 0.0
  %v2520 = vmax.f32 %v2476, 0.0
  %v2521 = vmax.f32 %v2477, 0.0
  %v2522 = vmax.f32 %v2478, 0.0
  %v2523 = vmax.f32 %v2479, 0.0
  %v2524 = vmax.f32 %v2480, 0.0
  %v2525 = vmax.f32 %v2481, 0.0
  %v2526 = vmax.f32 %v2482, 0.0
  %v2527 = vmax.f32 %v2483, 0.0
  %v2528 = vmax.f32 %v2484, 0.0
  %v2529 = vmax.f32 %v2485, 0.0
  %v2530 = vmax.f32 %v2486, 0.0
  %v2531 = vmax.f32 %v2487, 0.0
  %v2532 = vmax.f32 %v2488, 0.0
  %v2533 = vmax.f32 %v2489, 0.0
  %v2534 = vmax.f32 %v2490, 0.0
  %v2535 = vmax.f32 %v2491, 0.0
  %v2536 = vmax.f32 %v2492, 0.0
  %v2537 = vmax.f32 %v2493, 0.0
  %v2538 = vmax.f32 %v2494, 0.0
  %v2539 = vmax.f32 %v2495, 0.0
  %v2540 = vpack.c.bf16 %v2518, %v2496
  %v2541 = vpack.c.bf16 %v2519, %v2497
  %v2542 = vpack.c.bf16 %v2520, %v2498
  %v2543 = vpack.c.bf16 %v2521, %v2499
  %v2544 = vpack.c.bf16 %v2522, %v2500
  %v2545 = vpack.c.bf16 %v2523, %v2501
  %v2546 = vpack.c.bf16 %v2524, %v2502
  %v2547 = vpack.c.bf16 %v2525, %v2503
  %v2548 = vpack.c.bf16 %v2526, %v2504
  %v2549 = vpack.c.bf16 %v2527, %v2505
  %v2550 = vpack.c.bf16 %v2528, %v2506
  %v2551 = vpack.c.bf16 %v2529, %v2507
  %v2552 = vpack.c.bf16 %v2530, %v2508
  %v2553 = vpack.c.bf16 %v2531, %v2509
  %v2554 = vpack.c.bf16 %v2532, %v2510
  %v2555 = vpack.c.bf16 %v2533, %v2511
  %v2556 = vpack.c.bf16 %v2534, %v2512
  %v2557 = vpack.c.bf16 %v2535, %v2513
  %v2558 = vpack.c.bf16 %v2536, %v2514
  %v2559 = vpack.c.bf16 %v2537, %v2515
  %v2560 = vpack.c.bf16 %v2538, %v2516
  %v2561 = vpack.c.bf16 %v2539, %v2517
  %v2584 = vunpack.c.l.b16 %v2540
  %v2585 = vunpack.c.l.b16 %v2541
  %v2586 = vunpack.c.l.b16 %v2542
  %v2587 = vunpack.c.l.b16 %v2543
  %v2588 = vunpack.c.l.b16 %v2544
  %v2589 = vunpack.c.l.b16 %v2545
  %v2590 = vunpack.c.l.b16 %v2546
  %v2591 = vunpack.c.l.b16 %v2547
  %v2592 = vunpack.c.l.b16 %v2548
  %v2593 = vunpack.c.l.b16 %v2549
  %v2594 = vunpack.c.l.b16 %v2550
  %v2595 = vunpack.c.l.b16 %v2551
  %v2596 = vunpack.c.l.b16 %v2552
  %v2597 = vunpack.c.l.b16 %v2553
  %v2598 = vunpack.c.l.b16 %v2554
  %v2599 = vunpack.c.l.b16 %v2555
  %v2600 = vunpack.c.l.b16 %v2556
  %v2601 = vunpack.c.l.b16 %v2557
  %v2602 = vunpack.c.l.b16 %v2558
  %v2603 = vunpack.c.l.b16 %v2559
  %v2604 = vunpack.c.l.b16 %v2560
  %v2605 = vunpack.c.l.b16 %v2561
  %v2606 = vunpack.c.h.b16 %v2540
  %v2607 = vunpack.c.h.b16 %v2541
  %v2608 = vunpack.c.h.b16 %v2542
  %v2609 = vunpack.c.h.b16 %v2543
  %v2610 = vunpack.c.h.b16 %v2544
  %v2611 = vunpack.c.h.b16 %v2545
  %v2612 = vunpack.c.h.b16 %v2546
  %v2613 = vunpack.c.h.b16 %v2547
  %v2614 = vunpack.c.h.b16 %v2548
  %v2615 = vunpack.c.h.b16 %v2549
  %v2616 = vunpack.c.h.b16 %v2550
  %v2617 = vunpack.c.h.b16 %v2551
  %v2618 = vunpack.c.h.b16 %v2552
  %v2619 = vunpack.c.h.b16 %v2553
  %v2620 = vunpack.c.h.b16 %v2554
  %v2621 = vunpack.c.h.b16 %v2555
  %v2622 = vunpack.c.h.b16 %v2556
  %v2623 = vunpack.c.h.b16 %v2557
  %v2624 = vunpack.c.h.b16 %v2558
  %v2625 = vunpack.c.h.b16 %v2559
  %v2626 = vunpack.c.h.b16 %v2560
  %v2627 = vunpack.c.h.b16 %v2561
  %v2628 = vpack.c.b16 %v2585, %v2584
  %v2629 = vpack.c.b16 %v2587, %v2586
  %v2630 = vpack.c.b16 %v2589, %v2588
  %v2631 = vpack.c.b16 %v2591, %v2590
  %v2632 = vpack.c.b16 %v2593, %v2592
  %v2633 = vpack.c.b16 %v2595, %v2594
  %v2634 = vpack.c.b16 %v2597, %v2596
  %v2635 = vpack.c.b16 %v2599, %v2598
  %v2636 = vpack.c.b16 %v2601, %v2600
  %v2637 = vpack.c.b16 %v2603, %v2602
  %v2638 = vpack.c.b16 %v2605, %v2604
  %v2639 = vpack.c.b16 %v2607, %v2606
  %v2640 = vpack.c.b16 %v2609, %v2608
  %v2641 = vpack.c.b16 %v2611, %v2610
  %v2642 = vpack.c.b16 %v2613, %v2612
  %v2643 = vpack.c.b16 %v2615, %v2614
  %v2644 = vpack.c.b16 %v2617, %v2616
  %v2645 = vpack.c.b16 %v2619, %v2618
  %v2646 = vpack.c.b16 %v2621, %v2620
  %v2647 = vpack.c.b16 %v2623, %v2622
  %v2648 = vpack.c.b16 %v2625, %v2624
  %v2649 = vpack.c.b16 %v2627, %v2626
  %2672 = vst [vmem:[%s4] sm:$0xff] %v2628
  %2673 = vst [vmem:[%s4 + $0x8] sm:$0xff] %v2629
  %2674 = vst [vmem:[%s4 + $0x10] sm:$0xff] %v2630
  %2675 = vst [vmem:[%s4 + $0x18] sm:$0xff] %v2631
  %2676 = vst [vmem:[%s4 + $0x20] sm:$0xff] %v2632
  %2677 = vst [vmem:[%s4 + $0x28] sm:$0xff] %v2633
  %2678 = vst [vmem:[%s4 + $0x30] sm:$0xff] %v2634
  %2679 = vst [vmem:[%s4 + $0x38] sm:$0xff] %v2635
  %2680 = vst [vmem:[%s4 + $0x40] sm:$0xff] %v2636
  %2681 = vst [vmem:[%s4 + $0x48] sm:$0xff] %v2637
  %vm2682 = vcmask 130052
  %vm2683 = vmor %vm2682, %vm1683
  %2684 = vst.msk [vmem:[%s4 + $0x50] sm:$0xff] %vm2683, %v2638
  %2685 = vst [vmem:[%s4 + $0x58] sm:$0xff] %v2639
  %2686 = vst [vmem:[%s4 + $0x60] sm:$0xff] %v2640
  %2687 = vst [vmem:[%s4 + $0x68] sm:$0xff] %v2641
  %2688 = vst [vmem:[%s4 + $0x70] sm:$0xff] %v2642
  %2689 = vst [vmem:[%s4 + $0x78] sm:$0xff] %v2643
  %2690 = vst [vmem:[%s4 + $0x80] sm:$0xff] %v2644
  %2691 = vst [vmem:[%s4 + $0x88] sm:$0xff] %v2645
  %2692 = vst [vmem:[%s4 + $0x90] sm:$0xff] %v2646
  %2693 = vst [vmem:[%s4 + $0x98] sm:$0xff] %v2647
  %2694 = vst [vmem:[%s4 + $0xa0] sm:$0xff] %v2648
  %2695 = vst.msk [vmem:[%s4 + $0xa8] sm:$0xff] %vm2683, %v2649
  // Predicated region
  $region18: #{forward.4} parent=0 // pred_check
    _
  $region19: #{forward.4} parent=0 // pred_check_branch
    %2697 = sbr.rel (0) target = $region21
  $region20: #{forward.4} parent=0 // pred_region
    _
  $region21: #{forward.4} parent=0 // pred_fallthru
    _
  // Predicated region
  $region22: #{forward.4} parent=0 // pred_check
    _
  $region23: #{forward.4} parent=0 // pred_check_branch
    %2699 = sbr.rel (0) target = $region25
  $region24: #{forward.4} parent=0 // pred_region
    _
  $region25: #{forward.4} parent=0 // pred_fallthru
    _

// kernel: squeeze.2
$region0: #{squeeze.2}
  %s0 = inlined_call_operand.vmem [shape: f32[8], index: 0, kind: input, shape index: {}]
  %s1 = inlined_call_operand.hbm [shape: f32[2,4,1], index: 1, kind: output, shape index: {}]
  $region1: #{squeeze.2} parent=0
    #allocation0 [shape = 'u8[1024]{0}', space=vmem, size = 0x400, scoped, tag = 'operand span for operand 1']
    #allocation1 [shape = 's32[1]{0}', space=sflag, size = 0x4, scoped, tag = 'scoped memory for squeeze.2']
    #allocation2 [shape = 'u8[4096]{0}', space=vmem, size = 0x1000, scoped, tag = 'scoped mem for output reshape']
    #allocation3 [shape = 'u8[4096]{0}', space=vmem, size = 0x1000, scoped, tag = 'scoped mem for input reshape']
    %2 = vsyncpa [#allocation1], 0
    %s4 = sshll.u32 1, 1
    %s5 = ssub.s32 %s4, 1
    %v6 = vld [vmem:[%s0] sm:%s5]
    %7 = vst [vmem:[#allocation3] sm:%s5] %v6
    %v8 = vld [vmem:[#allocation3] sm:$0x1]
    %vm9 = vcmask 31744
    %10 = vst.msk [vmem:[#allocation2] sm:$0x1] %vm9, %v8
    %v11 = vld [vmem:[#allocation3] sm:$0x1]
    %12 = vrot.lane.b32.xlu0 %v11, 124
    %v13 = vpop.permute.xlu0 %12
    %vm14 = vcmask 31744
    %s15 = scalar_lea.vmem [#allocation2], 1
    %16 = vst.msk [vmem:[%s15] sm:$0x1] %vm14, %v13
    %s18 = sshll.u32 1, 2
    %s19 = ssub.s32 %s18, 1
    %v21 = vld [vmem:[#allocation2] sm:%s19]
    %s22 = sshll.u32 1, 2
    %s23 = ssub.s32 %s22, 1
    %24 = vst [vmem:[#allocation0] sm:%s23] %v21
    %s26 = ssub.s32 32, 32
    %27 = vsyncadd [#allocation1], %s26
    %s29 = sshll.u32 [#allocation0], 4
    %s30 = int_to_ptr.vmem [resolvable:$true] %s29
    %32 = dma.vmem_to_hbm [thread:$0]  %s30, 32, %s1, [#allocation1]
    %33 = dma.done [#allocation1], 32
    %34 = vsyncpa [#allocation1], 1

// kernel: forward.5
$region0: #{forward.5}
  #allocation0 [shape = 'u32[]', space=smem, size = 0x4, offset = 0x4, fixed_abs, tag = 'smem constant byte address 0x4 - core index']
  #allocation1 [shape = 'u32[144,128]{1,0:T(1,128)}', space=vmem, size = 0x12000, scoped, tag = 'internal scratch']
  #allocation2 [shape = 'f32[1,1]{1,0:T(1,128)S(1)}', space=vmem, size = 0x200, scoped, tag = 'scoped memory for forward.5']
  %s0 = inlined_call_operand.vmem [shape: bf16[400,400], index: 0, kind: input, shape index: {}]
  %s1 = inlined_call_operand.vmem [shape: bf16[32,400], index: 1, kind: input, shape index: {}]
  %s2 = inlined_call_operand.vmem [shape: f32[32,1], index: 2, kind: input, shape index: {}, may-alias: {2,5}]
  %s3 = inlined_call_operand.vmem [shape: f32[32,1], index: 3, kind: input, shape index: {}, may-alias: {3,6}]
  %s4 = inlined_call_operand.vmem [shape: bf16[25,32,32], index: 4, kind: input, shape index: {}]
  %s5 = inlined_call_operand.vmem [shape: f32[32,1], index: 5, kind: input, shape index: {}, may-alias: {2,5}]
  %s6 = inlined_call_operand.vmem [shape: f32[32,1], index: 6, kind: input, shape index: {}, may-alias: {3,6}]
  %s7 = inlined_call_operand.vmem [shape: bf16[16,32], index: 7, kind: input, shape index: {}]
  %s8 = inlined_call_operand.vmem [shape: f32[16,1], index: 8, kind: input, shape index: {}]
  %s9 = inlined_call_operand.vmem [shape: bf16[1,16], index: 9, kind: input, shape index: {}]
  %s10 = inlined_call_operand.<no memory space> [shape: f32[1,1], index: 10, kind: input, shape index: {}]
  %s11 = inlined_call_operand.vmem [shape: f32[1,16], index: 11, kind: output, shape index: {0}]
  %s12 = inlined_call_operand.hbm [shape: f32[2,2], index: 12, kind: output, shape index: {1}]
  %13 = xla_tuple %s11, %s12
  %s14 = sld [smem:[#allocation0]]
  $region62: #{forward.5} parent=0
    _
  %s16 = ssub.s32 1, %s14
  %s17 = scalar_select 0, %s16, %s14
  %v18 = vstv %s10
  %19 = vst [vmem:[#allocation2] sm:$0x1] %v18
  $region1: #{forward.5} parent=0
    #allocation3 [shape = 'u8[1024]{0}', space=vmem, size = 0x400, scoped, tag = 'output window, operand 1, single buffered']
    #allocation4 [shape = 's32[1]{0}', space=sflag, size = 0x4, scoped, tag = 'scoped memory for forward.5']
    %20 = vsyncpa [#allocation4], 0
    // Predicated region
    $region2: #{forward.5} parent=1 // pred_check
      _
    $region3: #{forward.5} parent=1 // pred_check_branch
      %22 = sbr.rel (0) target = $region5
    $region4: #{forward.5} parent=1 // pred_region
      _
    $region5: #{forward.5} parent=1 // pred_fallthru
      _
    // Predicated region
    $region6: #{forward.5} parent=1 // pred_check
      _
    $region7: #{forward.5} parent=1 // pred_check_branch
      %24 = sbr.rel (0) target = $region9
    $region8: #{forward.5} parent=1 // pred_region
      _
    $region9: #{forward.5} parent=1 // pred_fallthru
      _
    // Predicated region
    $region10: #{forward.5} parent=1 // pred_check
      _
    $region11: #{forward.5} parent=1 // pred_check_branch
      %26 = sbr.rel (0) target = $region13
    $region12: #{forward.5} parent=1 // pred_region
      _
    $region13: #{forward.5} parent=1 // pred_fallthru
      _
    // Predicated region
    $region14: #{forward.5} parent=1 // pred_check
      _
    $region15: #{forward.5} parent=1 // pred_check_branch
      %28 = sbr.rel (0) target = $region17
    $region16: #{forward.5} parent=1 // pred_region
      _
    $region17: #{forward.5} parent=1 // pred_fallthru
      _
    // Predicated region
    $region18: #{forward.5} parent=1 // pred_check
      _
    $region19: #{forward.5} parent=1 // pred_check_branch
      %30 = sbr.rel (0) target = $region21
    $region20: #{forward.5} parent=1 // pred_region
      _
    $region21: #{forward.5} parent=1 // pred_fallthru
      _
    // Predicated region
    $region22: #{forward.5} parent=1 // pred_check
      _
    $region23: #{forward.5} parent=1 // pred_check_branch
      %32 = sbr.rel (0) target = $region25
    $region24: #{forward.5} parent=1 // pred_region
      _
    $region25: #{forward.5} parent=1 // pred_fallthru
      _
    // Predicated region
    $region26: #{forward.5} parent=1 // pred_check
      _
    $region27: #{forward.5} parent=1 // pred_check_branch
      %34 = sbr.rel (0) target = $region29
    $region28: #{forward.5} parent=1 // pred_region
      _
    $region29: #{forward.5} parent=1 // pred_fallthru
      _
    // Predicated region
    $region30: #{forward.5} parent=1 // pred_check
      _
    $region31: #{forward.5} parent=1 // pred_check_branch
      %36 = sbr.rel (0) target = $region33
    $region32: #{forward.5} parent=1 // pred_region
      _
    $region33: #{forward.5} parent=1 // pred_fallthru
      _
    // Predicated region
    $region34: #{forward.5} parent=1 // pred_check
      _
    $region35: #{forward.5} parent=1 // pred_check_branch
      %38 = sbr.rel (0) target = $region37
    $region36: #{forward.5} parent=1 // pred_region
      _
    $region37: #{forward.5} parent=1 // pred_fallthru
      _
    // Predicated region
    $region38: #{forward.5} parent=1 // pred_check
      _
    $region39: #{forward.5} parent=1 // pred_check_branch
      %40 = sbr.rel (0) target = $region41
    $region40: #{forward.5} parent=1 // pred_region
      _
    $region41: #{forward.5} parent=1 // pred_fallthru
      _
    // Predicated region
    $region42: #{forward.5} parent=1 // pred_check
      _
    $region43: #{forward.5} parent=1 // pred_check_branch
      %42 = sbr.rel (0) target = $region45
    $region44: #{forward.5} parent=1 // pred_region
      _
    $region45: #{forward.5} parent=1 // pred_fallthru
      _
    %v44 = vld [vmem:[%s1] sm:$0xff]
    %v45 = vld [vmem:[%s1 + $0x8] sm:$0xff]
    %v46 = vld [vmem:[%s1 + $0x10] sm:$0xff]
    %v47 = vld [vmem:[%s1 + $0x18] sm:$0xff]
    %v48 = vld [vmem:[%s1 + $0x20] sm:$0xff]
    %v49 = vld [vmem:[%s1 + $0x28] sm:$0xff]
    %v50 = vld [vmem:[%s1 + $0x30] sm:$0xff]
    %v51 = vld [vmem:[%s1 + $0x38] sm:$0xff]
    %v52 = vld [vmem:[%s0] sm:$0xff]
    %v53 = vld [vmem:[%s0 + $0x8] sm:$0xff]
    %v54 = vld [vmem:[%s0 + $0x10] sm:$0xff]
    %v55 = vld [vmem:[%s0 + $0x18] sm:$0xff]
    %v56 = vld [vmem:[%s0 + $0x20] sm:$0xff]
    %v57 = vld [vmem:[%s0 + $0x28] sm:$0xff]
    %v58 = vld [vmem:[%s0 + $0x30] sm:$0xff]
    %v59 = vld [vmem:[%s0 + $0x38] sm:$0xff]
    %v60 = vld [vmem:[%s0 + $0x40] sm:$0xff]
    %v61 = vld [vmem:[%s0 + $0x48] sm:$0xff]
    %v62 = vld [vmem:[%s0 + $0x50] sm:$0xff]
    %v63 = vld [vmem:[%s0 + $0x58] sm:$0xff]
    %v64 = vld [vmem:[%s0 + $0x60] sm:$0xff]
    %v65 = vld [vmem:[%s0 + $0x68] sm:$0xff]
    %v66 = vld [vmem:[%s0 + $0x70] sm:$0xff]
    %v67 = vld [vmem:[%s0 + $0x78] sm:$0xff]
    %v68 = vld [vmem:[%s0 + $0x80] sm:$0xff]
    %v69 = vld [vmem:[%s0 + $0x88] sm:$0xff]
    %v70 = vld [vmem:[%s0 + $0x90] sm:$0xff]
    %v71 = vld [vmem:[%s0 + $0x98] sm:$0xff]
    %v72 = vld [vmem:[%s0 + $0xa0] sm:$0xff]
    %v73 = vld [vmem:[%s0 + $0xa8] sm:$0xff]
    %v74 = vld [vmem:[%s0 + $0xb0] sm:$0xff]
    %v75 = vld [vmem:[%s0 + $0xb8] sm:$0xff]
    %v76 = vld [vmem:[%s0 + $0xc0] sm:$0xff]
    %v77 = vld [vmem:[%s0 + $0xc8] sm:$0xff]
    %v78 = vld [vmem:[%s0 + $0xd0] sm:$0xff]
    %v79 = vld [vmem:[%s0 + $0xd8] sm:$0xff]
    %v80 = vld [vmem:[%s0 + $0xe0] sm:$0xff]
    %v81 = vld [vmem:[%s0 + $0xe8] sm:$0xff]
    %v82 = vld [vmem:[%s0 + $0xf0] sm:$0xff]
    %v83 = vld [vmem:[%s0 + $0xf8] sm:$0xff]
    %v84 = vld [vmem:[%s0 + $0x100] sm:$0xff]
    %v85 = vld [vmem:[%s0 + $0x108] sm:$0xff]
    %v86 = vld [vmem:[%s0 + $0x110] sm:$0xff]
    %v87 = vld [vmem:[%s0 + $0x118] sm:$0xff]
    %v88 = vld [vmem:[%s0 + $0x120] sm:$0xff]
    %v89 = vld [vmem:[%s0 + $0x128] sm:$0xff]
    %v90 = vld [vmem:[%s0 + $0x130] sm:$0xff]
    %v91 = vld [vmem:[%s0 + $0x138] sm:$0xff]
    %v92 = vld [vmem:[%s0 + $0x140] sm:$0xff]
    %v93 = vld [vmem:[%s0 + $0x148] sm:$0xff]
    %v94 = vld [vmem:[%s0 + $0x150] sm:$0xff]
    %v95 = vld [vmem:[%s0 + $0x158] sm:$0xff]
    %v96 = vld [vmem:[%s0 + $0x160] sm:$0xff]
    %v97 = vld [vmem:[%s0 + $0x168] sm:$0xff]
    %v98 = vld [vmem:[%s0 + $0x170] sm:$0xff]
    %v99 = vld [vmem:[%s0 + $0x178] sm:$0xff]
    %v100 = vld [vmem:[%s0 + $0x180] sm:$0xff]
    %v101 = vld [vmem:[%s0 + $0x188] sm:$0xff]
    %v102 = vld [vmem:[%s0 + $0x190] sm:$0xff]
    %v103 = vld [vmem:[%s0 + $0x198] sm:$0xff]
    %v104 = vld [vmem:[%s0 + $0x1a0] sm:$0xff]
    %v105 = vld [vmem:[%s0 + $0x1a8] sm:$0xff]
    %v106 = vld [vmem:[%s0 + $0x1b0] sm:$0xff]
    %v107 = vld [vmem:[%s0 + $0x1b8] sm:$0xff]
    %v108 = vld [vmem:[%s0 + $0x1c0] sm:$0xff]
    %v109 = vld [vmem:[%s0 + $0x1c8] sm:$0xff]
    %v110 = vld [vmem:[%s0 + $0x1d0] sm:$0xff]
    %v111 = vld [vmem:[%s0 + $0x1d8] sm:$0xff]
    %v112 = vld [vmem:[%s0 + $0x1e0] sm:$0xff]
    %v113 = vld [vmem:[%s0 + $0x1e8] sm:$0xff]
    %v114 = vld [vmem:[%s0 + $0x1f0] sm:$0xff]
    %v115 = vld [vmem:[%s0 + $0x1f8] sm:$0xff]
    %v116 = vld [vmem:[%s0 + $0x200] sm:$0xff]
    %v117 = vld [vmem:[%s0 + $0x208] sm:$0xff]
    %v118 = vld [vmem:[%s0 + $0x210] sm:$0xff]
    %v119 = vld [vmem:[%s0 + $0x218] sm:$0xff]
    %v120 = vld [vmem:[%s0 + $0x220] sm:$0xff]
    %v121 = vld [vmem:[%s0 + $0x228] sm:$0xff]
    %v122 = vld [vmem:[%s0 + $0x230] sm:$0xff]
    %v123 = vld [vmem:[%s0 + $0x238] sm:$0xff]
    %v124 = vld [vmem:[%s0 + $0x240] sm:$0xff]
    %v125 = vld [vmem:[%s0 + $0x248] sm:$0xff]
    %v126 = vld [vmem:[%s0 + $0x250] sm:$0xff]
    %v127 = vld [vmem:[%s0 + $0x258] sm:$0xff]
    %v128 = vld [vmem:[%s0 + $0x260] sm:$0xff]
    %v129 = vld [vmem:[%s0 + $0x268] sm:$0xff]
    %v130 = vld [vmem:[%s0 + $0x270] sm:$0xff]
    %v131 = vld [vmem:[%s0 + $0x278] sm:$0xff]
    %v132 = vld [vmem:[%s0 + $0x280] sm:$0xff]
    %v133 = vld [vmem:[%s0 + $0x288] sm:$0xff]
    %v134 = vld [vmem:[%s0 + $0x290] sm:$0xff]
    %v135 = vld [vmem:[%s0 + $0x298] sm:$0xff]
    %v136 = vld [vmem:[%s0 + $0x2a0] sm:$0xff]
    %v137 = vld [vmem:[%s0 + $0x2a8] sm:$0xff]
    %v138 = vld [vmem:[%s0 + $0x2b0] sm:$0xff]
    %v139 = vld [vmem:[%s0 + $0x2b8] sm:$0xff]
    %v140 = vld [vmem:[%s0 + $0x2c0] sm:$0xff]
    %v141 = vld [vmem:[%s0 + $0x2c8] sm:$0xff]
    %v142 = vld [vmem:[%s0 + $0x2d0] sm:$0xff]
    %v143 = vld [vmem:[%s0 + $0x2d8] sm:$0xff]
    %v144 = vld [vmem:[%s0 + $0x2e0] sm:$0xff]
    %v145 = vld [vmem:[%s0 + $0x2e8] sm:$0xff]
    %v146 = vld [vmem:[%s0 + $0x2f0] sm:$0xff]
    %v147 = vld [vmem:[%s0 + $0x2f8] sm:$0xff]
    %v148 = vld [vmem:[%s0 + $0x300] sm:$0xff]
    %v149 = vld [vmem:[%s0 + $0x308] sm:$0xff]
    %v150 = vld [vmem:[%s0 + $0x310] sm:$0xff]
    %v151 = vld [vmem:[%s0 + $0x318] sm:$0xff]
    %v160 = vunpack.c.l.b16 %v44
    %v161 = vunpack.c.h.b16 %v44
    %v162 = vunpack.c.l.b16 %v45
    %v163 = vunpack.c.h.b16 %v45
    %v164 = vunpack.c.l.b16 %v46
    %v165 = vunpack.c.h.b16 %v46
    %v166 = vunpack.c.l.b16 %v47
    %v167 = vunpack.c.h.b16 %v47
    %v168 = vunpack.c.l.b16 %v48
    %v169 = vunpack.c.h.b16 %v48
    %v170 = vunpack.c.l.b16 %v49
    %v171 = vunpack.c.h.b16 %v49
    %v172 = vunpack.c.l.b16 %v50
    %v173 = vunpack.c.h.b16 %v50
    %v174 = vunpack.c.l.b16 %v51
    %v175 = vunpack.c.h.b16 %v51
    %v176 = vpack.c.b16 %v164, %v160
    %v177 = vpack.c.b16 %v165, %v161
    %v178 = vpack.c.b16 %v166, %v162
    %v179 = vpack.c.b16 %v167, %v163
    %v180 = vpack.c.b16 %v172, %v168
    %v181 = vpack.c.b16 %v173, %v169
    %v182 = vpack.c.b16 %v174, %v170
    %v183 = vpack.c.b16 %v175, %v171
    %v290 = vunpack.c.l.b16 %v52
    %v291 = vunpack.c.h.b16 %v52
    %v292 = vunpack.c.l.b16 %v53
    %v293 = vunpack.c.h.b16 %v53
    %v294 = vunpack.c.l.b16 %v54
    %v295 = vunpack.c.h.b16 %v54
    %v296 = vunpack.c.l.b16 %v55
    %v297 = vunpack.c.h.b16 %v55
    %v298 = vunpack.c.l.b16 %v56
    %v299 = vunpack.c.h.b16 %v56
    %v300 = vunpack.c.l.b16 %v57
    %v301 = vunpack.c.h.b16 %v57
    %v302 = vunpack.c.l.b16 %v58
    %v303 = vunpack.c.h.b16 %v58
    %v304 = vunpack.c.l.b16 %v59
    %v305 = vunpack.c.h.b16 %v59
    %v306 = vunpack.c.l.b16 %v60
    %v307 = vunpack.c.h.b16 %v60
    %v308 = vunpack.c.l.b16 %v61
    %v309 = vunpack.c.h.b16 %v61
    %v310 = vunpack.c.l.b16 %v62
    %v311 = vunpack.c.h.b16 %v62
    %v312 = vunpack.c.l.b16 %v63
    %v313 = vunpack.c.h.b16 %v63
    %v314 = vunpack.c.l.b16 %v64
    %v315 = vunpack.c.h.b16 %v64
    %v316 = vunpack.c.l.b16 %v65
    %v317 = vunpack.c.h.b16 %v65
    %v318 = vunpack.c.l.b16 %v66
    %v319 = vunpack.c.h.b16 %v66
    %v320 = vunpack.c.l.b16 %v67
    %v321 = vunpack.c.h.b16 %v67
    %v322 = vunpack.c.l.b16 %v68
    %v323 = vunpack.c.h.b16 %v68
    %v324 = vunpack.c.l.b16 %v69
    %v325 = vunpack.c.h.b16 %v69
    %v326 = vunpack.c.l.b16 %v70
    %v327 = vunpack.c.h.b16 %v70
    %v328 = vunpack.c.l.b16 %v71
    %v329 = vunpack.c.h.b16 %v71
    %v330 = vunpack.c.l.b16 %v72
    %v331 = vunpack.c.h.b16 %v72
    %v332 = vunpack.c.l.b16 %v73
    %v333 = vunpack.c.h.b16 %v73
    %v334 = vunpack.c.l.b16 %v74
    %v335 = vunpack.c.h.b16 %v74
    %v336 = vunpack.c.l.b16 %v75
    %v337 = vunpack.c.h.b16 %v75
    %v338 = vunpack.c.l.b16 %v76
    %v339 = vunpack.c.h.b16 %v76
    %v340 = vunpack.c.l.b16 %v77
    %v341 = vunpack.c.h.b16 %v77
    %v342 = vunpack.c.l.b16 %v78
    %v343 = vunpack.c.h.b16 %v78
    %v344 = vunpack.c.l.b16 %v79
    %v345 = vunpack.c.h.b16 %v79
    %v346 = vunpack.c.l.b16 %v80
    %v347 = vunpack.c.h.b16 %v80
    %v348 = vunpack.c.l.b16 %v81
    %v349 = vunpack.c.h.b16 %v81
    %v350 = vunpack.c.l.b16 %v82
    %v351 = vunpack.c.h.b16 %v82
    %v352 = vunpack.c.l.b16 %v83
    %v353 = vunpack.c.h.b16 %v83
    %v354 = vunpack.c.l.b16 %v84
    %v355 = vunpack.c.h.b16 %v84
    %v356 = vunpack.c.l.b16 %v85
    %v357 = vunpack.c.h.b16 %v85
    %v358 = vunpack.c.l.b16 %v86
    %v359 = vunpack.c.h.b16 %v86
    %v360 = vunpack.c.l.b16 %v87
    %v361 = vunpack.c.h.b16 %v87
    %v362 = vunpack.c.l.b16 %v88
    %v363 = vunpack.c.h.b16 %v88
    %v364 = vunpack.c.l.b16 %v89
    %v365 = vunpack.c.h.b16 %v89
    %v366 = vunpack.c.l.b16 %v90
    %v367 = vunpack.c.h.b16 %v90
    %v368 = vunpack.c.l.b16 %v91
    %v369 = vunpack.c.h.b16 %v91
    %v370 = vunpack.c.l.b16 %v92
    %v371 = vunpack.c.h.b16 %v92
    %v372 = vunpack.c.l.b16 %v93
    %v373 = vunpack.c.h.b16 %v93
    %v374 = vunpack.c.l.b16 %v94
    %v375 = vunpack.c.h.b16 %v94
    %v376 = vunpack.c.l.b16 %v95
    %v377 = vunpack.c.h.b16 %v95
    %v378 = vunpack.c.l.b16 %v96
    %v379 = vunpack.c.h.b16 %v96
    %v380 = vunpack.c.l.b16 %v97
    %v381 = vunpack.c.h.b16 %v97
    %v382 = vunpack.c.l.b16 %v98
    %v383 = vunpack.c.h.b16 %v98
    %v384 = vunpack.c.l.b16 %v99
    %v385 = vunpack.c.h.b16 %v99
    %v386 = vunpack.c.l.b16 %v100
    %v387 = vunpack.c.h.b16 %v100
    %v388 = vunpack.c.l.b16 %v101
    %v389 = vunpack.c.h.b16 %v101
    %v390 = vunpack.c.l.b16 %v102
    %v391 = vunpack.c.h.b16 %v102
    %v392 = vunpack.c.l.b16 %v103
    %v393 = vunpack.c.h.b16 %v103
    %v394 = vunpack.c.l.b16 %v104
    %v395 = vunpack.c.h.b16 %v104
    %v396 = vunpack.c.l.b16 %v105
    %v397 = vunpack.c.h.b16 %v105
    %v398 = vunpack.c.l.b16 %v106
    %v399 = vunpack.c.h.b16 %v106
    %v400 = vunpack.c.l.b16 %v107
    %v401 = vunpack.c.h.b16 %v107
    %v402 = vunpack.c.l.b16 %v108
    %v403 = vunpack.c.h.b16 %v108
    %v404 = vunpack.c.l.b16 %v109
    %v405 = vunpack.c.h.b16 %v109
    %v406 = vunpack.c.l.b16 %v110
    %v407 = vunpack.c.h.b16 %v110
    %v408 = vunpack.c.l.b16 %v111
    %v409 = vunpack.c.h.b16 %v111
    %v410 = vunpack.c.l.b16 %v112
    %v411 = vunpack.c.h.b16 %v112
    %v412 = vunpack.c.l.b16 %v113
    %v413 = vunpack.c.h.b16 %v113
    %v414 = vunpack.c.l.b16 %v114
    %v415 = vunpack.c.h.b16 %v114
    %v416 = vunpack.c.l.b16 %v115
    %v417 = vunpack.c.h.b16 %v115
    %v418 = vunpack.c.l.b16 %v116
    %v419 = vunpack.c.h.b16 %v116
    %v420 = vunpack.c.l.b16 %v117
    %v421 = vunpack.c.h.b16 %v117
    %v422 = vunpack.c.l.b16 %v118
    %v423 = vunpack.c.h.b16 %v118
    %v424 = vunpack.c.l.b16 %v119
    %v425 = vunpack.c.h.b16 %v119
    %v426 = vunpack.c.l.b16 %v120
    %v427 = vunpack.c.h.b16 %v120
    %v428 = vunpack.c.l.b16 %v121
    %v429 = vunpack.c.h.b16 %v121
    %v430 = vunpack.c.l.b16 %v122
    %v431 = vunpack.c.h.b16 %v122
    %v432 = vunpack.c.l.b16 %v123
    %v433 = vunpack.c.h.b16 %v123
    %v434 = vunpack.c.l.b16 %v124
    %v435 = vunpack.c.h.b16 %v124
    %v436 = vunpack.c.l.b16 %v125
    %v437 = vunpack.c.h.b16 %v125
    %v438 = vunpack.c.l.b16 %v126
    %v439 = vunpack.c.h.b16 %v126
    %v440 = vunpack.c.l.b16 %v127
    %v441 = vunpack.c.h.b16 %v127
    %v442 = vunpack.c.l.b16 %v128
    %v443 = vunpack.c.h.b16 %v128
    %v444 = vunpack.c.l.b16 %v129
    %v445 = vunpack.c.h.b16 %v129
    %v446 = vunpack.c.l.b16 %v130
    %v447 = vunpack.c.h.b16 %v130
    %v448 = vunpack.c.l.b16 %v131
    %v449 = vunpack.c.h.b16 %v131
    %v450 = vunpack.c.l.b16 %v132
    %v451 = vunpack.c.h.b16 %v132
    %v452 = vunpack.c.l.b16 %v133
    %v453 = vunpack.c.h.b16 %v133
    %v454 = vunpack.c.l.b16 %v134
    %v455 = vunpack.c.h.b16 %v134
    %v456 = vunpack.c.l.b16 %v135
    %v457 = vunpack.c.h.b16 %v135
    %v458 = vunpack.c.l.b16 %v136
    %v459 = vunpack.c.h.b16 %v136
    %v460 = vunpack.c.l.b16 %v137
    %v461 = vunpack.c.h.b16 %v137
    %v462 = vunpack.c.l.b16 %v138
    %v463 = vunpack.c.h.b16 %v138
    %v464 = vunpack.c.l.b16 %v139
    %v465 = vunpack.c.h.b16 %v139
    %v466 = vunpack.c.l.b16 %v140
    %v467 = vunpack.c.h.b16 %v140
    %v468 = vunpack.c.l.b16 %v141
    %v469 = vunpack.c.h.b16 %v141
    %v470 = vunpack.c.l.b16 %v142
    %v471 = vunpack.c.h.b16 %v142
    %v472 = vunpack.c.l.b16 %v143
    %v473 = vunpack.c.h.b16 %v143
    %v474 = vunpack.c.l.b16 %v144
    %v475 = vunpack.c.h.b16 %v144
    %v476 = vunpack.c.l.b16 %v145
    %v477 = vunpack.c.h.b16 %v145
    %v478 = vunpack.c.l.b16 %v146
    %v479 = vunpack.c.h.b16 %v146
    %v480 = vunpack.c.l.b16 %v147
    %v481 = vunpack.c.h.b16 %v147
    %v482 = vunpack.c.l.b16 %v148
    %v483 = vunpack.c.h.b16 %v148
    %v484 = vunpack.c.l.b16 %v149
    %v485 = vunpack.c.h.b16 %v149
    %v486 = vunpack.c.l.b16 %v150
    %v487 = vunpack.c.h.b16 %v150
    %v488 = vunpack.c.l.b16 %v151
    %v489 = vunpack.c.h.b16 %v151
    %v490 = vpack.c.b16 %v294, %v290
    %v491 = vpack.c.b16 %v295, %v291
    %v492 = vpack.c.b16 %v296, %v292
    %v493 = vpack.c.b16 %v297, %v293
    %v494 = vpack.c.b16 %v302, %v298
    %v495 = vpack.c.b16 %v303, %v299
    %v496 = vpack.c.b16 %v304, %v300
    %v497 = vpack.c.b16 %v305, %v301
    %v498 = vpack.c.b16 %v310, %v306
    %v499 = vpack.c.b16 %v311, %v307
    %v500 = vpack.c.b16 %v312, %v308
    %v501 = vpack.c.b16 %v313, %v309
    %v502 = vpack.c.b16 %v318, %v314
    %v503 = vpack.c.b16 %v319, %v315
    %v504 = vpack.c.b16 %v320, %v316
    %v505 = vpack.c.b16 %v321, %v317
    %v506 = vpack.c.b16 %v326, %v322
    %v507 = vpack.c.b16 %v327, %v323
    %v508 = vpack.c.b16 %v328, %v324
    %v509 = vpack.c.b16 %v329, %v325
    %v510 = vpack.c.b16 %v334, %v330
    %v511 = vpack.c.b16 %v335, %v331
    %v512 = vpack.c.b16 %v336, %v332
    %v513 = vpack.c.b16 %v337, %v333
    %v514 = vpack.c.b16 %v342, %v338
    %v515 = vpack.c.b16 %v343, %v339
    %v516 = vpack.c.b16 %v344, %v340
    %v517 = vpack.c.b16 %v345, %v341
    %v518 = vpack.c.b16 %v350, %v346
    %v519 = vpack.c.b16 %v351, %v347
    %v520 = vpack.c.b16 %v352, %v348
    %v521 = vpack.c.b16 %v353, %v349
    %v522 = vpack.c.b16 %v358, %v354
    %v523 = vpack.c.b16 %v359, %v355
    %v524 = vpack.c.b16 %v360, %v356
    %v525 = vpack.c.b16 %v361, %v357
    %v526 = vpack.c.b16 %v366, %v362
    %v527 = vpack.c.b16 %v367, %v363
    %v528 = vpack.c.b16 %v368, %v364
    %v529 = vpack.c.b16 %v369, %v365
    %v530 = vpack.c.b16 %v374, %v370
    %v531 = vpack.c.b16 %v375, %v371
    %v532 = vpack.c.b16 %v376, %v372
    %v533 = vpack.c.b16 %v377, %v373
    %v534 = vpack.c.b16 %v382, %v378
    %v535 = vpack.c.b16 %v383, %v379
    %v536 = vpack.c.b16 %v384, %v380
    %v537 = vpack.c.b16 %v385, %v381
    %v538 = vpack.c.b16 %v390, %v386
    %v539 = vpack.c.b16 %v391, %v387
    %v540 = vpack.c.b16 %v392, %v388
    %v541 = vpack.c.b16 %v393, %v389
    %v542 = vpack.c.b16 %v398, %v394
    %v543 = vpack.c.b16 %v399, %v395
    %v544 = vpack.c.b16 %v400, %v396
    %v545 = vpack.c.b16 %v401, %v397
    %v546 = vpack.c.b16 %v406, %v402
    %v547 = vpack.c.b16 %v407, %v403
    %v548 = vpack.c.b16 %v408, %v404
    %v549 = vpack.c.b16 %v409, %v405
    %v550 = vpack.c.b16 %v414, %v410
    %v551 = vpack.c.b16 %v415, %v411
    %v552 = vpack.c.b16 %v416, %v412
    %v553 = vpack.c.b16 %v417, %v413
    %v554 = vpack.c.b16 %v422, %v418
    %v555 = vpack.c.b16 %v423, %v419
    %v556 = vpack.c.b16 %v424, %v420
    %v557 = vpack.c.b16 %v425, %v421
    %v558 = vpack.c.b16 %v430, %v426
    %v559 = vpack.c.b16 %v431, %v427
    %v560 = vpack.c.b16 %v432, %v428
    %v561 = vpack.c.b16 %v433, %v429
    %v562 = vpack.c.b16 %v438, %v434
    %v563 = vpack.c.b16 %v439, %v435
    %v564 = vpack.c.b16 %v440, %v436
    %v565 = vpack.c.b16 %v441, %v437
    %v566 = vpack.c.b16 %v446, %v442
    %v567 = vpack.c.b16 %v447, %v443
    %v568 = vpack.c.b16 %v448, %v444
    %v569 = vpack.c.b16 %v449, %v445
    %v570 = vpack.c.b16 %v454, %v450
    %v571 = vpack.c.b16 %v455, %v451
    %v572 = vpack.c.b16 %v456, %v452
    %v573 = vpack.c.b16 %v457, %v453
    %v574 = vpack.c.b16 %v462, %v458
    %v575 = vpack.c.b16 %v463, %v459
    %v576 = vpack.c.b16 %v464, %v460
    %v577 = vpack.c.b16 %v465, %v461
    %v578 = vpack.c.b16 %v470, %v466
    %v579 = vpack.c.b16 %v471, %v467
    %v580 = vpack.c.b16 %v472, %v468
    %v581 = vpack.c.b16 %v473, %v469
    %v582 = vpack.c.b16 %v478, %v474
    %v583 = vpack.c.b16 %v479, %v475
    %v584 = vpack.c.b16 %v480, %v476
    %v585 = vpack.c.b16 %v481, %v477
    %v586 = vpack.c.b16 %v486, %v482
    %v587 = vpack.c.b16 %v487, %v483
    %v588 = vpack.c.b16 %v488, %v484
    %v589 = vpack.c.b16 %v489, %v485
    %vm690 = vcmask 130048
    %v692 = vsel %vm690, %v179, 0
    %v695 = vsel %vm690, %v183, 0
    %697 = vmatprep.subr.bf16.mxu0 %v519
    %698 = vmatpush1.bf16.msra.mxu0 %v518
    %699 = vmatprep.subr.bf16.mxu0 %v515
    %700 = vmatpush1.bf16.msra.mxu0 %v514
    %701 = vmatprep.subr.bf16.mxu0 %v511
    %702 = vmatpush1.bf16.msra.mxu0 %v510
    %703 = vmatprep.subr.bf16.mxu0 %v507
    %704 = vmatpush1.bf16.msra.mxu0 %v506
    %705 = vmatprep.subr.bf16.mxu0 %v503
    %706 = vmatpush1.bf16.msra.mxu0 %v502
    %707 = vmatprep.subr.bf16.mxu0 %v499
    %708 = vmatpush1.bf16.msra.mxu0 %v498
    %709 = vmatprep.subr.bf16.mxu0 %v495
    %710 = vmatpush1.bf16.msra.mxu0 %v494
    %711 = vmatprep.subr.bf16.mxu0 %v491
    %712 = vmatpush1.bf16.msra.mxu0 %v490
    %713 = vmatprep.subr.bf16.mxu0 %v551
    %714 = vmatpush2.bf16.msra.mxu0 %v550
    %715 = vmatprep.subr.bf16.mxu0 %v547
    %716 = vmatpush2.bf16.msra.mxu0 %v546
    %717 = vmatprep.subr.bf16.mxu0 %v543
    %718 = vmatpush2.bf16.msra.mxu0 %v542
    %719 = vmatprep.subr.bf16.mxu0 %v539
    %720 = vmatpush2.bf16.msra.mxu0 %v538
    %721 = vmatprep.subr.bf16.mxu0 %v535
    %722 = vmatpush2.bf16.msra.mxu0 %v534
    %723 = vmatprep.subr.bf16.mxu0 %v531
    %724 = vmatpush2.bf16.msra.mxu0 %v530
    %725 = vmatprep.subr.bf16.mxu0 %v527
    %726 = vmatpush2.bf16.msra.mxu0 %v526
    %727 = vmatprep.subr.bf16.mxu0 %v523
    %728 = vmatpush2.bf16.msra.mxu0 %v522
    %729 = vmatprep.mubr.bf16.mxu0 %v177
    %730 = vmatmul.mubr.bf16.gmra.mxu0 %v176
    %v731 = vpop.f32.mrf.mxu0
    %v732 = vadd.f32 0.0, %v731
    %v733 = vpop.f32.mrf.mxu0
    %v734 = vadd.f32 0.0, %v733
    %v735 = vpop.f32.mrf.mxu0
    %v736 = vadd.f32 0.0, %v735
    %v737 = vpop.f32.mrf.mxu0
    %v738 = vadd.f32 0.0, %v737
    %739 = vmatprep.mubr.bf16.mxu0 %v181
    %740 = vmatmul.mubr.bf16.gmra.mxu0 %v180
    %v741 = vpop.f32.mrf.mxu0
    %v742 = vadd.f32 0.0, %v741
    %v743 = vpop.f32.mrf.mxu0
    %v744 = vadd.f32 0.0, %v743
    %v745 = vpop.f32.mrf.mxu0
    %v746 = vadd.f32 0.0, %v745
    %v747 = vpop.f32.mrf.mxu0
    %v748 = vadd.f32 0.0, %v747
    %749 = vdwg.mxu0
    %750 = vmatprep.subr.bf16.mxu0 %v583
    %751 = vmatpush1.bf16.msra.mxu0 %v582
    %752 = vmatprep.subr.bf16.mxu0 %v579
    %753 = vmatpush1.bf16.msra.mxu0 %v578
    %754 = vmatprep.subr.bf16.mxu0 %v575
    %755 = vmatpush1.bf16.msra.mxu0 %v574
    %756 = vmatprep.subr.bf16.mxu0 %v571
    %757 = vmatpush1.bf16.msra.mxu0 %v570
    %758 = vmatprep.subr.bf16.mxu0 %v567
    %759 = vmatpush1.bf16.msra.mxu0 %v566
    %760 = vmatprep.subr.bf16.mxu0 %v563
    %761 = vmatpush1.bf16.msra.mxu0 %v562
    %762 = vmatprep.subr.bf16.mxu0 %v559
    %763 = vmatpush1.bf16.msra.mxu0 %v558
    %764 = vmatprep.subr.bf16.mxu0 %v555
    %765 = vmatpush1.bf16.msra.mxu0 %v554
    %766 = vmatprep.subr.bf16.mxu0 0
    %767 = vmatpush2.bf16.msra.mxu0 0
    %768 = vmatprep.subr.bf16.mxu0 0
    %769 = vmatpush2.bf16.msra.mxu0 0
    %770 = vmatprep.subr.bf16.mxu0 0
    %771 = vmatpush2.bf16.msra.mxu0 0
    %772 = vmatprep.subr.bf16.mxu0 0
    %773 = vmatpush2.bf16.msra.mxu0 0
    %774 = vmatprep.subr.bf16.mxu0 0
    %775 = vmatpush2.bf16.msra.mxu0 0
    %776 = vmatprep.subr.bf16.mxu0 0
    %777 = vmatpush2.bf16.msra.mxu0 0
    %778 = vmatprep.subr.bf16.mxu0 0
    %779 = vmatpush2.bf16.msra.mxu0 0
    %780 = vmatprep.subr.bf16.mxu0 %v587
    %781 = vmatpush2.bf16.msra.mxu0 %v586
    %782 = vmatprep.mubr.bf16.mxu0 %v692
    %783 = vmatmul.mubr.bf16.gmra.mxu0 %v178
    %v784 = vpop.f32.mrf.mxu0
    %v785 = vadd.f32 %v732, %v784
    %v786 = vpop.f32.mrf.mxu0
    %v787 = vadd.f32 %v734, %v786
    %v788 = vpop.f32.mrf.mxu0
    %v789 = vadd.f32 %v736, %v788
    %v790 = vpop.f32.mrf.mxu0
    %v791 = vadd.f32 %v738, %v790
    %792 = vmatprep.mubr.bf16.mxu0 %v695
    %793 = vmatmul.mubr.bf16.gmra.mxu0 %v182
    %v794 = vpop.f32.mrf.mxu0
    %v795 = vadd.f32 %v742, %v794
    %v796 = vpop.f32.mrf.mxu0
    %v797 = vadd.f32 %v744, %v796
    %v798 = vpop.f32.mrf.mxu0
    %v799 = vadd.f32 %v746, %v798
    %v800 = vpop.f32.mrf.mxu0
    %v801 = vadd.f32 %v748, %v800
    %802 = vdwg.mxu0
    %803 = vmatprep.subr.bf16.mxu0 %v521
    %804 = vmatpush1.bf16.msra.mxu0 %v520
    %805 = vmatprep.subr.bf16.mxu0 %v517
    %806 = vmatpush1.bf16.msra.mxu0 %v516
    %807 = vmatprep.subr.bf16.mxu0 %v513
    %808 = vmatpush1.bf16.msra.mxu0 %v512
    %809 = vmatprep.subr.bf16.mxu0 %v509
    %810 = vmatpush1.bf16.msra.mxu0 %v508
    %811 = vmatprep.subr.bf16.mxu0 %v505
    %812 = vmatpush1.bf16.msra.mxu0 %v504
    %813 = vmatprep.subr.bf16.mxu0 %v501
    %814 = vmatpush1.bf16.msra.mxu0 %v500
    %815 = vmatprep.subr.bf16.mxu0 %v497
    %816 = vmatpush1.bf16.msra.mxu0 %v496
    %817 = vmatprep.subr.bf16.mxu0 %v493
    %818 = vmatpush1.bf16.msra.mxu0 %v492
    %819 = vmatprep.subr.bf16.mxu0 %v553
    %820 = vmatpush2.bf16.msra.mxu0 %v552
    %821 = vmatprep.subr.bf16.mxu0 %v549
    %822 = vmatpush2.bf16.msra.mxu0 %v548
    %823 = vmatprep.subr.bf16.mxu0 %v545
    %824 = vmatpush2.bf16.msra.mxu0 %v544
    %825 = vmatprep.subr.bf16.mxu0 %v541
    %826 = vmatpush2.bf16.msra.mxu0 %v540
    %827 = vmatprep.subr.bf16.mxu0 %v537
    %828 = vmatpush2.bf16.msra.mxu0 %v536
    %829 = vmatprep.subr.bf16.mxu0 %v533
    %830 = vmatpush2.bf16.msra.mxu0 %v532
    %831 = vmatprep.subr.bf16.mxu0 %v529
    %832 = vmatpush2.bf16.msra.mxu0 %v528
    %833 = vmatprep.subr.bf16.mxu0 %v525
    %834 = vmatpush2.bf16.msra.mxu0 %v524
    %835 = vmatprep.mubr.bf16.mxu0 %v177
    %836 = vmatmul.mubr.bf16.gmra.mxu0 %v176
    %v837 = vpop.f32.mrf.mxu0
    %v838 = vadd.f32 0.0, %v837
    %v839 = vpop.f32.mrf.mxu0
    %v840 = vadd.f32 0.0, %v839
    %v841 = vpop.f32.mrf.mxu0
    %v842 = vadd.f32 0.0, %v841
    %v843 = vpop.f32.mrf.mxu0
    %v844 = vadd.f32 0.0, %v843
    %845 = vmatprep.mubr.bf16.mxu0 %v181
    %846 = vmatmul.mubr.bf16.gmra.mxu0 %v180
    %v847 = vpop.f32.mrf.mxu0
    %v848 = vadd.f32 0.0, %v847
    %v849 = vpop.f32.mrf.mxu0
    %v850 = vadd.f32 0.0, %v849
    %v851 = vpop.f32.mrf.mxu0
    %v852 = vadd.f32 0.0, %v851
    %v853 = vpop.f32.mrf.mxu0
    %v854 = vadd.f32 0.0, %v853
    %855 = vdwg.mxu0
    %856 = vmatprep.subr.bf16.mxu0 %v585
    %857 = vmatpush1.bf16.msra.mxu0 %v584
    %858 = vmatprep.subr.bf16.mxu0 %v581
    %859 = vmatpush1.bf16.msra.mxu0 %v580
    %860 = vmatprep.subr.bf16.mxu0 %v577
    %861 = vmatpush1.bf16.msra.mxu0 %v576
    %862 = vmatprep.subr.bf16.mxu0 %v573
    %863 = vmatpush1.bf16.msra.mxu0 %v572
    %864 = vmatprep.subr.bf16.mxu0 %v569
    %865 = vmatpush1.bf16.msra.mxu0 %v568
    %866 = vmatprep.subr.bf16.mxu0 %v565
    %867 = vmatpush1.bf16.msra.mxu0 %v564
    %868 = vmatprep.subr.bf16.mxu0 %v561
    %869 = vmatpush1.bf16.msra.mxu0 %v560
    %870 = vmatprep.subr.bf16.mxu0 %v557
    %871 = vmatpush1.bf16.msra.mxu0 %v556
    %872 = vmatprep.subr.bf16.mxu0 0
    %873 = vmatpush2.bf16.msra.mxu0 0
    %874 = vmatprep.subr.bf16.mxu0 0
    %875 = vmatpush2.bf16.msra.mxu0 0
    %876 = vmatprep.subr.bf16.mxu0 0
    %877 = vmatpush2.bf16.msra.mxu0 0
    %878 = vmatprep.subr.bf16.mxu0 0
    %879 = vmatpush2.bf16.msra.mxu0 0
    %880 = vmatprep.subr.bf16.mxu0 0
    %881 = vmatpush2.bf16.msra.mxu0 0
    %882 = vmatprep.subr.bf16.mxu0 0
    %883 = vmatpush2.bf16.msra.mxu0 0
    %884 = vmatprep.subr.bf16.mxu0 0
    %885 = vmatpush2.bf16.msra.mxu0 0
    %886 = vmatprep.subr.bf16.mxu0 %v589
    %887 = vmatpush2.bf16.msra.mxu0 %v588
    %888 = vmatprep.mubr.bf16.mxu0 %v692
    %889 = vmatmul.mubr.bf16.gmra.mxu0 %v178
    %v890 = vpop.f32.mrf.mxu0
    %v891 = vadd.f32 %v838, %v890
    %v892 = vpop.f32.mrf.mxu0
    %v893 = vadd.f32 %v840, %v892
    %v894 = vpop.f32.mrf.mxu0
    %v895 = vadd.f32 %v842, %v894
    %v896 = vpop.f32.mrf.mxu0
    %v897 = vadd.f32 %v844, %v896
    %898 = vmatprep.mubr.bf16.mxu0 %v695
    %899 = vmatmul.mubr.bf16.gmra.mxu0 %v182
    %v900 = vpop.f32.mrf.mxu0
    %v901 = vadd.f32 %v848, %v900
    %v902 = vpop.f32.mrf.mxu0
    %v903 = vadd.f32 %v850, %v902
    %v904 = vpop.f32.mrf.mxu0
    %v905 = vadd.f32 %v852, %v904
    %v906 = vpop.f32.mrf.mxu0
    %v907 = vadd.f32 %v854, %v906
    %908 = vdwg.mxu0
    %v909 = vld [vmem:[%s2] sm:$0xff]
    %v910 = vld [vmem:[%s2 + $0x8] sm:$0xff]
    %v911 = vld [vmem:[%s2 + $0x10] sm:$0xff]
    %v912 = vld [vmem:[%s2 + $0x18] sm:$0xff]
    %v913 = vld [vmem:[%s3] sm:$0xff]
    %v914 = vld [vmem:[%s3 + $0x8] sm:$0xff]
    %v915 = vld [vmem:[%s3 + $0x10] sm:$0xff]
    %v916 = vld [vmem:[%s3 + $0x18] sm:$0xff]
    %v917 = vadd.f32 %v785, %v787
    %v918 = vadd.f32 %v917, %v891
    %v919 = vsel %vm690, %v893, 0.0
    %v920 = vadd.f32 %v918, %v919
    %921 = vadd.xlane.f32.xlu0 %v920
    %v922 = vpop.xlane.xlu0 %921
    %v923 = vadd.f32 %v789, %v791
    %v924 = vadd.f32 %v923, %v895
    %v925 = vsel %vm690, %v897, 0.0
    %v926 = vadd.f32 %v924, %v925
    %927 = vadd.xlane.f32.xlu0 %v926
    %v928 = vpop.xlane.xlu0 %927
    %v929 = vadd.f32 %v795, %v797
    %v930 = vadd.f32 %v929, %v901
    %v931 = vsel %vm690, %v903, 0.0
    %v932 = vadd.f32 %v930, %v931
    %933 = vadd.xlane.f32.xlu0 %v932
    %v934 = vpop.xlane.xlu0 %933
    %v935 = vadd.f32 %v799, %v801
    %v936 = vadd.f32 %v935, %v905
    %v937 = vsel %vm690, %v907, 0.0
    %v938 = vadd.f32 %v936, %v937
    %939 = vadd.xlane.f32.xlu0 %v938
    %v940 = vpop.xlane.xlu0 %939
    %v941 = vmul.f32 %v785, %v785
    %v942 = vmul.f32 %v787, %v787
    %v943 = vmul.f32 %v891, %v891
    %v944 = vmul.f32 %v893, %v893
    %v945 = vmul.f32 %v789, %v789
    %v946 = vmul.f32 %v791, %v791
    %v947 = vmul.f32 %v895, %v895
    %v948 = vmul.f32 %v897, %v897
    %v949 = vmul.f32 %v795, %v795
    %v950 = vmul.f32 %v797, %v797
    %v951 = vmul.f32 %v901, %v901
    %v952 = vmul.f32 %v903, %v903
    %v953 = vmul.f32 %v799, %v799
    %v954 = vmul.f32 %v801, %v801
    %v955 = vmul.f32 %v905, %v905
    %v956 = vmul.f32 %v907, %v907
    %v957 = vadd.f32 %v941, %v942
    %v958 = vadd.f32 %v957, %v943
    %v959 = vsel %vm690, %v944, 0.0
    %v960 = vadd.f32 %v958, %v959
    %961 = vadd.xlane.f32.xlu0 %v960
    %v962 = vpop.xlane.xlu0 %961
    %v963 = vadd.f32 %v945, %v946
    %v964 = vadd.f32 %v963, %v947
    %v965 = vsel %vm690, %v948, 0.0
    %v966 = vadd.f32 %v964, %v965
    %967 = vadd.xlane.f32.xlu0 %v966
    %v968 = vpop.xlane.xlu0 %967
    %v969 = vadd.f32 %v949, %v950
    %v970 = vadd.f32 %v969, %v951
    %v971 = vsel %vm690, %v952, 0.0
    %v972 = vadd.f32 %v970, %v971
    %973 = vadd.xlane.f32.xlu0 %v972
    %v974 = vpop.xlane.xlu0 %973
    %v975 = vadd.f32 %v953, %v954
    %v976 = vadd.f32 %v975, %v955
    %v977 = vsel %vm690, %v956, 0.0
    %v978 = vadd.f32 %v976, %v977
    %979 = vadd.xlane.f32.xlu0 %v978
    %v980 = vpop.xlane.xlu0 %979
    %v981 = vmul.f32 %v922, 0.0025
    %v982 = vmul.f32 %v928, 0.0025
    %v983 = vmul.f32 %v934, 0.0025
    %v984 = vmul.f32 %v940, 0.0025
    %v985 = vmul.f32 %v962, 0.0025
    %v986 = vmul.f32 %v968, 0.0025
    %v987 = vmul.f32 %v974, 0.0025
    %v988 = vmul.f32 %v980, 0.0025
    %v989 = vmul.f32 %v981, %v981
    %v990 = vmul.f32 %v982, %v982
    %v991 = vmul.f32 %v983, %v983
    %v992 = vmul.f32 %v984, %v984
    %v993 = vsub.f32 %v985, %v989
    %v994 = vsub.f32 %v986, %v990
    %v995 = vsub.f32 %v987, %v991
    %v996 = vsub.f32 %v988, %v992
    %v997 = vmax.f32 %v993, 0.0
    %v998 = vmax.f32 %v994, 0.0
    %v999 = vmax.f32 %v995, 0.0
    %v1000 = vmax.f32 %v996, 0.0
    %v1001 = vadd.f32 %v997, 1e-05
    %v1002 = vadd.f32 %v998, 1e-05
    %v1003 = vadd.f32 %v999, 1e-05
    %v1004 = vadd.f32 %v1000, 1e-05
    %v1005 = vrsqrt.pop %v1001
    %v1006 = vrsqrt.pop %v1002
    %v1007 = vrsqrt.pop %v1003
    %v1008 = vrsqrt.pop %v1004
    %v1009 = vmul.f32 %v909, %v1005
    %v1010 = vmul.f32 %v910, %v1006
    %v1011 = vmul.f32 %v911, %v1007
    %v1012 = vmul.f32 %v912, %v1008
    %v1013 = vmul.f32 %v981, %v1009
    %v1014 = vmul.f32 %v982, %v1010
    %v1015 = vmul.f32 %v983, %v1011
    %v1016 = vmul.f32 %v984, %v1012
    %v1017 = vsub.f32 %v913, %v1013
    %v1018 = vsub.f32 %v914, %v1014
    %v1019 = vsub.f32 %v915, %v1015
    %v1020 = vsub.f32 %v916, %v1016
    %1022 = vset.pattern.permute.xlu0 0
    %1023 = vperm.xlu0 %1022, %v1009
    %v1024 = vpop.permute.xlu0 %1023
    %1027 = vset.pattern.permute.xlu0 0
    %1028 = vperm.xlu0 %1027, %v1010
    %v1029 = vpop.permute.xlu0 %1028
    %1032 = vset.pattern.permute.xlu0 0
    %1033 = vperm.xlu0 %1032, %v1011
    %v1034 = vpop.permute.xlu0 %1033
    %1037 = vset.pattern.permute.xlu0 0
    %1038 = vperm.xlu0 %1037, %v1012
    %v1039 = vpop.permute.xlu0 %1038
    %v1041 = vmul.f32 %v785, %v1024
    %v1042 = vmul.f32 %v787, %v1024
    %v1043 = vmul.f32 %v891, %v1024
    %v1044 = vmul.f32 %v893, %v1024
    %v1045 = vmul.f32 %v789, %v1029
    %v1046 = vmul.f32 %v791, %v1029
    %v1047 = vmul.f32 %v895, %v1029
    %v1048 = vmul.f32 %v897, %v1029
    %v1049 = vmul.f32 %v795, %v1034
    %v1050 = vmul.f32 %v797, %v1034
    %v1051 = vmul.f32 %v901, %v1034
    %v1052 = vmul.f32 %v903, %v1034
    %v1053 = vmul.f32 %v799, %v1039
    %v1054 = vmul.f32 %v801, %v1039
    %v1055 = vmul.f32 %v905, %v1039
    %v1056 = vmul.f32 %v907, %v1039
    %1058 = vset.pattern.permute.xlu0 0
    %1059 = vperm.xlu0 %1058, %v1017
    %v1060 = vpop.permute.xlu0 %1059
    %1063 = vset.pattern.permute.xlu0 0
    %1064 = vperm.xlu0 %1063, %v1018
    %v1065 = vpop.permute.xlu0 %1064
    %1068 = vset.pattern.permute.xlu0 0
    %1069 = vperm.xlu0 %1068, %v1019
    %v1070 = vpop.permute.xlu0 %1069
    %1073 = vset.pattern.permute.xlu0 0
    %1074 = vperm.xlu0 %1073, %v1020
    %v1075 = vpop.permute.xlu0 %1074
    %v1077 = vadd.f32 %v1041, %v1060
    %v1078 = vadd.f32 %v1042, %v1060
    %v1079 = vadd.f32 %v1043, %v1060
    %v1080 = vadd.f32 %v1044, %v1060
    %v1081 = vadd.f32 %v1045, %v1065
    %v1082 = vadd.f32 %v1046, %v1065
    %v1083 = vadd.f32 %v1047, %v1065
    %v1084 = vadd.f32 %v1048, %v1065
    %v1085 = vadd.f32 %v1049, %v1070
    %v1086 = vadd.f32 %v1050, %v1070
    %v1087 = vadd.f32 %v1051, %v1070
    %v1088 = vadd.f32 %v1052, %v1070
    %v1089 = vadd.f32 %v1053, %v1075
    %v1090 = vadd.f32 %v1054, %v1075
    %v1091 = vadd.f32 %v1055, %v1075
    %v1092 = vadd.f32 %v1056, %v1075
    %v1093 = vmax.f32 %v1077, 0.0
    %v1094 = vmax.f32 %v1078, 0.0
    %v1095 = vmax.f32 %v1079, 0.0
    %v1096 = vmax.f32 %v1080, 0.0
    %v1097 = vmax.f32 %v1081, 0.0
    %v1098 = vmax.f32 %v1082, 0.0
    %v1099 = vmax.f32 %v1083, 0.0
    %v1100 = vmax.f32 %v1084, 0.0
    %v1101 = vmax.f32 %v1085, 0.0
    %v1102 = vmax.f32 %v1086, 0.0
    %v1103 = vmax.f32 %v1087, 0.0
    %v1104 = vmax.f32 %v1088, 0.0
    %v1105 = vmax.f32 %v1089, 0.0
    %v1106 = vmax.f32 %v1090, 0.0
    %v1107 = vmax.f32 %v1091, 0.0
    %v1108 = vmax.f32 %v1092, 0.0
    %v1109 = vpack.c.bf16 %v1097, %v1093
    %v1110 = vpack.c.bf16 %v1098, %v1094
    %v1111 = vpack.c.bf16 %v1099, %v1095
    %v1112 = vpack.c.bf16 %v1100, %v1096
    %v1113 = vpack.c.bf16 %v1105, %v1101
    %v1114 = vpack.c.bf16 %v1106, %v1102
    %v1115 = vpack.c.bf16 %v1107, %v1103
    %v1116 = vpack.c.bf16 %v1108, %v1104
    %v1117 = vld [vmem:[%s4] sm:$0xf]
    %v1118 = vld [vmem:[%s4 + $0x4] sm:$0xf]
    %v1119 = vld [vmem:[%s4 + $0x8] sm:$0xf]
    %v1120 = vld [vmem:[%s4 + $0xc] sm:$0xf]
    %s1121 = scalar_lea.vmem %s4, 16
    %v1122 = vld [vmem:[%s1121] sm:$0xf]
    %v1123 = vld [vmem:[%s1121 + $0x4] sm:$0xf]
    %v1124 = vld [vmem:[%s1121 + $0x8] sm:$0xf]
    %v1125 = vld [vmem:[%s1121 + $0xc] sm:$0xf]
    %v1130 = vunpack.c.l.b16 %v1122
    %v1131 = vunpack.c.l.b16 %v1123
    %v1132 = vunpack.c.l.b16 %v1124
    %v1133 = vunpack.c.l.b16 %v1125
    %v1134 = vpack.c.b16 %v1131, %v1130
    %v1135 = vpack.c.b16 %v1133, %v1132
    %1138 = vrot.lane.b32.xlu0 %v1109, 112
    %v1139 = vpop.permute.xlu0 %1138
    %1140 = vrot.lane.b32.xlu0 %v1113, 112
    %v1141 = vpop.permute.xlu0 %1140
    %vm1144 = vcmask 261120
    %v1146 = vsel %vm1144, %v1134, 0
    %v1149 = vsel %vm1144, %v1135, 0
    %1151 = vmatprep.subr.bf16.mxu0 0
    %1152 = vmatpush1.bf16.msra.mxu0 0
    %1153 = vmatprep.subr.bf16.mxu0 0
    %1154 = vmatpush1.bf16.msra.mxu0 0
    %1155 = vmatprep.subr.bf16.mxu0 0
    %1156 = vmatpush1.bf16.msra.mxu0 0
    %1157 = vmatprep.subr.bf16.mxu0 0
    %1158 = vmatpush1.bf16.msra.mxu0 0
    %1159 = vmatprep.subr.bf16.mxu0 0
    %1160 = vmatpush1.bf16.msra.mxu0 0
    %1161 = vmatprep.subr.bf16.mxu0 0
    %1162 = vmatpush1.bf16.msra.mxu0 0
    %1163 = vmatprep.subr.bf16.mxu0 0
    %1164 = vmatpush1.bf16.msra.mxu0 %v1141
    %1165 = vmatprep.subr.bf16.mxu0 0
    %1166 = vmatpush1.bf16.msra.mxu0 %v1139
    %1167 = vmatprep.subr.bf16.mxu0 0
    %1168 = vmatpush2.bf16.msra.mxu0 0
    %1169 = vmatprep.subr.bf16.mxu0 0
    %1170 = vmatpush2.bf16.msra.mxu0 0
    %1171 = vmatprep.subr.bf16.mxu0 0
    %1172 = vmatpush2.bf16.msra.mxu0 0
    %1173 = vmatprep.subr.bf16.mxu0 0
    %1174 = vmatpush2.bf16.msra.mxu0 0
    %1175 = vmatprep.subr.bf16.mxu0 0
    %1176 = vmatpush2.bf16.msra.mxu0 0
    %1177 = vmatprep.subr.bf16.mxu0 0
    %1178 = vmatpush2.bf16.msra.mxu0 0
    %1179 = vmatprep.subr.bf16.mxu0 0
    %1180 = vmatpush2.bf16.msra.mxu0 0
    %1181 = vmatprep.subr.bf16.mxu0 0
    %1182 = vmatpush2.bf16.msra.mxu0 0
    %1183 = vmatprep.mubr.bf16.mxu0 0
    %1184 = vmatmul.mubr.bf16.gmra.mxu0 %v1146
    %v1185 = vpop.f32.mrf.mxu0
    %v1186 = vadd.f32 0.0, %v1185
    %v1187 = vpop.f32.mrf.mxu0
    %v1188 = vpop.f32.mrf.mxu0
    %v1189 = vadd.f32 0.0, %v1188
    %v1190 = vpop.f32.mrf.mxu0
    %1191 = vmatprep.mubr.bf16.mxu0 0
    %1192 = vmatmul.mubr.bf16.gmra.mxu0 %v1149
    %v1193 = vpop.f32.mrf.mxu0
    %v1194 = vadd.f32 0.0, %v1193
    %v1195 = vpop.f32.mrf.mxu0
    %v1196 = vpop.f32.mrf.mxu0
    %v1197 = vadd.f32 0.0, %v1196
    %v1198 = vpop.f32.mrf.mxu0
    %1199 = vdwg.mxu0
    %v1204 = vunpack.c.l.b16 %v1117
    %v1205 = vunpack.c.l.b16 %v1118
    %v1206 = vunpack.c.l.b16 %v1119
    %v1207 = vunpack.c.l.b16 %v1120
    %v1208 = vpack.c.b16 %v1205, %v1204
    %v1209 = vpack.c.b16 %v1207, %v1206
    %v1211 = vsel %vm1144, %v1208, 0
    %v1214 = vsel %vm1144, %v1209, 0
    %1216 = vmatprep.subr.bf16.mxu0 0
    %1217 = vmatpush1.bf16.msra.mxu0 0
    %1218 = vmatprep.subr.bf16.mxu0 0
    %1219 = vmatpush1.bf16.msra.mxu0 0
    %1220 = vmatprep.subr.bf16.mxu0 0
    %1221 = vmatpush1.bf16.msra.mxu0 0
    %1222 = vmatprep.subr.bf16.mxu0 0
    %1223 = vmatpush1.bf16.msra.mxu0 0
    %1224 = vmatprep.subr.bf16.mxu0 0
    %1225 = vmatpush1.bf16.msra.mxu0 0
    %1226 = vmatprep.subr.bf16.mxu0 0
    %1227 = vmatpush1.bf16.msra.mxu0 0
    %1228 = vmatprep.subr.bf16.mxu0 0
    %1229 = vmatpush1.bf16.msra.mxu0 %v1113
    %1230 = vmatprep.subr.bf16.mxu0 0
    %1231 = vmatpush1.bf16.msra.mxu0 %v1109
    %1232 = vmatprep.subr.bf16.mxu0 0
    %1233 = vmatpush2.bf16.msra.mxu0 0
    %1234 = vmatprep.subr.bf16.mxu0 0
    %1235 = vmatpush2.bf16.msra.mxu0 0
    %1236 = vmatprep.subr.bf16.mxu0 0
    %1237 = vmatpush2.bf16.msra.mxu0 0
    %1238 = vmatprep.subr.bf16.mxu0 0
    %1239 = vmatpush2.bf16.msra.mxu0 0
    %1240 = vmatprep.subr.bf16.mxu0 0
    %1241 = vmatpush2.bf16.msra.mxu0 0
    %1242 = vmatprep.subr.bf16.mxu0 0
    %1243 = vmatpush2.bf16.msra.mxu0 0
    %1244 = vmatprep.subr.bf16.mxu0 0
    %1245 = vmatpush2.bf16.msra.mxu0 0
    %1246 = vmatprep.subr.bf16.mxu0 0
    %1247 = vmatpush2.bf16.msra.mxu0 0
    %1248 = vmatprep.mubr.bf16.mxu0 0
    %1249 = vmatmul.mubr.bf16.gmra.mxu0 %v1211
    %v1250 = vpop.f32.mrf.mxu0
    %v1251 = vadd.f32 %v1186, %v1250
    %v1252 = vpop.f32.mrf.mxu0
    %v1253 = vpop.f32.mrf.mxu0
    %v1254 = vadd.f32 %v1189, %v1253
    %v1255 = vpop.f32.mrf.mxu0
    %1256 = vmatprep.mubr.bf16.mxu0 0
    %1257 = vmatmul.mubr.bf16.gmra.mxu0 %v1214
    %v1258 = vpop.f32.mrf.mxu0
    %v1259 = vadd.f32 %v1194, %v1258
    %v1260 = vpop.f32.mrf.mxu0
    %v1261 = vpop.f32.mrf.mxu0
    %v1262 = vadd.f32 %v1197, %v1261
    %v1263 = vpop.f32.mrf.mxu0
    %1264 = vdwg.mxu0
    %s1265 = scalar_lea.vmem %s4, 32
    %v1266 = vld [vmem:[%s1265] sm:$0xf]
    %v1267 = vld [vmem:[%s1265 + $0x4] sm:$0xf]
    %v1268 = vld [vmem:[%s1265 + $0x8] sm:$0xf]
    %v1269 = vld [vmem:[%s1265 + $0xc] sm:$0xf]
    %v1274 = vunpack.c.l.b16 %v1266
    %v1275 = vunpack.c.l.b16 %v1267
    %v1276 = vunpack.c.l.b16 %v1268
    %v1277 = vunpack.c.l.b16 %v1269
    %v1278 = vpack.c.b16 %v1275, %v1274
    %v1279 = vpack.c.b16 %v1277, %v1276
    %1280 = vrot.lane.b32.xlu0 %v1109, 96
    %v1281 = vpop.permute.xlu0 %1280
    %1282 = vrot.lane.b32.xlu0 %v1113, 96
    %v1283 = vpop.permute.xlu0 %1282
    %v1287 = vsel %vm1144, %v1278, 0
    %v1290 = vsel %vm1144, %v1279, 0
    %1292 = vmatprep.subr.bf16.mxu0 0
    %1293 = vmatpush1.bf16.msra.mxu0 0
    %1294 = vmatprep.subr.bf16.mxu0 0
    %1295 = vmatpush1.bf16.msra.mxu0 0
    %1296 = vmatprep.subr.bf16.mxu0 0
    %1297 = vmatpush1.bf16.msra.mxu0 0
    %1298 = vmatprep.subr.bf16.mxu0 0
    %1299 = vmatpush1.bf16.msra.mxu0 0
    %1300 = vmatprep.subr.bf16.mxu0 0
    %1301 = vmatpush1.bf16.msra.mxu0 0
    %1302 = vmatprep.subr.bf16.mxu0 0
    %1303 = vmatpush1.bf16.msra.mxu0 0
    %1304 = vmatprep.subr.bf16.mxu0 0
    %1305 = vmatpush1.bf16.msra.mxu0 %v1283
    %1306 = vmatprep.subr.bf16.mxu0 0
    %1307 = vmatpush1.bf16.msra.mxu0 %v1281
    %1308 = vmatprep.subr.bf16.mxu0 0
    %1309 = vmatpush2.bf16.msra.mxu0 0
    %1310 = vmatprep.subr.bf16.mxu0 0
    %1311 = vmatpush2.bf16.msra.mxu0 0
    %1312 = vmatprep.subr.bf16.mxu0 0
    %1313 = vmatpush2.bf16.msra.mxu0 0
    %1314 = vmatprep.subr.bf16.mxu0 0
    %1315 = vmatpush2.bf16.msra.mxu0 0
    %1316 = vmatprep.subr.bf16.mxu0 0
    %1317 = vmatpush2.bf16.msra.mxu0 0
    %1318 = vmatprep.subr.bf16.mxu0 0
    %1319 = vmatpush2.bf16.msra.mxu0 0
    %1320 = vmatprep.subr.bf16.mxu0 0
    %1321 = vmatpush2.bf16.msra.mxu0 0
    %1322 = vmatprep.subr.bf16.mxu0 0
    %1323 = vmatpush2.bf16.msra.mxu0 0
    %1324 = vmatprep.mubr.bf16.mxu0 0
    %1325 = vmatmul.mubr.bf16.gmra.mxu0 %v1287
    %v1326 = vpop.f32.mrf.mxu0
    %v1327 = vadd.f32 0.0, %v1326
    %v1328 = vpop.f32.mrf.mxu0
    %v1329 = vpop.f32.mrf.mxu0
    %v1330 = vadd.f32 0.0, %v1329
    %v1331 = vpop.f32.mrf.mxu0
    %1332 = vmatprep.mubr.bf16.mxu0 0
    %1333 = vmatmul.mubr.bf16.gmra.mxu0 %v1290
    %v1334 = vpop.f32.mrf.mxu0
    %v1335 = vadd.f32 0.0, %v1334
    %v1336 = vpop.f32.mrf.mxu0
    %v1337 = vpop.f32.mrf.mxu0
    %v1338 = vadd.f32 0.0, %v1337
    %v1339 = vpop.f32.mrf.mxu0
    %1340 = vdwg.mxu0
    %v1341 = vadd.f32 %v1251, %v1327
    %v1342 = vadd.f32 %v1254, %v1330
    %v1343 = vadd.f32 %v1259, %v1335
    %v1344 = vadd.f32 %v1262, %v1338
    %s1345 = scalar_lea.vmem %s4, 48
    %v1346 = vld [vmem:[%s1345] sm:$0xf]
    %v1347 = vld [vmem:[%s1345 + $0x4] sm:$0xf]
    %v1348 = vld [vmem:[%s1345 + $0x8] sm:$0xf]
    %v1349 = vld [vmem:[%s1345 + $0xc] sm:$0xf]
    %v1354 = vunpack.c.l.b16 %v1346
    %v1355 = vunpack.c.l.b16 %v1347
    %v1356 = vunpack.c.l.b16 %v1348
    %v1357 = vunpack.c.l.b16 %v1349
    %v1358 = vpack.c.b16 %v1355, %v1354
    %v1359 = vpack.c.b16 %v1357, %v1356
    %1360 = vrot.lane.b32.xlu0 %v1109, 80
    %v1361 = vpop.permute.xlu0 %1360
    %1362 = vrot.lane.b32.xlu0 %v1113, 80
    %v1363 = vpop.permute.xlu0 %1362
    %v1367 = vsel %vm1144, %v1358, 0
    %v1370 = vsel %vm1144, %v1359, 0
    %1372 = vmatprep.subr.bf16.mxu0 0
    %1373 = vmatpush1.bf16.msra.mxu0 0
    %1374 = vmatprep.subr.bf16.mxu0 0
    %1375 = vmatpush1.bf16.msra.mxu0 0
    %1376 = vmatprep.subr.bf16.mxu0 0
    %1377 = vmatpush1.bf16.msra.mxu0 0
    %1378 = vmatprep.subr.bf16.mxu0 0
    %1379 = vmatpush1.bf16.msra.mxu0 0
    %1380 = vmatprep.subr.bf16.mxu0 0
    %1381 = vmatpush1.bf16.msra.mxu0 0
    %1382 = vmatprep.subr.bf16.mxu0 0
    %1383 = vmatpush1.bf16.msra.mxu0 0
    %1384 = vmatprep.subr.bf16.mxu0 0
    %1385 = vmatpush1.bf16.msra.mxu0 %v1363
    %1386 = vmatprep.subr.bf16.mxu0 0
    %1387 = vmatpush1.bf16.msra.mxu0 %v1361
    %1388 = vmatprep.subr.bf16.mxu0 0
    %1389 = vmatpush2.bf16.msra.mxu0 0
    %1390 = vmatprep.subr.bf16.mxu0 0
    %1391 = vmatpush2.bf16.msra.mxu0 0
    %1392 = vmatprep.subr.bf16.mxu0 0
    %1393 = vmatpush2.bf16.msra.mxu0 0
    %1394 = vmatprep.subr.bf16.mxu0 0
    %1395 = vmatpush2.bf16.msra.mxu0 0
    %1396 = vmatprep.subr.bf16.mxu0 0
    %1397 = vmatpush2.bf16.msra.mxu0 0
    %1398 = vmatprep.subr.bf16.mxu0 0
    %1399 = vmatpush2.bf16.msra.mxu0 0
    %1400 = vmatprep.subr.bf16.mxu0 0
    %1401 = vmatpush2.bf16.msra.mxu0 0
    %1402 = vmatprep.subr.bf16.mxu0 0
    %1403 = vmatpush2.bf16.msra.mxu0 0
    %1404 = vmatprep.mubr.bf16.mxu0 0
    %1405 = vmatmul.mubr.bf16.gmra.mxu0 %v1367
    %v1406 = vpop.f32.mrf.mxu0
    %v1407 = vadd.f32 0.0, %v1406
    %v1408 = vpop.f32.mrf.mxu0
    %v1409 = vpop.f32.mrf.mxu0
    %v1410 = vadd.f32 0.0, %v1409
    %v1411 = vpop.f32.mrf.mxu0
    %1412 = vmatprep.mubr.bf16.mxu0 0
    %1413 = vmatmul.mubr.bf16.gmra.mxu0 %v1370
    %v1414 = vpop.f32.mrf.mxu0
    %v1415 = vadd.f32 0.0, %v1414
    %v1416 = vpop.f32.mrf.mxu0
    %v1417 = vpop.f32.mrf.mxu0
    %v1418 = vadd.f32 0.0, %v1417
    %v1419 = vpop.f32.mrf.mxu0
    %1420 = vdwg.mxu0
    %v1421 = vadd.f32 %v1341, %v1407
    %v1422 = vadd.f32 %v1342, %v1410
    %v1423 = vadd.f32 %v1343, %v1415
    %v1424 = vadd.f32 %v1344, %v1418
    %s1425 = scalar_lea.vmem %s4, 64
    %v1426 = vld [vmem:[%s1425] sm:$0xf]
    %v1427 = vld [vmem:[%s1425 + $0x4] sm:$0xf]
    %v1428 = vld [vmem:[%s1425 + $0x8] sm:$0xf]
    %v1429 = vld [vmem:[%s1425 + $0xc] sm:$0xf]
    %v1434 = vunpack.c.l.b16 %v1426
    %v1435 = vunpack.c.l.b16 %v1427
    %v1436 = vunpack.c.l.b16 %v1428
    %v1437 = vunpack.c.l.b16 %v1429
    %v1438 = vpack.c.b16 %v1435, %v1434
    %v1439 = vpack.c.b16 %v1437, %v1436
    %1440 = vrot.lane.b32.xlu0 %v1109, 64
    %v1441 = vpop.permute.xlu0 %1440
    %1442 = vrot.lane.b32.xlu0 %v1113, 64
    %v1443 = vpop.permute.xlu0 %1442
    %v1447 = vsel %vm1144, %v1438, 0
    %v1450 = vsel %vm1144, %v1439, 0
    %1452 = vmatprep.subr.bf16.mxu0 0
    %1453 = vmatpush1.bf16.msra.mxu0 0
    %1454 = vmatprep.subr.bf16.mxu0 0
    %1455 = vmatpush1.bf16.msra.mxu0 0
    %1456 = vmatprep.subr.bf16.mxu0 0
    %1457 = vmatpush1.bf16.msra.mxu0 0
    %1458 = vmatprep.subr.bf16.mxu0 0
    %1459 = vmatpush1.bf16.msra.mxu0 0
    %1460 = vmatprep.subr.bf16.mxu0 0
    %1461 = vmatpush1.bf16.msra.mxu0 0
    %1462 = vmatprep.subr.bf16.mxu0 0
    %1463 = vmatpush1.bf16.msra.mxu0 0
    %1464 = vmatprep.subr.bf16.mxu0 0
    %1465 = vmatpush1.bf16.msra.mxu0 %v1443
    %1466 = vmatprep.subr.bf16.mxu0 0
    %1467 = vmatpush1.bf16.msra.mxu0 %v1441
    %1468 = vmatprep.subr.bf16.mxu0 0
    %1469 = vmatpush2.bf16.msra.mxu0 0
    %1470 = vmatprep.subr.bf16.mxu0 0
    %1471 = vmatpush2.bf16.msra.mxu0 0
    %1472 = vmatprep.subr.bf16.mxu0 0
    %1473 = vmatpush2.bf16.msra.mxu0 0
    %1474 = vmatprep.subr.bf16.mxu0 0
    %1475 = vmatpush2.bf16.msra.mxu0 0
    %1476 = vmatprep.subr.bf16.mxu0 0
    %1477 = vmatpush2.bf16.msra.mxu0 0
    %1478 = vmatprep.subr.bf16.mxu0 0
    %1479 = vmatpush2.bf16.msra.mxu0 0
    %1480 = vmatprep.subr.bf16.mxu0 0
    %1481 = vmatpush2.bf16.msra.mxu0 0
    %1482 = vmatprep.subr.bf16.mxu0 0
    %1483 = vmatpush2.bf16.msra.mxu0 0
    %1484 = vmatprep.mubr.bf16.mxu0 0
    %1485 = vmatmul.mubr.bf16.gmra.mxu0 %v1447
    %v1486 = vpop.f32.mrf.mxu0
    %v1487 = vadd.f32 0.0, %v1486
    %v1488 = vpop.f32.mrf.mxu0
    %v1489 = vpop.f32.mrf.mxu0
    %v1490 = vadd.f32 0.0, %v1489
    %v1491 = vpop.f32.mrf.mxu0
    %1492 = vmatprep.mubr.bf16.mxu0 0
    %1493 = vmatmul.mubr.bf16.gmra.mxu0 %v1450
    %v1494 = vpop.f32.mrf.mxu0
    %v1495 = vadd.f32 0.0, %v1494
    %v1496 = vpop.f32.mrf.mxu0
    %v1497 = vpop.f32.mrf.mxu0
    %v1498 = vadd.f32 0.0, %v1497
    %v1499 = vpop.f32.mrf.mxu0
    %1500 = vdwg.mxu0
    %v1501 = vadd.f32 %v1421, %v1487
    %v1502 = vadd.f32 %v1422, %v1490
    %v1503 = vadd.f32 %v1423, %v1495
    %v1504 = vadd.f32 %v1424, %v1498
    %s1505 = scalar_lea.vmem %s4, 80
    %v1506 = vld [vmem:[%s1505] sm:$0xf]
    %v1507 = vld [vmem:[%s1505 + $0x4] sm:$0xf]
    %v1508 = vld [vmem:[%s1505 + $0x8] sm:$0xf]
    %v1509 = vld [vmem:[%s1505 + $0xc] sm:$0xf]
    %v1514 = vunpack.c.l.b16 %v1506
    %v1515 = vunpack.c.l.b16 %v1507
    %v1516 = vunpack.c.l.b16 %v1508
    %v1517 = vunpack.c.l.b16 %v1509
    %v1518 = vpack.c.b16 %v1515, %v1514
    %v1519 = vpack.c.b16 %v1517, %v1516
    %1520 = vrot.lane.b32.xlu0 %v1109, 48
    %v1521 = vpop.permute.xlu0 %1520
    %1522 = vrot.lane.b32.xlu0 %v1113, 48
    %v1523 = vpop.permute.xlu0 %1522
    %v1527 = vsel %vm1144, %v1518, 0
    %v1530 = vsel %vm1144, %v1519, 0
    %1532 = vmatprep.subr.bf16.mxu0 0
    %1533 = vmatpush1.bf16.msra.mxu0 0
    %1534 = vmatprep.subr.bf16.mxu0 0
    %1535 = vmatpush1.bf16.msra.mxu0 0
    %1536 = vmatprep.subr.bf16.mxu0 0
    %1537 = vmatpush1.bf16.msra.mxu0 0
    %1538 = vmatprep.subr.bf16.mxu0 0
    %1539 = vmatpush1.bf16.msra.mxu0 0
    %1540 = vmatprep.subr.bf16.mxu0 0
    %1541 = vmatpush1.bf16.msra.mxu0 0
    %1542 = vmatprep.subr.bf16.mxu0 0
    %1543 = vmatpush1.bf16.msra.mxu0 0
    %1544 = vmatprep.subr.bf16.mxu0 0
    %1545 = vmatpush1.bf16.msra.mxu0 %v1523
    %1546 = vmatprep.subr.bf16.mxu0 0
    %1547 = vmatpush1.bf16.msra.mxu0 %v1521
    %1548 = vmatprep.subr.bf16.mxu0 0
    %1549 = vmatpush2.bf16.msra.mxu0 0
    %1550 = vmatprep.subr.bf16.mxu0 0
    %1551 = vmatpush2.bf16.msra.mxu0 0
    %1552 = vmatprep.subr.bf16.mxu0 0
    %1553 = vmatpush2.bf16.msra.mxu0 0
    %1554 = vmatprep.subr.bf16.mxu0 0
    %1555 = vmatpush2.bf16.msra.mxu0 0
    %1556 = vmatprep.subr.bf16.mxu0 0
    %1557 = vmatpush2.bf16.msra.mxu0 0
    %1558 = vmatprep.subr.bf16.mxu0 0
    %1559 = vmatpush2.bf16.msra.mxu0 0
    %1560 = vmatprep.subr.bf16.mxu0 0
    %1561 = vmatpush2.bf16.msra.mxu0 0
    %1562 = vmatprep.subr.bf16.mxu0 0
    %1563 = vmatpush2.bf16.msra.mxu0 0
    %1564 = vmatprep.mubr.bf16.mxu0 0
    %1565 = vmatmul.mubr.bf16.gmra.mxu0 %v1527
    %v1566 = vpop.f32.mrf.mxu0
    %v1567 = vadd.f32 0.0, %v1566
    %v1568 = vpop.f32.mrf.mxu0
    %v1569 = vpop.f32.mrf.mxu0
    %v1570 = vadd.f32 0.0, %v1569
    %v1571 = vpop.f32.mrf.mxu0
    %1572 = vmatprep.mubr.bf16.mxu0 0
    %1573 = vmatmul.mubr.bf16.gmra.mxu0 %v1530
    %v1574 = vpop.f32.mrf.mxu0
    %v1575 = vadd.f32 0.0, %v1574
    %v1576 = vpop.f32.mrf.mxu0
    %v1577 = vpop.f32.mrf.mxu0
    %v1578 = vadd.f32 0.0, %v1577
    %v1579 = vpop.f32.mrf.mxu0
    %1580 = vdwg.mxu0
    %v1581 = vadd.f32 %v1501, %v1567
    %v1582 = vadd.f32 %v1502, %v1570
    %v1583 = vadd.f32 %v1503, %v1575
    %v1584 = vadd.f32 %v1504, %v1578
    %s1585 = scalar_lea.vmem %s4, 96
    %v1586 = vld [vmem:[%s1585] sm:$0xf]
    %v1587 = vld [vmem:[%s1585 + $0x4] sm:$0xf]
    %v1588 = vld [vmem:[%s1585 + $0x8] sm:$0xf]
    %v1589 = vld [vmem:[%s1585 + $0xc] sm:$0xf]
    %v1594 = vunpack.c.l.b16 %v1586
    %v1595 = vunpack.c.l.b16 %v1587
    %v1596 = vunpack.c.l.b16 %v1588
    %v1597 = vunpack.c.l.b16 %v1589
    %v1598 = vpack.c.b16 %v1595, %v1594
    %v1599 = vpack.c.b16 %v1597, %v1596
    %1600 = vrot.lane.b32.xlu0 %v1109, 32
    %v1601 = vpop.permute.xlu0 %1600
    %1602 = vrot.lane.b32.xlu0 %v1113, 32
    %v1603 = vpop.permute.xlu0 %1602
    %v1607 = vsel %vm1144, %v1598, 0
    %v1610 = vsel %vm1144, %v1599, 0
    %1612 = vmatprep.subr.bf16.mxu0 0
    %1613 = vmatpush1.bf16.msra.mxu0 0
    %1614 = vmatprep.subr.bf16.mxu0 0
    %1615 = vmatpush1.bf16.msra.mxu0 0
    %1616 = vmatprep.subr.bf16.mxu0 0
    %1617 = vmatpush1.bf16.msra.mxu0 0
    %1618 = vmatprep.subr.bf16.mxu0 0
    %1619 = vmatpush1.bf16.msra.mxu0 0
    %1620 = vmatprep.subr.bf16.mxu0 0
    %1621 = vmatpush1.bf16.msra.mxu0 0
    %1622 = vmatprep.subr.bf16.mxu0 0
    %1623 = vmatpush1.bf16.msra.mxu0 0
    %1624 = vmatprep.subr.bf16.mxu0 0
    %1625 = vmatpush1.bf16.msra.mxu0 %v1603
    %1626 = vmatprep.subr.bf16.mxu0 0
    %1627 = vmatpush1.bf16.msra.mxu0 %v1601
    %1628 = vmatprep.subr.bf16.mxu0 0
    %1629 = vmatpush2.bf16.msra.mxu0 0
    %1630 = vmatprep.subr.bf16.mxu0 0
    %1631 = vmatpush2.bf16.msra.mxu0 0
    %1632 = vmatprep.subr.bf16.mxu0 0
    %1633 = vmatpush2.bf16.msra.mxu0 0
    %1634 = vmatprep.subr.bf16.mxu0 0
    %1635 = vmatpush2.bf16.msra.mxu0 0
    %1636 = vmatprep.subr.bf16.mxu0 0
    %1637 = vmatpush2.bf16.msra.mxu0 0
    %1638 = vmatprep.subr.bf16.mxu0 0
    %1639 = vmatpush2.bf16.msra.mxu0 0
    %1640 = vmatprep.subr.bf16.mxu0 0
    %1641 = vmatpush2.bf16.msra.mxu0 0
    %1642 = vmatprep.subr.bf16.mxu0 0
    %1643 = vmatpush2.bf16.msra.mxu0 0
    %1644 = vmatprep.mubr.bf16.mxu0 0
    %1645 = vmatmul.mubr.bf16.gmra.mxu0 %v1607
    %v1646 = vpop.f32.mrf.mxu0
    %v1647 = vadd.f32 0.0, %v1646
    %v1648 = vpop.f32.mrf.mxu0
    %v1649 = vpop.f32.mrf.mxu0
    %v1650 = vadd.f32 0.0, %v1649
    %v1651 = vpop.f32.mrf.mxu0
    %1652 = vmatprep.mubr.bf16.mxu0 0
    %1653 = vmatmul.mubr.bf16.gmra.mxu0 %v1610
    %v1654 = vpop.f32.mrf.mxu0
    %v1655 = vadd.f32 0.0, %v1654
    %v1656 = vpop.f32.mrf.mxu0
    %v1657 = vpop.f32.mrf.mxu0
    %v1658 = vadd.f32 0.0, %v1657
    %v1659 = vpop.f32.mrf.mxu0
    %1660 = vdwg.mxu0
    %v1661 = vadd.f32 %v1581, %v1647
    %v1662 = vadd.f32 %v1582, %v1650
    %v1663 = vadd.f32 %v1583, %v1655
    %v1664 = vadd.f32 %v1584, %v1658
    %s1665 = scalar_lea.vmem %s4, 112
    %v1666 = vld [vmem:[%s1665] sm:$0xf]
    %v1667 = vld [vmem:[%s1665 + $0x4] sm:$0xf]
    %v1668 = vld [vmem:[%s1665 + $0x8] sm:$0xf]
    %v1669 = vld [vmem:[%s1665 + $0xc] sm:$0xf]
    %v1674 = vunpack.c.l.b16 %v1666
    %v1675 = vunpack.c.l.b16 %v1667
    %v1676 = vunpack.c.l.b16 %v1668
    %v1677 = vunpack.c.l.b16 %v1669
    %v1678 = vpack.c.b16 %v1675, %v1674
    %v1679 = vpack.c.b16 %v1677, %v1676
    %1680 = vrot.lane.b32.xlu0 %v1109, 16
    %v1681 = vpop.permute.xlu0 %1680
    %1682 = vrot.lane.b32.xlu0 %v1113, 16
    %v1683 = vpop.permute.xlu0 %1682
    %v1687 = vsel %vm1144, %v1678, 0
    %v1690 = vsel %vm1144, %v1679, 0
    %1692 = vmatprep.subr.bf16.mxu0 0
    %1693 = vmatpush1.bf16.msra.mxu0 0
    %1694 = vmatprep.subr.bf16.mxu0 0
    %1695 = vmatpush1.bf16.msra.mxu0 0
    %1696 = vmatprep.subr.bf16.mxu0 0
    %1697 = vmatpush1.bf16.msra.mxu0 0
    %1698 = vmatprep.subr.bf16.mxu0 0
    %1699 = vmatpush1.bf16.msra.mxu0 0
    %1700 = vmatprep.subr.bf16.mxu0 0
    %1701 = vmatpush1.bf16.msra.mxu0 0
    %1702 = vmatprep.subr.bf16.mxu0 0
    %1703 = vmatpush1.bf16.msra.mxu0 0
    %1704 = vmatprep.subr.bf16.mxu0 0
    %1705 = vmatpush1.bf16.msra.mxu0 %v1683
    %1706 = vmatprep.subr.bf16.mxu0 0
    %1707 = vmatpush1.bf16.msra.mxu0 %v1681
    %1708 = vmatprep.subr.bf16.mxu0 0
    %1709 = vmatpush2.bf16.msra.mxu0 0
    %1710 = vmatprep.subr.bf16.mxu0 0
    %1711 = vmatpush2.bf16.msra.mxu0 0
    %1712 = vmatprep.subr.bf16.mxu0 0
    %1713 = vmatpush2.bf16.msra.mxu0 0
    %1714 = vmatprep.subr.bf16.mxu0 0
    %1715 = vmatpush2.bf16.msra.mxu0 0
    %1716 = vmatprep.subr.bf16.mxu0 0
    %1717 = vmatpush2.bf16.msra.mxu0 0
    %1718 = vmatprep.subr.bf16.mxu0 0
    %1719 = vmatpush2.bf16.msra.mxu0 0
    %1720 = vmatprep.subr.bf16.mxu0 0
    %1721 = vmatpush2.bf16.msra.mxu0 0
    %1722 = vmatprep.subr.bf16.mxu0 0
    %1723 = vmatpush2.bf16.msra.mxu0 0
    %1724 = vmatprep.mubr.bf16.mxu0 0
    %1725 = vmatmul.mubr.bf16.gmra.mxu0 %v1687
    %v1726 = vpop.f32.mrf.mxu0
    %v1727 = vadd.f32 0.0, %v1726
    %v1728 = vpop.f32.mrf.mxu0
    %v1729 = vpop.f32.mrf.mxu0
    %v1730 = vadd.f32 0.0, %v1729
    %v1731 = vpop.f32.mrf.mxu0
    %1732 = vmatprep.mubr.bf16.mxu0 0
    %1733 = vmatmul.mubr.bf16.gmra.mxu0 %v1690
    %v1734 = vpop.f32.mrf.mxu0
    %v1735 = vadd.f32 0.0, %v1734
    %v1736 = vpop.f32.mrf.mxu0
    %v1737 = vpop.f32.mrf.mxu0
    %v1738 = vadd.f32 0.0, %v1737
    %v1739 = vpop.f32.mrf.mxu0
    %1740 = vdwg.mxu0
    %v1741 = vadd.f32 %v1661, %v1727
    %v1742 = vadd.f32 %v1662, %v1730
    %v1743 = vadd.f32 %v1663, %v1735
    %v1744 = vadd.f32 %v1664, %v1738
    %s1745 = scalar_lea.vmem %s4, 128
    %v1746 = vld [vmem:[%s1745] sm:$0xf]
    %v1747 = vld [vmem:[%s1745 + $0x4] sm:$0xf]
    %v1748 = vld [vmem:[%s1745 + $0x8] sm:$0xf]
    %v1749 = vld [vmem:[%s1745 + $0xc] sm:$0xf]
    %v1754 = vunpack.c.l.b16 %v1746
    %v1755 = vunpack.c.l.b16 %v1747
    %v1756 = vunpack.c.l.b16 %v1748
    %v1757 = vunpack.c.l.b16 %v1749
    %v1758 = vpack.c.b16 %v1755, %v1754
    %v1759 = vpack.c.b16 %v1757, %v1756
    %v1761 = vsel %vm1144, %v1758, 0
    %v1764 = vsel %vm1144, %v1759, 0
    %1766 = vmatprep.subr.bf16.mxu0 0
    %1767 = vmatpush1.bf16.msra.mxu0 0
    %1768 = vmatprep.subr.bf16.mxu0 0
    %1769 = vmatpush1.bf16.msra.mxu0 0
    %1770 = vmatprep.subr.bf16.mxu0 0
    %1771 = vmatpush1.bf16.msra.mxu0 0
    %1772 = vmatprep.subr.bf16.mxu0 0
    %1773 = vmatpush1.bf16.msra.mxu0 0
    %1774 = vmatprep.subr.bf16.mxu0 0
    %1775 = vmatpush1.bf16.msra.mxu0 0
    %1776 = vmatprep.subr.bf16.mxu0 0
    %1777 = vmatpush1.bf16.msra.mxu0 0
    %1778 = vmatprep.subr.bf16.mxu0 0
    %1779 = vmatpush1.bf16.msra.mxu0 %v1114
    %1780 = vmatprep.subr.bf16.mxu0 0
    %1781 = vmatpush1.bf16.msra.mxu0 %v1110
    %1782 = vmatprep.subr.bf16.mxu0 0
    %1783 = vmatpush2.bf16.msra.mxu0 0
    %1784 = vmatprep.subr.bf16.mxu0 0
    %1785 = vmatpush2.bf16.msra.mxu0 0
    %1786 = vmatprep.subr.bf16.mxu0 0
    %1787 = vmatpush2.bf16.msra.mxu0 0
    %1788 = vmatprep.subr.bf16.mxu0 0
    %1789 = vmatpush2.bf16.msra.mxu0 0
    %1790 = vmatprep.subr.bf16.mxu0 0
    %1791 = vmatpush2.bf16.msra.mxu0 0
    %1792 = vmatprep.subr.bf16.mxu0 0
    %1793 = vmatpush2.bf16.msra.mxu0 0
    %1794 = vmatprep.subr.bf16.mxu0 0
    %1795 = vmatpush2.bf16.msra.mxu0 0
    %1796 = vmatprep.subr.bf16.mxu0 0
    %1797 = vmatpush2.bf16.msra.mxu0 0
    %1798 = vmatprep.mubr.bf16.mxu0 0
    %1799 = vmatmul.mubr.bf16.gmra.mxu0 %v1761
    %v1800 = vpop.f32.mrf.mxu0
    %v1801 = vadd.f32 0.0, %v1800
    %v1802 = vpop.f32.mrf.mxu0
    %v1803 = vpop.f32.mrf.mxu0
    %v1804 = vadd.f32 0.0, %v1803
    %v1805 = vpop.f32.mrf.mxu0
    %1806 = vmatprep.mubr.bf16.mxu0 0
    %1807 = vmatmul.mubr.bf16.gmra.mxu0 %v1764
    %v1808 = vpop.f32.mrf.mxu0
    %v1809 = vadd.f32 0.0, %v1808
    %v1810 = vpop.f32.mrf.mxu0
    %v1811 = vpop.f32.mrf.mxu0
    %v1812 = vadd.f32 0.0, %v1811
    %v1813 = vpop.f32.mrf.mxu0
    %1814 = vdwg.mxu0
    %v1815 = vadd.f32 %v1741, %v1801
    %v1816 = vadd.f32 %v1742, %v1804
    %v1817 = vadd.f32 %v1743, %v1809
    %v1818 = vadd.f32 %v1744, %v1812
    %s1819 = scalar_lea.vmem %s4, 144
    %v1820 = vld [vmem:[%s1819] sm:$0xf]
    %v1821 = vld [vmem:[%s1819 + $0x4] sm:$0xf]
    %v1822 = vld [vmem:[%s1819 + $0x8] sm:$0xf]
    %v1823 = vld [vmem:[%s1819 + $0xc] sm:$0xf]
    %v1828 = vunpack.c.l.b16 %v1820
    %v1829 = vunpack.c.l.b16 %v1821
    %v1830 = vunpack.c.l.b16 %v1822
    %v1831 = vunpack.c.l.b16 %v1823
    %v1832 = vpack.c.b16 %v1829, %v1828
    %v1833 = vpack.c.b16 %v1831, %v1830
    %1836 = vrot.lane.b32.xlu0 %v1110, 112
    %v1837 = vpop.permute.xlu0 %1836
    %1838 = vrot.lane.b32.xlu0 %v1114, 112
    %v1839 = vpop.permute.xlu0 %1838
    %v1843 = vsel %vm1144, %v1832, 0
    %v1846 = vsel %vm1144, %v1833, 0
    %1848 = vmatprep.subr.bf16.mxu0 0
    %1849 = vmatpush1.bf16.msra.mxu0 0
    %1850 = vmatprep.subr.bf16.mxu0 0
    %1851 = vmatpush1.bf16.msra.mxu0 0
    %1852 = vmatprep.subr.bf16.mxu0 0
    %1853 = vmatpush1.bf16.msra.mxu0 0
    %1854 = vmatprep.subr.bf16.mxu0 0
    %1855 = vmatpush1.bf16.msra.mxu0 0
    %1856 = vmatprep.subr.bf16.mxu0 0
    %1857 = vmatpush1.bf16.msra.mxu0 0
    %1858 = vmatprep.subr.bf16.mxu0 0
    %1859 = vmatpush1.bf16.msra.mxu0 0
    %1860 = vmatprep.subr.bf16.mxu0 0
    %1861 = vmatpush1.bf16.msra.mxu0 %v1839
    %1862 = vmatprep.subr.bf16.mxu0 0
    %1863 = vmatpush1.bf16.msra.mxu0 %v1837
    %1864 = vmatprep.subr.bf16.mxu0 0
    %1865 = vmatpush2.bf16.msra.mxu0 0
    %1866 = vmatprep.subr.bf16.mxu0 0
    %1867 = vmatpush2.bf16.msra.mxu0 0
    %1868 = vmatprep.subr.bf16.mxu0 0
    %1869 = vmatpush2.bf16.msra.mxu0 0
    %1870 = vmatprep.subr.bf16.mxu0 0
    %1871 = vmatpush2.bf16.msra.mxu0 0
    %1872 = vmatprep.subr.bf16.mxu0 0
    %1873 = vmatpush2.bf16.msra.mxu0 0
    %1874 = vmatprep.subr.bf16.mxu0 0
    %1875 = vmatpush2.bf16.msra.mxu0 0
    %1876 = vmatprep.subr.bf16.mxu0 0
    %1877 = vmatpush2.bf16.msra.mxu0 0
    %1878 = vmatprep.subr.bf16.mxu0 0
    %1879 = vmatpush2.bf16.msra.mxu0 0
    %1880 = vmatprep.mubr.bf16.mxu0 0
    %1881 = vmatmul.mubr.bf16.gmra.mxu0 %v1843
    %v1882 = vpop.f32.mrf.mxu0
    %v1883 = vadd.f32 0.0, %v1882
    %v1884 = vpop.f32.mrf.mxu0
    %v1885 = vpop.f32.mrf.mxu0
    %v1886 = vadd.f32 0.0, %v1885
    %v1887 = vpop.f32.mrf.mxu0
    %1888 = vmatprep.mubr.bf16.mxu0 0
    %1889 = vmatmul.mubr.bf16.gmra.mxu0 %v1846
    %v1890 = vpop.f32.mrf.mxu0
    %v1891 = vadd.f32 0.0, %v1890
    %v1892 = vpop.f32.mrf.mxu0
    %v1893 = vpop.f32.mrf.mxu0
    %v1894 = vadd.f32 0.0, %v1893
    %v1895 = vpop.f32.mrf.mxu0
    %1896 = vdwg.mxu0
    %v1897 = vadd.f32 %v1815, %v1883
    %v1898 = vadd.f32 %v1816, %v1886
    %v1899 = vadd.f32 %v1817, %v1891
    %v1900 = vadd.f32 %v1818, %v1894
    %s1901 = scalar_lea.vmem %s4, 160
    %v1902 = vld [vmem:[%s1901] sm:$0xf]
    %v1903 = vld [vmem:[%s1901 + $0x4] sm:$0xf]
    %v1904 = vld [vmem:[%s1901 + $0x8] sm:$0xf]
    %v1905 = vld [vmem:[%s1901 + $0xc] sm:$0xf]
    %v1910 = vunpack.c.l.b16 %v1902
    %v1911 = vunpack.c.l.b16 %v1903
    %v1912 = vunpack.c.l.b16 %v1904
    %v1913 = vunpack.c.l.b16 %v1905
    %v1914 = vpack.c.b16 %v1911, %v1910
    %v1915 = vpack.c.b16 %v1913, %v1912
    %1916 = vrot.lane.b32.xlu0 %v1110, 96
    %v1917 = vpop.permute.xlu0 %1916
    %1918 = vrot.lane.b32.xlu0 %v1114, 96
    %v1919 = vpop.permute.xlu0 %1918
    %v1923 = vsel %vm1144, %v1914, 0
    %v1926 = vsel %vm1144, %v1915, 0
    %1928 = vmatprep.subr.bf16.mxu0 0
    %1929 = vmatpush1.bf16.msra.mxu0 0
    %1930 = vmatprep.subr.bf16.mxu0 0
    %1931 = vmatpush1.bf16.msra.mxu0 0
    %1932 = vmatprep.subr.bf16.mxu0 0
    %1933 = vmatpush1.bf16.msra.mxu0 0
    %1934 = vmatprep.subr.bf16.mxu0 0
    %1935 = vmatpush1.bf16.msra.mxu0 0
    %1936 = vmatprep.subr.bf16.mxu0 0
    %1937 = vmatpush1.bf16.msra.mxu0 0
    %1938 = vmatprep.subr.bf16.mxu0 0
    %1939 = vmatpush1.bf16.msra.mxu0 0
    %1940 = vmatprep.subr.bf16.mxu0 0
    %1941 = vmatpush1.bf16.msra.mxu0 %v1919
    %1942 = vmatprep.subr.bf16.mxu0 0
    %1943 = vmatpush1.bf16.msra.mxu0 %v1917
    %1944 = vmatprep.subr.bf16.mxu0 0
    %1945 = vmatpush2.bf16.msra.mxu0 0
    %1946 = vmatprep.subr.bf16.mxu0 0
    %1947 = vmatpush2.bf16.msra.mxu0 0
    %1948 = vmatprep.subr.bf16.mxu0 0
    %1949 = vmatpush2.bf16.msra.mxu0 0
    %1950 = vmatprep.subr.bf16.mxu0 0
    %1951 = vmatpush2.bf16.msra.mxu0 0
    %1952 = vmatprep.subr.bf16.mxu0 0
    %1953 = vmatpush2.bf16.msra.mxu0 0
    %1954 = vmatprep.subr.bf16.mxu0 0
    %1955 = vmatpush2.bf16.msra.mxu0 0
    %1956 = vmatprep.subr.bf16.mxu0 0
    %1957 = vmatpush2.bf16.msra.mxu0 0
    %1958 = vmatprep.subr.bf16.mxu0 0
    %1959 = vmatpush2.bf16.msra.mxu0 0
    %1960 = vmatprep.mubr.bf16.mxu0 0
    %1961 = vmatmul.mubr.bf16.gmra.mxu0 %v1923
    %v1962 = vpop.f32.mrf.mxu0
    %v1963 = vadd.f32 0.0, %v1962
    %v1964 = vpop.f32.mrf.mxu0
    %v1965 = vpop.f32.mrf.mxu0
    %v1966 = vadd.f32 0.0, %v1965
    %v1967 = vpop.f32.mrf.mxu0
    %1968 = vmatprep.mubr.bf16.mxu0 0
    %1969 = vmatmul.mubr.bf16.gmra.mxu0 %v1926
    %v1970 = vpop.f32.mrf.mxu0
    %v1971 = vadd.f32 0.0, %v1970
    %v1972 = vpop.f32.mrf.mxu0
    %v1973 = vpop.f32.mrf.mxu0
    %v1974 = vadd.f32 0.0, %v1973
    %v1975 = vpop.f32.mrf.mxu0
    %1976 = vdwg.mxu0
    %v1977 = vadd.f32 %v1897, %v1963
    %v1978 = vadd.f32 %v1898, %v1966
    %v1979 = vadd.f32 %v1899, %v1971
    %v1980 = vadd.f32 %v1900, %v1974
    %s1981 = scalar_lea.vmem %s4, 176
    %v1982 = vld [vmem:[%s1981] sm:$0xf]
    %v1983 = vld [vmem:[%s1981 + $0x4] sm:$0xf]
    %v1984 = vld [vmem:[%s1981 + $0x8] sm:$0xf]
    %v1985 = vld [vmem:[%s1981 + $0xc] sm:$0xf]
    %v1990 = vunpack.c.l.b16 %v1982
    %v1991 = vunpack.c.l.b16 %v1983
    %v1992 = vunpack.c.l.b16 %v1984
    %v1993 = vunpack.c.l.b16 %v1985
    %v1994 = vpack.c.b16 %v1991, %v1990
    %v1995 = vpack.c.b16 %v1993, %v1992
    %1996 = vrot.lane.b32.xlu0 %v1110, 80
    %v1997 = vpop.permute.xlu0 %1996
    %1998 = vrot.lane.b32.xlu0 %v1114, 80
    %v1999 = vpop.permute.xlu0 %1998
    %v2003 = vsel %vm1144, %v1994, 0
    %v2006 = vsel %vm1144, %v1995, 0
    %2008 = vmatprep.subr.bf16.mxu0 0
    %2009 = vmatpush1.bf16.msra.mxu0 0
    %2010 = vmatprep.subr.bf16.mxu0 0
    %2011 = vmatpush1.bf16.msra.mxu0 0
    %2012 = vmatprep.subr.bf16.mxu0 0
    %2013 = vmatpush1.bf16.msra.mxu0 0
    %2014 = vmatprep.subr.bf16.mxu0 0
    %2015 = vmatpush1.bf16.msra.mxu0 0
    %2016 = vmatprep.subr.bf16.mxu0 0
    %2017 = vmatpush1.bf16.msra.mxu0 0
    %2018 = vmatprep.subr.bf16.mxu0 0
    %2019 = vmatpush1.bf16.msra.mxu0 0
    %2020 = vmatprep.subr.bf16.mxu0 0
    %2021 = vmatpush1.bf16.msra.mxu0 %v1999
    %2022 = vmatprep.subr.bf16.mxu0 0
    %2023 = vmatpush1.bf16.msra.mxu0 %v1997
    %2024 = vmatprep.subr.bf16.mxu0 0
    %2025 = vmatpush2.bf16.msra.mxu0 0
    %2026 = vmatprep.subr.bf16.mxu0 0
    %2027 = vmatpush2.bf16.msra.mxu0 0
    %2028 = vmatprep.subr.bf16.mxu0 0
    %2029 = vmatpush2.bf16.msra.mxu0 0
    %2030 = vmatprep.subr.bf16.mxu0 0
    %2031 = vmatpush2.bf16.msra.mxu0 0
    %2032 = vmatprep.subr.bf16.mxu0 0
    %2033 = vmatpush2.bf16.msra.mxu0 0
    %2034 = vmatprep.subr.bf16.mxu0 0
    %2035 = vmatpush2.bf16.msra.mxu0 0
    %2036 = vmatprep.subr.bf16.mxu0 0
    %2037 = vmatpush2.bf16.msra.mxu0 0
    %2038 = vmatprep.subr.bf16.mxu0 0
    %2039 = vmatpush2.bf16.msra.mxu0 0
    %2040 = vmatprep.mubr.bf16.mxu0 0
    %2041 = vmatmul.mubr.bf16.gmra.mxu0 %v2003
    %v2042 = vpop.f32.mrf.mxu0
    %v2043 = vadd.f32 0.0, %v2042
    %v2044 = vpop.f32.mrf.mxu0
    %v2045 = vpop.f32.mrf.mxu0
    %v2046 = vadd.f32 0.0, %v2045
    %v2047 = vpop.f32.mrf.mxu0
    %2048 = vmatprep.mubr.bf16.mxu0 0
    %2049 = vmatmul.mubr.bf16.gmra.mxu0 %v2006
    %v2050 = vpop.f32.mrf.mxu0
    %v2051 = vadd.f32 0.0, %v2050
    %v2052 = vpop.f32.mrf.mxu0
    %v2053 = vpop.f32.mrf.mxu0
    %v2054 = vadd.f32 0.0, %v2053
    %v2055 = vpop.f32.mrf.mxu0
    %2056 = vdwg.mxu0
    %v2057 = vadd.f32 %v1977, %v2043
    %v2058 = vadd.f32 %v1978, %v2046
    %v2059 = vadd.f32 %v1979, %v2051
    %v2060 = vadd.f32 %v1980, %v2054
    %s2061 = scalar_lea.vmem %s4, 192
    %v2062 = vld [vmem:[%s2061] sm:$0xf]
    %v2063 = vld [vmem:[%s2061 + $0x4] sm:$0xf]
    %v2064 = vld [vmem:[%s2061 + $0x8] sm:$0xf]
    %v2065 = vld [vmem:[%s2061 + $0xc] sm:$0xf]
    %v2070 = vunpack.c.l.b16 %v2062
    %v2071 = vunpack.c.l.b16 %v2063
    %v2072 = vunpack.c.l.b16 %v2064
    %v2073 = vunpack.c.l.b16 %v2065
    %v2074 = vpack.c.b16 %v2071, %v2070
    %v2075 = vpack.c.b16 %v2073, %v2072
    %2076 = vrot.lane.b32.xlu0 %v1110, 64
    %v2077 = vpop.permute.xlu0 %2076
    %2078 = vrot.lane.b32.xlu0 %v1114, 64
    %v2079 = vpop.permute.xlu0 %2078
    %v2083 = vsel %vm1144, %v2074, 0
    %v2086 = vsel %vm1144, %v2075, 0
    %2088 = vmatprep.subr.bf16.mxu0 0
    %2089 = vmatpush1.bf16.msra.mxu0 0
    %2090 = vmatprep.subr.bf16.mxu0 0
    %2091 = vmatpush1.bf16.msra.mxu0 0
    %2092 = vmatprep.subr.bf16.mxu0 0
    %2093 = vmatpush1.bf16.msra.mxu0 0
    %2094 = vmatprep.subr.bf16.mxu0 0
    %2095 = vmatpush1.bf16.msra.mxu0 0
    %2096 = vmatprep.subr.bf16.mxu0 0
    %2097 = vmatpush1.bf16.msra.mxu0 0
    %2098 = vmatprep.subr.bf16.mxu0 0
    %2099 = vmatpush1.bf16.msra.mxu0 0
    %2100 = vmatprep.subr.bf16.mxu0 0
    %2101 = vmatpush1.bf16.msra.mxu0 %v2079
    %2102 = vmatprep.subr.bf16.mxu0 0
    %2103 = vmatpush1.bf16.msra.mxu0 %v2077
    %2104 = vmatprep.subr.bf16.mxu0 0
    %2105 = vmatpush2.bf16.msra.mxu0 0
    %2106 = vmatprep.subr.bf16.mxu0 0
    %2107 = vmatpush2.bf16.msra.mxu0 0
    %2108 = vmatprep.subr.bf16.mxu0 0
    %2109 = vmatpush2.bf16.msra.mxu0 0
    %2110 = vmatprep.subr.bf16.mxu0 0
    %2111 = vmatpush2.bf16.msra.mxu0 0
    %2112 = vmatprep.subr.bf16.mxu0 0
    %2113 = vmatpush2.bf16.msra.mxu0 0
    %2114 = vmatprep.subr.bf16.mxu0 0
    %2115 = vmatpush2.bf16.msra.mxu0 0
    %2116 = vmatprep.subr.bf16.mxu0 0
    %2117 = vmatpush2.bf16.msra.mxu0 0
    %2118 = vmatprep.subr.bf16.mxu0 0
    %2119 = vmatpush2.bf16.msra.mxu0 0
    %2120 = vmatprep.mubr.bf16.mxu0 0
    %2121 = vmatmul.mubr.bf16.gmra.mxu0 %v2083
    %v2122 = vpop.f32.mrf.mxu0
    %v2123 = vadd.f32 0.0, %v2122
    %v2124 = vpop.f32.mrf.mxu0
    %v2125 = vpop.f32.mrf.mxu0
    %v2126 = vadd.f32 0.0, %v2125
    %v2127 = vpop.f32.mrf.mxu0
    %2128 = vmatprep.mubr.bf16.mxu0 0
    %2129 = vmatmul.mubr.bf16.gmra.mxu0 %v2086
    %v2130 = vpop.f32.mrf.mxu0
    %v2131 = vadd.f32 0.0, %v2130
    %v2132 = vpop.f32.mrf.mxu0
    %v2133 = vpop.f32.mrf.mxu0
    %v2134 = vadd.f32 0.0, %v2133
    %v2135 = vpop.f32.mrf.mxu0
    %2136 = vdwg.mxu0
    %v2137 = vadd.f32 %v2057, %v2123
    %v2138 = vadd.f32 %v2058, %v2126
    %v2139 = vadd.f32 %v2059, %v2131
    %v2140 = vadd.f32 %v2060, %v2134
    %s2141 = scalar_lea.vmem %s4, 208
    %v2142 = vld [vmem:[%s2141] sm:$0xf]
    %v2143 = vld [vmem:[%s2141 + $0x4] sm:$0xf]
    %v2144 = vld [vmem:[%s2141 + $0x8] sm:$0xf]
    %v2145 = vld [vmem:[%s2141 + $0xc] sm:$0xf]
    %v2150 = vunpack.c.l.b16 %v2142
    %v2151 = vunpack.c.l.b16 %v2143
    %v2152 = vunpack.c.l.b16 %v2144
    %v2153 = vunpack.c.l.b16 %v2145
    %v2154 = vpack.c.b16 %v2151, %v2150
    %v2155 = vpack.c.b16 %v2153, %v2152
    %2156 = vrot.lane.b32.xlu0 %v1110, 48
    %v2157 = vpop.permute.xlu0 %2156
    %2158 = vrot.lane.b32.xlu0 %v1114, 48
    %v2159 = vpop.permute.xlu0 %2158
    %v2163 = vsel %vm1144, %v2154, 0
    %v2166 = vsel %vm1144, %v2155, 0
    %2168 = vmatprep.subr.bf16.mxu0 0
    %2169 = vmatpush1.bf16.msra.mxu0 0
    %2170 = vmatprep.subr.bf16.mxu0 0
    %2171 = vmatpush1.bf16.msra.mxu0 0
    %2172 = vmatprep.subr.bf16.mxu0 0
    %2173 = vmatpush1.bf16.msra.mxu0 0
    %2174 = vmatprep.subr.bf16.mxu0 0
    %2175 = vmatpush1.bf16.msra.mxu0 0
    %2176 = vmatprep.subr.bf16.mxu0 0
    %2177 = vmatpush1.bf16.msra.mxu0 0
    %2178 = vmatprep.subr.bf16.mxu0 0
    %2179 = vmatpush1.bf16.msra.mxu0 0
    %2180 = vmatprep.subr.bf16.mxu0 0
    %2181 = vmatpush1.bf16.msra.mxu0 %v2159
    %2182 = vmatprep.subr.bf16.mxu0 0
    %2183 = vmatpush1.bf16.msra.mxu0 %v2157
    %2184 = vmatprep.subr.bf16.mxu0 0
    %2185 = vmatpush2.bf16.msra.mxu0 0
    %2186 = vmatprep.subr.bf16.mxu0 0
    %2187 = vmatpush2.bf16.msra.mxu0 0
    %2188 = vmatprep.subr.bf16.mxu0 0
    %2189 = vmatpush2.bf16.msra.mxu0 0
    %2190 = vmatprep.subr.bf16.mxu0 0
    %2191 = vmatpush2.bf16.msra.mxu0 0
    %2192 = vmatprep.subr.bf16.mxu0 0
    %2193 = vmatpush2.bf16.msra.mxu0 0
    %2194 = vmatprep.subr.bf16.mxu0 0
    %2195 = vmatpush2.bf16.msra.mxu0 0
    %2196 = vmatprep.subr.bf16.mxu0 0
    %2197 = vmatpush2.bf16.msra.mxu0 0
    %2198 = vmatprep.subr.bf16.mxu0 0
    %2199 = vmatpush2.bf16.msra.mxu0 0
    %2200 = vmatprep.mubr.bf16.mxu0 0
    %2201 = vmatmul.mubr.bf16.gmra.mxu0 %v2163
    %v2202 = vpop.f32.mrf.mxu0
    %v2203 = vadd.f32 0.0, %v2202
    %v2204 = vpop.f32.mrf.mxu0
    %v2205 = vpop.f32.mrf.mxu0
    %v2206 = vadd.f32 0.0, %v2205
    %v2207 = vpop.f32.mrf.mxu0
    %2208 = vmatprep.mubr.bf16.mxu0 0
    %2209 = vmatmul.mubr.bf16.gmra.mxu0 %v2166
    %v2210 = vpop.f32.mrf.mxu0
    %v2211 = vadd.f32 0.0, %v2210
    %v2212 = vpop.f32.mrf.mxu0
    %v2213 = vpop.f32.mrf.mxu0
    %v2214 = vadd.f32 0.0, %v2213
    %v2215 = vpop.f32.mrf.mxu0
    %2216 = vdwg.mxu0
    %v2217 = vadd.f32 %v2137, %v2203
    %v2218 = vadd.f32 %v2138, %v2206
    %v2219 = vadd.f32 %v2139, %v2211
    %v2220 = vadd.f32 %v2140, %v2214
    %s2221 = scalar_lea.vmem %s4, 224
    %v2222 = vld [vmem:[%s2221] sm:$0xf]
    %v2223 = vld [vmem:[%s2221 + $0x4] sm:$0xf]
    %v2224 = vld [vmem:[%s2221 + $0x8] sm:$0xf]
    %v2225 = vld [vmem:[%s2221 + $0xc] sm:$0xf]
    %v2230 = vunpack.c.l.b16 %v2222
    %v2231 = vunpack.c.l.b16 %v2223
    %v2232 = vunpack.c.l.b16 %v2224
    %v2233 = vunpack.c.l.b16 %v2225
    %v2234 = vpack.c.b16 %v2231, %v2230
    %v2235 = vpack.c.b16 %v2233, %v2232
    %2236 = vrot.lane.b32.xlu0 %v1110, 32
    %v2237 = vpop.permute.xlu0 %2236
    %2238 = vrot.lane.b32.xlu0 %v1114, 32
    %v2239 = vpop.permute.xlu0 %2238
    %v2243 = vsel %vm1144, %v2234, 0
    %v2246 = vsel %vm1144, %v2235, 0
    %2248 = vmatprep.subr.bf16.mxu0 0
    %2249 = vmatpush1.bf16.msra.mxu0 0
    %2250 = vmatprep.subr.bf16.mxu0 0
    %2251 = vmatpush1.bf16.msra.mxu0 0
    %2252 = vmatprep.subr.bf16.mxu0 0
    %2253 = vmatpush1.bf16.msra.mxu0 0
    %2254 = vmatprep.subr.bf16.mxu0 0
    %2255 = vmatpush1.bf16.msra.mxu0 0
    %2256 = vmatprep.subr.bf16.mxu0 0
    %2257 = vmatpush1.bf16.msra.mxu0 0
    %2258 = vmatprep.subr.bf16.mxu0 0
    %2259 = vmatpush1.bf16.msra.mxu0 0
    %2260 = vmatprep.subr.bf16.mxu0 0
    %2261 = vmatpush1.bf16.msra.mxu0 %v2239
    %2262 = vmatprep.subr.bf16.mxu0 0
    %2263 = vmatpush1.bf16.msra.mxu0 %v2237
    %2264 = vmatprep.subr.bf16.mxu0 0
    %2265 = vmatpush2.bf16.msra.mxu0 0
    %2266 = vmatprep.subr.bf16.mxu0 0
    %2267 = vmatpush2.bf16.msra.mxu0 0
    %2268 = vmatprep.subr.bf16.mxu0 0
    %2269 = vmatpush2.bf16.msra.mxu0 0
    %2270 = vmatprep.subr.bf16.mxu0 0
    %2271 = vmatpush2.bf16.msra.mxu0 0
    %2272 = vmatprep.subr.bf16.mxu0 0
    %2273 = vmatpush2.bf16.msra.mxu0 0
    %2274 = vmatprep.subr.bf16.mxu0 0
    %2275 = vmatpush2.bf16.msra.mxu0 0
    %2276 = vmatprep.subr.bf16.mxu0 0
    %2277 = vmatpush2.bf16.msra.mxu0 0
    %2278 = vmatprep.subr.bf16.mxu0 0
    %2279 = vmatpush2.bf16.msra.mxu0 0
    %2280 = vmatprep.mubr.bf16.mxu0 0
    %2281 = vmatmul.mubr.bf16.gmra.mxu0 %v2243
    %v2282 = vpop.f32.mrf.mxu0
    %v2283 = vadd.f32 0.0, %v2282
    %v2284 = vpop.f32.mrf.mxu0
    %v2285 = vpop.f32.mrf.mxu0
    %v2286 = vadd.f32 0.0, %v2285
    %v2287 = vpop.f32.mrf.mxu0
    %2288 = vmatprep.mubr.bf16.mxu0 0
    %2289 = vmatmul.mubr.bf16.gmra.mxu0 %v2246
    %v2290 = vpop.f32.mrf.mxu0
    %v2291 = vadd.f32 0.0, %v2290
    %v2292 = vpop.f32.mrf.mxu0
    %v2293 = vpop.f32.mrf.mxu0
    %v2294 = vadd.f32 0.0, %v2293
    %v2295 = vpop.f32.mrf.mxu0
    %2296 = vdwg.mxu0
    %v2297 = vadd.f32 %v2217, %v2283
    %v2298 = vadd.f32 %v2218, %v2286
    %v2299 = vadd.f32 %v2219, %v2291
    %v2300 = vadd.f32 %v2220, %v2294
    %s2301 = scalar_lea.vmem %s4, 240
    %v2302 = vld [vmem:[%s2301] sm:$0xf]
    %v2303 = vld [vmem:[%s2301 + $0x4] sm:$0xf]
    %v2304 = vld [vmem:[%s2301 + $0x8] sm:$0xf]
    %v2305 = vld [vmem:[%s2301 + $0xc] sm:$0xf]
    %v2310 = vunpack.c.l.b16 %v2302
    %v2311 = vunpack.c.l.b16 %v2303
    %v2312 = vunpack.c.l.b16 %v2304
    %v2313 = vunpack.c.l.b16 %v2305
    %v2314 = vpack.c.b16 %v2311, %v2310
    %v2315 = vpack.c.b16 %v2313, %v2312
    %2316 = vrot.lane.b32.xlu0 %v1110, 16
    %v2317 = vpop.permute.xlu0 %2316
    %2318 = vrot.lane.b32.xlu0 %v1114, 16
    %v2319 = vpop.permute.xlu0 %2318
    %v2323 = vsel %vm1144, %v2314, 0
    %v2326 = vsel %vm1144, %v2315, 0
    %2328 = vmatprep.subr.bf16.mxu0 0
    %2329 = vmatpush1.bf16.msra.mxu0 0
    %2330 = vmatprep.subr.bf16.mxu0 0
    %2331 = vmatpush1.bf16.msra.mxu0 0
    %2332 = vmatprep.subr.bf16.mxu0 0
    %2333 = vmatpush1.bf16.msra.mxu0 0
    %2334 = vmatprep.subr.bf16.mxu0 0
    %2335 = vmatpush1.bf16.msra.mxu0 0
    %2336 = vmatprep.subr.bf16.mxu0 0
    %2337 = vmatpush1.bf16.msra.mxu0 0
    %2338 = vmatprep.subr.bf16.mxu0 0
    %2339 = vmatpush1.bf16.msra.mxu0 0
    %2340 = vmatprep.subr.bf16.mxu0 0
    %2341 = vmatpush1.bf16.msra.mxu0 %v2319
    %2342 = vmatprep.subr.bf16.mxu0 0
    %2343 = vmatpush1.bf16.msra.mxu0 %v2317
    %2344 = vmatprep.subr.bf16.mxu0 0
    %2345 = vmatpush2.bf16.msra.mxu0 0
    %2346 = vmatprep.subr.bf16.mxu0 0
    %2347 = vmatpush2.bf16.msra.mxu0 0
    %2348 = vmatprep.subr.bf16.mxu0 0
    %2349 = vmatpush2.bf16.msra.mxu0 0
    %2350 = vmatprep.subr.bf16.mxu0 0
    %2351 = vmatpush2.bf16.msra.mxu0 0
    %2352 = vmatprep.subr.bf16.mxu0 0
    %2353 = vmatpush2.bf16.msra.mxu0 0
    %2354 = vmatprep.subr.bf16.mxu0 0
    %2355 = vmatpush2.bf16.msra.mxu0 0
    %2356 = vmatprep.subr.bf16.mxu0 0
    %2357 = vmatpush2.bf16.msra.mxu0 0
    %2358 = vmatprep.subr.bf16.mxu0 0
    %2359 = vmatpush2.bf16.msra.mxu0 0
    %2360 = vmatprep.mubr.bf16.mxu0 0
    %2361 = vmatmul.mubr.bf16.gmra.mxu0 %v2323
    %v2362 = vpop.f32.mrf.mxu0
    %v2363 = vadd.f32 0.0, %v2362
    %v2364 = vpop.f32.mrf.mxu0
    %v2365 = vpop.f32.mrf.mxu0
    %v2366 = vadd.f32 0.0, %v2365
    %v2367 = vpop.f32.mrf.mxu0
    %2368 = vmatprep.mubr.bf16.mxu0 0
    %2369 = vmatmul.mubr.bf16.gmra.mxu0 %v2326
    %v2370 = vpop.f32.mrf.mxu0
    %v2371 = vadd.f32 0.0, %v2370
    %v2372 = vpop.f32.mrf.mxu0
    %v2373 = vpop.f32.mrf.mxu0
    %v2374 = vadd.f32 0.0, %v2373
    %v2375 = vpop.f32.mrf.mxu0
    %2376 = vdwg.mxu0
    %v2377 = vadd.f32 %v2297, %v2363
    %v2378 = vadd.f32 %v2298, %v2366
    %v2379 = vadd.f32 %v2299, %v2371
    %v2380 = vadd.f32 %v2300, %v2374
    %s2381 = scalar_lea.vmem %s4, 256
    %v2382 = vld [vmem:[%s2381] sm:$0xf]
    %v2383 = vld [vmem:[%s2381 + $0x4] sm:$0xf]
    %v2384 = vld [vmem:[%s2381 + $0x8] sm:$0xf]
    %v2385 = vld [vmem:[%s2381 + $0xc] sm:$0xf]
    %v2390 = vunpack.c.l.b16 %v2382
    %v2391 = vunpack.c.l.b16 %v2383
    %v2392 = vunpack.c.l.b16 %v2384
    %v2393 = vunpack.c.l.b16 %v2385
    %v2394 = vpack.c.b16 %v2391, %v2390
    %v2395 = vpack.c.b16 %v2393, %v2392
    %v2397 = vsel %vm1144, %v2394, 0
    %v2400 = vsel %vm1144, %v2395, 0
    %2402 = vmatprep.subr.bf16.mxu0 0
    %2403 = vmatpush1.bf16.msra.mxu0 0
    %2404 = vmatprep.subr.bf16.mxu0 0
    %2405 = vmatpush1.bf16.msra.mxu0 0
    %2406 = vmatprep.subr.bf16.mxu0 0
    %2407 = vmatpush1.bf16.msra.mxu0 0
    %2408 = vmatprep.subr.bf16.mxu0 0
    %2409 = vmatpush1.bf16.msra.mxu0 0
    %2410 = vmatprep.subr.bf16.mxu0 0
    %2411 = vmatpush1.bf16.msra.mxu0 0
    %2412 = vmatprep.subr.bf16.mxu0 0
    %2413 = vmatpush1.bf16.msra.mxu0 0
    %2414 = vmatprep.subr.bf16.mxu0 0
    %2415 = vmatpush1.bf16.msra.mxu0 %v1115
    %2416 = vmatprep.subr.bf16.mxu0 0
    %2417 = vmatpush1.bf16.msra.mxu0 %v1111
    %2418 = vmatprep.subr.bf16.mxu0 0
    %2419 = vmatpush2.bf16.msra.mxu0 0
    %2420 = vmatprep.subr.bf16.mxu0 0
    %2421 = vmatpush2.bf16.msra.mxu0 0
    %2422 = vmatprep.subr.bf16.mxu0 0
    %2423 = vmatpush2.bf16.msra.mxu0 0
    %2424 = vmatprep.subr.bf16.mxu0 0
    %2425 = vmatpush2.bf16.msra.mxu0 0
    %2426 = vmatprep.subr.bf16.mxu0 0
    %2427 = vmatpush2.bf16.msra.mxu0 0
    %2428 = vmatprep.subr.bf16.mxu0 0
    %2429 = vmatpush2.bf16.msra.mxu0 0
    %2430 = vmatprep.subr.bf16.mxu0 0
    %2431 = vmatpush2.bf16.msra.mxu0 0
    %2432 = vmatprep.subr.bf16.mxu0 0
    %2433 = vmatpush2.bf16.msra.mxu0 0
    %2434 = vmatprep.mubr.bf16.mxu0 0
    %2435 = vmatmul.mubr.bf16.gmra.mxu0 %v2397
    %v2436 = vpop.f32.mrf.mxu0
    %v2437 = vadd.f32 0.0, %v2436
    %v2438 = vpop.f32.mrf.mxu0
    %v2439 = vpop.f32.mrf.mxu0
    %v2440 = vadd.f32 0.0, %v2439
    %v2441 = vpop.f32.mrf.mxu0
    %2442 = vmatprep.mubr.bf16.mxu0 0
    %2443 = vmatmul.mubr.bf16.gmra.mxu0 %v2400
    %v2444 = vpop.f32.mrf.mxu0
    %v2445 = vadd.f32 0.0, %v2444
    %v2446 = vpop.f32.mrf.mxu0
    %v2447 = vpop.f32.mrf.mxu0
    %v2448 = vadd.f32 0.0, %v2447
    %v2449 = vpop.f32.mrf.mxu0
    %2450 = vdwg.mxu0
    %v2451 = vadd.f32 %v2377, %v2437
    %v2452 = vadd.f32 %v2378, %v2440
    %v2453 = vadd.f32 %v2379, %v2445
    %v2454 = vadd.f32 %v2380, %v2448
    %s2455 = scalar_lea.vmem %s4, 272
    %v2456 = vld [vmem:[%s2455] sm:$0xf]
    %v2457 = vld [vmem:[%s2455 + $0x4] sm:$0xf]
    %v2458 = vld [vmem:[%s2455 + $0x8] sm:$0xf]
    %v2459 = vld [vmem:[%s2455 + $0xc] sm:$0xf]
    %v2464 = vunpack.c.l.b16 %v2456
    %v2465 = vunpack.c.l.b16 %v2457
    %v2466 = vunpack.c.l.b16 %v2458
    %v2467 = vunpack.c.l.b16 %v2459
    %v2468 = vpack.c.b16 %v2465, %v2464
    %v2469 = vpack.c.b16 %v2467, %v2466
    %2472 = vrot.lane.b32.xlu0 %v1111, 112
    %v2473 = vpop.permute.xlu0 %2472
    %2474 = vrot.lane.b32.xlu0 %v1115, 112
    %v2475 = vpop.permute.xlu0 %2474
    %v2479 = vsel %vm1144, %v2468, 0
    %v2482 = vsel %vm1144, %v2469, 0
    %2484 = vmatprep.subr.bf16.mxu0 0
    %2485 = vmatpush1.bf16.msra.mxu0 0
    %2486 = vmatprep.subr.bf16.mxu0 0
    %2487 = vmatpush1.bf16.msra.mxu0 0
    %2488 = vmatprep.subr.bf16.mxu0 0
    %2489 = vmatpush1.bf16.msra.mxu0 0
    %2490 = vmatprep.subr.bf16.mxu0 0
    %2491 = vmatpush1.bf16.msra.mxu0 0
    %2492 = vmatprep.subr.bf16.mxu0 0
    %2493 = vmatpush1.bf16.msra.mxu0 0
    %2494 = vmatprep.subr.bf16.mxu0 0
    %2495 = vmatpush1.bf16.msra.mxu0 0
    %2496 = vmatprep.subr.bf16.mxu0 0
    %2497 = vmatpush1.bf16.msra.mxu0 %v2475
    %2498 = vmatprep.subr.bf16.mxu0 0
    %2499 = vmatpush1.bf16.msra.mxu0 %v2473
    %2500 = vmatprep.subr.bf16.mxu0 0
    %2501 = vmatpush2.bf16.msra.mxu0 0
    %2502 = vmatprep.subr.bf16.mxu0 0
    %2503 = vmatpush2.bf16.msra.mxu0 0
    %2504 = vmatprep.subr.bf16.mxu0 0
    %2505 = vmatpush2.bf16.msra.mxu0 0
    %2506 = vmatprep.subr.bf16.mxu0 0
    %2507 = vmatpush2.bf16.msra.mxu0 0
    %2508 = vmatprep.subr.bf16.mxu0 0
    %2509 = vmatpush2.bf16.msra.mxu0 0
    %2510 = vmatprep.subr.bf16.mxu0 0
    %2511 = vmatpush2.bf16.msra.mxu0 0
    %2512 = vmatprep.subr.bf16.mxu0 0
    %2513 = vmatpush2.bf16.msra.mxu0 0
    %2514 = vmatprep.subr.bf16.mxu0 0
    %2515 = vmatpush2.bf16.msra.mxu0 0
    %2516 = vmatprep.mubr.bf16.mxu0 0
    %2517 = vmatmul.mubr.bf16.gmra.mxu0 %v2479
    %v2518 = vpop.f32.mrf.mxu0
    %v2519 = vadd.f32 0.0, %v2518
    %v2520 = vpop.f32.mrf.mxu0
    %v2521 = vpop.f32.mrf.mxu0
    %v2522 = vadd.f32 0.0, %v2521
    %v2523 = vpop.f32.mrf.mxu0
    %2524 = vmatprep.mubr.bf16.mxu0 0
    %2525 = vmatmul.mubr.bf16.gmra.mxu0 %v2482
    %v2526 = vpop.f32.mrf.mxu0
    %v2527 = vadd.f32 0.0, %v2526
    %v2528 = vpop.f32.mrf.mxu0
    %v2529 = vpop.f32.mrf.mxu0
    %v2530 = vadd.f32 0.0, %v2529
    %v2531 = vpop.f32.mrf.mxu0
    %2532 = vdwg.mxu0
    %v2533 = vadd.f32 %v2451, %v2519
    %v2534 = vadd.f32 %v2452, %v2522
    %v2535 = vadd.f32 %v2453, %v2527
    %v2536 = vadd.f32 %v2454, %v2530
    %s2537 = scalar_lea.vmem %s4, 288
    %v2538 = vld [vmem:[%s2537] sm:$0xf]
    %v2539 = vld [vmem:[%s2537 + $0x4] sm:$0xf]
    %v2540 = vld [vmem:[%s2537 + $0x8] sm:$0xf]
    %v2541 = vld [vmem:[%s2537 + $0xc] sm:$0xf]
    %v2546 = vunpack.c.l.b16 %v2538
    %v2547 = vunpack.c.l.b16 %v2539
    %v2548 = vunpack.c.l.b16 %v2540
    %v2549 = vunpack.c.l.b16 %v2541
    %v2550 = vpack.c.b16 %v2547, %v2546
    %v2551 = vpack.c.b16 %v2549, %v2548
    %2552 = vrot.lane.b32.xlu0 %v1111, 96
    %v2553 = vpop.permute.xlu0 %2552
    %2554 = vrot.lane.b32.xlu0 %v1115, 96
    %v2555 = vpop.permute.xlu0 %2554
    %v2559 = vsel %vm1144, %v2550, 0
    %v2562 = vsel %vm1144, %v2551, 0
    %2564 = vmatprep.subr.bf16.mxu0 0
    %2565 = vmatpush1.bf16.msra.mxu0 0
    %2566 = vmatprep.subr.bf16.mxu0 0
    %2567 = vmatpush1.bf16.msra.mxu0 0
    %2568 = vmatprep.subr.bf16.mxu0 0
    %2569 = vmatpush1.bf16.msra.mxu0 0
    %2570 = vmatprep.subr.bf16.mxu0 0
    %2571 = vmatpush1.bf16.msra.mxu0 0
    %2572 = vmatprep.subr.bf16.mxu0 0
    %2573 = vmatpush1.bf16.msra.mxu0 0
    %2574 = vmatprep.subr.bf16.mxu0 0
    %2575 = vmatpush1.bf16.msra.mxu0 0
    %2576 = vmatprep.subr.bf16.mxu0 0
    %2577 = vmatpush1.bf16.msra.mxu0 %v2555
    %2578 = vmatprep.subr.bf16.mxu0 0
    %2579 = vmatpush1.bf16.msra.mxu0 %v2553
    %2580 = vmatprep.subr.bf16.mxu0 0
    %2581 = vmatpush2.bf16.msra.mxu0 0
    %2582 = vmatprep.subr.bf16.mxu0 0
    %2583 = vmatpush2.bf16.msra.mxu0 0
    %2584 = vmatprep.subr.bf16.mxu0 0
    %2585 = vmatpush2.bf16.msra.mxu0 0
    %2586 = vmatprep.subr.bf16.mxu0 0
    %2587 = vmatpush2.bf16.msra.mxu0 0
    %2588 = vmatprep.subr.bf16.mxu0 0
    %2589 = vmatpush2.bf16.msra.mxu0 0
    %2590 = vmatprep.subr.bf16.mxu0 0
    %2591 = vmatpush2.bf16.msra.mxu0 0
    %2592 = vmatprep.subr.bf16.mxu0 0
    %2593 = vmatpush2.bf16.msra.mxu0 0
    %2594 = vmatprep.subr.bf16.mxu0 0
    %2595 = vmatpush2.bf16.msra.mxu0 0
    %2596 = vmatprep.mubr.bf16.mxu0 0
    %2597 = vmatmul.mubr.bf16.gmra.mxu0 %v2559
    %v2598 = vpop.f32.mrf.mxu0
    %v2599 = vadd.f32 0.0, %v2598
    %v2600 = vpop.f32.mrf.mxu0
    %v2601 = vpop.f32.mrf.mxu0
    %v2602 = vadd.f32 0.0, %v2601
    %v2603 = vpop.f32.mrf.mxu0
    %2604 = vmatprep.mubr.bf16.mxu0 0
    %2605 = vmatmul.mubr.bf16.gmra.mxu0 %v2562
    %v2606 = vpop.f32.mrf.mxu0
    %v2607 = vadd.f32 0.0, %v2606
    %v2608 = vpop.f32.mrf.mxu0
    %v2609 = vpop.f32.mrf.mxu0
    %v2610 = vadd.f32 0.0, %v2609
    %v2611 = vpop.f32.mrf.mxu0
    %2612 = vdwg.mxu0
    %v2613 = vadd.f32 %v2533, %v2599
    %v2614 = vadd.f32 %v2534, %v2602
    %v2615 = vadd.f32 %v2535, %v2607
    %v2616 = vadd.f32 %v2536, %v2610
    %s2617 = scalar_lea.vmem %s4, 304
    %v2618 = vld [vmem:[%s2617] sm:$0xf]
    %v2619 = vld [vmem:[%s2617 + $0x4] sm:$0xf]
    %v2620 = vld [vmem:[%s2617 + $0x8] sm:$0xf]
    %v2621 = vld [vmem:[%s2617 + $0xc] sm:$0xf]
    %v2626 = vunpack.c.l.b16 %v2618
    %v2627 = vunpack.c.l.b16 %v2619
    %v2628 = vunpack.c.l.b16 %v2620
    %v2629 = vunpack.c.l.b16 %v2621
    %v2630 = vpack.c.b16 %v2627, %v2626
    %v2631 = vpack.c.b16 %v2629, %v2628
    %2632 = vrot.lane.b32.xlu0 %v1111, 80
    %v2633 = vpop.permute.xlu0 %2632
    %2634 = vrot.lane.b32.xlu0 %v1115, 80
    %v2635 = vpop.permute.xlu0 %2634
    %v2639 = vsel %vm1144, %v2630, 0
    %v2642 = vsel %vm1144, %v2631, 0
    %2644 = vmatprep.subr.bf16.mxu0 0
    %2645 = vmatpush1.bf16.msra.mxu0 0
    %2646 = vmatprep.subr.bf16.mxu0 0
    %2647 = vmatpush1.bf16.msra.mxu0 0
    %2648 = vmatprep.subr.bf16.mxu0 0
    %2649 = vmatpush1.bf16.msra.mxu0 0
    %2650 = vmatprep.subr.bf16.mxu0 0
    %2651 = vmatpush1.bf16.msra.mxu0 0
    %2652 = vmatprep.subr.bf16.mxu0 0
    %2653 = vmatpush1.bf16.msra.mxu0 0
    %2654 = vmatprep.subr.bf16.mxu0 0
    %2655 = vmatpush1.bf16.msra.mxu0 0
    %2656 = vmatprep.subr.bf16.mxu0 0
    %2657 = vmatpush1.bf16.msra.mxu0 %v2635
    %2658 = vmatprep.subr.bf16.mxu0 0
    %2659 = vmatpush1.bf16.msra.mxu0 %v2633
    %2660 = vmatprep.subr.bf16.mxu0 0
    %2661 = vmatpush2.bf16.msra.mxu0 0
    %2662 = vmatprep.subr.bf16.mxu0 0
    %2663 = vmatpush2.bf16.msra.mxu0 0
    %2664 = vmatprep.subr.bf16.mxu0 0
    %2665 = vmatpush2.bf16.msra.mxu0 0
    %2666 = vmatprep.subr.bf16.mxu0 0
    %2667 = vmatpush2.bf16.msra.mxu0 0
    %2668 = vmatprep.subr.bf16.mxu0 0
    %2669 = vmatpush2.bf16.msra.mxu0 0
    %2670 = vmatprep.subr.bf16.mxu0 0
    %2671 = vmatpush2.bf16.msra.mxu0 0
    %2672 = vmatprep.subr.bf16.mxu0 0
    %2673 = vmatpush2.bf16.msra.mxu0 0
    %2674 = vmatprep.subr.bf16.mxu0 0
    %2675 = vmatpush2.bf16.msra.mxu0 0
    %2676 = vmatprep.mubr.bf16.mxu0 0
    %2677 = vmatmul.mubr.bf16.gmra.mxu0 %v2639
    %v2678 = vpop.f32.mrf.mxu0
    %v2679 = vadd.f32 0.0, %v2678
    %v2680 = vpop.f32.mrf.mxu0
    %v2681 = vpop.f32.mrf.mxu0
    %v2682 = vadd.f32 0.0, %v2681
    %v2683 = vpop.f32.mrf.mxu0
    %2684 = vmatprep.mubr.bf16.mxu0 0
    %2685 = vmatmul.mubr.bf16.gmra.mxu0 %v2642
    %v2686 = vpop.f32.mrf.mxu0
    %v2687 = vadd.f32 0.0, %v2686
    %v2688 = vpop.f32.mrf.mxu0
    %v2689 = vpop.f32.mrf.mxu0
    %v2690 = vadd.f32 0.0, %v2689
    %v2691 = vpop.f32.mrf.mxu0
    %2692 = vdwg.mxu0
    %v2693 = vadd.f32 %v2613, %v2679
    %v2694 = vadd.f32 %v2614, %v2682
    %v2695 = vadd.f32 %v2615, %v2687
    %v2696 = vadd.f32 %v2616, %v2690
    %s2697 = scalar_lea.vmem %s4, 320
    %v2698 = vld [vmem:[%s2697] sm:$0xf]
    %v2699 = vld [vmem:[%s2697 + $0x4] sm:$0xf]
    %v2700 = vld [vmem:[%s2697 + $0x8] sm:$0xf]
    %v2701 = vld [vmem:[%s2697 + $0xc] sm:$0xf]
    %v2706 = vunpack.c.l.b16 %v2698
    %v2707 = vunpack.c.l.b16 %v2699
    %v2708 = vunpack.c.l.b16 %v2700
    %v2709 = vunpack.c.l.b16 %v2701
    %v2710 = vpack.c.b16 %v2707, %v2706
    %v2711 = vpack.c.b16 %v2709, %v2708
    %2712 = vrot.lane.b32.xlu0 %v1111, 64
    %v2713 = vpop.permute.xlu0 %2712
    %2714 = vrot.lane.b32.xlu0 %v1115, 64
    %v2715 = vpop.permute.xlu0 %2714
    %v2719 = vsel %vm1144, %v2710, 0
    %v2722 = vsel %vm1144, %v2711, 0
    %2724 = vmatprep.subr.bf16.mxu0 0
    %2725 = vmatpush1.bf16.msra.mxu0 0
    %2726 = vmatprep.subr.bf16.mxu0 0
    %2727 = vmatpush1.bf16.msra.mxu0 0
    %2728 = vmatprep.subr.bf16.mxu0 0
    %2729 = vmatpush1.bf16.msra.mxu0 0
    %2730 = vmatprep.subr.bf16.mxu0 0
    %2731 = vmatpush1.bf16.msra.mxu0 0
    %2732 = vmatprep.subr.bf16.mxu0 0
    %2733 = vmatpush1.bf16.msra.mxu0 0
    %2734 = vmatprep.subr.bf16.mxu0 0
    %2735 = vmatpush1.bf16.msra.mxu0 0
    %2736 = vmatprep.subr.bf16.mxu0 0
    %2737 = vmatpush1.bf16.msra.mxu0 %v2715
    %2738 = vmatprep.subr.bf16.mxu0 0
    %2739 = vmatpush1.bf16.msra.mxu0 %v2713
    %2740 = vmatprep.subr.bf16.mxu0 0
    %2741 = vmatpush2.bf16.msra.mxu0 0
    %2742 = vmatprep.subr.bf16.mxu0 0
    %2743 = vmatpush2.bf16.msra.mxu0 0
    %2744 = vmatprep.subr.bf16.mxu0 0
    %2745 = vmatpush2.bf16.msra.mxu0 0
    %2746 = vmatprep.subr.bf16.mxu0 0
    %2747 = vmatpush2.bf16.msra.mxu0 0
    %2748 = vmatprep.subr.bf16.mxu0 0
    %2749 = vmatpush2.bf16.msra.mxu0 0
    %2750 = vmatprep.subr.bf16.mxu0 0
    %2751 = vmatpush2.bf16.msra.mxu0 0
    %2752 = vmatprep.subr.bf16.mxu0 0
    %2753 = vmatpush2.bf16.msra.mxu0 0
    %2754 = vmatprep.subr.bf16.mxu0 0
    %2755 = vmatpush2.bf16.msra.mxu0 0
    %2756 = vmatprep.mubr.bf16.mxu0 0
    %2757 = vmatmul.mubr.bf16.gmra.mxu0 %v2719
    %v2758 = vpop.f32.mrf.mxu0
    %v2759 = vadd.f32 0.0, %v2758
    %v2760 = vpop.f32.mrf.mxu0
    %v2761 = vpop.f32.mrf.mxu0
    %v2762 = vadd.f32 0.0, %v2761
    %v2763 = vpop.f32.mrf.mxu0
    %2764 = vmatprep.mubr.bf16.mxu0 0
    %2765 = vmatmul.mubr.bf16.gmra.mxu0 %v2722
    %v2766 = vpop.f32.mrf.mxu0
    %v2767 = vadd.f32 0.0, %v2766
    %v2768 = vpop.f32.mrf.mxu0
    %v2769 = vpop.f32.mrf.mxu0
    %v2770 = vadd.f32 0.0, %v2769
    %v2771 = vpop.f32.mrf.mxu0
    %2772 = vdwg.mxu0
    %v2773 = vadd.f32 %v2693, %v2759
    %v2774 = vadd.f32 %v2694, %v2762
    %v2775 = vadd.f32 %v2695, %v2767
    %v2776 = vadd.f32 %v2696, %v2770
    %s2777 = scalar_lea.vmem %s4, 336
    %v2778 = vld [vmem:[%s2777] sm:$0xf]
    %v2779 = vld [vmem:[%s2777 + $0x4] sm:$0xf]
    %v2780 = vld [vmem:[%s2777 + $0x8] sm:$0xf]
    %v2781 = vld [vmem:[%s2777 + $0xc] sm:$0xf]
    %v2786 = vunpack.c.l.b16 %v2778
    %v2787 = vunpack.c.l.b16 %v2779
    %v2788 = vunpack.c.l.b16 %v2780
    %v2789 = vunpack.c.l.b16 %v2781
    %v2790 = vpack.c.b16 %v2787, %v2786
    %v2791 = vpack.c.b16 %v2789, %v2788
    %2792 = vrot.lane.b32.xlu0 %v1111, 48
    %v2793 = vpop.permute.xlu0 %2792
    %2794 = vrot.lane.b32.xlu0 %v1115, 48
    %v2795 = vpop.permute.xlu0 %2794
    %v2799 = vsel %vm1144, %v2790, 0
    %v2802 = vsel %vm1144, %v2791, 0
    %2804 = vmatprep.subr.bf16.mxu0 0
    %2805 = vmatpush1.bf16.msra.mxu0 0
    %2806 = vmatprep.subr.bf16.mxu0 0
    %2807 = vmatpush1.bf16.msra.mxu0 0
    %2808 = vmatprep.subr.bf16.mxu0 0
    %2809 = vmatpush1.bf16.msra.mxu0 0
    %2810 = vmatprep.subr.bf16.mxu0 0
    %2811 = vmatpush1.bf16.msra.mxu0 0
    %2812 = vmatprep.subr.bf16.mxu0 0
    %2813 = vmatpush1.bf16.msra.mxu0 0
    %2814 = vmatprep.subr.bf16.mxu0 0
    %2815 = vmatpush1.bf16.msra.mxu0 0
    %2816 = vmatprep.subr.bf16.mxu0 0
    %2817 = vmatpush1.bf16.msra.mxu0 %v2795
    %2818 = vmatprep.subr.bf16.mxu0 0
    %2819 = vmatpush1.bf16.msra.mxu0 %v2793
    %2820 = vmatprep.subr.bf16.mxu0 0
    %2821 = vmatpush2.bf16.msra.mxu0 0
    %2822 = vmatprep.subr.bf16.mxu0 0
    %2823 = vmatpush2.bf16.msra.mxu0 0
    %2824 = vmatprep.subr.bf16.mxu0 0
    %2825 = vmatpush2.bf16.msra.mxu0 0
    %2826 = vmatprep.subr.bf16.mxu0 0
    %2827 = vmatpush2.bf16.msra.mxu0 0
    %2828 = vmatprep.subr.bf16.mxu0 0
    %2829 = vmatpush2.bf16.msra.mxu0 0
    %2830 = vmatprep.subr.bf16.mxu0 0
    %2831 = vmatpush2.bf16.msra.mxu0 0
    %2832 = vmatprep.subr.bf16.mxu0 0
    %2833 = vmatpush2.bf16.msra.mxu0 0
    %2834 = vmatprep.subr.bf16.mxu0 0
    %2835 = vmatpush2.bf16.msra.mxu0 0
    %2836 = vmatprep.mubr.bf16.mxu0 0
    %2837 = vmatmul.mubr.bf16.gmra.mxu0 %v2799
    %v2838 = vpop.f32.mrf.mxu0
    %v2839 = vadd.f32 0.0, %v2838
    %v2840 = vpop.f32.mrf.mxu0
    %v2841 = vpop.f32.mrf.mxu0
    %v2842 = vadd.f32 0.0, %v2841
    %v2843 = vpop.f32.mrf.mxu0
    %2844 = vmatprep.mubr.bf16.mxu0 0
    %2845 = vmatmul.mubr.bf16.gmra.mxu0 %v2802
    %v2846 = vpop.f32.mrf.mxu0
    %v2847 = vadd.f32 0.0, %v2846
    %v2848 = vpop.f32.mrf.mxu0
    %v2849 = vpop.f32.mrf.mxu0
    %v2850 = vadd.f32 0.0, %v2849
    %v2851 = vpop.f32.mrf.mxu0
    %2852 = vdwg.mxu0
    %v2853 = vadd.f32 %v2773, %v2839
    %v2854 = vadd.f32 %v2774, %v2842
    %v2855 = vadd.f32 %v2775, %v2847
    %v2856 = vadd.f32 %v2776, %v2850
    %s2857 = scalar_lea.vmem %s4, 352
    %v2858 = vld [vmem:[%s2857] sm:$0xf]
    %v2859 = vld [vmem:[%s2857 + $0x4] sm:$0xf]
    %v2860 = vld [vmem:[%s2857 + $0x8] sm:$0xf]
    %v2861 = vld [vmem:[%s2857 + $0xc] sm:$0xf]
    %v2866 = vunpack.c.l.b16 %v2858
    %v2867 = vunpack.c.l.b16 %v2859
    %v2868 = vunpack.c.l.b16 %v2860
    %v2869 = vunpack.c.l.b16 %v2861
    %v2870 = vpack.c.b16 %v2867, %v2866
    %v2871 = vpack.c.b16 %v2869, %v2868
    %2872 = vrot.lane.b32.xlu0 %v1111, 32
    %v2873 = vpop.permute.xlu0 %2872
    %2874 = vrot.lane.b32.xlu0 %v1115, 32
    %v2875 = vpop.permute.xlu0 %2874
    %v2879 = vsel %vm1144, %v2870, 0
    %v2882 = vsel %vm1144, %v2871, 0
    %2884 = vmatprep.subr.bf16.mxu0 0
    %2885 = vmatpush1.bf16.msra.mxu0 0
    %2886 = vmatprep.subr.bf16.mxu0 0
    %2887 = vmatpush1.bf16.msra.mxu0 0
    %2888 = vmatprep.subr.bf16.mxu0 0
    %2889 = vmatpush1.bf16.msra.mxu0 0
    %2890 = vmatprep.subr.bf16.mxu0 0
    %2891 = vmatpush1.bf16.msra.mxu0 0
    %2892 = vmatprep.subr.bf16.mxu0 0
    %2893 = vmatpush1.bf16.msra.mxu0 0
    %2894 = vmatprep.subr.bf16.mxu0 0
    %2895 = vmatpush1.bf16.msra.mxu0 0
    %2896 = vmatprep.subr.bf16.mxu0 0
    %2897 = vmatpush1.bf16.msra.mxu0 %v2875
    %2898 = vmatprep.subr.bf16.mxu0 0
    %2899 = vmatpush1.bf16.msra.mxu0 %v2873
    %2900 = vmatprep.subr.bf16.mxu0 0
    %2901 = vmatpush2.bf16.msra.mxu0 0
    %2902 = vmatprep.subr.bf16.mxu0 0
    %2903 = vmatpush2.bf16.msra.mxu0 0
    %2904 = vmatprep.subr.bf16.mxu0 0
    %2905 = vmatpush2.bf16.msra.mxu0 0
    %2906 = vmatprep.subr.bf16.mxu0 0
    %2907 = vmatpush2.bf16.msra.mxu0 0
    %2908 = vmatprep.subr.bf16.mxu0 0
    %2909 = vmatpush2.bf16.msra.mxu0 0
    %2910 = vmatprep.subr.bf16.mxu0 0
    %2911 = vmatpush2.bf16.msra.mxu0 0
    %2912 = vmatprep.subr.bf16.mxu0 0
    %2913 = vmatpush2.bf16.msra.mxu0 0
    %2914 = vmatprep.subr.bf16.mxu0 0
    %2915 = vmatpush2.bf16.msra.mxu0 0
    %2916 = vmatprep.mubr.bf16.mxu0 0
    %2917 = vmatmul.mubr.bf16.gmra.mxu0 %v2879
    %v2918 = vpop.f32.mrf.mxu0
    %v2919 = vadd.f32 0.0, %v2918
    %v2920 = vpop.f32.mrf.mxu0
    %v2921 = vpop.f32.mrf.mxu0
    %v2922 = vadd.f32 0.0, %v2921
    %v2923 = vpop.f32.mrf.mxu0
    %2924 = vmatprep.mubr.bf16.mxu0 0
    %2925 = vmatmul.mubr.bf16.gmra.mxu0 %v2882
    %v2926 = vpop.f32.mrf.mxu0
    %v2927 = vadd.f32 0.0, %v2926
    %v2928 = vpop.f32.mrf.mxu0
    %v2929 = vpop.f32.mrf.mxu0
    %v2930 = vadd.f32 0.0, %v2929
    %v2931 = vpop.f32.mrf.mxu0
    %2932 = vdwg.mxu0
    %v2933 = vadd.f32 %v2853, %v2919
    %v2934 = vadd.f32 %v2854, %v2922
    %v2935 = vadd.f32 %v2855, %v2927
    %v2936 = vadd.f32 %v2856, %v2930
    %s2937 = scalar_lea.vmem %s4, 368
    %v2938 = vld [vmem:[%s2937] sm:$0xf]
    %v2939 = vld [vmem:[%s2937 + $0x4] sm:$0xf]
    %v2940 = vld [vmem:[%s2937 + $0x8] sm:$0xf]
    %v2941 = vld [vmem:[%s2937 + $0xc] sm:$0xf]
    %v2946 = vunpack.c.l.b16 %v2938
    %v2947 = vunpack.c.l.b16 %v2939
    %v2948 = vunpack.c.l.b16 %v2940
    %v2949 = vunpack.c.l.b16 %v2941
    %v2950 = vpack.c.b16 %v2947, %v2946
    %v2951 = vpack.c.b16 %v2949, %v2948
    %2952 = vrot.lane.b32.xlu0 %v1111, 16
    %v2953 = vpop.permute.xlu0 %2952
    %2954 = vrot.lane.b32.xlu0 %v1115, 16
    %v2955 = vpop.permute.xlu0 %2954
    %v2959 = vsel %vm1144, %v2950, 0
    %v2962 = vsel %vm1144, %v2951, 0
    %2964 = vmatprep.subr.bf16.mxu0 0
    %2965 = vmatpush1.bf16.msra.mxu0 0
    %2966 = vmatprep.subr.bf16.mxu0 0
    %2967 = vmatpush1.bf16.msra.mxu0 0
    %2968 = vmatprep.subr.bf16.mxu0 0
    %2969 = vmatpush1.bf16.msra.mxu0 0
    %2970 = vmatprep.subr.bf16.mxu0 0
    %2971 = vmatpush1.bf16.msra.mxu0 0
    %2972 = vmatprep.subr.bf16.mxu0 0
    %2973 = vmatpush1.bf16.msra.mxu0 0
    %2974 = vmatprep.subr.bf16.mxu0 0
    %2975 = vmatpush1.bf16.msra.mxu0 0
    %2976 = vmatprep.subr.bf16.mxu0 0
    %2977 = vmatpush1.bf16.msra.mxu0 %v2955
    %2978 = vmatprep.subr.bf16.mxu0 0
    %2979 = vmatpush1.bf16.msra.mxu0 %v2953
    %2980 = vmatprep.subr.bf16.mxu0 0
    %2981 = vmatpush2.bf16.msra.mxu0 0
    %2982 = vmatprep.subr.bf16.mxu0 0
    %2983 = vmatpush2.bf16.msra.mxu0 0
    %2984 = vmatprep.subr.bf16.mxu0 0
    %2985 = vmatpush2.bf16.msra.mxu0 0
    %2986 = vmatprep.subr.bf16.mxu0 0
    %2987 = vmatpush2.bf16.msra.mxu0 0
    %2988 = vmatprep.subr.bf16.mxu0 0
    %2989 = vmatpush2.bf16.msra.mxu0 0
    %2990 = vmatprep.subr.bf16.mxu0 0
    %2991 = vmatpush2.bf16.msra.mxu0 0
    %2992 = vmatprep.subr.bf16.mxu0 0
    %2993 = vmatpush2.bf16.msra.mxu0 0
    %2994 = vmatprep.subr.bf16.mxu0 0
    %2995 = vmatpush2.bf16.msra.mxu0 0
    %2996 = vmatprep.mubr.bf16.mxu0 0
    %2997 = vmatmul.mubr.bf16.gmra.mxu0 %v2959
    %v2998 = vpop.f32.mrf.mxu0
    %v2999 = vadd.f32 0.0, %v2998
    %v3000 = vpop.f32.mrf.mxu0
    %v3001 = vpop.f32.mrf.mxu0
    %v3002 = vadd.f32 0.0, %v3001
    %v3003 = vpop.f32.mrf.mxu0
    %3004 = vmatprep.mubr.bf16.mxu0 0
    %3005 = vmatmul.mubr.bf16.gmra.mxu0 %v2962
    %v3006 = vpop.f32.mrf.mxu0
    %v3007 = vadd.f32 0.0, %v3006
    %v3008 = vpop.f32.mrf.mxu0
    %v3009 = vpop.f32.mrf.mxu0
    %v3010 = vadd.f32 0.0, %v3009
    %v3011 = vpop.f32.mrf.mxu0
    %3012 = vdwg.mxu0
    %v3013 = vadd.f32 %v2933, %v2999
    %v3014 = vadd.f32 %v2934, %v3002
    %v3015 = vadd.f32 %v2935, %v3007
    %v3016 = vadd.f32 %v2936, %v3010
    %s3017 = scalar_lea.vmem %s4, 384
    %v3018 = vld [vmem:[%s3017] sm:$0xf]
    %v3019 = vld [vmem:[%s3017 + $0x4] sm:$0xf]
    %v3020 = vld [vmem:[%s3017 + $0x8] sm:$0xf]
    %v3021 = vld [vmem:[%s3017 + $0xc] sm:$0xf]
    %v3026 = vunpack.c.l.b16 %v3018
    %v3027 = vunpack.c.l.b16 %v3019
    %v3028 = vunpack.c.l.b16 %v3020
    %v3029 = vunpack.c.l.b16 %v3021
    %v3030 = vpack.c.b16 %v3027, %v3026
    %v3031 = vpack.c.b16 %v3029, %v3028
    %v3033 = vsel %vm1144, %v3030, 0
    %v3036 = vsel %vm1144, %v3031, 0
    %3038 = vmatprep.subr.bf16.mxu0 0
    %3039 = vmatpush1.bf16.msra.mxu0 0
    %3040 = vmatprep.subr.bf16.mxu0 0
    %3041 = vmatpush1.bf16.msra.mxu0 0
    %3042 = vmatprep.subr.bf16.mxu0 0
    %3043 = vmatpush1.bf16.msra.mxu0 0
    %3044 = vmatprep.subr.bf16.mxu0 0
    %3045 = vmatpush1.bf16.msra.mxu0 0
    %3046 = vmatprep.subr.bf16.mxu0 0
    %3047 = vmatpush1.bf16.msra.mxu0 0
    %3048 = vmatprep.subr.bf16.mxu0 0
    %3049 = vmatpush1.bf16.msra.mxu0 0
    %3050 = vmatprep.subr.bf16.mxu0 0
    %3051 = vmatpush1.bf16.msra.mxu0 %v1116
    %3052 = vmatprep.subr.bf16.mxu0 0
    %3053 = vmatpush1.bf16.msra.mxu0 %v1112
    %3054 = vmatprep.subr.bf16.mxu0 0
    %3055 = vmatpush2.bf16.msra.mxu0 0
    %3056 = vmatprep.subr.bf16.mxu0 0
    %3057 = vmatpush2.bf16.msra.mxu0 0
    %3058 = vmatprep.subr.bf16.mxu0 0
    %3059 = vmatpush2.bf16.msra.mxu0 0
    %3060 = vmatprep.subr.bf16.mxu0 0
    %3061 = vmatpush2.bf16.msra.mxu0 0
    %3062 = vmatprep.subr.bf16.mxu0 0
    %3063 = vmatpush2.bf16.msra.mxu0 0
    %3064 = vmatprep.subr.bf16.mxu0 0
    %3065 = vmatpush2.bf16.msra.mxu0 0
    %3066 = vmatprep.subr.bf16.mxu0 0
    %3067 = vmatpush2.bf16.msra.mxu0 0
    %3068 = vmatprep.subr.bf16.mxu0 0
    %3069 = vmatpush2.bf16.msra.mxu0 0
    %3070 = vmatprep.mubr.bf16.mxu0 0
    %3071 = vmatmul.mubr.bf16.gmra.mxu0 %v3033
    %v3072 = vpop.f32.mrf.mxu0
    %v3073 = vadd.f32 0.0, %v3072
    %v3074 = vpop.f32.mrf.mxu0
    %v3075 = vpop.f32.mrf.mxu0
    %v3076 = vadd.f32 0.0, %v3075
    %v3077 = vpop.f32.mrf.mxu0
    %3078 = vmatprep.mubr.bf16.mxu0 0
    %3079 = vmatmul.mubr.bf16.gmra.mxu0 %v3036
    %v3080 = vpop.f32.mrf.mxu0
    %v3081 = vadd.f32 0.0, %v3080
    %v3082 = vpop.f32.mrf.mxu0
    %v3083 = vpop.f32.mrf.mxu0
    %v3084 = vadd.f32 0.0, %v3083
    %v3085 = vpop.f32.mrf.mxu0
    %3086 = vdwg.mxu0
    %v3087 = vadd.f32 %v3013, %v3073
    %v3088 = vadd.f32 %v3014, %v3076
    %v3089 = vadd.f32 %v3015, %v3081
    %v3090 = vadd.f32 %v3016, %v3084
    %v3091 = vld [vmem:[%s5] sm:$0xff]
    %v3092 = vld [vmem:[%s5 + $0x8] sm:$0xff]
    %v3093 = vld [vmem:[%s5 + $0x10] sm:$0xff]
    %v3094 = vld [vmem:[%s5 + $0x18] sm:$0xff]
    %v3095 = vld [vmem:[%s6] sm:$0xff]
    %v3096 = vld [vmem:[%s6 + $0x8] sm:$0xff]
    %v3097 = vld [vmem:[%s6 + $0x10] sm:$0xff]
    %v3098 = vld [vmem:[%s6 + $0x18] sm:$0xff]
    %v3099 = vsel %vm690, %v3087, 0.0
    %3100 = vadd.xlane.f32.xlu0 %v3099
    %v3101 = vpop.xlane.xlu0 %3100
    %v3102 = vsel %vm690, %v3088, 0.0
    %3103 = vadd.xlane.f32.xlu0 %v3102
    %v3104 = vpop.xlane.xlu0 %3103
    %v3105 = vsel %vm690, %v3089, 0.0
    %3106 = vadd.xlane.f32.xlu0 %v3105
    %v3107 = vpop.xlane.xlu0 %3106
    %v3108 = vsel %vm690, %v3090, 0.0
    %3109 = vadd.xlane.f32.xlu0 %v3108
    %v3110 = vpop.xlane.xlu0 %3109
    %v3111 = vmul.f32 %v3087, %v3087
    %v3112 = vmul.f32 %v3088, %v3088
    %v3113 = vmul.f32 %v3089, %v3089
    %v3114 = vmul.f32 %v3090, %v3090
    %v3115 = vsel %vm690, %v3111, 0.0
    %3116 = vadd.xlane.f32.xlu0 %v3115
    %v3117 = vpop.xlane.xlu0 %3116
    %v3118 = vsel %vm690, %v3112, 0.0
    %3119 = vadd.xlane.f32.xlu0 %v3118
    %v3120 = vpop.xlane.xlu0 %3119
    %v3121 = vsel %vm690, %v3113, 0.0
    %3122 = vadd.xlane.f32.xlu0 %v3121
    %v3123 = vpop.xlane.xlu0 %3122
    %v3124 = vsel %vm690, %v3114, 0.0
    %3125 = vadd.xlane.f32.xlu0 %v3124
    %v3126 = vpop.xlane.xlu0 %3125
    %v3127 = vmul.f32 %v3101, 0.0625
    %v3128 = vmul.f32 %v3104, 0.0625
    %v3129 = vmul.f32 %v3107, 0.0625
    %v3130 = vmul.f32 %v3110, 0.0625
    %v3131 = vmul.f32 %v3117, 0.0625
    %v3132 = vmul.f32 %v3120, 0.0625
    %v3133 = vmul.f32 %v3123, 0.0625
    %v3134 = vmul.f32 %v3126, 0.0625
    %v3135 = vmul.f32 %v3127, %v3127
    %v3136 = vmul.f32 %v3128, %v3128
    %v3137 = vmul.f32 %v3129, %v3129
    %v3138 = vmul.f32 %v3130, %v3130
    %v3139 = vsub.f32 %v3131, %v3135
    %v3140 = vsub.f32 %v3132, %v3136
    %v3141 = vsub.f32 %v3133, %v3137
    %v3142 = vsub.f32 %v3134, %v3138
    %v3143 = vmax.f32 %v3139, 0.0
    %v3144 = vmax.f32 %v3140, 0.0
    %v3145 = vmax.f32 %v3141, 0.0
    %v3146 = vmax.f32 %v3142, 0.0
    %v3147 = vadd.f32 %v3143, 1e-05
    %v3148 = vadd.f32 %v3144, 1e-05
    %v3149 = vadd.f32 %v3145, 1e-05
    %v3150 = vadd.f32 %v3146, 1e-05
    %v3151 = vrsqrt.pop %v3147
    %v3152 = vrsqrt.pop %v3148
    %v3153 = vrsqrt.pop %v3149
    %v3154 = vrsqrt.pop %v3150
    %v3155 = vmul.f32 %v3091, %v3151
    %v3156 = vmul.f32 %v3092, %v3152
    %v3157 = vmul.f32 %v3093, %v3153
    %v3158 = vmul.f32 %v3094, %v3154
    %v3159 = vmul.f32 %v3127, %v3155
    %v3160 = vmul.f32 %v3128, %v3156
    %v3161 = vmul.f32 %v3129, %v3157
    %v3162 = vmul.f32 %v3130, %v3158
    %v3163 = vsub.f32 %v3095, %v3159
    %v3164 = vsub.f32 %v3096, %v3160
    %v3165 = vsub.f32 %v3097, %v3161
    %v3166 = vsub.f32 %v3098, %v3162
    %3168 = vset.pattern.permute.xlu0 0
    %3169 = vperm.xlu0 %3168, %v3155
    %v3170 = vpop.permute.xlu0 %3169
    %3173 = vset.pattern.permute.xlu0 0
    %3174 = vperm.xlu0 %3173, %v3156
    %v3175 = vpop.permute.xlu0 %3174
    %3178 = vset.pattern.permute.xlu0 0
    %3179 = vperm.xlu0 %3178, %v3157
    %v3180 = vpop.permute.xlu0 %3179
    %3183 = vset.pattern.permute.xlu0 0
    %3184 = vperm.xlu0 %3183, %v3158
    %v3185 = vpop.permute.xlu0 %3184
    %v3187 = vmul.f32 %v3087, %v3170
    %v3188 = vmul.f32 %v3088, %v3175
    %v3189 = vmul.f32 %v3089, %v3180
    %v3190 = vmul.f32 %v3090, %v3185
    %3192 = vset.pattern.permute.xlu0 0
    %3193 = vperm.xlu0 %3192, %v3163
    %v3194 = vpop.permute.xlu0 %3193
    %3197 = vset.pattern.permute.xlu0 0
    %3198 = vperm.xlu0 %3197, %v3164
    %v3199 = vpop.permute.xlu0 %3198
    %3202 = vset.pattern.permute.xlu0 0
    %3203 = vperm.xlu0 %3202, %v3165
    %v3204 = vpop.permute.xlu0 %3203
    %3207 = vset.pattern.permute.xlu0 0
    %3208 = vperm.xlu0 %3207, %v3166
    %v3209 = vpop.permute.xlu0 %3208
    %v3211 = vadd.f32 %v3187, %v3194
    %v3212 = vadd.f32 %v3188, %v3199
    %v3213 = vadd.f32 %v3189, %v3204
    %v3214 = vadd.f32 %v3190, %v3209
    %v3215 = vmax.f32 %v3211, 0.0
    %v3216 = vmax.f32 %v3212, 0.0
    %v3217 = vmax.f32 %v3213, 0.0
    %v3218 = vmax.f32 %v3214, 0.0
    %v3219 = vpack.c.bf16 %v3216, %v3215
    %v3220 = vpack.c.bf16 %v3218, %v3217
    %v3221 = vld [vmem:[%s7] sm:$0xf]
    %v3222 = vld [vmem:[%s7 + $0x4] sm:$0xf]
    %v3223 = vld [vmem:[%s8] sm:$0xff]
    %v3224 = vld [vmem:[%s8 + $0x8] sm:$0xff]
    %3226 = vset.pattern.permute.xlu0 0
    %3227 = vperm.xlu0 %3226, %v3223
    %v3228 = vpop.permute.xlu0 %3227
    %3231 = vset.pattern.permute.xlu0 0
    %3232 = vperm.xlu0 %3231, %v3224
    %v3233 = vpop.permute.xlu0 %3232
    %v3237 = vunpack.c.l.b16 %v3221
    %v3238 = vunpack.c.l.b16 %v3222
    %v3239 = vpack.c.b16 %v3238, %v3237
    %v3241 = vsel %vm1144, %v3239, 0
    %3243 = vmatprep.subr.bf16.mxu0 0
    %3244 = vmatpush1.bf16.msra.mxu0 0
    %3245 = vmatprep.subr.bf16.mxu0 0
    %3246 = vmatpush1.bf16.msra.mxu0 0
    %3247 = vmatprep.subr.bf16.mxu0 0
    %3248 = vmatpush1.bf16.msra.mxu0 0
    %3249 = vmatprep.subr.bf16.mxu0 0
    %3250 = vmatpush1.bf16.msra.mxu0 0
    %3251 = vmatprep.subr.bf16.mxu0 0
    %3252 = vmatpush1.bf16.msra.mxu0 0
    %3253 = vmatprep.subr.bf16.mxu0 0
    %3254 = vmatpush1.bf16.msra.mxu0 0
    %3255 = vmatprep.subr.bf16.mxu0 0
    %3256 = vmatpush1.bf16.msra.mxu0 %v3220
    %3257 = vmatprep.subr.bf16.mxu0 0
    %3258 = vmatpush1.bf16.msra.mxu0 %v3219
    %3259 = vmatprep.subr.bf16.mxu0 0
    %3260 = vmatpush2.bf16.msra.mxu0 0
    %3261 = vmatprep.subr.bf16.mxu0 0
    %3262 = vmatpush2.bf16.msra.mxu0 0
    %3263 = vmatprep.subr.bf16.mxu0 0
    %3264 = vmatpush2.bf16.msra.mxu0 0
    %3265 = vmatprep.subr.bf16.mxu0 0
    %3266 = vmatpush2.bf16.msra.mxu0 0
    %3267 = vmatprep.subr.bf16.mxu0 0
    %3268 = vmatpush2.bf16.msra.mxu0 0
    %3269 = vmatprep.subr.bf16.mxu0 0
    %3270 = vmatpush2.bf16.msra.mxu0 0
    %3271 = vmatprep.subr.bf16.mxu0 0
    %3272 = vmatpush2.bf16.msra.mxu0 0
    %3273 = vmatprep.subr.bf16.mxu0 0
    %3274 = vmatpush2.bf16.msra.mxu0 0
    %3275 = vmatprep.mubr.bf16.mxu0 0
    %3276 = vmatmul.mubr.bf16.gmra.mxu0 %v3241
    %v3277 = vpop.f32.mrf.mxu0
    %v3278 = vadd.f32 %v3228, %v3277
    %v3279 = vpop.f32.mrf.mxu0
    %v3280 = vpop.f32.mrf.mxu0
    %v3281 = vadd.f32 %v3233, %v3280
    %v3282 = vpop.f32.mrf.mxu0
    %3283 = vdwg.mxu0
    %v3284 = vmax.f32 %v3278, 0.0
    %v3285 = vmax.f32 %v3281, 0.0
    %v3286 = vpack.c.bf16 %v3285, %v3284
    %v3287 = vld [vmem:[%s9] sm:$0x1]
    %v3288 = vld [vmem:[#allocation2] sm:$0x1]
    %3290 = vset.pattern.permute.xlu0 0
    %3291 = vperm.xlu0 %3290, %v3288
    %v3292 = vpop.permute.xlu0 %3291
    %v3294 = vlaneseq
    %v3295 = vshrl.u32 %v3294, 7
    %v3296 = vsub.s32 0, %v3295
    %v3297 = vrot.slane %v3292, %v3296
    %v3299 = vsel %vm690, %v3287, 0
    %3301 = vmatprep.subr.bf16.mxu0 0
    %3302 = vmatpush1.bf16.msra.mxu0 0
    %3303 = vmatprep.subr.bf16.mxu0 0
    %3304 = vmatpush1.bf16.msra.mxu0 0
    %3305 = vmatprep.subr.bf16.mxu0 0
    %3306 = vmatpush1.bf16.msra.mxu0 0
    %3307 = vmatprep.subr.bf16.mxu0 0
    %3308 = vmatpush1.bf16.msra.mxu0 0
    %3309 = vmatprep.subr.bf16.mxu0 0
    %3310 = vmatpush1.bf16.msra.mxu0 0
    %3311 = vmatprep.subr.bf16.mxu0 0
    %3312 = vmatpush1.bf16.msra.mxu0 0
    %3313 = vmatprep.subr.bf16.mxu0 0
    %3314 = vmatpush1.bf16.msra.mxu0 0
    %3315 = vmatprep.subr.bf16.mxu0 0
    %3316 = vmatpush1.bf16.msra.mxu0 %v3286
    %3317 = vmatprep.subr.bf16.mxu0 0
    %3318 = vmatpush2.bf16.msra.mxu0 0
    %3319 = vmatprep.subr.bf16.mxu0 0
    %3320 = vmatpush2.bf16.msra.mxu0 0
    %3321 = vmatprep.subr.bf16.mxu0 0
    %3322 = vmatpush2.bf16.msra.mxu0 0
    %3323 = vmatprep.subr.bf16.mxu0 0
    %3324 = vmatpush2.bf16.msra.mxu0 0
    %3325 = vmatprep.subr.bf16.mxu0 0
    %3326 = vmatpush2.bf16.msra.mxu0 0
    %3327 = vmatprep.subr.bf16.mxu0 0
    %3328 = vmatpush2.bf16.msra.mxu0 0
    %3329 = vmatprep.subr.bf16.mxu0 0
    %3330 = vmatpush2.bf16.msra.mxu0 0
    %3331 = vmatprep.subr.bf16.mxu0 0
    %3332 = vmatpush2.bf16.msra.mxu0 0
    %3333 = vmatprep.mubr.bf16.mxu0 0
    %3334 = vmatmul.mubr.bf16.gmra.mxu0 %v3299
    %v3335 = vpop.f32.mrf.mxu0
    %v3336 = vadd.f32 %v3297, %v3335
    %v3337 = vpop.f32.mrf.mxu0
    %v3338 = vpop.f32.mrf.mxu0
    %v3339 = vpop.f32.mrf.mxu0
    %3340 = vdwg.mxu0
    %vm3341 = vcmask 122880
    %3342 = vst.msk [vmem:[%s11] sm:$0x1] %vm3341, %v3336
    %v3343 = vlaneseq
    %v3344 = vand.u32 %v3343, 127
    %v3345 = vlaneseq
    %v3346 = vshrl.u32 %v3345, 7
    %v3347 = vmul.u32 %v3346, 4
    %vm3348 = vcmp.ge.s32.totalorder %v3344, %v3347
    %v3349 = vadd.s32 %v3346, 1
    %v3350 = vmul.u32 %v3349, 4
    %vm3351 = vcmp.lt.s32.totalorder %v3344, %v3350
    %vm3352 = vmand %vm3348, %vm3351
    %v3353 = vsel %vm3352, 1, 0
    %v3354 = vcvt.s32.f32 %v3353
    %v3355 = vlaneseq
    %v3356 = vshrl.u32 %v3355, 7
    %v3357 = vsub.s32 0, %v3356
    %v3358 = vrot.slane %v3336, %v3357
    %v3359 = vmul.f32 %v3354, %v3358
    %vm3360 = vcmask 125952
    %v3361 = vsel %vm3360, %v3359, 0.0
    %3362 = vadd.xlane.f32.xlu0 %v3361
    %v3363 = vpop.xlane.xlu0 %3362
    %v3365 = vrot.slane %v3363, 2
    %v3367 = vmax.f32 %v3363, %v3365
    %v3368 = vsub.f32 %v3363, %v3367
    %v3369 = vmul.f32 %v3368, 1.442695
    %v3370 = vpow.pop %v3369
    %v3372 = vrot.slane %v3367, 6
    %v3374 = vsub.f32 %v3363, %v3372
    %v3375 = vmul.f32 %v3374, 1.442695
    %v3376 = vpow.pop %v3375
    %v3378 = vrot.slane %v3376, 2
    %v3380 = vadd.f32 %v3370, %v3378
    %v3381 = vrcp.pop %v3380
    %v3382 = vmul.f32 1.0, %v3381
    %v3383 = vmul.f32 %v3370, %v3382
    %v3385 = vrot.slane %v3382, 6
    %v3387 = vmul.f32 %v3376, %v3385
    %v3389 = vrot.slane %v3387, 2
    %3390 = vrot.lane.b32.xlu0 %v3389, 1
    %v3391 = vpop.permute.xlu0 %3390
    %vm3393 = vcmask 7168
    %v3394 = vsel %vm3393, %v3383, %v3391
    %vm3395 = vcmask 9216
    %3396 = vst.msk [vmem:[#allocation3] sm:$0x3] %vm3395, %v3394
    // Predicated region
    $region46: #{forward.5} parent=1 // pred_check
      _
    $region47: #{forward.5} parent=1 // pred_check_branch
      %3398 = sbr.rel (0) target = $region49
    $region48: #{forward.5} parent=1 // pred_region
      _
    $region49: #{forward.5} parent=1 // pred_fallthru
      _
    // Predicated region
    $region50: #{forward.5} parent=1 // pred_check
      _
    $region51: #{forward.5} parent=1 // pred_check_branch
      %3400 = sbr.rel (0) target = $region53
    $region52: #{forward.5} parent=1 // pred_region
      %s3402 = ssub.s32 32, 32
      %3403 = vsyncadd [#allocation4], %s3402
      %s3405 = sshll.u32 [#allocation3], 4
      %s3406 = int_to_ptr.vmem [resolvable:$true] %s3405
      %3408 = dma.vmem_to_hbm [thread:$0]  %s3406, 32, %s12, [#allocation4]
    $region53: #{forward.5} parent=1 // pred_fallthru
      _
    // Predicated region
    $region54: #{forward.5} parent=1 // pred_check
      _
    $region55: #{forward.5} parent=1 // pred_check_branch
      %3410 = sbr.rel (0) target = $region57
    $region56: #{forward.5} parent=1 // pred_region
      _
    $region57: #{forward.5} parent=1 // pred_fallthru
      _
    // Predicated region
    $region58: #{forward.5} parent=1 // pred_check
      _
    $region59: #{forward.5} parent=1 // pred_check_branch
      %3412 = sbr.rel (0) target = $region61
    $region60: #{forward.5} parent=1 // pred_region
      %3413 = dma.done [#allocation4], 32
    $region61: #{forward.5} parent=1 // pred_fallthru
      _
    %3414 = vsyncpa [#allocation4], 1

</llo_original>
